<compile_context>
chip_gen: v6e
topology: v6e:2x2x1
jax: 0.10.0
libtpu: 0.0.40
codegen_flags: <defaults>
</compile_context>

<pallas_src>
import math
from functools import partial

import jax
import jax.numpy as jnp
from jax.experimental import pallas as pl
from jax.experimental.pallas import tpu as pltpu


# ----------------------------------------------------------------------------- fused kernel

def make_ensemble_kernel(layer_num, ks, hidden):
    """One grid step == one ensemble member (fold). Everything stays in VMEM/vregs."""

    def kernel(a_ref, x_ref, tri_ref, *refs):
        layer_refs = refs[: 3 * layer_num]
        w1_ref, b1_ref, w2_ref, b2_ref, w3_ref, b3_ref, o_ref = refs[3 * layer_num:]

        G, N, _ = a_ref.shape
        a = a_ref[...]                        # (G, N, N) raw adjacency (shared across models)
        tri = tri_ref[...][None]              # (1, N, N)  tri[i, j] = 1.0 iff j < i (tie-break)
        h = x_ref[...]                        # (G, N, F)  node features
        mask = jnp.ones((G, N), jnp.float32)  # layer-0: all nodes kept
        out_gmp = jnp.zeros((G, hidden), jnp.float32)
        out_gap = jnp.zeros((G, hidden), jnp.float32)

        for li in range(layer_num):           # static unroll (layer_num is a Python int)
            w = layer_refs[3 * li][0]          # (Fin, H)
            b = layer_refs[3 * li + 1][0]      # (1, H)
            p = layer_refs[3 * li + 2][0]      # (1, H)   pre-normalized score vector p/||p||
            k = ks[li]                         # static top-k size for this layer

            # ---- GCNConv: relu(D^-1/2 (A_kept + I_kept) D^-1/2 X W + b)  (self-loop folded)
            m_row = mask[:, None, :]                               # (G, 1, N)
            m_col = mask[:, :, None]                               # (G, N, 1)
            a_eff = a * m_row                                      # drop edges from removed nodes
            deg = jnp.sum(a_eff, axis=-1, keepdims=True) + m_col   # +1 self loop on kept nodes
            dinv = jnp.where(deg > 0.0, jax.lax.rsqrt(deg), 0.0)

            fin = h.shape[-1]
            xw = jnp.dot(h.reshape(G * N, fin), w,
                         preferred_element_type=jnp.float32).reshape(G, N, hidden)
            agg = jnp.einsum('gij,gjh->gih', a_eff, dinv * xw,
                             preferred_element_type=jnp.float32)
            h = jnp.maximum(dinv * agg + (dinv * dinv * m_col) * xw + b, 0.0)

            # ---- TopKPooling: score -> keep top-k (static k) via rank counting -> tanh gate
            score = jnp.sum(h * p, axis=-1)                        # (G, N)  == h @ (p/||p||)
            ms = jnp.where(mask > 0.0, score, -1e30)
            si = ms[:, :, None]                                    # (G, N, 1)
            sj = ms[:, None, :]                                    # (G, 1, N)
            beats = jnp.where(sj > si, 1.0, jnp.where(sj == si, tri, 0.0))
            rank = jnp.sum(beats, axis=-1)                         # #nodes ranked ahead of i
            mask = jnp.where((rank < k) & (mask > 0.0), 1.0, 0.0)  # new kept-node mask

            gate = jnp.tanh(score) * mask
            h = h * gate[:, :, None]                               # gated; dropped nodes -> 0

            # ---- readout: global max / mean pool over kept nodes (k >= 1 so count >= 1)
            m_col = mask[:, :, None]
            gmp = jnp.max(jnp.where(m_col > 0.0, h, -1e30), axis=1)               # (G, H)
            gap = jnp.sum(h, axis=1) / jnp.sum(mask, axis=-1, keepdims=True)      # (G, H)
            out_gmp = out_gmp + gmp
            out_gap = out_gap + gap

        # ---- classifier head: lin1 -> relu -> lin2 -> relu -> lin3 -> log_softmax -> exp
        # lin1 split into gmp/gap halves == cat([gmp_sum, gap_sum], -1) @ W1 (no lane concat)
        w1 = w1_ref[0]                                             # (2H, H)
        h1 = (jnp.dot(out_gmp, w1[:hidden, :], preferred_element_type=jnp.float32)
              + jnp.dot(out_gap, w1[hidden:, :], preferred_element_type=jnp.float32)
              + b1_ref[0])
        h1 = jnp.maximum(h1, 0.0)                                  # dropout: eval no-op
        h2 = jnp.maximum(jnp.dot(h1, w2_ref[0], preferred_element_type=jnp.float32)
                         + b2_ref[0], 0.0)
        z = jnp.dot(h2, w3_ref[0], preferred_element_type=jnp.float32) + b3_ref[0]  # (G, 2)
        zmax = jnp.max(z, axis=-1, keepdims=True)
        ez = jnp.exp(z - zmax)
        o_ref[0] = ez / jnp.sum(ez, axis=-1, keepdims=True)        # exp(log_softmax) = softmax

    return kernel


# ----------------------------------------------------------------------------- jitted wrapper

@partial(jax.jit, static_argnames=("layer_num", "ratio"))
def cv_ensemble_forward(params, x, A, *, layer_num, ratio):
    """CV_ENSEMBLE_DWK.forward: mean over models of exp(log_softmax(model(batch))).

    `params` is a dict of ensemble-stacked arrays (leading axis M = #models)."""
    M = params['w1'].shape[0]
    G, N, feat = x.shape
    hidden = params['gcl0_w'].shape[-1]

    # static top-k sizes per layer (dense batch: every graph has the same node count)
    ks = []
    n = N
    for _ in range(layer_num):
        n = int(math.ceil(ratio * n))
        ks.append(n)

    # strict lower-triangular tie-break matrix (constant; passed once, never re-DMA'd)
    ii = jnp.arange(N, dtype=jnp.int32)
    tri = (ii[None, :] < ii[:, None]).astype(jnp.float32)

    args = [A, x, tri]
    in_specs = [
        pl.BlockSpec((G, N, N), lambda m: (0, 0, 0)),      # shared across models
        pl.BlockSpec((G, N, feat), lambda m: (0, 0, 0)),   # shared across models
        pl.BlockSpec((N, N), lambda m: (0, 0)),
    ]

    for li in range(layer_num):
        w = params[f'gcl{li}_w']
        b = params[f'gcl{li}_b']
        p = params[f'p{li}']
        p = p / jnp.sqrt(jnp.sum(p * p, axis=-1, keepdims=True))   # fold ||p|| into p (fused by XLA)
        for arr in (w, b, p):
            args.append(arr)
            in_specs.append(pl.BlockSpec((1,) + arr.shape[1:], lambda m: (m, 0, 0)))

    for name in ('w1', 'b1', 'w2', 'b2', 'w3', 'b3'):
        arr = params[name]
        args.append(arr)
        in_specs.append(pl.BlockSpec((1,) + arr.shape[1:], lambda m: (m, 0, 0)))

    kernel = make_ensemble_kernel(layer_num, tuple(ks), hidden)

    probs = pl.pallas_call(
        kernel,
        out_shape=jax.ShapeDtypeStruct((M, G, 2), jnp.float32),
        grid_spec=pl.GridSpec(
            grid=(M,),                                     # one grid step per ensemble member
            in_specs=in_specs,
            out_specs=pl.BlockSpec((1, G, 2), lambda m: (m, 0, 0)),
        ),
        compiler_params=pltpu.CompilerParams(
            dimension_semantics=("parallel",),             # lets v7x use both TensorCores
            vmem_limit_bytes=32 * 1024 * 1024,             # ample headroom on v5e's 16 MiB default
        ),
    )(*args)

    return jnp.mean(probs, axis=0)                         # ensemble mean over models


# ----------------------------------------------------------------------------- params / reference

def init_model_params(key, feat_dim, hidden, layer_num):
    keys = iter(jax.random.split(key, 4 * layer_num + 8))

    def nrm(shape, scale=0.1):
        return (scale * jax.random.normal(next(keys), shape)).astype(jnp.float32)

    params = {}
    dims_in = [feat_dim] + [hidden] * (layer_num - 1)
    for i, din in enumerate(dims_in):
        params[f'gcl{i}_w'] = nrm((din, hidden))           # GCNConv weight
        params[f'gcl{i}_b'] = nrm((1, hidden), 0.01)       # GCNConv bias
        params[f'p{i}'] = nrm((1, hidden))                 # TopKPooling score vector
    h2 = hidden // 2
    params['w1'] = nrm((2 * hidden, hidden)); params['b1'] = nrm((1, hidden), 0.01)
    params['w2'] = nrm((hidden, h2));         params['b2'] = nrm((1, h2), 0.01)
    params['w3'] = nrm((h2, 2));              params['b3'] = nrm((1, 2), 0.01)
    return params


def reference_forward(models_list, x, A, *, layer_num, ratio):
    """Pure-JAX reference (lax.top_k based) for correctness checking."""
    G, N, _ = x.shape

    def one_model(params):
        hidden = params['gcl0_w'].shape[-1]
        mask = jnp.ones((G, N), jnp.float32)
        h = x
        out = jnp.zeros((G, 2 * hidden), jnp.float32)
        n_nodes = N
        for li in range(layer_num):
            W = params[f'gcl{li}_w']; b = params[f'gcl{li}_b']; p = params[f'p{li}'][0]
            a_eff = A * mask[:, None, :]
            deg = jnp.sum(a_eff, axis=-1) + mask
            dinv = jnp.where(deg > 0, 1.0 / jnp.sqrt(deg), 0.0)
            xw = jnp.einsum('gnf,fh->gnh', h, W)
            hh = (dinv[..., None] * jnp.einsum('gij,gjh->gih', a_eff, dinv[..., None] * xw)
                  + (dinv * dinv * mask)[..., None] * xw + b)
            hh = jax.nn.relu(hh)
            score = jnp.einsum('gnh,h->gn', hh, p) / jnp.linalg.norm(p)
            k = int(math.ceil(ratio * n_nodes)); n_nodes = k
            _, idx = jax.lax.top_k(jnp.where(mask > 0, score, -jnp.inf), k)
            new_mask = jnp.zeros_like(mask).at[jnp.arange(G)[:, None], idx].set(1.0)
            gate = jnp.tanh(score) * new_mask
            hh = hh * gate[..., None]
            mask = new_mask
            gmp = jnp.max(jnp.where(mask[..., None] > 0, hh, -1e30), axis=1)
            gap = jnp.sum(hh, axis=1) / jnp.sum(mask, axis=-1, keepdims=True)
            out = out + jnp.concatenate([gmp, gap], axis=-1)
            h = hh
        h1 = jax.nn.relu(out @ params['w1'] + params['b1'])
        h2 = jax.nn.relu(h1 @ params['w2'] + params['b2'])
        z = h2 @ params['w3'] + params['b3']
        return jax.nn.softmax(z, axis=-1)

    return jnp.mean(jnp.stack([one_model(p) for p in models_list]), axis=0)


# ----------------------------------------------------------------------------- main

if __name__ == "__main__":
    G, N = 4, 16            # graphs in the batch, nodes per graph
    FEAT = 16               # hyper_parameters.vector_length
    HID = 32                # gnn.hidden_size
    RATIO = 0.5             # gnn.pooling_ratio
    LAYER_NUM = 2           # gnn.layer_num
    N_MODELS = 3            # ensemble members (folds)

    key = jax.random.PRNGKey(0)
    kx, ka, kp = jax.random.split(key, 3)

    x = jax.random.normal(kx, (G, N, FEAT), jnp.float32)
    u = jax.random.uniform(ka, (G, N, N))
    A = (u < 0.3).astype(jnp.float32)
    A = jnp.maximum(A, jnp.transpose(A, (0, 2, 1)))          # symmetric
    A = A * (1.0 - jnp.eye(N, dtype=jnp.float32)[None])      # no self loops (kernel adds them)

    models = [init_model_params(jax.random.fold_in(kp, m), FEAT, HID, LAYER_NUM)
              for m in range(N_MODELS)]
    stacked = jax.tree_util.tree_map(lambda *xs: jnp.stack(xs, axis=0), *models)

    pred = cv_ensemble_forward(stacked, x, A, layer_num=LAYER_NUM, ratio=RATIO)
    pred = jax.block_until_ready(pred)

    ref = jax.block_until_ready(
        reference_forward(models, x, A, layer_num=LAYER_NUM, ratio=RATIO))

    assert pred.shape == (G, 2)
    assert bool(jnp.all(jnp.isfinite(pred)))
    # each row is an average of softmax distributions -> sums to 1
    assert bool(jnp.allclose(jnp.sum(pred, axis=-1), 1.0, atol=1e-5))
    assert bool(jnp.allclose(pred, ref, atol=1e-4, rtol=1e-4))
    print("KERNEL_OK")
</pallas_src>

<mosaic_0001>
module attributes {stable_mosaic.version = 11 : i64} {
  func.func @kernel(%arg0: i32, %arg1: memref<4x16x16xf32, #tpu.memory_space<vmem>>, %arg2: memref<4x16x16xf32, #tpu.memory_space<vmem>>, %arg3: memref<16x16xf32, #tpu.memory_space<vmem>>, %arg4: memref<1x16x32xf32, #tpu.memory_space<vmem>>, %arg5: memref<1x1x32xf32, #tpu.memory_space<vmem>>, %arg6: memref<1x1x32xf32, #tpu.memory_space<vmem>>, %arg7: memref<1x32x32xf32, #tpu.memory_space<vmem>>, %arg8: memref<1x1x32xf32, #tpu.memory_space<vmem>>, %arg9: memref<1x1x32xf32, #tpu.memory_space<vmem>>, %arg10: memref<1x64x32xf32, #tpu.memory_space<vmem>>, %arg11: memref<1x1x32xf32, #tpu.memory_space<vmem>>, %arg12: memref<1x32x16xf32, #tpu.memory_space<vmem>>, %arg13: memref<1x1x16xf32, #tpu.memory_space<vmem>>, %arg14: memref<1x16x2xf32, #tpu.memory_space<vmem>>, %arg15: memref<1x1x2xf32, #tpu.memory_space<vmem>>, %arg16: memref<1x4x2xf32, #tpu.memory_space<vmem>>) attributes {dimension_semantics = [#tpu.dimension_semantics<parallel>], iteration_bounds = array<i64: 3>, scalar_prefetch = 0 : i64, scratch_operands = 0 : i64, tpu.core_type = #tpu.core_type<tc>, window_params = [{pipeline_mode = #tpu.pipeline_mode<synchronous>, transform_indices = @transform_0, window_bounds = array<i64: 4, 16, 16>}, {pipeline_mode = #tpu.pipeline_mode<synchronous>, transform_indices = @transform_1, window_bounds = array<i64: 4, 16, 16>}, {pipeline_mode = #tpu.pipeline_mode<synchronous>, transform_indices = @transform_2, window_bounds = array<i64: 16, 16>}, {transform_indices = @transform_3, window_bounds = array<i64: 1, 16, 32>}, {transform_indices = @transform_4, window_bounds = array<i64: 1, 1, 32>}, {transform_indices = @transform_5, window_bounds = array<i64: 1, 1, 32>}, {transform_indices = @transform_6, window_bounds = array<i64: 1, 32, 32>}, {transform_indices = @transform_7, window_bounds = array<i64: 1, 1, 32>}, {transform_indices = @transform_8, window_bounds = array<i64: 1, 1, 32>}, {transform_indices = @transform_9, window_bounds = array<i64: 1, 64, 32>}, {transform_indices = @transform_10, window_bounds = array<i64: 1, 1, 32>}, {transform_indices = @transform_11, window_bounds = array<i64: 1, 32, 16>}, {transform_indices = @transform_12, window_bounds = array<i64: 1, 1, 16>}, {transform_indices = @transform_13, window_bounds = array<i64: 1, 16, 2>}, {transform_indices = @transform_14, window_bounds = array<i64: 1, 1, 2>}, {transform_indices = @transform_15, window_bounds = array<i64: 1, 4, 2>}]} {
    %c0 = arith.constant 0 : index
    %c0_0 = arith.constant 0 : index
    %c0_1 = arith.constant 0 : index
    %0 = vector.load %arg1[%c0, %c0_0, %c0_1] : memref<4x16x16xf32, #tpu.memory_space<vmem>>, vector<4x16x16xf32>
    %c0_2 = arith.constant 0 : index
    %c0_3 = arith.constant 0 : index
    %1 = vector.load %arg3[%c0_2, %c0_3] : memref<16x16xf32, #tpu.memory_space<vmem>>, vector<16x16xf32>
    %2 = vector.shape_cast %1 : vector<16x16xf32> to vector<1x16x16xf32>
    %c0_4 = arith.constant 0 : index
    %c0_5 = arith.constant 0 : index
    %c0_6 = arith.constant 0 : index
    %3 = vector.load %arg2[%c0_4, %c0_5, %c0_6] : memref<4x16x16xf32, #tpu.memory_space<vmem>>, vector<4x16x16xf32>
    %cst = arith.constant 1.000000e+00 : f32
    %4 = vector.broadcast %cst : f32 to vector<4x16xf32>
    %cst_7 = arith.constant 0.000000e+00 : f32
    %5 = vector.broadcast %cst_7 : f32 to vector<4x32xf32>
    %cst_8 = arith.constant 0.000000e+00 : f32
    %6 = vector.broadcast %cst_8 : f32 to vector<4x32xf32>
    %c0_9 = arith.constant 0 : index
    %c0_10 = arith.constant 0 : index
    %c0_11 = arith.constant 0 : index
    %7 = vector.load %arg4[%c0_9, %c0_10, %c0_11] : memref<1x16x32xf32, #tpu.memory_space<vmem>>, vector<1x16x32xf32>
    %8 = vector.shape_cast %7 : vector<1x16x32xf32> to vector<16x32xf32>
    %c0_12 = arith.constant 0 : index
    %c0_13 = arith.constant 0 : index
    %c0_14 = arith.constant 0 : index
    %9 = vector.load %arg5[%c0_12, %c0_13, %c0_14] : memref<1x1x32xf32, #tpu.memory_space<vmem>>, vector<1x1x32xf32>
    %10 = vector.shape_cast %9 : vector<1x1x32xf32> to vector<1x32xf32>
    %c0_15 = arith.constant 0 : index
    %c0_16 = arith.constant 0 : index
    %c0_17 = arith.constant 0 : index
    %11 = vector.load %arg6[%c0_15, %c0_16, %c0_17] : memref<1x1x32xf32, #tpu.memory_space<vmem>>, vector<1x1x32xf32>
    %12 = vector.shape_cast %11 : vector<1x1x32xf32> to vector<1x32xf32>
    %13 = vector.shape_cast %4 : vector<4x16xf32> to vector<4x1x16xf32>
    %14 = vector.shape_cast %4 : vector<4x16xf32> to vector<4x16x1xf32>
    %15 = vector.broadcast %13 : vector<4x1x16xf32> to vector<4x16x16xf32>
    %16 = arith.mulf %0, %15 : vector<4x16x16xf32>
    %cst_18 = arith.constant dense<0.000000e+00> : vector<4x16xf32>
    %17 = vector.multi_reduction <add>, %16, %cst_18 [2] : vector<4x16x16xf32> to vector<4x16xf32>
    %18 = vector.shape_cast %17 : vector<4x16xf32> to vector<4x16x1xf32>
    %19 = arith.addf %18, %14 : vector<4x16x1xf32>
    %cst_19 = arith.constant 0.000000e+00 : f32
    %20 = vector.broadcast %cst_19 : f32 to vector<4x16x1xf32>
    %21 = arith.cmpf ogt, %19, %20 : vector<4x16x1xf32>
    %22 = math.rsqrt %19 : vector<4x16x1xf32>
    %cst_20 = arith.constant 0.000000e+00 : f32
    %23 = vector.broadcast %cst_20 : f32 to vector<4x16x1xf32>
    %24 = arith.select %21, %22, %23 : vector<4x16x1xi1>, vector<4x16x1xf32>
    %25 = vector.shape_cast %3 : vector<4x16x16xf32> to vector<64x16xf32>
    %cst_21 = arith.constant dense<0.000000e+00> : vector<64x32xf32>
    %26 = tpu.matmul %25, %8, %cst_21 {dimension_numbers = #tpu.dot_dimension_numbers<[1], [0], [0], [1], [0, 0, 1, 1], [], []>} : vector<64x16xf32>, vector<16x32xf32>, vector<64x32xf32> -> vector<64x32xf32>
    %27 = vector.shape_cast %26 : vector<64x32xf32> to vector<4x16x32xf32>
    %28 = vector.broadcast %24 : vector<4x16x1xf32> to vector<4x16x32xf32>
    %29 = arith.mulf %28, %27 : vector<4x16x32xf32>
    "tpu.trace_start"() <{level = 10 : i32, message = "gij,gjh->gih"}> : () -> ()
    %cst_22 = arith.constant dense<0.000000e+00> : vector<4x16x32xf32>
    %30 = tpu.matmul %16, %29, %cst_22 {dimension_numbers = #tpu.dot_dimension_numbers<[2], [1], [1], [2], [0, 0, 0, 1, 1, 2], [0], [0]>} : vector<4x16x16xf32>, vector<4x16x32xf32>, vector<4x16x32xf32> -> vector<4x16x32xf32>
    "tpu.trace_stop"() : () -> ()
    %31 = vector.broadcast %24 : vector<4x16x1xf32> to vector<4x16x32xf32>
    %32 = arith.mulf %31, %30 : vector<4x16x32xf32>
    %33 = arith.mulf %24, %24 : vector<4x16x1xf32>
    %34 = arith.mulf %33, %14 : vector<4x16x1xf32>
    %35 = vector.broadcast %34 : vector<4x16x1xf32> to vector<4x16x32xf32>
    %36 = arith.mulf %35, %27 : vector<4x16x32xf32>
    %37 = arith.addf %32, %36 : vector<4x16x32xf32>
    %38 = vector.shape_cast %10 : vector<1x32xf32> to vector<1x1x32xf32>
    %39 = vector.broadcast %38 : vector<1x1x32xf32> to vector<4x16x32xf32>
    %40 = arith.addf %37, %39 : vector<4x16x32xf32>
    %cst_23 = arith.constant 0.000000e+00 : f32
    %41 = vector.broadcast %cst_23 : f32 to vector<4x16x32xf32>
    %42 = arith.maximumf %40, %41 : vector<4x16x32xf32>
    %43 = vector.shape_cast %12 : vector<1x32xf32> to vector<1x1x32xf32>
    %44 = vector.broadcast %43 : vector<1x1x32xf32> to vector<4x16x32xf32>
    %45 = arith.mulf %42, %44 : vector<4x16x32xf32>
    %cst_24 = arith.constant dense<0.000000e+00> : vector<4x16xf32>
    %46 = vector.multi_reduction <add>, %45, %cst_24 [2] : vector<4x16x32xf32> to vector<4x16xf32>
    %cst_25 = arith.constant 0.000000e+00 : f32
    %47 = vector.broadcast %cst_25 : f32 to vector<4x16xf32>
    %48 = arith.cmpf ogt, %4, %47 : vector<4x16xf32>
    %cst_26 = arith.constant -1.000000e+30 : f32
    %49 = vector.broadcast %cst_26 : f32 to vector<4x16xf32>
    %50 = arith.select %48, %46, %49 : vector<4x16xi1>, vector<4x16xf32>
    %51 = vector.shape_cast %50 : vector<4x16xf32> to vector<4x16x1xf32>
    %52 = vector.shape_cast %50 : vector<4x16xf32> to vector<4x1x16xf32>
    %53 = vector.broadcast %52 : vector<4x1x16xf32> to vector<4x16x16xf32>
    %54 = vector.broadcast %51 : vector<4x16x1xf32> to vector<4x16x16xf32>
    %55 = arith.cmpf ogt, %53, %54 : vector<4x16x16xf32>
    %56 = vector.broadcast %52 : vector<4x1x16xf32> to vector<4x16x16xf32>
    %57 = vector.broadcast %51 : vector<4x16x1xf32> to vector<4x16x16xf32>
    %58 = arith.cmpf oeq, %56, %57 : vector<4x16x16xf32>
    %cst_27 = arith.constant 0.000000e+00 : f32
    %59 = vector.shape_cast %2 : vector<1x16x16xf32> to vector<1x16x16xf32>
    %60 = vector.broadcast %59 : vector<1x16x16xf32> to vector<4x16x16xf32>
    %61 = vector.broadcast %cst_27 : f32 to vector<4x16x16xf32>
    %62 = arith.select %58, %60, %61 : vector<4x16x16xi1>, vector<4x16x16xf32>
    %cst_28 = arith.constant 1.000000e+00 : f32
    %63 = vector.broadcast %cst_28 : f32 to vector<4x16x16xf32>
    %64 = arith.select %55, %63, %62 : vector<4x16x16xi1>, vector<4x16x16xf32>
    %cst_29 = arith.constant dense<0.000000e+00> : vector<4x16xf32>
    %65 = vector.multi_reduction <add>, %64, %cst_29 [2] : vector<4x16x16xf32> to vector<4x16xf32>
    %cst_30 = arith.constant 8.000000e+00 : f32
    %66 = vector.broadcast %cst_30 : f32 to vector<4x16xf32>
    %67 = arith.cmpf olt, %65, %66 : vector<4x16xf32>
    %cst_31 = arith.constant 0.000000e+00 : f32
    %68 = vector.broadcast %cst_31 : f32 to vector<4x16xf32>
    %69 = arith.cmpf ogt, %4, %68 : vector<4x16xf32>
    %70 = arith.andi %67, %69 : vector<4x16xi1>
    %cst_32 = arith.constant 1.000000e+00 : f32
    %cst_33 = arith.constant 0.000000e+00 : f32
    %71 = vector.broadcast %cst_32 : f32 to vector<4x16xf32>
    %72 = vector.broadcast %cst_33 : f32 to vector<4x16xf32>
    %73 = arith.select %70, %71, %72 : vector<4x16xi1>, vector<4x16xf32>
    %74 = math.tanh %46 : vector<4x16xf32>
    %75 = arith.mulf %74, %73 : vector<4x16xf32>
    %76 = vector.shape_cast %75 : vector<4x16xf32> to vector<4x16x1xf32>
    %77 = vector.broadcast %76 : vector<4x16x1xf32> to vector<4x16x32xf32>
    %78 = arith.mulf %42, %77 : vector<4x16x32xf32>
    %79 = vector.shape_cast %73 : vector<4x16xf32> to vector<4x16x1xf32>
    %cst_34 = arith.constant 0.000000e+00 : f32
    %80 = vector.broadcast %cst_34 : f32 to vector<4x16x1xf32>
    %81 = arith.cmpf ogt, %79, %80 : vector<4x16x1xf32>
    %cst_35 = arith.constant -1.000000e+30 : f32
    %82 = vector.shape_cast %81 : vector<4x16x1xi1> to vector<4x16x1xi1>
    %83 = vector.broadcast %82 : vector<4x16x1xi1> to vector<4x16x32xi1>
    %84 = vector.broadcast %cst_35 : f32 to vector<4x16x32xf32>
    %85 = arith.select %83, %78, %84 : vector<4x16x32xi1>, vector<4x16x32xf32>
    %cst_36 = arith.constant dense<0xFF800000> : vector<4x32xf32>
    %86 = vector.multi_reduction <maximumf>, %85, %cst_36 [1] : vector<4x16x32xf32> to vector<4x32xf32>
    %cst_37 = arith.constant dense<0.000000e+00> : vector<4x32xf32>
    %87 = vector.multi_reduction <add>, %78, %cst_37 [1] : vector<4x16x32xf32> to vector<4x32xf32>
    %cst_38 = arith.constant dense<0.000000e+00> : vector<4xf32>
    %88 = vector.multi_reduction <add>, %73, %cst_38 [1] : vector<4x16xf32> to vector<4xf32>
    %89 = vector.shape_cast %88 : vector<4xf32> to vector<4x1xf32>
    %90 = vector.broadcast %89 : vector<4x1xf32> to vector<4x32xf32>
    %91 = arith.divf %87, %90 : vector<4x32xf32>
    %92 = arith.addf %5, %86 : vector<4x32xf32>
    %93 = arith.addf %6, %91 : vector<4x32xf32>
    %c0_39 = arith.constant 0 : index
    %c0_40 = arith.constant 0 : index
    %c0_41 = arith.constant 0 : index
    %94 = vector.load %arg7[%c0_39, %c0_40, %c0_41] : memref<1x32x32xf32, #tpu.memory_space<vmem>>, vector<1x32x32xf32>
    %95 = vector.shape_cast %94 : vector<1x32x32xf32> to vector<32x32xf32>
    %c0_42 = arith.constant 0 : index
    %c0_43 = arith.constant 0 : index
    %c0_44 = arith.constant 0 : index
    %96 = vector.load %arg8[%c0_42, %c0_43, %c0_44] : memref<1x1x32xf32, #tpu.memory_space<vmem>>, vector<1x1x32xf32>
    %97 = vector.shape_cast %96 : vector<1x1x32xf32> to vector<1x32xf32>
    %c0_45 = arith.constant 0 : index
    %c0_46 = arith.constant 0 : index
    %c0_47 = arith.constant 0 : index
    %98 = vector.load %arg9[%c0_45, %c0_46, %c0_47] : memref<1x1x32xf32, #tpu.memory_space<vmem>>, vector<1x1x32xf32>
    %99 = vector.shape_cast %98 : vector<1x1x32xf32> to vector<1x32xf32>
    %100 = vector.shape_cast %73 : vector<4x16xf32> to vector<4x1x16xf32>
    %101 = vector.shape_cast %73 : vector<4x16xf32> to vector<4x16x1xf32>
    %102 = vector.broadcast %100 : vector<4x1x16xf32> to vector<4x16x16xf32>
    %103 = arith.mulf %0, %102 : vector<4x16x16xf32>
    %cst_48 = arith.constant dense<0.000000e+00> : vector<4x16xf32>
    %104 = vector.multi_reduction <add>, %103, %cst_48 [2] : vector<4x16x16xf32> to vector<4x16xf32>
    %105 = vector.shape_cast %104 : vector<4x16xf32> to vector<4x16x1xf32>
    %106 = arith.addf %105, %101 : vector<4x16x1xf32>
    %cst_49 = arith.constant 0.000000e+00 : f32
    %107 = vector.broadcast %cst_49 : f32 to vector<4x16x1xf32>
    %108 = arith.cmpf ogt, %106, %107 : vector<4x16x1xf32>
    %109 = math.rsqrt %106 : vector<4x16x1xf32>
    %cst_50 = arith.constant 0.000000e+00 : f32
    %110 = vector.broadcast %cst_50 : f32 to vector<4x16x1xf32>
    %111 = arith.select %108, %109, %110 : vector<4x16x1xi1>, vector<4x16x1xf32>
    %112 = vector.shape_cast %78 : vector<4x16x32xf32> to vector<64x32xf32>
    %cst_51 = arith.constant dense<0.000000e+00> : vector<64x32xf32>
    %113 = tpu.matmul %112, %95, %cst_51 {dimension_numbers = #tpu.dot_dimension_numbers<[1], [0], [0], [1], [0, 0, 1, 1], [], []>} : vector<64x32xf32>, vector<32x32xf32>, vector<64x32xf32> -> vector<64x32xf32>
    %114 = vector.shape_cast %113 : vector<64x32xf32> to vector<4x16x32xf32>
    %115 = vector.broadcast %111 : vector<4x16x1xf32> to vector<4x16x32xf32>
    %116 = arith.mulf %115, %114 : vector<4x16x32xf32>
    "tpu.trace_start"() <{level = 10 : i32, message = "gij,gjh->gih"}> : () -> ()
    %cst_52 = arith.constant dense<0.000000e+00> : vector<4x16x32xf32>
    %117 = tpu.matmul %103, %116, %cst_52 {dimension_numbers = #tpu.dot_dimension_numbers<[2], [1], [1], [2], [0, 0, 0, 1, 1, 2], [0], [0]>} : vector<4x16x16xf32>, vector<4x16x32xf32>, vector<4x16x32xf32> -> vector<4x16x32xf32>
    "tpu.trace_stop"() : () -> ()
    %118 = vector.broadcast %111 : vector<4x16x1xf32> to vector<4x16x32xf32>
    %119 = arith.mulf %118, %117 : vector<4x16x32xf32>
    %120 = arith.mulf %111, %111 : vector<4x16x1xf32>
    %121 = arith.mulf %120, %101 : vector<4x16x1xf32>
    %122 = vector.broadcast %121 : vector<4x16x1xf32> to vector<4x16x32xf32>
    %123 = arith.mulf %122, %114 : vector<4x16x32xf32>
    %124 = arith.addf %119, %123 : vector<4x16x32xf32>
    %125 = vector.shape_cast %97 : vector<1x32xf32> to vector<1x1x32xf32>
    %126 = vector.broadcast %125 : vector<1x1x32xf32> to vector<4x16x32xf32>
    %127 = arith.addf %124, %126 : vector<4x16x32xf32>
    %cst_53 = arith.constant 0.000000e+00 : f32
    %128 = vector.broadcast %cst_53 : f32 to vector<4x16x32xf32>
    %129 = arith.maximumf %127, %128 : vector<4x16x32xf32>
    %130 = vector.shape_cast %99 : vector<1x32xf32> to vector<1x1x32xf32>
    %131 = vector.broadcast %130 : vector<1x1x32xf32> to vector<4x16x32xf32>
    %132 = arith.mulf %129, %131 : vector<4x16x32xf32>
    %cst_54 = arith.constant dense<0.000000e+00> : vector<4x16xf32>
    %133 = vector.multi_reduction <add>, %132, %cst_54 [2] : vector<4x16x32xf32> to vector<4x16xf32>
    %cst_55 = arith.constant 0.000000e+00 : f32
    %134 = vector.broadcast %cst_55 : f32 to vector<4x16xf32>
    %135 = arith.cmpf ogt, %73, %134 : vector<4x16xf32>
    %cst_56 = arith.constant -1.000000e+30 : f32
    %136 = vector.broadcast %cst_56 : f32 to vector<4x16xf32>
    %137 = arith.select %135, %133, %136 : vector<4x16xi1>, vector<4x16xf32>
    %138 = vector.shape_cast %137 : vector<4x16xf32> to vector<4x16x1xf32>
    %139 = vector.shape_cast %137 : vector<4x16xf32> to vector<4x1x16xf32>
    %140 = vector.broadcast %139 : vector<4x1x16xf32> to vector<4x16x16xf32>
    %141 = vector.broadcast %138 : vector<4x16x1xf32> to vector<4x16x16xf32>
    %142 = arith.cmpf ogt, %140, %141 : vector<4x16x16xf32>
    %143 = vector.broadcast %139 : vector<4x1x16xf32> to vector<4x16x16xf32>
    %144 = vector.broadcast %138 : vector<4x16x1xf32> to vector<4x16x16xf32>
    %145 = arith.cmpf oeq, %143, %144 : vector<4x16x16xf32>
    %cst_57 = arith.constant 0.000000e+00 : f32
    %146 = vector.shape_cast %2 : vector<1x16x16xf32> to vector<1x16x16xf32>
    %147 = vector.broadcast %146 : vector<1x16x16xf32> to vector<4x16x16xf32>
    %148 = vector.broadcast %cst_57 : f32 to vector<4x16x16xf32>
    %149 = arith.select %145, %147, %148 : vector<4x16x16xi1>, vector<4x16x16xf32>
    %cst_58 = arith.constant 1.000000e+00 : f32
    %150 = vector.broadcast %cst_58 : f32 to vector<4x16x16xf32>
    %151 = arith.select %142, %150, %149 : vector<4x16x16xi1>, vector<4x16x16xf32>
    %cst_59 = arith.constant dense<0.000000e+00> : vector<4x16xf32>
    %152 = vector.multi_reduction <add>, %151, %cst_59 [2] : vector<4x16x16xf32> to vector<4x16xf32>
    %cst_60 = arith.constant 4.000000e+00 : f32
    %153 = vector.broadcast %cst_60 : f32 to vector<4x16xf32>
    %154 = arith.cmpf olt, %152, %153 : vector<4x16xf32>
    %cst_61 = arith.constant 0.000000e+00 : f32
    %155 = vector.broadcast %cst_61 : f32 to vector<4x16xf32>
    %156 = arith.cmpf ogt, %73, %155 : vector<4x16xf32>
    %157 = arith.andi %154, %156 : vector<4x16xi1>
    %cst_62 = arith.constant 1.000000e+00 : f32
    %cst_63 = arith.constant 0.000000e+00 : f32
    %158 = vector.broadcast %cst_62 : f32 to vector<4x16xf32>
    %159 = vector.broadcast %cst_63 : f32 to vector<4x16xf32>
    %160 = arith.select %157, %158, %159 : vector<4x16xi1>, vector<4x16xf32>
    %161 = math.tanh %133 : vector<4x16xf32>
    %162 = arith.mulf %161, %160 : vector<4x16xf32>
    %163 = vector.shape_cast %162 : vector<4x16xf32> to vector<4x16x1xf32>
    %164 = vector.broadcast %163 : vector<4x16x1xf32> to vector<4x16x32xf32>
    %165 = arith.mulf %129, %164 : vector<4x16x32xf32>
    %166 = vector.shape_cast %160 : vector<4x16xf32> to vector<4x16x1xf32>
    %cst_64 = arith.constant 0.000000e+00 : f32
    %167 = vector.broadcast %cst_64 : f32 to vector<4x16x1xf32>
    %168 = arith.cmpf ogt, %166, %167 : vector<4x16x1xf32>
    %cst_65 = arith.constant -1.000000e+30 : f32
    %169 = vector.shape_cast %168 : vector<4x16x1xi1> to vector<4x16x1xi1>
    %170 = vector.broadcast %169 : vector<4x16x1xi1> to vector<4x16x32xi1>
    %171 = vector.broadcast %cst_65 : f32 to vector<4x16x32xf32>
    %172 = arith.select %170, %165, %171 : vector<4x16x32xi1>, vector<4x16x32xf32>
    %cst_66 = arith.constant dense<0xFF800000> : vector<4x32xf32>
    %173 = vector.multi_reduction <maximumf>, %172, %cst_66 [1] : vector<4x16x32xf32> to vector<4x32xf32>
    %cst_67 = arith.constant dense<0.000000e+00> : vector<4x32xf32>
    %174 = vector.multi_reduction <add>, %165, %cst_67 [1] : vector<4x16x32xf32> to vector<4x32xf32>
    %cst_68 = arith.constant dense<0.000000e+00> : vector<4xf32>
    %175 = vector.multi_reduction <add>, %160, %cst_68 [1] : vector<4x16xf32> to vector<4xf32>
    %176 = vector.shape_cast %175 : vector<4xf32> to vector<4x1xf32>
    %177 = vector.broadcast %176 : vector<4x1xf32> to vector<4x32xf32>
    %178 = arith.divf %174, %177 : vector<4x32xf32>
    %179 = arith.addf %92, %173 : vector<4x32xf32>
    %180 = arith.addf %93, %178 : vector<4x32xf32>
    %c0_69 = arith.constant 0 : index
    %c0_70 = arith.constant 0 : index
    %c0_71 = arith.constant 0 : index
    %181 = vector.load %arg10[%c0_69, %c0_70, %c0_71] : memref<1x64x32xf32, #tpu.memory_space<vmem>>, vector<1x64x32xf32>
    %182 = vector.shape_cast %181 : vector<1x64x32xf32> to vector<64x32xf32>
    %183 = vector.extract_strided_slice %182 {offsets = [0, 0], sizes = [32, 32], strides = [1, 1]} : vector<64x32xf32> to vector<32x32xf32>
    %cst_72 = arith.constant dense<0.000000e+00> : vector<4x32xf32>
    %184 = tpu.matmul %179, %183, %cst_72 {dimension_numbers = #tpu.dot_dimension_numbers<[1], [0], [0], [1], [0, 0, 1, 1], [], []>} : vector<4x32xf32>, vector<32x32xf32>, vector<4x32xf32> -> vector<4x32xf32>
    %185 = vector.extract_strided_slice %182 {offsets = [32, 0], sizes = [32, 32], strides = [1, 1]} : vector<64x32xf32> to vector<32x32xf32>
    %cst_73 = arith.constant dense<0.000000e+00> : vector<4x32xf32>
    %186 = tpu.matmul %180, %185, %cst_73 {dimension_numbers = #tpu.dot_dimension_numbers<[1], [0], [0], [1], [0, 0, 1, 1], [], []>} : vector<4x32xf32>, vector<32x32xf32>, vector<4x32xf32> -> vector<4x32xf32>
    %187 = arith.addf %184, %186 : vector<4x32xf32>
    %c0_74 = arith.constant 0 : index
    %c0_75 = arith.constant 0 : index
    %c0_76 = arith.constant 0 : index
    %188 = vector.load %arg11[%c0_74, %c0_75, %c0_76] : memref<1x1x32xf32, #tpu.memory_space<vmem>>, vector<1x1x32xf32>
    %189 = vector.shape_cast %188 : vector<1x1x32xf32> to vector<1x32xf32>
    %190 = vector.broadcast %189 : vector<1x32xf32> to vector<4x32xf32>
    %191 = arith.addf %187, %190 : vector<4x32xf32>
    %cst_77 = arith.constant 0.000000e+00 : f32
    %192 = vector.broadcast %cst_77 : f32 to vector<4x32xf32>
    %193 = arith.maximumf %191, %192 : vector<4x32xf32>
    %c0_78 = arith.constant 0 : index
    %c0_79 = arith.constant 0 : index
    %c0_80 = arith.constant 0 : index
    %194 = vector.load %arg12[%c0_78, %c0_79, %c0_80] : memref<1x32x16xf32, #tpu.memory_space<vmem>>, vector<1x32x16xf32>
    %195 = vector.shape_cast %194 : vector<1x32x16xf32> to vector<32x16xf32>
    %cst_81 = arith.constant dense<0.000000e+00> : vector<4x16xf32>
    %196 = tpu.matmul %193, %195, %cst_81 {dimension_numbers = #tpu.dot_dimension_numbers<[1], [0], [0], [1], [0, 0, 1, 1], [], []>} : vector<4x32xf32>, vector<32x16xf32>, vector<4x16xf32> -> vector<4x16xf32>
    %c0_82 = arith.constant 0 : index
    %c0_83 = arith.constant 0 : index
    %c0_84 = arith.constant 0 : index
    %197 = vector.load %arg13[%c0_82, %c0_83, %c0_84] : memref<1x1x16xf32, #tpu.memory_space<vmem>>, vector<1x1x16xf32>
    %198 = vector.shape_cast %197 : vector<1x1x16xf32> to vector<1x16xf32>
    %199 = vector.broadcast %198 : vector<1x16xf32> to vector<4x16xf32>
    %200 = arith.addf %196, %199 : vector<4x16xf32>
    %cst_85 = arith.constant 0.000000e+00 : f32
    %201 = vector.broadcast %cst_85 : f32 to vector<4x16xf32>
    %202 = arith.maximumf %200, %201 : vector<4x16xf32>
    %c0_86 = arith.constant 0 : index
    %c0_87 = arith.constant 0 : index
    %c0_88 = arith.constant 0 : index
    %203 = vector.load %arg14[%c0_86, %c0_87, %c0_88] : memref<1x16x2xf32, #tpu.memory_space<vmem>>, vector<1x16x2xf32>
    %204 = vector.shape_cast %203 : vector<1x16x2xf32> to vector<16x2xf32>
    %cst_89 = arith.constant dense<0.000000e+00> : vector<4x2xf32>
    %205 = tpu.matmul %202, %204, %cst_89 {dimension_numbers = #tpu.dot_dimension_numbers<[1], [0], [0], [1], [0, 0, 1, 1], [], []>} : vector<4x16xf32>, vector<16x2xf32>, vector<4x2xf32> -> vector<4x2xf32>
    %c0_90 = arith.constant 0 : index
    %c0_91 = arith.constant 0 : index
    %c0_92 = arith.constant 0 : index
    %206 = vector.load %arg15[%c0_90, %c0_91, %c0_92] : memref<1x1x2xf32, #tpu.memory_space<vmem>>, vector<1x1x2xf32>
    %207 = vector.shape_cast %206 : vector<1x1x2xf32> to vector<1x2xf32>
    %208 = vector.broadcast %207 : vector<1x2xf32> to vector<4x2xf32>
    %209 = arith.addf %205, %208 : vector<4x2xf32>
    %cst_93 = arith.constant dense<0xFF800000> : vector<4xf32>
    %210 = vector.multi_reduction <maximumf>, %209, %cst_93 [1] : vector<4x2xf32> to vector<4xf32>
    %211 = vector.shape_cast %210 : vector<4xf32> to vector<4x1xf32>
    %212 = vector.broadcast %211 : vector<4x1xf32> to vector<4x2xf32>
    %213 = arith.subf %209, %212 : vector<4x2xf32>
    %214 = math.exp %213 : vector<4x2xf32>
    %cst_94 = arith.constant dense<0.000000e+00> : vector<4xf32>
    %215 = vector.multi_reduction <add>, %214, %cst_94 [1] : vector<4x2xf32> to vector<4xf32>
    %216 = vector.shape_cast %215 : vector<4xf32> to vector<4x1xf32>
    %217 = vector.broadcast %216 : vector<4x1xf32> to vector<4x2xf32>
    %218 = arith.divf %214, %217 : vector<4x2xf32>
    %c0_95 = arith.constant 0 : index
    %c0_96 = arith.constant 0 : index
    %c0_97 = arith.constant 0 : index
    %219 = vector.load %arg16[%c0_95, %c0_96, %c0_97] : memref<1x4x2xf32, #tpu.memory_space<vmem>>, vector<1x4x2xf32>
    %220 = vector.shape_cast %219 : vector<1x4x2xf32> to vector<4x2xf32>
    %221 = vector.shape_cast %218 : vector<4x2xf32> to vector<1x4x2xf32>
    tpu.vector_store %arg16[%c0_95, %c0_96, %c0_97], %221 {strides = array<i32>} : memref<1x4x2xf32, #tpu.memory_space<vmem>>, vector<1x4x2xf32>,
    return
  }
  func.func @transform_0(%arg0: i32) -> (i32, i32, i32) {
    %c0_i32 = arith.constant 0 : i32
    %c0_i32_0 = arith.constant 0 : i32
    %c0_i32_1 = arith.constant 0 : i32
    %c0_i32_2 = arith.constant 0 : i32
    return %c0_i32, %c0_i32_0, %c0_i32_1 : i32, i32, i32
  }
  func.func @transform_1(%arg0: i32) -> (i32, i32, i32) {
    %c0_i32 = arith.constant 0 : i32
    %c0_i32_0 = arith.constant 0 : i32
    %c0_i32_1 = arith.constant 0 : i32
    %c0_i32_2 = arith.constant 0 : i32
    return %c0_i32, %c0_i32_0, %c0_i32_1 : i32, i32, i32
  }
  func.func @transform_2(%arg0: i32) -> (i32, i32) {
    %c0_i32 = arith.constant 0 : i32
    %c0_i32_0 = arith.constant 0 : i32
    %c0_i32_1 = arith.constant 0 : i32
    return %c0_i32, %c0_i32_0 : i32, i32
  }
  func.func @transform_3(%arg0: i32) -> (i32, i32, i32) {
    %c0_i32 = arith.constant 0 : i32
    %c0_i32_0 = arith.constant 0 : i32
    %c0_i32_1 = arith.constant 0 : i32
    return %arg0, %c0_i32, %c0_i32_0 : i32, i32, i32
  }
  func.func @transform_4(%arg0: i32) -> (i32, i32, i32) {
    %c0_i32 = arith.constant 0 : i32
    %c0_i32_0 = arith.constant 0 : i32
    %c0_i32_1 = arith.constant 0 : i32
    return %arg0, %c0_i32, %c0_i32_0 : i32, i32, i32
  }
  func.func @transform_5(%arg0: i32) -> (i32, i32, i32) {
    %c0_i32 = arith.constant 0 : i32
    %c0_i32_0 = arith.constant 0 : i32
    %c0_i32_1 = arith.constant 0 : i32
    return %arg0, %c0_i32, %c0_i32_0 : i32, i32, i32
  }
  func.func @transform_6(%arg0: i32) -> (i32, i32, i32) {
    %c0_i32 = arith.constant 0 : i32
    %c0_i32_0 = arith.constant 0 : i32
    %c0_i32_1 = arith.constant 0 : i32
    return %arg0, %c0_i32, %c0_i32_0 : i32, i32, i32
  }
  func.func @transform_7(%arg0: i32) -> (i32, i32, i32) {
    %c0_i32 = arith.constant 0 : i32
    %c0_i32_0 = arith.constant 0 : i32
    %c0_i32_1 = arith.constant 0 : i32
    return %arg0, %c0_i32, %c0_i32_0 : i32, i32, i32
  }
  func.func @transform_8(%arg0: i32) -> (i32, i32, i32) {
    %c0_i32 = arith.constant 0 : i32
    %c0_i32_0 = arith.constant 0 : i32
    %c0_i32_1 = arith.constant 0 : i32
    return %arg0, %c0_i32, %c0_i32_0 : i32, i32, i32
  }
  func.func @transform_9(%arg0: i32) -> (i32, i32, i32) {
    %c0_i32 = arith.constant 0 : i32
    %c0_i32_0 = arith.constant 0 : i32
    %c0_i32_1 = arith.constant 0 : i32
    return %arg0, %c0_i32, %c0_i32_0 : i32, i32, i32
  }
  func.func @transform_10(%arg0: i32) -> (i32, i32, i32) {
    %c0_i32 = arith.constant 0 : i32
    %c0_i32_0 = arith.constant 0 : i32
    %c0_i32_1 = arith.constant 0 : i32
    return %arg0, %c0_i32, %c0_i32_0 : i32, i32, i32
  }
  func.func @transform_11(%arg0: i32) -> (i32, i32, i32) {
    %c0_i32 = arith.constant 0 : i32
    %c0_i32_0 = arith.constant 0 : i32
    %c0_i32_1 = arith.constant 0 : i32
    return %arg0, %c0_i32, %c0_i32_0 : i32, i32, i32
  }
  func.func @transform_12(%arg0: i32) -> (i32, i32, i32) {
    %c0_i32 = arith.constant 0 : i32
    %c0_i32_0 = arith.constant 0 : i32
    %c0_i32_1 = arith.constant 0 : i32
    return %arg0, %c0_i32, %c0_i32_0 : i32, i32, i32
  }
  func.func @transform_13(%arg0: i32) -> (i32, i32, i32) {
    %c0_i32 = arith.constant 0 : i32
    %c0_i32_0 = arith.constant 0 : i32
    %c0_i32_1 = arith.constant 0 : i32
    return %arg0, %c0_i32, %c0_i32_0 : i32, i32, i32
  }
  func.func @transform_14(%arg0: i32) -> (i32, i32, i32) {
    %c0_i32 = arith.constant 0 : i32
    %c0_i32_0 = arith.constant 0 : i32
    %c0_i32_1 = arith.constant 0 : i32
    return %arg0, %c0_i32, %c0_i32_0 : i32, i32, i32
  }
  func.func @transform_15(%arg0: i32) -> (i32, i32, i32) {
    %c0_i32 = arith.constant 0 : i32
    %c0_i32_0 = arith.constant 0 : i32
    %c0_i32_1 = arith.constant 0 : i32
    return %arg0, %c0_i32, %c0_i32_0 : i32, i32, i32
  }
}

</mosaic_0001>

<llo_original>
// kernel: cv_ensemble_forward.1
$region0: #{cv_ensemble_forward.1}
  #allocation0 [shape = 'u32[]', space=smem, size = 0x4, offset = 0x4, fixed_abs, tag = 'smem constant byte address 0x4 - core index']
  #allocation1 [shape = 'u32[144,128]{1,0:T(1,128)}', space=vmem, size = 0x12000, scoped, tag = 'internal scratch']
  %s0 = inlined_call_operand.vmem [shape: f32[4,16,16], index: 0, kind: input, shape index: {}]
  %s1 = inlined_call_operand.vmem [shape: f32[4,16,16], index: 1, kind: input, shape index: {}]
  %s2 = inlined_call_operand.vmem [shape: f32[16,16], index: 2, kind: input, shape index: {}]
  %s3 = inlined_call_operand.vmem [shape: f32[3,16,32], index: 3, kind: input, shape index: {}]
  %s4 = inlined_call_operand.vmem [shape: f32[3,1,32], index: 4, kind: input, shape index: {}]
  %s5 = inlined_call_operand.vmem [shape: f32[3,1,32], index: 5, kind: input, shape index: {}]
  %s6 = inlined_call_operand.vmem [shape: f32[3,32,32], index: 6, kind: input, shape index: {}]
  %s7 = inlined_call_operand.vmem [shape: f32[3,1,32], index: 7, kind: input, shape index: {}]
  %s8 = inlined_call_operand.vmem [shape: f32[3,1,32], index: 8, kind: input, shape index: {}]
  %s9 = inlined_call_operand.vmem [shape: f32[3,64,32], index: 9, kind: input, shape index: {}]
  %s10 = inlined_call_operand.vmem [shape: f32[3,1,32], index: 10, kind: input, shape index: {}]
  %s11 = inlined_call_operand.vmem [shape: f32[3,32,16], index: 11, kind: input, shape index: {}]
  %s12 = inlined_call_operand.vmem [shape: f32[3,1,16], index: 12, kind: input, shape index: {}]
  %s13 = inlined_call_operand.vmem [shape: f32[3,16,2], index: 13, kind: input, shape index: {}]
  %s14 = inlined_call_operand.vmem [shape: f32[3,1,2], index: 14, kind: input, shape index: {}]
  %s15 = inlined_call_operand.vmem [shape: f32[3,4,2], index: 15, kind: output, shape index: {}]
  %s16 = sld [smem:[#allocation0]]
  $region93: #{cv_ensemble_forward.1} parent=0
    _
  %s18 = ssub.s32 1, %s16
  %s19 = scalar_select 0, %s18, %s16
  loop: start=0, step=1, limit=5
  $region2: #{cv_ensemble_forward.1} parent=0 // loop_pre_header
    _
  $region3: #{cv_ensemble_forward.1} parent=0 // loop_header
    %s21 = sphi 0, %s25
    %p22 = scmp.ge.s32.totalorder %s21, 5
    %s29 = sphi 0, %s29
    %s31 = sphi 0, %s29
    %s32 = sphi 0, %s31
    %s46 = sphi 0, %s32
    %s50 = sphi 0, %s50
    %s52 = sphi 0, %s50
    %s53 = sphi 0, %s52
    %s67 = sphi 0, %s53
    %s71 = sphi 0, %s71
    %s73 = sphi 0, %s71
    %s74 = sphi 0, %s73
    %s88 = sphi 0, %s74
    %s94 = sphi 0, %s96
    %s97 = sphi 0, %s94
    %s98 = sphi 0, %s97
    %s114 = sphi 0, %s98
    %s120 = sphi 0, %s122
    %s123 = sphi 0, %s120
    %s124 = sphi 0, %s123
    %s140 = sphi 0, %s124
    %s146 = sphi 0, %s148
    %s149 = sphi 0, %s146
    %s150 = sphi 0, %s149
    %s166 = sphi 0, %s150
    %s172 = sphi 0, %s174
    %s175 = sphi 0, %s172
    %s176 = sphi 0, %s175
    %s192 = sphi 0, %s176
    %s198 = sphi 0, %s200
    %s201 = sphi 0, %s198
    %s202 = sphi 0, %s201
    %s218 = sphi 0, %s202
    %s224 = sphi 0, %s226
    %s227 = sphi 0, %s224
    %s228 = sphi 0, %s227
    %s244 = sphi 0, %s228
    %s250 = sphi 0, %s252
    %s253 = sphi 0, %s250
    %s254 = sphi 0, %s253
    %s270 = sphi 0, %s254
    %s276 = sphi 0, %s278
    %s279 = sphi 0, %s276
    %s280 = sphi 0, %s279
    %s296 = sphi 0, %s280
    %s302 = sphi 0, %s304
    %s305 = sphi 0, %s302
    %s306 = sphi 0, %s305
    %s322 = sphi 0, %s306
    %s328 = sphi 0, %s330
    %s331 = sphi 0, %s328
    %s332 = sphi 0, %s331
    %s348 = sphi 0, %s332
    %s354 = sphi 0, %s356
    %s357 = sphi 0, %s354
    %s358 = sphi 0, %s357
    %s374 = sphi 0, %s358
    %s380 = sphi 0, %s382
    %s383 = sphi 0, %s380
    %s384 = sphi 0, %s383
    %s400 = sphi 0, %s384
    %s406 = sphi 0, %s408
    %s409 = sphi 0, %s406
    %s410 = sphi 0, %s409
    %s426 = sphi 0, %s410
  $region4: #{cv_ensemble_forward.1} parent=0 // loop_header_branch
    %24 = sbr.rel (%p22) target = $region8
  $region5: #{cv_ensemble_forward.1} parent=0 // loop_body
    %s26 = ssub.s32 %s21, 1
    %s27 = ssub.s32 %s21, 2
    %s28 = sadd.s32 %s21, 1
    %s30 = sadd.s32 %s29, 1
    %p33 = scmp.eq.s32.totalorder %s21, 2
    %p34 = scmp.ne.s32.totalorder %s29, %s31
    %p35 = scmp.eq.s32.totalorder %s21, 0
    %p36 = por %p34, %p35
    %p37 = scmp.ne.s32.totalorder %s29, %s31
    %p38 = scmp.eq.s32.totalorder %s26, 2
    %p39 = por %p37, %p38
    %p40 = scmp.ne.s32.totalorder %s31, %s32
    %p41 = scmp.eq.s32.totalorder %s26, 0
    %p42 = por %p40, %p41
    %p43 = scmp.ne.s32.totalorder %s31, %s32
    %p44 = scmp.eq.s32.totalorder %s27, 2
    %p45 = por %p43, %p44
    %p47 = scmp.ne.s32.totalorder %s32, %s46
    %p48 = scmp.eq.s32.totalorder %s27, 0
    %p49 = por %p47, %p48
    %s51 = sadd.s32 %s50, 1
    %p54 = scmp.eq.s32.totalorder %s21, 2
    %p55 = scmp.ne.s32.totalorder %s50, %s52
    %p56 = scmp.eq.s32.totalorder %s21, 0
    %p57 = por %p55, %p56
    %p58 = scmp.ne.s32.totalorder %s50, %s52
    %p59 = scmp.eq.s32.totalorder %s26, 2
    %p60 = por %p58, %p59
    %p61 = scmp.ne.s32.totalorder %s52, %s53
    %p62 = scmp.eq.s32.totalorder %s26, 0
    %p63 = por %p61, %p62
    %p64 = scmp.ne.s32.totalorder %s52, %s53
    %p65 = scmp.eq.s32.totalorder %s27, 2
    %p66 = por %p64, %p65
    %p68 = scmp.ne.s32.totalorder %s53, %s67
    %p69 = scmp.eq.s32.totalorder %s27, 0
    %p70 = por %p68, %p69
    %s72 = sadd.s32 %s71, 1
    %p75 = scmp.eq.s32.totalorder %s21, 2
    %p76 = scmp.ne.s32.totalorder %s71, %s73
    %p77 = scmp.eq.s32.totalorder %s21, 0
    %p78 = por %p76, %p77
    %p79 = scmp.ne.s32.totalorder %s71, %s73
    %p80 = scmp.eq.s32.totalorder %s26, 2
    %p81 = por %p79, %p80
    %p82 = scmp.ne.s32.totalorder %s73, %s74
    %p83 = scmp.eq.s32.totalorder %s26, 0
    %p84 = por %p82, %p83
    %p85 = scmp.ne.s32.totalorder %s73, %s74
    %p86 = scmp.eq.s32.totalorder %s27, 2
    %p87 = por %p85, %p86
    %p89 = scmp.ne.s32.totalorder %s74, %s88
    %p90 = scmp.eq.s32.totalorder %s27, 0
    %p91 = por %p89, %p90
    %s92 = ssub.s32 %s21, %s28
    %p93 = scmp.eq.s32.totalorder %s92, 0
    %s95 = sadd.s32 %s94, 1
    %s96 = scalar_select %p93, %s94, %s95
    %p99 = pneg %p93
    %p100 = scmp.eq.s32.totalorder %s21, 2
    %p101 = por %p99, %p100
    %p102 = scmp.ne.s32.totalorder %s94, %s97
    %p103 = scmp.eq.s32.totalorder %s21, 0
    %p104 = por %p102, %p103
    %p105 = scmp.ne.s32.totalorder %s94, %s97
    %p106 = scmp.eq.s32.totalorder %s26, 2
    %p107 = por %p105, %p106
    %p108 = scmp.ne.s32.totalorder %s97, %s98
    %p109 = scmp.eq.s32.totalorder %s26, 0
    %p110 = por %p108, %p109
    %p111 = scmp.ne.s32.totalorder %s97, %s98
    %p112 = scmp.eq.s32.totalorder %s27, 2
    %p113 = por %p111, %p112
    %p115 = scmp.ne.s32.totalorder %s98, %s114
    %p116 = scmp.eq.s32.totalorder %s27, 0
    %p117 = por %p115, %p116
    %s118 = ssub.s32 %s21, %s28
    %p119 = scmp.eq.s32.totalorder %s118, 0
    %s121 = sadd.s32 %s120, 1
    %s122 = scalar_select %p119, %s120, %s121
    %p125 = pneg %p119
    %p126 = scmp.eq.s32.totalorder %s21, 2
    %p127 = por %p125, %p126
    %p128 = scmp.ne.s32.totalorder %s120, %s123
    %p129 = scmp.eq.s32.totalorder %s21, 0
    %p130 = por %p128, %p129
    %p131 = scmp.ne.s32.totalorder %s120, %s123
    %p132 = scmp.eq.s32.totalorder %s26, 2
    %p133 = por %p131, %p132
    %p134 = scmp.ne.s32.totalorder %s123, %s124
    %p135 = scmp.eq.s32.totalorder %s26, 0
    %p136 = por %p134, %p135
    %p137 = scmp.ne.s32.totalorder %s123, %s124
    %p138 = scmp.eq.s32.totalorder %s27, 2
    %p139 = por %p137, %p138
    %p141 = scmp.ne.s32.totalorder %s124, %s140
    %p142 = scmp.eq.s32.totalorder %s27, 0
    %p143 = por %p141, %p142
    %s144 = ssub.s32 %s21, %s28
    %p145 = scmp.eq.s32.totalorder %s144, 0
    %s147 = sadd.s32 %s146, 1
    %s148 = scalar_select %p145, %s146, %s147
    %p151 = pneg %p145
    %p152 = scmp.eq.s32.totalorder %s21, 2
    %p153 = por %p151, %p152
    %p154 = scmp.ne.s32.totalorder %s146, %s149
    %p155 = scmp.eq.s32.totalorder %s21, 0
    %p156 = por %p154, %p155
    %p157 = scmp.ne.s32.totalorder %s146, %s149
    %p158 = scmp.eq.s32.totalorder %s26, 2
    %p159 = por %p157, %p158
    %p160 = scmp.ne.s32.totalorder %s149, %s150
    %p161 = scmp.eq.s32.totalorder %s26, 0
    %p162 = por %p160, %p161
    %p163 = scmp.ne.s32.totalorder %s149, %s150
    %p164 = scmp.eq.s32.totalorder %s27, 2
    %p165 = por %p163, %p164
    %p167 = scmp.ne.s32.totalorder %s150, %s166
    %p168 = scmp.eq.s32.totalorder %s27, 0
    %p169 = por %p167, %p168
    %s170 = ssub.s32 %s21, %s28
    %p171 = scmp.eq.s32.totalorder %s170, 0
    %s173 = sadd.s32 %s172, 1
    %s174 = scalar_select %p171, %s172, %s173
    %p177 = pneg %p171
    %p178 = scmp.eq.s32.totalorder %s21, 2
    %p179 = por %p177, %p178
    %p180 = scmp.ne.s32.totalorder %s172, %s175
    %p181 = scmp.eq.s32.totalorder %s21, 0
    %p182 = por %p180, %p181
    %p183 = scmp.ne.s32.totalorder %s172, %s175
    %p184 = scmp.eq.s32.totalorder %s26, 2
    %p185 = por %p183, %p184
    %p186 = scmp.ne.s32.totalorder %s175, %s176
    %p187 = scmp.eq.s32.totalorder %s26, 0
    %p188 = por %p186, %p187
    %p189 = scmp.ne.s32.totalorder %s175, %s176
    %p190 = scmp.eq.s32.totalorder %s27, 2
    %p191 = por %p189, %p190
    %p193 = scmp.ne.s32.totalorder %s176, %s192
    %p194 = scmp.eq.s32.totalorder %s27, 0
    %p195 = por %p193, %p194
    %s196 = ssub.s32 %s21, %s28
    %p197 = scmp.eq.s32.totalorder %s196, 0
    %s199 = sadd.s32 %s198, 1
    %s200 = scalar_select %p197, %s198, %s199
    %p203 = pneg %p197
    %p204 = scmp.eq.s32.totalorder %s21, 2
    %p205 = por %p203, %p204
    %p206 = scmp.ne.s32.totalorder %s198, %s201
    %p207 = scmp.eq.s32.totalorder %s21, 0
    %p208 = por %p206, %p207
    %p209 = scmp.ne.s32.totalorder %s198, %s201
    %p210 = scmp.eq.s32.totalorder %s26, 2
    %p211 = por %p209, %p210
    %p212 = scmp.ne.s32.totalorder %s201, %s202
    %p213 = scmp.eq.s32.totalorder %s26, 0
    %p214 = por %p212, %p213
    %p215 = scmp.ne.s32.totalorder %s201, %s202
    %p216 = scmp.eq.s32.totalorder %s27, 2
    %p217 = por %p215, %p216
    %p219 = scmp.ne.s32.totalorder %s202, %s218
    %p220 = scmp.eq.s32.totalorder %s27, 0
    %p221 = por %p219, %p220
    %s222 = ssub.s32 %s21, %s28
    %p223 = scmp.eq.s32.totalorder %s222, 0
    %s225 = sadd.s32 %s224, 1
    %s226 = scalar_select %p223, %s224, %s225
    %p229 = pneg %p223
    %p230 = scmp.eq.s32.totalorder %s21, 2
    %p231 = por %p229, %p230
    %p232 = scmp.ne.s32.totalorder %s224, %s227
    %p233 = scmp.eq.s32.totalorder %s21, 0
    %p234 = por %p232, %p233
    %p235 = scmp.ne.s32.totalorder %s224, %s227
    %p236 = scmp.eq.s32.totalorder %s26, 2
    %p237 = por %p235, %p236
    %p238 = scmp.ne.s32.totalorder %s227, %s228
    %p239 = scmp.eq.s32.totalorder %s26, 0
    %p240 = por %p238, %p239
    %p241 = scmp.ne.s32.totalorder %s227, %s228
    %p242 = scmp.eq.s32.totalorder %s27, 2
    %p243 = por %p241, %p242
    %p245 = scmp.ne.s32.totalorder %s228, %s244
    %p246 = scmp.eq.s32.totalorder %s27, 0
    %p247 = por %p245, %p246
    %s248 = ssub.s32 %s21, %s28
    %p249 = scmp.eq.s32.totalorder %s248, 0
    %s251 = sadd.s32 %s250, 1
    %s252 = scalar_select %p249, %s250, %s251
    %p255 = pneg %p249
    %p256 = scmp.eq.s32.totalorder %s21, 2
    %p257 = por %p255, %p256
    %p258 = scmp.ne.s32.totalorder %s250, %s253
    %p259 = scmp.eq.s32.totalorder %s21, 0
    %p260 = por %p258, %p259
    %p261 = scmp.ne.s32.totalorder %s250, %s253
    %p262 = scmp.eq.s32.totalorder %s26, 2
    %p263 = por %p261, %p262
    %p264 = scmp.ne.s32.totalorder %s253, %s254
    %p265 = scmp.eq.s32.totalorder %s26, 0
    %p266 = por %p264, %p265
    %p267 = scmp.ne.s32.totalorder %s253, %s254
    %p268 = scmp.eq.s32.totalorder %s27, 2
    %p269 = por %p267, %p268
    %p271 = scmp.ne.s32.totalorder %s254, %s270
    %p272 = scmp.eq.s32.totalorder %s27, 0
    %p273 = por %p271, %p272
    %s274 = ssub.s32 %s21, %s28
    %p275 = scmp.eq.s32.totalorder %s274, 0
    %s277 = sadd.s32 %s276, 1
    %s278 = scalar_select %p275, %s276, %s277
    %p281 = pneg %p275
    %p282 = scmp.eq.s32.totalorder %s21, 2
    %p283 = por %p281, %p282
    %p284 = scmp.ne.s32.totalorder %s276, %s279
    %p285 = scmp.eq.s32.totalorder %s21, 0
    %p286 = por %p284, %p285
    %p287 = scmp.ne.s32.totalorder %s276, %s279
    %p288 = scmp.eq.s32.totalorder %s26, 2
    %p289 = por %p287, %p288
    %p290 = scmp.ne.s32.totalorder %s279, %s280
    %p291 = scmp.eq.s32.totalorder %s26, 0
    %p292 = por %p290, %p291
    %p293 = scmp.ne.s32.totalorder %s279, %s280
    %p294 = scmp.eq.s32.totalorder %s27, 2
    %p295 = por %p293, %p294
    %p297 = scmp.ne.s32.totalorder %s280, %s296
    %p298 = scmp.eq.s32.totalorder %s27, 0
    %p299 = por %p297, %p298
    %s300 = ssub.s32 %s21, %s28
    %p301 = scmp.eq.s32.totalorder %s300, 0
    %s303 = sadd.s32 %s302, 1
    %s304 = scalar_select %p301, %s302, %s303
    %p307 = pneg %p301
    %p308 = scmp.eq.s32.totalorder %s21, 2
    %p309 = por %p307, %p308
    %p310 = scmp.ne.s32.totalorder %s302, %s305
    %p311 = scmp.eq.s32.totalorder %s21, 0
    %p312 = por %p310, %p311
    %p313 = scmp.ne.s32.totalorder %s302, %s305
    %p314 = scmp.eq.s32.totalorder %s26, 2
    %p315 = por %p313, %p314
    %p316 = scmp.ne.s32.totalorder %s305, %s306
    %p317 = scmp.eq.s32.totalorder %s26, 0
    %p318 = por %p316, %p317
    %p319 = scmp.ne.s32.totalorder %s305, %s306
    %p320 = scmp.eq.s32.totalorder %s27, 2
    %p321 = por %p319, %p320
    %p323 = scmp.ne.s32.totalorder %s306, %s322
    %p324 = scmp.eq.s32.totalorder %s27, 0
    %p325 = por %p323, %p324
    %s326 = ssub.s32 %s21, %s28
    %p327 = scmp.eq.s32.totalorder %s326, 0
    %s329 = sadd.s32 %s328, 1
    %s330 = scalar_select %p327, %s328, %s329
    %p333 = pneg %p327
    %p334 = scmp.eq.s32.totalorder %s21, 2
    %p335 = por %p333, %p334
    %p336 = scmp.ne.s32.totalorder %s328, %s331
    %p337 = scmp.eq.s32.totalorder %s21, 0
    %p338 = por %p336, %p337
    %p339 = scmp.ne.s32.totalorder %s328, %s331
    %p340 = scmp.eq.s32.totalorder %s26, 2
    %p341 = por %p339, %p340
    %p342 = scmp.ne.s32.totalorder %s331, %s332
    %p343 = scmp.eq.s32.totalorder %s26, 0
    %p344 = por %p342, %p343
    %p345 = scmp.ne.s32.totalorder %s331, %s332
    %p346 = scmp.eq.s32.totalorder %s27, 2
    %p347 = por %p345, %p346
    %p349 = scmp.ne.s32.totalorder %s332, %s348
    %p350 = scmp.eq.s32.totalorder %s27, 0
    %p351 = por %p349, %p350
    %s352 = ssub.s32 %s21, %s28
    %p353 = scmp.eq.s32.totalorder %s352, 0
    %s355 = sadd.s32 %s354, 1
    %s356 = scalar_select %p353, %s354, %s355
    %p359 = pneg %p353
    %p360 = scmp.eq.s32.totalorder %s21, 2
    %p361 = por %p359, %p360
    %p362 = scmp.ne.s32.totalorder %s354, %s357
    %p363 = scmp.eq.s32.totalorder %s21, 0
    %p364 = por %p362, %p363
    %p365 = scmp.ne.s32.totalorder %s354, %s357
    %p366 = scmp.eq.s32.totalorder %s26, 2
    %p367 = por %p365, %p366
    %p368 = scmp.ne.s32.totalorder %s357, %s358
    %p369 = scmp.eq.s32.totalorder %s26, 0
    %p370 = por %p368, %p369
    %p371 = scmp.ne.s32.totalorder %s357, %s358
    %p372 = scmp.eq.s32.totalorder %s27, 2
    %p373 = por %p371, %p372
    %p375 = scmp.ne.s32.totalorder %s358, %s374
    %p376 = scmp.eq.s32.totalorder %s27, 0
    %p377 = por %p375, %p376
    %s378 = ssub.s32 %s21, %s28
    %p379 = scmp.eq.s32.totalorder %s378, 0
    %s381 = sadd.s32 %s380, 1
    %s382 = scalar_select %p379, %s380, %s381
    %p385 = pneg %p379
    %p386 = scmp.eq.s32.totalorder %s21, 2
    %p387 = por %p385, %p386
    %p388 = scmp.ne.s32.totalorder %s380, %s383
    %p389 = scmp.eq.s32.totalorder %s21, 0
    %p390 = por %p388, %p389
    %p391 = scmp.ne.s32.totalorder %s380, %s383
    %p392 = scmp.eq.s32.totalorder %s26, 2
    %p393 = por %p391, %p392
    %p394 = scmp.ne.s32.totalorder %s383, %s384
    %p395 = scmp.eq.s32.totalorder %s26, 0
    %p396 = por %p394, %p395
    %p397 = scmp.ne.s32.totalorder %s383, %s384
    %p398 = scmp.eq.s32.totalorder %s27, 2
    %p399 = por %p397, %p398
    %p401 = scmp.ne.s32.totalorder %s384, %s400
    %p402 = scmp.eq.s32.totalorder %s27, 0
    %p403 = por %p401, %p402
    %s404 = ssub.s32 %s21, %s28
    %p405 = scmp.eq.s32.totalorder %s404, 0
    %s407 = sadd.s32 %s406, 1
    %s408 = scalar_select %p405, %s406, %s407
    %p411 = pneg %p405
    %p412 = scmp.eq.s32.totalorder %s21, 2
    %p413 = por %p411, %p412
    %p414 = scmp.ne.s32.totalorder %s406, %s409
    %p415 = scmp.eq.s32.totalorder %s21, 0
    %p416 = por %p414, %p415
    %p417 = scmp.ne.s32.totalorder %s406, %s409
    %p418 = scmp.eq.s32.totalorder %s26, 2
    %p419 = por %p417, %p418
    %p420 = scmp.ne.s32.totalorder %s409, %s410
    %p421 = scmp.eq.s32.totalorder %s26, 0
    %p422 = por %p420, %p421
    %p423 = scmp.ne.s32.totalorder %s409, %s410
    %p424 = scmp.eq.s32.totalorder %s27, 2
    %p425 = por %p423, %p424
    %p427 = scmp.ne.s32.totalorder %s410, %s426
    %p428 = scmp.eq.s32.totalorder %s27, 0
    %p429 = por %p427, %p428
    %p430 = scmp.le.s32.totalorder 1, %s21
    %p431 = scmp.lt.s32.totalorder %s21, 4
    %p432 = pnand %p430, %p431
    %p433 = pneg %p432
    // Predicated region
    $region9: #{cv_ensemble_forward.1} parent=5 // pred_check
      _
    $region10: #{cv_ensemble_forward.1} parent=5 // pred_check_branch
      %435 = sbr.rel (%p432) target = $region12
    $region11: #{cv_ensemble_forward.1} parent=5 // pred_region
      %s436 = ssub.s32 %s21, 1
      // Predicated region
      $region13: #{cv_ensemble_forward.1} parent=11 // pred_check
        %p437 = pneg %p42
      $region14: #{cv_ensemble_forward.1} parent=11 // pred_check_branch
        %439 = sbr.rel (%p437) target = $region16
      $region15: #{cv_ensemble_forward.1} parent=11 // pred_region
        _
      $region16: #{cv_ensemble_forward.1} parent=11 // pred_fallthru
        _
      // Predicated region
      $region17: #{cv_ensemble_forward.1} parent=11 // pred_check
        %p440 = pneg %p63
      $region18: #{cv_ensemble_forward.1} parent=11 // pred_check_branch
        %442 = sbr.rel (%p440) target = $region20
      $region19: #{cv_ensemble_forward.1} parent=11 // pred_region
        _
      $region20: #{cv_ensemble_forward.1} parent=11 // pred_fallthru
        _
      // Predicated region
      $region21: #{cv_ensemble_forward.1} parent=11 // pred_check
        %p443 = pneg %p84
      $region22: #{cv_ensemble_forward.1} parent=11 // pred_check_branch
        %445 = sbr.rel (%p443) target = $region24
      $region23: #{cv_ensemble_forward.1} parent=11 // pred_region
        _
      $region24: #{cv_ensemble_forward.1} parent=11 // pred_fallthru
        _
    $region12: #{cv_ensemble_forward.1} parent=5 // pred_fallthru
      _
    %p446 = scmp.lt.s32.totalorder %s21, 3
    // Predicated region
    $region25: #{cv_ensemble_forward.1} parent=5 // pred_check
      %p447 = pneg %p446
    $region26: #{cv_ensemble_forward.1} parent=5 // pred_check_branch
      %449 = sbr.rel (%p447) target = $region28
    $region27: #{cv_ensemble_forward.1} parent=5 // pred_region
      // Predicated region
      $region29: #{cv_ensemble_forward.1} parent=27 // pred_check
        %p450 = pneg %p104
      $region30: #{cv_ensemble_forward.1} parent=27 // pred_check_branch
        %452 = sbr.rel (%p450) target = $region32
      $region31: #{cv_ensemble_forward.1} parent=27 // pred_region
        %p453 = scmp.lt.s32.totalorder %s21, 2
        %s454 = scalar_select %p453, %s21, 2
        %s455 = smul.addr %s454, 2
        %s456 = smul.addr %s455, 8
        %s457 = scalar_lea.vmem %s3, %s456
      $region32: #{cv_ensemble_forward.1} parent=27 // pred_fallthru
        _
      // Predicated region
      $region33: #{cv_ensemble_forward.1} parent=27 // pred_check
        %p458 = pneg %p130
      $region34: #{cv_ensemble_forward.1} parent=27 // pred_check_branch
        %460 = sbr.rel (%p458) target = $region36
      $region35: #{cv_ensemble_forward.1} parent=27 // pred_region
        %p461 = scmp.lt.s32.totalorder %s21, 2
        %s462 = scalar_select %p461, %s21, 2
        %s463 = scalar_lea.vmem %s4, %s462
      $region36: #{cv_ensemble_forward.1} parent=27 // pred_fallthru
        _
      // Predicated region
      $region37: #{cv_ensemble_forward.1} parent=27 // pred_check
        %p464 = pneg %p156
      $region38: #{cv_ensemble_forward.1} parent=27 // pred_check_branch
        %466 = sbr.rel (%p464) target = $region40
      $region39: #{cv_ensemble_forward.1} parent=27 // pred_region
        %p467 = scmp.lt.s32.totalorder %s21, 2
        %s468 = scalar_select %p467, %s21, 2
        %s469 = scalar_lea.vmem %s5, %s468
      $region40: #{cv_ensemble_forward.1} parent=27 // pred_fallthru
        _
      // Predicated region
      $region41: #{cv_ensemble_forward.1} parent=27 // pred_check
        %p470 = pneg %p182
      $region42: #{cv_ensemble_forward.1} parent=27 // pred_check_branch
        %472 = sbr.rel (%p470) target = $region44
      $region43: #{cv_ensemble_forward.1} parent=27 // pred_region
        %p473 = scmp.lt.s32.totalorder %s21, 2
        %s474 = scalar_select %p473, %s21, 2
        %s475 = smul.addr %s474, 4
        %s476 = smul.addr %s475, 8
        %s477 = scalar_lea.vmem %s6, %s476
      $region44: #{cv_ensemble_forward.1} parent=27 // pred_fallthru
        _
      // Predicated region
      $region45: #{cv_ensemble_forward.1} parent=27 // pred_check
        %p478 = pneg %p208
      $region46: #{cv_ensemble_forward.1} parent=27 // pred_check_branch
        %480 = sbr.rel (%p478) target = $region48
      $region47: #{cv_ensemble_forward.1} parent=27 // pred_region
        %p481 = scmp.lt.s32.totalorder %s21, 2
        %s482 = scalar_select %p481, %s21, 2
        %s483 = scalar_lea.vmem %s7, %s482
      $region48: #{cv_ensemble_forward.1} parent=27 // pred_fallthru
        _
      // Predicated region
      $region49: #{cv_ensemble_forward.1} parent=27 // pred_check
        %p484 = pneg %p234
      $region50: #{cv_ensemble_forward.1} parent=27 // pred_check_branch
        %486 = sbr.rel (%p484) target = $region52
      $region51: #{cv_ensemble_forward.1} parent=27 // pred_region
        %p487 = scmp.lt.s32.totalorder %s21, 2
        %s488 = scalar_select %p487, %s21, 2
        %s489 = scalar_lea.vmem %s8, %s488
      $region52: #{cv_ensemble_forward.1} parent=27 // pred_fallthru
        _
      // Predicated region
      $region53: #{cv_ensemble_forward.1} parent=27 // pred_check
        %p490 = pneg %p260
      $region54: #{cv_ensemble_forward.1} parent=27 // pred_check_branch
        %492 = sbr.rel (%p490) target = $region56
      $region55: #{cv_ensemble_forward.1} parent=27 // pred_region
        %p493 = scmp.lt.s32.totalorder %s21, 2
        %s494 = scalar_select %p493, %s21, 2
        %s495 = smul.addr %s494, 8
        %s496 = smul.addr %s495, 8
        %s497 = scalar_lea.vmem %s9, %s496
      $region56: #{cv_ensemble_forward.1} parent=27 // pred_fallthru
        _
      // Predicated region
      $region57: #{cv_ensemble_forward.1} parent=27 // pred_check
        %p498 = pneg %p286
      $region58: #{cv_ensemble_forward.1} parent=27 // pred_check_branch
        %500 = sbr.rel (%p498) target = $region60
      $region59: #{cv_ensemble_forward.1} parent=27 // pred_region
        %p501 = scmp.lt.s32.totalorder %s21, 2
        %s502 = scalar_select %p501, %s21, 2
        %s503 = scalar_lea.vmem %s10, %s502
      $region60: #{cv_ensemble_forward.1} parent=27 // pred_fallthru
        _
      // Predicated region
      $region61: #{cv_ensemble_forward.1} parent=27 // pred_check
        %p504 = pneg %p312
      $region62: #{cv_ensemble_forward.1} parent=27 // pred_check_branch
        %506 = sbr.rel (%p504) target = $region64
      $region63: #{cv_ensemble_forward.1} parent=27 // pred_region
        %p507 = scmp.lt.s32.totalorder %s21, 2
        %s508 = scalar_select %p507, %s21, 2
        %s509 = smul.addr %s508, 4
        %s510 = smul.addr %s509, 8
        %s511 = scalar_lea.vmem %s11, %s510
      $region64: #{cv_ensemble_forward.1} parent=27 // pred_fallthru
        _
      // Predicated region
      $region65: #{cv_ensemble_forward.1} parent=27 // pred_check
        %p512 = pneg %p338
      $region66: #{cv_ensemble_forward.1} parent=27 // pred_check_branch
        %514 = sbr.rel (%p512) target = $region68
      $region67: #{cv_ensemble_forward.1} parent=27 // pred_region
        %p515 = scmp.lt.s32.totalorder %s21, 2
        %s516 = scalar_select %p515, %s21, 2
        %s517 = scalar_lea.vmem %s12, %s516
      $region68: #{cv_ensemble_forward.1} parent=27 // pred_fallthru
        _
      // Predicated region
      $region69: #{cv_ensemble_forward.1} parent=27 // pred_check
        %p518 = pneg %p364
      $region70: #{cv_ensemble_forward.1} parent=27 // pred_check_branch
        %520 = sbr.rel (%p518) target = $region72
      $region71: #{cv_ensemble_forward.1} parent=27 // pred_region
        %p521 = scmp.lt.s32.totalorder %s21, 2
        %s522 = scalar_select %p521, %s21, 2
        %s523 = smul.addr %s522, 2
        %s524 = smul.addr %s523, 8
        %s525 = scalar_lea.vmem %s13, %s524
      $region72: #{cv_ensemble_forward.1} parent=27 // pred_fallthru
        _
      // Predicated region
      $region73: #{cv_ensemble_forward.1} parent=27 // pred_check
        %p526 = pneg %p390
      $region74: #{cv_ensemble_forward.1} parent=27 // pred_check_branch
        %528 = sbr.rel (%p526) target = $region76
      $region75: #{cv_ensemble_forward.1} parent=27 // pred_region
        %p529 = scmp.lt.s32.totalorder %s21, 2
        %s530 = scalar_select %p529, %s21, 2
        %s531 = scalar_lea.vmem %s14, %s530
      $region76: #{cv_ensemble_forward.1} parent=27 // pred_fallthru
        _
    $region28: #{cv_ensemble_forward.1} parent=5 // pred_fallthru
      _
    %p532 = scmp.le.s32.totalorder 1, %s21
    %p533 = scmp.lt.s32.totalorder %s21, 4
    %p534 = pnand %p532, %p533
    %p535 = pneg %p534
    // Predicated region
    $region77: #{cv_ensemble_forward.1} parent=5 // pred_check
      _
    $region78: #{cv_ensemble_forward.1} parent=5 // pred_check_branch
      %537 = sbr.rel (%p534) target = $region80
    $region79: #{cv_ensemble_forward.1} parent=5 // pred_region
      %s538 = ssub.s32 %s21, 1
      %p539 = pneg %p42
      %p540 = pneg %p39
      %p541 = pneg %p63
      %p542 = pneg %p60
      %p543 = pneg %p84
      %p544 = pneg %p81
      %p545 = scmp.lt.s32.totalorder %s26, 2
      %s546 = scalar_select %p545, %s26, 2
      %s547 = smul.addr %s546, 2
      %s548 = smul.addr %s547, 8
      %s549 = scalar_lea.vmem %s3, %s548
      %p550 = pneg %p110
      %p551 = pneg %p107
      %p552 = scmp.lt.s32.totalorder %s26, 2
      %s553 = scalar_select %p552, %s26, 2
      %s554 = scalar_lea.vmem %s4, %s553
      %p555 = pneg %p136
      %p556 = pneg %p133
      %p557 = scmp.lt.s32.totalorder %s26, 2
      %s558 = scalar_select %p557, %s26, 2
      %s559 = scalar_lea.vmem %s5, %s558
      %p560 = pneg %p162
      %p561 = pneg %p159
      %p562 = scmp.lt.s32.totalorder %s26, 2
      %s563 = scalar_select %p562, %s26, 2
      %s564 = smul.addr %s563, 4
      %s565 = smul.addr %s564, 8
      %s566 = scalar_lea.vmem %s6, %s565
      %p567 = pneg %p188
      %p568 = pneg %p185
      %p569 = scmp.lt.s32.totalorder %s26, 2
      %s570 = scalar_select %p569, %s26, 2
      %s571 = scalar_lea.vmem %s7, %s570
      %p572 = pneg %p214
      %p573 = pneg %p211
      %p574 = scmp.lt.s32.totalorder %s26, 2
      %s575 = scalar_select %p574, %s26, 2
      %s576 = scalar_lea.vmem %s8, %s575
      %p577 = pneg %p240
      %p578 = pneg %p237
      %p579 = scmp.lt.s32.totalorder %s26, 2
      %s580 = scalar_select %p579, %s26, 2
      %s581 = smul.addr %s580, 8
      %s582 = smul.addr %s581, 8
      %s583 = scalar_lea.vmem %s9, %s582
      %p584 = pneg %p266
      %p585 = pneg %p263
      %p586 = scmp.lt.s32.totalorder %s26, 2
      %s587 = scalar_select %p586, %s26, 2
      %s588 = scalar_lea.vmem %s10, %s587
      %p589 = pneg %p292
      %p590 = pneg %p289
      %p591 = scmp.lt.s32.totalorder %s26, 2
      %s592 = scalar_select %p591, %s26, 2
      %s593 = smul.addr %s592, 4
      %s594 = smul.addr %s593, 8
      %s595 = scalar_lea.vmem %s11, %s594
      %p596 = pneg %p318
      %p597 = pneg %p315
      %p598 = scmp.lt.s32.totalorder %s26, 2
      %s599 = scalar_select %p598, %s26, 2
      %s600 = scalar_lea.vmem %s12, %s599
      %p601 = pneg %p344
      %p602 = pneg %p341
      %p603 = scmp.lt.s32.totalorder %s26, 2
      %s604 = scalar_select %p603, %s26, 2
      %s605 = smul.addr %s604, 2
      %s606 = smul.addr %s605, 8
      %s607 = scalar_lea.vmem %s13, %s606
      %p608 = pneg %p370
      %p609 = pneg %p367
      %p610 = scmp.lt.s32.totalorder %s26, 2
      %s611 = scalar_select %p610, %s26, 2
      %s612 = scalar_lea.vmem %s14, %s611
      %p613 = pneg %p396
      %p614 = pneg %p393
      %p615 = pneg %p422
      %p616 = pneg %p419
      %p617 = scmp.lt.s32.totalorder %s26, 2
      %s618 = scalar_select %p617, %s26, 2
      %s619 = smul.addr %s618, 4
      %s620 = scalar_lea.vmem %s15, %s619
      %p621 = scmp.lt.s32.totalorder %s26, 2
      %s622 = scalar_select %p621, %s26, 2
      %s623 = smul.addr %s622, 2
      %s624 = smul.addr %s623, 8
      %s625 = scalar_lea.vmem %s3, %s624
      %p626 = scmp.lt.s32.totalorder %s26, 2
      %s627 = scalar_select %p626, %s26, 2
      %s628 = scalar_lea.vmem %s4, %s627
      %p629 = scmp.lt.s32.totalorder %s26, 2
      %s630 = scalar_select %p629, %s26, 2
      %s631 = scalar_lea.vmem %s5, %s630
      %p632 = scmp.lt.s32.totalorder %s26, 2
      %s633 = scalar_select %p632, %s26, 2
      %s634 = smul.addr %s633, 4
      %s635 = smul.addr %s634, 8
      %s636 = scalar_lea.vmem %s6, %s635
      %p637 = scmp.lt.s32.totalorder %s26, 2
      %s638 = scalar_select %p637, %s26, 2
      %s639 = scalar_lea.vmem %s7, %s638
      %p640 = scmp.lt.s32.totalorder %s26, 2
      %s641 = scalar_select %p640, %s26, 2
      %s642 = scalar_lea.vmem %s8, %s641
      %p643 = scmp.lt.s32.totalorder %s26, 2
      %s644 = scalar_select %p643, %s26, 2
      %s645 = smul.addr %s644, 8
      %s646 = smul.addr %s645, 8
      %s647 = scalar_lea.vmem %s9, %s646
      %p648 = scmp.lt.s32.totalorder %s26, 2
      %s649 = scalar_select %p648, %s26, 2
      %s650 = scalar_lea.vmem %s10, %s649
      %p651 = scmp.lt.s32.totalorder %s26, 2
      %s652 = scalar_select %p651, %s26, 2
      %s653 = smul.addr %s652, 4
      %s654 = smul.addr %s653, 8
      %s655 = scalar_lea.vmem %s11, %s654
      %p656 = scmp.lt.s32.totalorder %s26, 2
      %s657 = scalar_select %p656, %s26, 2
      %s658 = scalar_lea.vmem %s12, %s657
      %p659 = scmp.lt.s32.totalorder %s26, 2
      %s660 = scalar_select %p659, %s26, 2
      %s661 = smul.addr %s660, 2
      %s662 = smul.addr %s661, 8
      %s663 = scalar_lea.vmem %s13, %s662
      %p664 = scmp.lt.s32.totalorder %s26, 2
      %s665 = scalar_select %p664, %s26, 2
      %s666 = scalar_lea.vmem %s14, %s665
      %p667 = scmp.lt.s32.totalorder %s26, 2
      %s668 = scalar_select %p667, %s26, 2
      %s669 = smul.addr %s668, 4
      %s670 = scalar_lea.vmem %s15, %s669
      %v671 = vld [vmem:[%s0] sm:$0xff]
      %v672 = vld [vmem:[%s0 + $0x8] sm:$0xff]
      %v673 = vld [vmem:[%s0 + $0x10] sm:$0xff]
      %v674 = vld [vmem:[%s0 + $0x18] sm:$0xff]
      %v675 = vld [vmem:[%s0 + $0x20] sm:$0xff]
      %v676 = vld [vmem:[%s0 + $0x28] sm:$0xff]
      %v677 = vld [vmem:[%s0 + $0x30] sm:$0xff]
      %v678 = vld [vmem:[%s0 + $0x38] sm:$0xff]
      %v679 = vld [vmem:[%s2] sm:$0xff]
      %v680 = vld [vmem:[%s2 + $0x8] sm:$0xff]
      %v681 = vld [vmem:[%s1] sm:$0xff]
      %v682 = vld [vmem:[%s1 + $0x8] sm:$0xff]
      %v683 = vld [vmem:[%s1 + $0x10] sm:$0xff]
      %v684 = vld [vmem:[%s1 + $0x18] sm:$0xff]
      %v685 = vld [vmem:[%s1 + $0x20] sm:$0xff]
      %v686 = vld [vmem:[%s1 + $0x28] sm:$0xff]
      %v687 = vld [vmem:[%s1 + $0x30] sm:$0xff]
      %v688 = vld [vmem:[%s1 + $0x38] sm:$0xff]
      %v689 = vld [vmem:[%s625] sm:$0xff]
      %v690 = vld [vmem:[%s625 + $0x8] sm:$0xff]
      %v691 = vld [vmem:[%s628] sm:$0x1]
      %v692 = vld [vmem:[%s631] sm:$0x1]
      %vm693 = vcmask 130048
      %v694 = vsel %vm693, %v671, 0.0
      %695 = vadd.xlane.f32.xlu0 %v694
      %v696 = vpop.xlane.xlu0 %695
      %v697 = vsel %vm693, %v672, 0.0
      %698 = vadd.xlane.f32.xlu0 %v697
      %v699 = vpop.xlane.xlu0 %698
      %v700 = vsel %vm693, %v673, 0.0
      %701 = vadd.xlane.f32.xlu0 %v700
      %v702 = vpop.xlane.xlu0 %701
      %v703 = vsel %vm693, %v674, 0.0
      %704 = vadd.xlane.f32.xlu0 %v703
      %v705 = vpop.xlane.xlu0 %704
      %v706 = vsel %vm693, %v675, 0.0
      %707 = vadd.xlane.f32.xlu0 %v706
      %v708 = vpop.xlane.xlu0 %707
      %v709 = vsel %vm693, %v676, 0.0
      %710 = vadd.xlane.f32.xlu0 %v709
      %v711 = vpop.xlane.xlu0 %710
      %v712 = vsel %vm693, %v677, 0.0
      %713 = vadd.xlane.f32.xlu0 %v712
      %v714 = vpop.xlane.xlu0 %713
      %v715 = vsel %vm693, %v678, 0.0
      %716 = vadd.xlane.f32.xlu0 %v715
      %v717 = vpop.xlane.xlu0 %716
      %v718 = vadd.f32 %v696, 1.0
      %v719 = vadd.f32 %v699, 1.0
      %v720 = vadd.f32 %v702, 1.0
      %v721 = vadd.f32 %v705, 1.0
      %v722 = vadd.f32 %v708, 1.0
      %v723 = vadd.f32 %v711, 1.0
      %v724 = vadd.f32 %v714, 1.0
      %v725 = vadd.f32 %v717, 1.0
      %vm726 = vcmp.gt.f32.partialorder %v718, 0.0
      %vm727 = vcmp.gt.f32.partialorder %v719, 0.0
      %vm728 = vcmp.gt.f32.partialorder %v720, 0.0
      %vm729 = vcmp.gt.f32.partialorder %v721, 0.0
      %vm730 = vcmp.gt.f32.partialorder %v722, 0.0
      %vm731 = vcmp.gt.f32.partialorder %v723, 0.0
      %vm732 = vcmp.gt.f32.partialorder %v724, 0.0
      %vm733 = vcmp.gt.f32.partialorder %v725, 0.0
      %v734 = vrsqrt.pop %v718
      %v735 = vrsqrt.pop %v719
      %v736 = vrsqrt.pop %v720
      %v737 = vrsqrt.pop %v721
      %v738 = vrsqrt.pop %v722
      %v739 = vrsqrt.pop %v723
      %v740 = vrsqrt.pop %v724
      %v741 = vrsqrt.pop %v725
      %v742 = vsel %vm726, %v734, 0.0
      %v743 = vsel %vm727, %v735, 0.0
      %v744 = vsel %vm728, %v736, 0.0
      %v745 = vsel %vm729, %v737, 0.0
      %v746 = vsel %vm730, %v738, 0.0
      %v747 = vsel %vm731, %v739, 0.0
      %v748 = vsel %vm732, %v740, 0.0
      %v749 = vsel %vm733, %v741, 0.0
      %v751 = vsel %vm693, %v681, 0
      %v754 = vsel %vm693, %v682, 0
      %v757 = vsel %vm693, %v683, 0
      %v760 = vsel %vm693, %v684, 0
      %v763 = vsel %vm693, %v685, 0
      %v766 = vsel %vm693, %v686, 0
      %v769 = vsel %vm693, %v687, 0
      %v772 = vsel %vm693, %v688, 0
      %774 = vmatprep.subr.mxu0 0.0
      %775 = vmatpush1.msra.mxu0 0.0
      %776 = vmatprep.subr.mxu0 0.0
      %777 = vmatpush1.msra.mxu0 0.0
      %778 = vmatprep.subr.mxu0 0.0
      %779 = vmatpush1.msra.mxu0 0.0
      %780 = vmatprep.subr.mxu0 0.0
      %781 = vmatpush1.msra.mxu0 0.0
      %782 = vmatprep.subr.mxu0 0.0
      %783 = vmatpush1.msra.mxu0 0.0
      %784 = vmatprep.subr.mxu0 0.0
      %785 = vmatpush1.msra.mxu0 0.0
      %786 = vmatprep.subr.mxu0 0.0
      %787 = vmatpush1.msra.mxu0 0.0
      %788 = vmatprep.subr.mxu0 0.0
      %789 = vmatpush1.msra.mxu0 0.0
      %790 = vmatprep.subr.mxu0 0.0
      %791 = vmatpush1.msra.mxu0 0.0
      %792 = vmatprep.subr.mxu0 0.0
      %793 = vmatpush1.msra.mxu0 0.0
      %794 = vmatprep.subr.mxu0 0.0
      %795 = vmatpush1.msra.mxu0 0.0
      %796 = vmatprep.subr.mxu0 0.0
      %797 = vmatpush1.msra.mxu0 0.0
      %798 = vmatprep.subr.mxu0 0.0
      %799 = vmatpush1.msra.mxu0 0.0
      %800 = vmatprep.subr.mxu0 0.0
      %801 = vmatpush1.msra.mxu0 0.0
      %802 = vmatprep.subr.mxu0 0.0
      %803 = vmatpush1.msra.mxu0 %v690
      %804 = vmatprep.subr.mxu0 0.0
      %805 = vmatpush1.msra.mxu0 %v689
      %806 = vmatprep.subr.mxu0 0.0
      %807 = vmatpush2.msra.mxu0 0.0
      %808 = vmatprep.subr.mxu0 0.0
      %809 = vmatpush2.msra.mxu0 0.0
      %810 = vmatprep.subr.mxu0 0.0
      %811 = vmatpush2.msra.mxu0 0.0
      %812 = vmatprep.subr.mxu0 0.0
      %813 = vmatpush2.msra.mxu0 0.0
      %814 = vmatprep.subr.mxu0 0.0
      %815 = vmatpush2.msra.mxu0 0.0
      %816 = vmatprep.subr.mxu0 0.0
      %817 = vmatpush2.msra.mxu0 0.0
      %818 = vmatprep.subr.mxu0 0.0
      %819 = vmatpush2.msra.mxu0 0.0
      %820 = vmatprep.subr.mxu0 0.0
      %821 = vmatpush2.msra.mxu0 0.0
      %822 = vmatprep.subr.mxu0 0.0
      %823 = vmatpush2.msra.mxu0 0.0
      %824 = vmatprep.subr.mxu0 0.0
      %825 = vmatpush2.msra.mxu0 0.0
      %826 = vmatprep.subr.mxu0 0.0
      %827 = vmatpush2.msra.mxu0 0.0
      %828 = vmatprep.subr.mxu0 0.0
      %829 = vmatpush2.msra.mxu0 0.0
      %830 = vmatprep.subr.mxu0 0.0
      %831 = vmatpush2.msra.mxu0 0.0
      %832 = vmatprep.subr.mxu0 0.0
      %833 = vmatpush2.msra.mxu0 0.0
      %834 = vmatprep.subr.mxu0 0.0
      %835 = vmatpush2.msra.mxu0 0.0
      %836 = vmatprep.subr.mxu0 0.0
      %837 = vmatpush2.msra.mxu0 0.0
      %838 = vmatprep.mubr.f32.mxu0 0.0
      %839 = vmatmul.mubr.f32.gmra.mxu0 %v751
      %v840 = vpop.f32.mrf.mxu0
      %v841 = vadd.f32 0.0, %v840
      %v842 = vpop.f32.mrf.mxu0
      %843 = vmatprep.mubr.f32.mxu0 0.0
      %844 = vmatmul.mubr.f32.gmra.mxu0 %v754
      %v845 = vpop.f32.mrf.mxu0
      %v846 = vadd.f32 0.0, %v845
      %v847 = vpop.f32.mrf.mxu0
      %848 = vmatprep.mubr.f32.mxu0 0.0
      %849 = vmatmul.mubr.f32.gmra.mxu0 %v757
      %v850 = vpop.f32.mrf.mxu0
      %v851 = vadd.f32 0.0, %v850
      %v852 = vpop.f32.mrf.mxu0
      %853 = vmatprep.mubr.f32.mxu0 0.0
      %854 = vmatmul.mubr.f32.gmra.mxu0 %v760
      %v855 = vpop.f32.mrf.mxu0
      %v856 = vadd.f32 0.0, %v855
      %v857 = vpop.f32.mrf.mxu0
      %858 = vmatprep.mubr.f32.mxu0 0.0
      %859 = vmatmul.mubr.f32.gmra.mxu0 %v763
      %v860 = vpop.f32.mrf.mxu0
      %v861 = vadd.f32 0.0, %v860
      %v862 = vpop.f32.mrf.mxu0
      %863 = vmatprep.mubr.f32.mxu0 0.0
      %864 = vmatmul.mubr.f32.gmra.mxu0 %v766
      %v865 = vpop.f32.mrf.mxu0
      %v866 = vadd.f32 0.0, %v865
      %v867 = vpop.f32.mrf.mxu0
      %868 = vmatprep.mubr.f32.mxu0 0.0
      %869 = vmatmul.mubr.f32.gmra.mxu0 %v769
      %v870 = vpop.f32.mrf.mxu0
      %v871 = vadd.f32 0.0, %v870
      %v872 = vpop.f32.mrf.mxu0
      %873 = vmatprep.mubr.f32.mxu0 0.0
      %874 = vmatmul.mubr.f32.gmra.mxu0 %v772
      %v875 = vpop.f32.mrf.mxu0
      %v876 = vadd.f32 0.0, %v875
      %v877 = vpop.f32.mrf.mxu0
      %878 = vdwg.mxu0
      %v879 = vmul.f32 %v742, %v841
      %v880 = vmul.f32 %v743, %v846
      %v881 = vmul.f32 %v744, %v851
      %v882 = vmul.f32 %v745, %v856
      %v883 = vmul.f32 %v746, %v861
      %v884 = vmul.f32 %v747, %v866
      %v885 = vmul.f32 %v748, %v871
      %v886 = vmul.f32 %v749, %v876
      %v888 = vsel %vm693, %v671, 0
      %v891 = vsel %vm693, %v672, 0
      %893 = vmatprep.subr.mxu0 0.0
      %894 = vmatpush1.msra.mxu0 0.0
      %895 = vmatprep.subr.mxu0 0.0
      %896 = vmatpush1.msra.mxu0 0.0
      %897 = vmatprep.subr.mxu0 0.0
      %898 = vmatpush1.msra.mxu0 0.0
      %899 = vmatprep.subr.mxu0 0.0
      %900 = vmatpush1.msra.mxu0 0.0
      %901 = vmatprep.subr.mxu0 0.0
      %902 = vmatpush1.msra.mxu0 0.0
      %903 = vmatprep.subr.mxu0 0.0
      %904 = vmatpush1.msra.mxu0 0.0
      %905 = vmatprep.subr.mxu0 0.0
      %906 = vmatpush1.msra.mxu0 0.0
      %907 = vmatprep.subr.mxu0 0.0
      %908 = vmatpush1.msra.mxu0 0.0
      %909 = vmatprep.subr.mxu0 0.0
      %910 = vmatpush1.msra.mxu0 0.0
      %911 = vmatprep.subr.mxu0 0.0
      %912 = vmatpush1.msra.mxu0 0.0
      %913 = vmatprep.subr.mxu0 0.0
      %914 = vmatpush1.msra.mxu0 0.0
      %915 = vmatprep.subr.mxu0 0.0
      %916 = vmatpush1.msra.mxu0 0.0
      %917 = vmatprep.subr.mxu0 0.0
      %918 = vmatpush1.msra.mxu0 0.0
      %919 = vmatprep.subr.mxu0 0.0
      %920 = vmatpush1.msra.mxu0 0.0
      %921 = vmatprep.subr.mxu0 0.0
      %922 = vmatpush1.msra.mxu0 %v880
      %923 = vmatprep.subr.mxu0 0.0
      %924 = vmatpush1.msra.mxu0 %v879
      %925 = vmatprep.subr.mxu0 0.0
      %926 = vmatpush2.msra.mxu0 0.0
      %927 = vmatprep.subr.mxu0 0.0
      %928 = vmatpush2.msra.mxu0 0.0
      %929 = vmatprep.subr.mxu0 0.0
      %930 = vmatpush2.msra.mxu0 0.0
      %931 = vmatprep.subr.mxu0 0.0
      %932 = vmatpush2.msra.mxu0 0.0
      %933 = vmatprep.subr.mxu0 0.0
      %934 = vmatpush2.msra.mxu0 0.0
      %935 = vmatprep.subr.mxu0 0.0
      %936 = vmatpush2.msra.mxu0 0.0
      %937 = vmatprep.subr.mxu0 0.0
      %938 = vmatpush2.msra.mxu0 0.0
      %939 = vmatprep.subr.mxu0 0.0
      %940 = vmatpush2.msra.mxu0 0.0
      %941 = vmatprep.subr.mxu0 0.0
      %942 = vmatpush2.msra.mxu0 0.0
      %943 = vmatprep.subr.mxu0 0.0
      %944 = vmatpush2.msra.mxu0 0.0
      %945 = vmatprep.subr.mxu0 0.0
      %946 = vmatpush2.msra.mxu0 0.0
      %947 = vmatprep.subr.mxu0 0.0
      %948 = vmatpush2.msra.mxu0 0.0
      %949 = vmatprep.subr.mxu0 0.0
      %950 = vmatpush2.msra.mxu0 0.0
      %951 = vmatprep.subr.mxu0 0.0
      %952 = vmatpush2.msra.mxu0 0.0
      %953 = vmatprep.subr.mxu0 0.0
      %954 = vmatpush2.msra.mxu0 0.0
      %955 = vmatprep.subr.mxu0 0.0
      %956 = vmatpush2.msra.mxu0 0.0
      %957 = vmatprep.mubr.f32.mxu0 0.0
      %958 = vmatmul.mubr.f32.gmra.mxu0 %v888
      %v959 = vpop.f32.mrf.mxu0
      %v960 = vadd.f32 0.0, %v959
      %v961 = vpop.f32.mrf.mxu0
      %962 = vmatprep.mubr.f32.mxu0 0.0
      %963 = vmatmul.mubr.f32.gmra.mxu0 %v891
      %v964 = vpop.f32.mrf.mxu0
      %v965 = vadd.f32 0.0, %v964
      %v966 = vpop.f32.mrf.mxu0
      %967 = vdwg.mxu0
      %v969 = vsel %vm693, %v673, 0
      %v972 = vsel %vm693, %v674, 0
      %974 = vmatprep.subr.mxu0 0.0
      %975 = vmatpush1.msra.mxu0 0.0
      %976 = vmatprep.subr.mxu0 0.0
      %977 = vmatpush1.msra.mxu0 0.0
      %978 = vmatprep.subr.mxu0 0.0
      %979 = vmatpush1.msra.mxu0 0.0
      %980 = vmatprep.subr.mxu0 0.0
      %981 = vmatpush1.msra.mxu0 0.0
      %982 = vmatprep.subr.mxu0 0.0
      %983 = vmatpush1.msra.mxu0 0.0
      %984 = vmatprep.subr.mxu0 0.0
      %985 = vmatpush1.msra.mxu0 0.0
      %986 = vmatprep.subr.mxu0 0.0
      %987 = vmatpush1.msra.mxu0 0.0
      %988 = vmatprep.subr.mxu0 0.0
      %989 = vmatpush1.msra.mxu0 0.0
      %990 = vmatprep.subr.mxu0 0.0
      %991 = vmatpush1.msra.mxu0 0.0
      %992 = vmatprep.subr.mxu0 0.0
      %993 = vmatpush1.msra.mxu0 0.0
      %994 = vmatprep.subr.mxu0 0.0
      %995 = vmatpush1.msra.mxu0 0.0
      %996 = vmatprep.subr.mxu0 0.0
      %997 = vmatpush1.msra.mxu0 0.0
      %998 = vmatprep.subr.mxu0 0.0
      %999 = vmatpush1.msra.mxu0 0.0
      %1000 = vmatprep.subr.mxu0 0.0
      %1001 = vmatpush1.msra.mxu0 0.0
      %1002 = vmatprep.subr.mxu0 0.0
      %1003 = vmatpush1.msra.mxu0 %v882
      %1004 = vmatprep.subr.mxu0 0.0
      %1005 = vmatpush1.msra.mxu0 %v881
      %1006 = vmatprep.subr.mxu0 0.0
      %1007 = vmatpush2.msra.mxu0 0.0
      %1008 = vmatprep.subr.mxu0 0.0
      %1009 = vmatpush2.msra.mxu0 0.0
      %1010 = vmatprep.subr.mxu0 0.0
      %1011 = vmatpush2.msra.mxu0 0.0
      %1012 = vmatprep.subr.mxu0 0.0
      %1013 = vmatpush2.msra.mxu0 0.0
      %1014 = vmatprep.subr.mxu0 0.0
      %1015 = vmatpush2.msra.mxu0 0.0
      %1016 = vmatprep.subr.mxu0 0.0
      %1017 = vmatpush2.msra.mxu0 0.0
      %1018 = vmatprep.subr.mxu0 0.0
      %1019 = vmatpush2.msra.mxu0 0.0
      %1020 = vmatprep.subr.mxu0 0.0
      %1021 = vmatpush2.msra.mxu0 0.0
      %1022 = vmatprep.subr.mxu0 0.0
      %1023 = vmatpush2.msra.mxu0 0.0
      %1024 = vmatprep.subr.mxu0 0.0
      %1025 = vmatpush2.msra.mxu0 0.0
      %1026 = vmatprep.subr.mxu0 0.0
      %1027 = vmatpush2.msra.mxu0 0.0
      %1028 = vmatprep.subr.mxu0 0.0
      %1029 = vmatpush2.msra.mxu0 0.0
      %1030 = vmatprep.subr.mxu0 0.0
      %1031 = vmatpush2.msra.mxu0 0.0
      %1032 = vmatprep.subr.mxu0 0.0
      %1033 = vmatpush2.msra.mxu0 0.0
      %1034 = vmatprep.subr.mxu0 0.0
      %1035 = vmatpush2.msra.mxu0 0.0
      %1036 = vmatprep.subr.mxu0 0.0
      %1037 = vmatpush2.msra.mxu0 0.0
      %1038 = vmatprep.mubr.f32.mxu0 0.0
      %1039 = vmatmul.mubr.f32.gmra.mxu0 %v969
      %v1040 = vpop.f32.mrf.mxu0
      %v1041 = vadd.f32 0.0, %v1040
      %v1042 = vpop.f32.mrf.mxu0
      %1043 = vmatprep.mubr.f32.mxu0 0.0
      %1044 = vmatmul.mubr.f32.gmra.mxu0 %v972
      %v1045 = vpop.f32.mrf.mxu0
      %v1046 = vadd.f32 0.0, %v1045
      %v1047 = vpop.f32.mrf.mxu0
      %1048 = vdwg.mxu0
      %v1050 = vsel %vm693, %v675, 0
      %v1053 = vsel %vm693, %v676, 0
      %1055 = vmatprep.subr.mxu0 0.0
      %1056 = vmatpush1.msra.mxu0 0.0
      %1057 = vmatprep.subr.mxu0 0.0
      %1058 = vmatpush1.msra.mxu0 0.0
      %1059 = vmatprep.subr.mxu0 0.0
      %1060 = vmatpush1.msra.mxu0 0.0
      %1061 = vmatprep.subr.mxu0 0.0
      %1062 = vmatpush1.msra.mxu0 0.0
      %1063 = vmatprep.subr.mxu0 0.0
      %1064 = vmatpush1.msra.mxu0 0.0
      %1065 = vmatprep.subr.mxu0 0.0
      %1066 = vmatpush1.msra.mxu0 0.0
      %1067 = vmatprep.subr.mxu0 0.0
      %1068 = vmatpush1.msra.mxu0 0.0
      %1069 = vmatprep.subr.mxu0 0.0
      %1070 = vmatpush1.msra.mxu0 0.0
      %1071 = vmatprep.subr.mxu0 0.0
      %1072 = vmatpush1.msra.mxu0 0.0
      %1073 = vmatprep.subr.mxu0 0.0
      %1074 = vmatpush1.msra.mxu0 0.0
      %1075 = vmatprep.subr.mxu0 0.0
      %1076 = vmatpush1.msra.mxu0 0.0
      %1077 = vmatprep.subr.mxu0 0.0
      %1078 = vmatpush1.msra.mxu0 0.0
      %1079 = vmatprep.subr.mxu0 0.0
      %1080 = vmatpush1.msra.mxu0 0.0
      %1081 = vmatprep.subr.mxu0 0.0
      %1082 = vmatpush1.msra.mxu0 0.0
      %1083 = vmatprep.subr.mxu0 0.0
      %1084 = vmatpush1.msra.mxu0 %v884
      %1085 = vmatprep.subr.mxu0 0.0
      %1086 = vmatpush1.msra.mxu0 %v883
      %1087 = vmatprep.subr.mxu0 0.0
      %1088 = vmatpush2.msra.mxu0 0.0
      %1089 = vmatprep.subr.mxu0 0.0
      %1090 = vmatpush2.msra.mxu0 0.0
      %1091 = vmatprep.subr.mxu0 0.0
      %1092 = vmatpush2.msra.mxu0 0.0
      %1093 = vmatprep.subr.mxu0 0.0
      %1094 = vmatpush2.msra.mxu0 0.0
      %1095 = vmatprep.subr.mxu0 0.0
      %1096 = vmatpush2.msra.mxu0 0.0
      %1097 = vmatprep.subr.mxu0 0.0
      %1098 = vmatpush2.msra.mxu0 0.0
      %1099 = vmatprep.subr.mxu0 0.0
      %1100 = vmatpush2.msra.mxu0 0.0
      %1101 = vmatprep.subr.mxu0 0.0
      %1102 = vmatpush2.msra.mxu0 0.0
      %1103 = vmatprep.subr.mxu0 0.0
      %1104 = vmatpush2.msra.mxu0 0.0
      %1105 = vmatprep.subr.mxu0 0.0
      %1106 = vmatpush2.msra.mxu0 0.0
      %1107 = vmatprep.subr.mxu0 0.0
      %1108 = vmatpush2.msra.mxu0 0.0
      %1109 = vmatprep.subr.mxu0 0.0
      %1110 = vmatpush2.msra.mxu0 0.0
      %1111 = vmatprep.subr.mxu0 0.0
      %1112 = vmatpush2.msra.mxu0 0.0
      %1113 = vmatprep.subr.mxu0 0.0
      %1114 = vmatpush2.msra.mxu0 0.0
      %1115 = vmatprep.subr.mxu0 0.0
      %1116 = vmatpush2.msra.mxu0 0.0
      %1117 = vmatprep.subr.mxu0 0.0
      %1118 = vmatpush2.msra.mxu0 0.0
      %1119 = vmatprep.mubr.f32.mxu0 0.0
      %1120 = vmatmul.mubr.f32.gmra.mxu0 %v1050
      %v1121 = vpop.f32.mrf.mxu0
      %v1122 = vadd.f32 0.0, %v1121
      %v1123 = vpop.f32.mrf.mxu0
      %1124 = vmatprep.mubr.f32.mxu0 0.0
      %1125 = vmatmul.mubr.f32.gmra.mxu0 %v1053
      %v1126 = vpop.f32.mrf.mxu0
      %v1127 = vadd.f32 0.0, %v1126
      %v1128 = vpop.f32.mrf.mxu0
      %1129 = vdwg.mxu0
      %v1131 = vsel %vm693, %v677, 0
      %v1134 = vsel %vm693, %v678, 0
      %1136 = vmatprep.subr.mxu0 0.0
      %1137 = vmatpush1.msra.mxu0 0.0
      %1138 = vmatprep.subr.mxu0 0.0
      %1139 = vmatpush1.msra.mxu0 0.0
      %1140 = vmatprep.subr.mxu0 0.0
      %1141 = vmatpush1.msra.mxu0 0.0
      %1142 = vmatprep.subr.mxu0 0.0
      %1143 = vmatpush1.msra.mxu0 0.0
      %1144 = vmatprep.subr.mxu0 0.0
      %1145 = vmatpush1.msra.mxu0 0.0
      %1146 = vmatprep.subr.mxu0 0.0
      %1147 = vmatpush1.msra.mxu0 0.0
      %1148 = vmatprep.subr.mxu0 0.0
      %1149 = vmatpush1.msra.mxu0 0.0
      %1150 = vmatprep.subr.mxu0 0.0
      %1151 = vmatpush1.msra.mxu0 0.0
      %1152 = vmatprep.subr.mxu0 0.0
      %1153 = vmatpush1.msra.mxu0 0.0
      %1154 = vmatprep.subr.mxu0 0.0
      %1155 = vmatpush1.msra.mxu0 0.0
      %1156 = vmatprep.subr.mxu0 0.0
      %1157 = vmatpush1.msra.mxu0 0.0
      %1158 = vmatprep.subr.mxu0 0.0
      %1159 = vmatpush1.msra.mxu0 0.0
      %1160 = vmatprep.subr.mxu0 0.0
      %1161 = vmatpush1.msra.mxu0 0.0
      %1162 = vmatprep.subr.mxu0 0.0
      %1163 = vmatpush1.msra.mxu0 0.0
      %1164 = vmatprep.subr.mxu0 0.0
      %1165 = vmatpush1.msra.mxu0 %v886
      %1166 = vmatprep.subr.mxu0 0.0
      %1167 = vmatpush1.msra.mxu0 %v885
      %1168 = vmatprep.subr.mxu0 0.0
      %1169 = vmatpush2.msra.mxu0 0.0
      %1170 = vmatprep.subr.mxu0 0.0
      %1171 = vmatpush2.msra.mxu0 0.0
      %1172 = vmatprep.subr.mxu0 0.0
      %1173 = vmatpush2.msra.mxu0 0.0
      %1174 = vmatprep.subr.mxu0 0.0
      %1175 = vmatpush2.msra.mxu0 0.0
      %1176 = vmatprep.subr.mxu0 0.0
      %1177 = vmatpush2.msra.mxu0 0.0
      %1178 = vmatprep.subr.mxu0 0.0
      %1179 = vmatpush2.msra.mxu0 0.0
      %1180 = vmatprep.subr.mxu0 0.0
      %1181 = vmatpush2.msra.mxu0 0.0
      %1182 = vmatprep.subr.mxu0 0.0
      %1183 = vmatpush2.msra.mxu0 0.0
      %1184 = vmatprep.subr.mxu0 0.0
      %1185 = vmatpush2.msra.mxu0 0.0
      %1186 = vmatprep.subr.mxu0 0.0
      %1187 = vmatpush2.msra.mxu0 0.0
      %1188 = vmatprep.subr.mxu0 0.0
      %1189 = vmatpush2.msra.mxu0 0.0
      %1190 = vmatprep.subr.mxu0 0.0
      %1191 = vmatpush2.msra.mxu0 0.0
      %1192 = vmatprep.subr.mxu0 0.0
      %1193 = vmatpush2.msra.mxu0 0.0
      %1194 = vmatprep.subr.mxu0 0.0
      %1195 = vmatpush2.msra.mxu0 0.0
      %1196 = vmatprep.subr.mxu0 0.0
      %1197 = vmatpush2.msra.mxu0 0.0
      %1198 = vmatprep.subr.mxu0 0.0
      %1199 = vmatpush2.msra.mxu0 0.0
      %1200 = vmatprep.mubr.f32.mxu0 0.0
      %1201 = vmatmul.mubr.f32.gmra.mxu0 %v1131
      %v1202 = vpop.f32.mrf.mxu0
      %v1203 = vadd.f32 0.0, %v1202
      %v1204 = vpop.f32.mrf.mxu0
      %1205 = vmatprep.mubr.f32.mxu0 0.0
      %1206 = vmatmul.mubr.f32.gmra.mxu0 %v1134
      %v1207 = vpop.f32.mrf.mxu0
      %v1208 = vadd.f32 0.0, %v1207
      %v1209 = vpop.f32.mrf.mxu0
      %1210 = vdwg.mxu0
      %v1211 = vmul.f32 %v742, %v960
      %v1212 = vmul.f32 %v743, %v965
      %v1213 = vmul.f32 %v744, %v1041
      %v1214 = vmul.f32 %v745, %v1046
      %v1215 = vmul.f32 %v746, %v1122
      %v1216 = vmul.f32 %v747, %v1127
      %v1217 = vmul.f32 %v748, %v1203
      %v1218 = vmul.f32 %v749, %v1208
      %v1219 = vmul.f32 %v742, %v742
      %v1220 = vmul.f32 %v743, %v743
      %v1221 = vmul.f32 %v744, %v744
      %v1222 = vmul.f32 %v745, %v745
      %v1223 = vmul.f32 %v746, %v746
      %v1224 = vmul.f32 %v747, %v747
      %v1225 = vmul.f32 %v748, %v748
      %v1226 = vmul.f32 %v749, %v749
      %v1227 = vmul.f32 %v1219, %v841
      %v1228 = vmul.f32 %v1220, %v846
      %v1229 = vmul.f32 %v1221, %v851
      %v1230 = vmul.f32 %v1222, %v856
      %v1231 = vmul.f32 %v1223, %v861
      %v1232 = vmul.f32 %v1224, %v866
      %v1233 = vmul.f32 %v1225, %v871
      %v1234 = vmul.f32 %v1226, %v876
      %v1235 = vadd.f32 %v1211, %v1227
      %v1236 = vadd.f32 %v1212, %v1228
      %v1237 = vadd.f32 %v1213, %v1229
      %v1238 = vadd.f32 %v1214, %v1230
      %v1239 = vadd.f32 %v1215, %v1231
      %v1240 = vadd.f32 %v1216, %v1232
      %v1241 = vadd.f32 %v1217, %v1233
      %v1242 = vadd.f32 %v1218, %v1234
      %v1244 = vlaneseq
      %v1245 = vshrl.u32 %v1244, 7
      %v1246 = vsub.s32 0, %v1245
      %v1247 = vrot.slane %v691, %v1246
      %v1249 = vadd.f32 %v1235, %v1247
      %v1250 = vadd.f32 %v1236, %v1247
      %v1251 = vadd.f32 %v1237, %v1247
      %v1252 = vadd.f32 %v1238, %v1247
      %v1253 = vadd.f32 %v1239, %v1247
      %v1254 = vadd.f32 %v1240, %v1247
      %v1255 = vadd.f32 %v1241, %v1247
      %v1256 = vadd.f32 %v1242, %v1247
      %v1257 = vmax.f32 %v1249, 0.0
      %v1258 = vmax.f32 %v1250, 0.0
      %v1259 = vmax.f32 %v1251, 0.0
      %v1260 = vmax.f32 %v1252, 0.0
      %v1261 = vmax.f32 %v1253, 0.0
      %v1262 = vmax.f32 %v1254, 0.0
      %v1263 = vmax.f32 %v1255, 0.0
      %v1264 = vmax.f32 %v1256, 0.0
      %v1266 = vlaneseq
      %v1267 = vshrl.u32 %v1266, 7
      %v1268 = vsub.s32 0, %v1267
      %v1269 = vrot.slane %v692, %v1268
      %v1271 = vmul.f32 %v1257, %v1269
      %v1272 = vmul.f32 %v1258, %v1269
      %v1273 = vmul.f32 %v1259, %v1269
      %v1274 = vmul.f32 %v1260, %v1269
      %v1275 = vmul.f32 %v1261, %v1269
      %v1276 = vmul.f32 %v1262, %v1269
      %v1277 = vmul.f32 %v1263, %v1269
      %v1278 = vmul.f32 %v1264, %v1269
      %vm1279 = vcmask 261120
      %v1280 = vsel %vm1279, %v1271, 0.0
      %1281 = vadd.xlane.f32.xlu0 %v1280
      %v1282 = vpop.xlane.xlu0 %1281
      %v1283 = vsel %vm1279, %v1272, 0.0
      %1284 = vadd.xlane.f32.xlu0 %v1283
      %v1285 = vpop.xlane.xlu0 %1284
      %v1286 = vsel %vm1279, %v1273, 0.0
      %1287 = vadd.xlane.f32.xlu0 %v1286
      %v1288 = vpop.xlane.xlu0 %1287
      %v1289 = vsel %vm1279, %v1274, 0.0
      %1290 = vadd.xlane.f32.xlu0 %v1289
      %v1291 = vpop.xlane.xlu0 %1290
      %v1292 = vsel %vm1279, %v1275, 0.0
      %1293 = vadd.xlane.f32.xlu0 %v1292
      %v1294 = vpop.xlane.xlu0 %1293
      %v1295 = vsel %vm1279, %v1276, 0.0
      %1296 = vadd.xlane.f32.xlu0 %v1295
      %v1297 = vpop.xlane.xlu0 %1296
      %v1298 = vsel %vm1279, %v1277, 0.0
      %1299 = vadd.xlane.f32.xlu0 %v1298
      %v1300 = vpop.xlane.xlu0 %1299
      %v1301 = vsel %vm1279, %v1278, 0.0
      %1302 = vadd.xlane.f32.xlu0 %v1301
      %v1303 = vpop.xlane.xlu0 %1302
      %vm1304 = vcmp.gt.f32.partialorder 1.0, 0.0
      %v1305 = vsel %vm1304, %v1282, -1e+30
      %v1306 = vsel %vm1304, %v1285, -1e+30
      %v1307 = vsel %vm1304, %v1288, -1e+30
      %v1308 = vsel %vm1304, %v1291, -1e+30
      %v1309 = vsel %vm1304, %v1294, -1e+30
      %v1310 = vsel %vm1304, %v1297, -1e+30
      %v1311 = vsel %vm1304, %v1300, -1e+30
      %v1312 = vsel %vm1304, %v1303, -1e+30
      %v1321 = vlaneseq
      %v1322 = vshrl.u32 %v1321, 7
      %v1323 = vsub.s32 0, %v1322
      %v1324 = vrot.slane %v1305, %v1323
      %v1325 = vlaneseq
      %v1326 = vshrl.u32 %v1325, 7
      %v1327 = vsub.s32 1, %v1326
      %v1328 = vrot.slane %v1305, %v1327
      %v1329 = vlaneseq
      %v1330 = vshrl.u32 %v1329, 7
      %v1331 = vsub.s32 2, %v1330
      %v1332 = vrot.slane %v1305, %v1331
      %v1333 = vlaneseq
      %v1334 = vshrl.u32 %v1333, 7
      %v1335 = vsub.s32 3, %v1334
      %v1336 = vrot.slane %v1305, %v1335
      %v1337 = vlaneseq
      %v1338 = vshrl.u32 %v1337, 7
      %v1339 = vsub.s32 4, %v1338
      %v1340 = vrot.slane %v1305, %v1339
      %v1341 = vlaneseq
      %v1342 = vshrl.u32 %v1341, 7
      %v1343 = vsub.s32 5, %v1342
      %v1344 = vrot.slane %v1305, %v1343
      %v1345 = vlaneseq
      %v1346 = vshrl.u32 %v1345, 7
      %v1347 = vsub.s32 6, %v1346
      %v1348 = vrot.slane %v1305, %v1347
      %v1349 = vlaneseq
      %v1350 = vshrl.u32 %v1349, 7
      %v1351 = vsub.s32 7, %v1350
      %v1352 = vrot.slane %v1305, %v1351
      %v1353 = vlaneseq
      %v1354 = vshrl.u32 %v1353, 7
      %v1355 = vsub.s32 0, %v1354
      %v1356 = vrot.slane %v1306, %v1355
      %v1357 = vlaneseq
      %v1358 = vshrl.u32 %v1357, 7
      %v1359 = vsub.s32 1, %v1358
      %v1360 = vrot.slane %v1306, %v1359
      %v1361 = vlaneseq
      %v1362 = vshrl.u32 %v1361, 7
      %v1363 = vsub.s32 2, %v1362
      %v1364 = vrot.slane %v1306, %v1363
      %v1365 = vlaneseq
      %v1366 = vshrl.u32 %v1365, 7
      %v1367 = vsub.s32 3, %v1366
      %v1368 = vrot.slane %v1306, %v1367
      %v1369 = vlaneseq
      %v1370 = vshrl.u32 %v1369, 7
      %v1371 = vsub.s32 4, %v1370
      %v1372 = vrot.slane %v1306, %v1371
      %v1373 = vlaneseq
      %v1374 = vshrl.u32 %v1373, 7
      %v1375 = vsub.s32 5, %v1374
      %v1376 = vrot.slane %v1306, %v1375
      %v1377 = vlaneseq
      %v1378 = vshrl.u32 %v1377, 7
      %v1379 = vsub.s32 6, %v1378
      %v1380 = vrot.slane %v1306, %v1379
      %v1381 = vlaneseq
      %v1382 = vshrl.u32 %v1381, 7
      %v1383 = vsub.s32 7, %v1382
      %v1384 = vrot.slane %v1306, %v1383
      %v1385 = vlaneseq
      %v1386 = vshrl.u32 %v1385, 7
      %v1387 = vsub.s32 0, %v1386
      %v1388 = vrot.slane %v1307, %v1387
      %v1389 = vlaneseq
      %v1390 = vshrl.u32 %v1389, 7
      %v1391 = vsub.s32 1, %v1390
      %v1392 = vrot.slane %v1307, %v1391
      %v1393 = vlaneseq
      %v1394 = vshrl.u32 %v1393, 7
      %v1395 = vsub.s32 2, %v1394
      %v1396 = vrot.slane %v1307, %v1395
      %v1397 = vlaneseq
      %v1398 = vshrl.u32 %v1397, 7
      %v1399 = vsub.s32 3, %v1398
      %v1400 = vrot.slane %v1307, %v1399
      %v1401 = vlaneseq
      %v1402 = vshrl.u32 %v1401, 7
      %v1403 = vsub.s32 4, %v1402
      %v1404 = vrot.slane %v1307, %v1403
      %v1405 = vlaneseq
      %v1406 = vshrl.u32 %v1405, 7
      %v1407 = vsub.s32 5, %v1406
      %v1408 = vrot.slane %v1307, %v1407
      %v1409 = vlaneseq
      %v1410 = vshrl.u32 %v1409, 7
      %v1411 = vsub.s32 6, %v1410
      %v1412 = vrot.slane %v1307, %v1411
      %v1413 = vlaneseq
      %v1414 = vshrl.u32 %v1413, 7
      %v1415 = vsub.s32 7, %v1414
      %v1416 = vrot.slane %v1307, %v1415
      %v1417 = vlaneseq
      %v1418 = vshrl.u32 %v1417, 7
      %v1419 = vsub.s32 0, %v1418
      %v1420 = vrot.slane %v1308, %v1419
      %v1421 = vlaneseq
      %v1422 = vshrl.u32 %v1421, 7
      %v1423 = vsub.s32 1, %v1422
      %v1424 = vrot.slane %v1308, %v1423
      %v1425 = vlaneseq
      %v1426 = vshrl.u32 %v1425, 7
      %v1427 = vsub.s32 2, %v1426
      %v1428 = vrot.slane %v1308, %v1427
      %v1429 = vlaneseq
      %v1430 = vshrl.u32 %v1429, 7
      %v1431 = vsub.s32 3, %v1430
      %v1432 = vrot.slane %v1308, %v1431
      %v1433 = vlaneseq
      %v1434 = vshrl.u32 %v1433, 7
      %v1435 = vsub.s32 4, %v1434
      %v1436 = vrot.slane %v1308, %v1435
      %v1437 = vlaneseq
      %v1438 = vshrl.u32 %v1437, 7
      %v1439 = vsub.s32 5, %v1438
      %v1440 = vrot.slane %v1308, %v1439
      %v1441 = vlaneseq
      %v1442 = vshrl.u32 %v1441, 7
      %v1443 = vsub.s32 6, %v1442
      %v1444 = vrot.slane %v1308, %v1443
      %v1445 = vlaneseq
      %v1446 = vshrl.u32 %v1445, 7
      %v1447 = vsub.s32 7, %v1446
      %v1448 = vrot.slane %v1308, %v1447
      %v1449 = vlaneseq
      %v1450 = vshrl.u32 %v1449, 7
      %v1451 = vsub.s32 0, %v1450
      %v1452 = vrot.slane %v1309, %v1451
      %v1453 = vlaneseq
      %v1454 = vshrl.u32 %v1453, 7
      %v1455 = vsub.s32 1, %v1454
      %v1456 = vrot.slane %v1309, %v1455
      %v1457 = vlaneseq
      %v1458 = vshrl.u32 %v1457, 7
      %v1459 = vsub.s32 2, %v1458
      %v1460 = vrot.slane %v1309, %v1459
      %v1461 = vlaneseq
      %v1462 = vshrl.u32 %v1461, 7
      %v1463 = vsub.s32 3, %v1462
      %v1464 = vrot.slane %v1309, %v1463
      %v1465 = vlaneseq
      %v1466 = vshrl.u32 %v1465, 7
      %v1467 = vsub.s32 4, %v1466
      %v1468 = vrot.slane %v1309, %v1467
      %v1469 = vlaneseq
      %v1470 = vshrl.u32 %v1469, 7
      %v1471 = vsub.s32 5, %v1470
      %v1472 = vrot.slane %v1309, %v1471
      %v1473 = vlaneseq
      %v1474 = vshrl.u32 %v1473, 7
      %v1475 = vsub.s32 6, %v1474
      %v1476 = vrot.slane %v1309, %v1475
      %v1477 = vlaneseq
      %v1478 = vshrl.u32 %v1477, 7
      %v1479 = vsub.s32 7, %v1478
      %v1480 = vrot.slane %v1309, %v1479
      %v1481 = vlaneseq
      %v1482 = vshrl.u32 %v1481, 7
      %v1483 = vsub.s32 0, %v1482
      %v1484 = vrot.slane %v1310, %v1483
      %v1485 = vlaneseq
      %v1486 = vshrl.u32 %v1485, 7
      %v1487 = vsub.s32 1, %v1486
      %v1488 = vrot.slane %v1310, %v1487
      %v1489 = vlaneseq
      %v1490 = vshrl.u32 %v1489, 7
      %v1491 = vsub.s32 2, %v1490
      %v1492 = vrot.slane %v1310, %v1491
      %v1493 = vlaneseq
      %v1494 = vshrl.u32 %v1493, 7
      %v1495 = vsub.s32 3, %v1494
      %v1496 = vrot.slane %v1310, %v1495
      %v1497 = vlaneseq
      %v1498 = vshrl.u32 %v1497, 7
      %v1499 = vsub.s32 4, %v1498
      %v1500 = vrot.slane %v1310, %v1499
      %v1501 = vlaneseq
      %v1502 = vshrl.u32 %v1501, 7
      %v1503 = vsub.s32 5, %v1502
      %v1504 = vrot.slane %v1310, %v1503
      %v1505 = vlaneseq
      %v1506 = vshrl.u32 %v1505, 7
      %v1507 = vsub.s32 6, %v1506
      %v1508 = vrot.slane %v1310, %v1507
      %v1509 = vlaneseq
      %v1510 = vshrl.u32 %v1509, 7
      %v1511 = vsub.s32 7, %v1510
      %v1512 = vrot.slane %v1310, %v1511
      %v1513 = vlaneseq
      %v1514 = vshrl.u32 %v1513, 7
      %v1515 = vsub.s32 0, %v1514
      %v1516 = vrot.slane %v1311, %v1515
      %v1517 = vlaneseq
      %v1518 = vshrl.u32 %v1517, 7
      %v1519 = vsub.s32 1, %v1518
      %v1520 = vrot.slane %v1311, %v1519
      %v1521 = vlaneseq
      %v1522 = vshrl.u32 %v1521, 7
      %v1523 = vsub.s32 2, %v1522
      %v1524 = vrot.slane %v1311, %v1523
      %v1525 = vlaneseq
      %v1526 = vshrl.u32 %v1525, 7
      %v1527 = vsub.s32 3, %v1526
      %v1528 = vrot.slane %v1311, %v1527
      %v1529 = vlaneseq
      %v1530 = vshrl.u32 %v1529, 7
      %v1531 = vsub.s32 4, %v1530
      %v1532 = vrot.slane %v1311, %v1531
      %v1533 = vlaneseq
      %v1534 = vshrl.u32 %v1533, 7
      %v1535 = vsub.s32 5, %v1534
      %v1536 = vrot.slane %v1311, %v1535
      %v1537 = vlaneseq
      %v1538 = vshrl.u32 %v1537, 7
      %v1539 = vsub.s32 6, %v1538
      %v1540 = vrot.slane %v1311, %v1539
      %v1541 = vlaneseq
      %v1542 = vshrl.u32 %v1541, 7
      %v1543 = vsub.s32 7, %v1542
      %v1544 = vrot.slane %v1311, %v1543
      %v1545 = vlaneseq
      %v1546 = vshrl.u32 %v1545, 7
      %v1547 = vsub.s32 0, %v1546
      %v1548 = vrot.slane %v1312, %v1547
      %v1549 = vlaneseq
      %v1550 = vshrl.u32 %v1549, 7
      %v1551 = vsub.s32 1, %v1550
      %v1552 = vrot.slane %v1312, %v1551
      %v1553 = vlaneseq
      %v1554 = vshrl.u32 %v1553, 7
      %v1555 = vsub.s32 2, %v1554
      %v1556 = vrot.slane %v1312, %v1555
      %v1557 = vlaneseq
      %v1558 = vshrl.u32 %v1557, 7
      %v1559 = vsub.s32 3, %v1558
      %v1560 = vrot.slane %v1312, %v1559
      %v1561 = vlaneseq
      %v1562 = vshrl.u32 %v1561, 7
      %v1563 = vsub.s32 4, %v1562
      %v1564 = vrot.slane %v1312, %v1563
      %v1565 = vlaneseq
      %v1566 = vshrl.u32 %v1565, 7
      %v1567 = vsub.s32 5, %v1566
      %v1568 = vrot.slane %v1312, %v1567
      %v1569 = vlaneseq
      %v1570 = vshrl.u32 %v1569, 7
      %v1571 = vsub.s32 6, %v1570
      %v1572 = vrot.slane %v1312, %v1571
      %v1573 = vlaneseq
      %v1574 = vshrl.u32 %v1573, 7
      %v1575 = vsub.s32 7, %v1574
      %v1576 = vrot.slane %v1312, %v1575
      %vm1641 = vcmp.gt.f32.partialorder %v1305, %v1324
      %vm1642 = vcmp.gt.f32.partialorder %v1306, %v1324
      %vm1643 = vcmp.gt.f32.partialorder %v1305, %v1328
      %vm1644 = vcmp.gt.f32.partialorder %v1306, %v1328
      %vm1645 = vcmp.gt.f32.partialorder %v1305, %v1332
      %vm1646 = vcmp.gt.f32.partialorder %v1306, %v1332
      %vm1647 = vcmp.gt.f32.partialorder %v1305, %v1336
      %vm1648 = vcmp.gt.f32.partialorder %v1306, %v1336
      %vm1649 = vcmp.gt.f32.partialorder %v1305, %v1340
      %vm1650 = vcmp.gt.f32.partialorder %v1306, %v1340
      %vm1651 = vcmp.gt.f32.partialorder %v1305, %v1344
      %vm1652 = vcmp.gt.f32.partialorder %v1306, %v1344
      %vm1653 = vcmp.gt.f32.partialorder %v1305, %v1348
      %vm1654 = vcmp.gt.f32.partialorder %v1306, %v1348
      %vm1655 = vcmp.gt.f32.partialorder %v1305, %v1352
      %vm1656 = vcmp.gt.f32.partialorder %v1306, %v1352
      %vm1657 = vcmp.gt.f32.partialorder %v1305, %v1356
      %vm1658 = vcmp.gt.f32.partialorder %v1306, %v1356
      %vm1659 = vcmp.gt.f32.partialorder %v1305, %v1360
      %vm1660 = vcmp.gt.f32.partialorder %v1306, %v1360
      %vm1661 = vcmp.gt.f32.partialorder %v1305, %v1364
      %vm1662 = vcmp.gt.f32.partialorder %v1306, %v1364
      %vm1663 = vcmp.gt.f32.partialorder %v1305, %v1368
      %vm1664 = vcmp.gt.f32.partialorder %v1306, %v1368
      %vm1665 = vcmp.gt.f32.partialorder %v1305, %v1372
      %vm1666 = vcmp.gt.f32.partialorder %v1306, %v1372
      %vm1667 = vcmp.gt.f32.partialorder %v1305, %v1376
      %vm1668 = vcmp.gt.f32.partialorder %v1306, %v1376
      %vm1669 = vcmp.gt.f32.partialorder %v1305, %v1380
      %vm1670 = vcmp.gt.f32.partialorder %v1306, %v1380
      %vm1671 = vcmp.gt.f32.partialorder %v1305, %v1384
      %vm1672 = vcmp.gt.f32.partialorder %v1306, %v1384
      %vm1673 = vcmp.gt.f32.partialorder %v1307, %v1388
      %vm1674 = vcmp.gt.f32.partialorder %v1308, %v1388
      %vm1675 = vcmp.gt.f32.partialorder %v1307, %v1392
      %vm1676 = vcmp.gt.f32.partialorder %v1308, %v1392
      %vm1677 = vcmp.gt.f32.partialorder %v1307, %v1396
      %vm1678 = vcmp.gt.f32.partialorder %v1308, %v1396
      %vm1679 = vcmp.gt.f32.partialorder %v1307, %v1400
      %vm1680 = vcmp.gt.f32.partialorder %v1308, %v1400
      %vm1681 = vcmp.gt.f32.partialorder %v1307, %v1404
      %vm1682 = vcmp.gt.f32.partialorder %v1308, %v1404
      %vm1683 = vcmp.gt.f32.partialorder %v1307, %v1408
      %vm1684 = vcmp.gt.f32.partialorder %v1308, %v1408
      %vm1685 = vcmp.gt.f32.partialorder %v1307, %v1412
      %vm1686 = vcmp.gt.f32.partialorder %v1308, %v1412
      %vm1687 = vcmp.gt.f32.partialorder %v1307, %v1416
      %vm1688 = vcmp.gt.f32.partialorder %v1308, %v1416
      %vm1689 = vcmp.gt.f32.partialorder %v1307, %v1420
      %vm1690 = vcmp.gt.f32.partialorder %v1308, %v1420
      %vm1691 = vcmp.gt.f32.partialorder %v1307, %v1424
      %vm1692 = vcmp.gt.f32.partialorder %v1308, %v1424
      %vm1693 = vcmp.gt.f32.partialorder %v1307, %v1428
      %vm1694 = vcmp.gt.f32.partialorder %v1308, %v1428
      %vm1695 = vcmp.gt.f32.partialorder %v1307, %v1432
      %vm1696 = vcmp.gt.f32.partialorder %v1308, %v1432
      %vm1697 = vcmp.gt.f32.partialorder %v1307, %v1436
      %vm1698 = vcmp.gt.f32.partialorder %v1308, %v1436
      %vm1699 = vcmp.gt.f32.partialorder %v1307, %v1440
      %vm1700 = vcmp.gt.f32.partialorder %v1308, %v1440
      %vm1701 = vcmp.gt.f32.partialorder %v1307, %v1444
      %vm1702 = vcmp.gt.f32.partialorder %v1308, %v1444
      %vm1703 = vcmp.gt.f32.partialorder %v1307, %v1448
      %vm1704 = vcmp.gt.f32.partialorder %v1308, %v1448
      %vm1705 = vcmp.gt.f32.partialorder %v1309, %v1452
      %vm1706 = vcmp.gt.f32.partialorder %v1310, %v1452
      %vm1707 = vcmp.gt.f32.partialorder %v1309, %v1456
      %vm1708 = vcmp.gt.f32.partialorder %v1310, %v1456
      %vm1709 = vcmp.gt.f32.partialorder %v1309, %v1460
      %vm1710 = vcmp.gt.f32.partialorder %v1310, %v1460
      %vm1711 = vcmp.gt.f32.partialorder %v1309, %v1464
      %vm1712 = vcmp.gt.f32.partialorder %v1310, %v1464
      %vm1713 = vcmp.gt.f32.partialorder %v1309, %v1468
      %vm1714 = vcmp.gt.f32.partialorder %v1310, %v1468
      %vm1715 = vcmp.gt.f32.partialorder %v1309, %v1472
      %vm1716 = vcmp.gt.f32.partialorder %v1310, %v1472
      %vm1717 = vcmp.gt.f32.partialorder %v1309, %v1476
      %vm1718 = vcmp.gt.f32.partialorder %v1310, %v1476
      %vm1719 = vcmp.gt.f32.partialorder %v1309, %v1480
      %vm1720 = vcmp.gt.f32.partialorder %v1310, %v1480
      %vm1721 = vcmp.gt.f32.partialorder %v1309, %v1484
      %vm1722 = vcmp.gt.f32.partialorder %v1310, %v1484
      %vm1723 = vcmp.gt.f32.partialorder %v1309, %v1488
      %vm1724 = vcmp.gt.f32.partialorder %v1310, %v1488
      %vm1725 = vcmp.gt.f32.partialorder %v1309, %v1492
      %vm1726 = vcmp.gt.f32.partialorder %v1310, %v1492
      %vm1727 = vcmp.gt.f32.partialorder %v1309, %v1496
      %vm1728 = vcmp.gt.f32.partialorder %v1310, %v1496
      %vm1729 = vcmp.gt.f32.partialorder %v1309, %v1500
      %vm1730 = vcmp.gt.f32.partialorder %v1310, %v1500
      %vm1731 = vcmp.gt.f32.partialorder %v1309, %v1504
      %vm1732 = vcmp.gt.f32.partialorder %v1310, %v1504
      %vm1733 = vcmp.gt.f32.partialorder %v1309, %v1508
      %vm1734 = vcmp.gt.f32.partialorder %v1310, %v1508
      %vm1735 = vcmp.gt.f32.partialorder %v1309, %v1512
      %vm1736 = vcmp.gt.f32.partialorder %v1310, %v1512
      %vm1737 = vcmp.gt.f32.partialorder %v1311, %v1516
      %vm1738 = vcmp.gt.f32.partialorder %v1312, %v1516
      %vm1739 = vcmp.gt.f32.partialorder %v1311, %v1520
      %vm1740 = vcmp.gt.f32.partialorder %v1312, %v1520
      %vm1741 = vcmp.gt.f32.partialorder %v1311, %v1524
      %vm1742 = vcmp.gt.f32.partialorder %v1312, %v1524
      %vm1743 = vcmp.gt.f32.partialorder %v1311, %v1528
      %vm1744 = vcmp.gt.f32.partialorder %v1312, %v1528
      %vm1745 = vcmp.gt.f32.partialorder %v1311, %v1532
      %vm1746 = vcmp.gt.f32.partialorder %v1312, %v1532
      %vm1747 = vcmp.gt.f32.partialorder %v1311, %v1536
      %vm1748 = vcmp.gt.f32.partialorder %v1312, %v1536
      %vm1749 = vcmp.gt.f32.partialorder %v1311, %v1540
      %vm1750 = vcmp.gt.f32.partialorder %v1312, %v1540
      %vm1751 = vcmp.gt.f32.partialorder %v1311, %v1544
      %vm1752 = vcmp.gt.f32.partialorder %v1312, %v1544
      %vm1753 = vcmp.gt.f32.partialorder %v1311, %v1548
      %vm1754 = vcmp.gt.f32.partialorder %v1312, %v1548
      %vm1755 = vcmp.gt.f32.partialorder %v1311, %v1552
      %vm1756 = vcmp.gt.f32.partialorder %v1312, %v1552
      %vm1757 = vcmp.gt.f32.partialorder %v1311, %v1556
      %vm1758 = vcmp.gt.f32.partialorder %v1312, %v1556
      %vm1759 = vcmp.gt.f32.partialorder %v1311, %v1560
      %vm1760 = vcmp.gt.f32.partialorder %v1312, %v1560
      %vm1761 = vcmp.gt.f32.partialorder %v1311, %v1564
      %vm1762 = vcmp.gt.f32.partialorder %v1312, %v1564
      %vm1763 = vcmp.gt.f32.partialorder %v1311, %v1568
      %vm1764 = vcmp.gt.f32.partialorder %v1312, %v1568
      %vm1765 = vcmp.gt.f32.partialorder %v1311, %v1572
      %vm1766 = vcmp.gt.f32.partialorder %v1312, %v1572
      %vm1767 = vcmp.gt.f32.partialorder %v1311, %v1576
      %vm1768 = vcmp.gt.f32.partialorder %v1312, %v1576
      %vm1769 = vcmp.eq.f32.partialorder %v1305, %v1324
      %vm1770 = vcmp.eq.f32.partialorder %v1306, %v1324
      %vm1771 = vcmp.eq.f32.partialorder %v1305, %v1328
      %vm1772 = vcmp.eq.f32.partialorder %v1306, %v1328
      %vm1773 = vcmp.eq.f32.partialorder %v1305, %v1332
      %vm1774 = vcmp.eq.f32.partialorder %v1306, %v1332
      %vm1775 = vcmp.eq.f32.partialorder %v1305, %v1336
      %vm1776 = vcmp.eq.f32.partialorder %v1306, %v1336
      %vm1777 = vcmp.eq.f32.partialorder %v1305, %v1340
      %vm1778 = vcmp.eq.f32.partialorder %v1306, %v1340
      %vm1779 = vcmp.eq.f32.partialorder %v1305, %v1344
      %vm1780 = vcmp.eq.f32.partialorder %v1306, %v1344
      %vm1781 = vcmp.eq.f32.partialorder %v1305, %v1348
      %vm1782 = vcmp.eq.f32.partialorder %v1306, %v1348
      %vm1783 = vcmp.eq.f32.partialorder %v1305, %v1352
      %vm1784 = vcmp.eq.f32.partialorder %v1306, %v1352
      %vm1785 = vcmp.eq.f32.partialorder %v1305, %v1356
      %vm1786 = vcmp.eq.f32.partialorder %v1306, %v1356
      %vm1787 = vcmp.eq.f32.partialorder %v1305, %v1360
      %vm1788 = vcmp.eq.f32.partialorder %v1306, %v1360
      %vm1789 = vcmp.eq.f32.partialorder %v1305, %v1364
      %vm1790 = vcmp.eq.f32.partialorder %v1306, %v1364
      %vm1791 = vcmp.eq.f32.partialorder %v1305, %v1368
      %vm1792 = vcmp.eq.f32.partialorder %v1306, %v1368
      %vm1793 = vcmp.eq.f32.partialorder %v1305, %v1372
      %vm1794 = vcmp.eq.f32.partialorder %v1306, %v1372
      %vm1795 = vcmp.eq.f32.partialorder %v1305, %v1376
      %vm1796 = vcmp.eq.f32.partialorder %v1306, %v1376
      %vm1797 = vcmp.eq.f32.partialorder %v1305, %v1380
      %vm1798 = vcmp.eq.f32.partialorder %v1306, %v1380
      %vm1799 = vcmp.eq.f32.partialorder %v1305, %v1384
      %vm1800 = vcmp.eq.f32.partialorder %v1306, %v1384
      %vm1801 = vcmp.eq.f32.partialorder %v1307, %v1388
      %vm1802 = vcmp.eq.f32.partialorder %v1308, %v1388
      %vm1803 = vcmp.eq.f32.partialorder %v1307, %v1392
      %vm1804 = vcmp.eq.f32.partialorder %v1308, %v1392
      %vm1805 = vcmp.eq.f32.partialorder %v1307, %v1396
      %vm1806 = vcmp.eq.f32.partialorder %v1308, %v1396
      %vm1807 = vcmp.eq.f32.partialorder %v1307, %v1400
      %vm1808 = vcmp.eq.f32.partialorder %v1308, %v1400
      %vm1809 = vcmp.eq.f32.partialorder %v1307, %v1404
      %vm1810 = vcmp.eq.f32.partialorder %v1308, %v1404
      %vm1811 = vcmp.eq.f32.partialorder %v1307, %v1408
      %vm1812 = vcmp.eq.f32.partialorder %v1308, %v1408
      %vm1813 = vcmp.eq.f32.partialorder %v1307, %v1412
      %vm1814 = vcmp.eq.f32.partialorder %v1308, %v1412
      %vm1815 = vcmp.eq.f32.partialorder %v1307, %v1416
      %vm1816 = vcmp.eq.f32.partialorder %v1308, %v1416
      %vm1817 = vcmp.eq.f32.partialorder %v1307, %v1420
      %vm1818 = vcmp.eq.f32.partialorder %v1308, %v1420
      %vm1819 = vcmp.eq.f32.partialorder %v1307, %v1424
      %vm1820 = vcmp.eq.f32.partialorder %v1308, %v1424
      %vm1821 = vcmp.eq.f32.partialorder %v1307, %v1428
      %vm1822 = vcmp.eq.f32.partialorder %v1308, %v1428
      %vm1823 = vcmp.eq.f32.partialorder %v1307, %v1432
      %vm1824 = vcmp.eq.f32.partialorder %v1308, %v1432
      %vm1825 = vcmp.eq.f32.partialorder %v1307, %v1436
      %vm1826 = vcmp.eq.f32.partialorder %v1308, %v1436
      %vm1827 = vcmp.eq.f32.partialorder %v1307, %v1440
      %vm1828 = vcmp.eq.f32.partialorder %v1308, %v1440
      %vm1829 = vcmp.eq.f32.partialorder %v1307, %v1444
      %vm1830 = vcmp.eq.f32.partialorder %v1308, %v1444
      %vm1831 = vcmp.eq.f32.partialorder %v1307, %v1448
      %vm1832 = vcmp.eq.f32.partialorder %v1308, %v1448
      %vm1833 = vcmp.eq.f32.partialorder %v1309, %v1452
      %vm1834 = vcmp.eq.f32.partialorder %v1310, %v1452
      %vm1835 = vcmp.eq.f32.partialorder %v1309, %v1456
      %vm1836 = vcmp.eq.f32.partialorder %v1310, %v1456
      %vm1837 = vcmp.eq.f32.partialorder %v1309, %v1460
      %vm1838 = vcmp.eq.f32.partialorder %v1310, %v1460
      %vm1839 = vcmp.eq.f32.partialorder %v1309, %v1464
      %vm1840 = vcmp.eq.f32.partialorder %v1310, %v1464
      %vm1841 = vcmp.eq.f32.partialorder %v1309, %v1468
      %vm1842 = vcmp.eq.f32.partialorder %v1310, %v1468
      %vm1843 = vcmp.eq.f32.partialorder %v1309, %v1472
      %vm1844 = vcmp.eq.f32.partialorder %v1310, %v1472
      %vm1845 = vcmp.eq.f32.partialorder %v1309, %v1476
      %vm1846 = vcmp.eq.f32.partialorder %v1310, %v1476
      %vm1847 = vcmp.eq.f32.partialorder %v1309, %v1480
      %vm1848 = vcmp.eq.f32.partialorder %v1310, %v1480
      %vm1849 = vcmp.eq.f32.partialorder %v1309, %v1484
      %vm1850 = vcmp.eq.f32.partialorder %v1310, %v1484
      %vm1851 = vcmp.eq.f32.partialorder %v1309, %v1488
      %vm1852 = vcmp.eq.f32.partialorder %v1310, %v1488
      %vm1853 = vcmp.eq.f32.partialorder %v1309, %v1492
      %vm1854 = vcmp.eq.f32.partialorder %v1310, %v1492
      %vm1855 = vcmp.eq.f32.partialorder %v1309, %v1496
      %vm1856 = vcmp.eq.f32.partialorder %v1310, %v1496
      %vm1857 = vcmp.eq.f32.partialorder %v1309, %v1500
      %vm1858 = vcmp.eq.f32.partialorder %v1310, %v1500
      %vm1859 = vcmp.eq.f32.partialorder %v1309, %v1504
      %vm1860 = vcmp.eq.f32.partialorder %v1310, %v1504
      %vm1861 = vcmp.eq.f32.partialorder %v1309, %v1508
      %vm1862 = vcmp.eq.f32.partialorder %v1310, %v1508
      %vm1863 = vcmp.eq.f32.partialorder %v1309, %v1512
      %vm1864 = vcmp.eq.f32.partialorder %v1310, %v1512
      %vm1865 = vcmp.eq.f32.partialorder %v1311, %v1516
      %vm1866 = vcmp.eq.f32.partialorder %v1312, %v1516
      %vm1867 = vcmp.eq.f32.partialorder %v1311, %v1520
      %vm1868 = vcmp.eq.f32.partialorder %v1312, %v1520
      %vm1869 = vcmp.eq.f32.partialorder %v1311, %v1524
      %vm1870 = vcmp.eq.f32.partialorder %v1312, %v1524
      %vm1871 = vcmp.eq.f32.partialorder %v1311, %v1528
      %vm1872 = vcmp.eq.f32.partialorder %v1312, %v1528
      %vm1873 = vcmp.eq.f32.partialorder %v1311, %v1532
      %vm1874 = vcmp.eq.f32.partialorder %v1312, %v1532
      %vm1875 = vcmp.eq.f32.partialorder %v1311, %v1536
      %vm1876 = vcmp.eq.f32.partialorder %v1312, %v1536
      %vm1877 = vcmp.eq.f32.partialorder %v1311, %v1540
      %vm1878 = vcmp.eq.f32.partialorder %v1312, %v1540
      %vm1879 = vcmp.eq.f32.partialorder %v1311, %v1544
      %vm1880 = vcmp.eq.f32.partialorder %v1312, %v1544
      %vm1881 = vcmp.eq.f32.partialorder %v1311, %v1548
      %vm1882 = vcmp.eq.f32.partialorder %v1312, %v1548
      %vm1883 = vcmp.eq.f32.partialorder %v1311, %v1552
      %vm1884 = vcmp.eq.f32.partialorder %v1312, %v1552
      %vm1885 = vcmp.eq.f32.partialorder %v1311, %v1556
      %vm1886 = vcmp.eq.f32.partialorder %v1312, %v1556
      %vm1887 = vcmp.eq.f32.partialorder %v1311, %v1560
      %vm1888 = vcmp.eq.f32.partialorder %v1312, %v1560
      %vm1889 = vcmp.eq.f32.partialorder %v1311, %v1564
      %vm1890 = vcmp.eq.f32.partialorder %v1312, %v1564
      %vm1891 = vcmp.eq.f32.partialorder %v1311, %v1568
      %vm1892 = vcmp.eq.f32.partialorder %v1312, %v1568
      %vm1893 = vcmp.eq.f32.partialorder %v1311, %v1572
      %vm1894 = vcmp.eq.f32.partialorder %v1312, %v1572
      %vm1895 = vcmp.eq.f32.partialorder %v1311, %v1576
      %vm1896 = vcmp.eq.f32.partialorder %v1312, %v1576
      %v1899 = vlaneseq
      %v1900 = vshrl.u32 %v1899, 7
      %v1901 = vsub.s32 0, %v1900
      %v1902 = vrot.slane %v679, %v1901
      %1904 = vbcast.lane.b32.xlu0 %v1902, 256
      %v1905 = vpop.permute.xlu0 %1904
      %s1907 = sor.u32 256, 8
      %1908 = vbcast.lane.b32.xlu0 %v1902, %s1907
      %v1909 = vpop.permute.xlu0 %1908
      %v1910 = vlaneseq
      %v1911 = vshrl.u32 %v1910, 7
      %v1912 = vsub.s32 1, %v1911
      %v1913 = vrot.slane %v679, %v1912
      %1915 = vbcast.lane.b32.xlu0 %v1913, 256
      %v1916 = vpop.permute.xlu0 %1915
      %s1918 = sor.u32 256, 8
      %1919 = vbcast.lane.b32.xlu0 %v1913, %s1918
      %v1920 = vpop.permute.xlu0 %1919
      %v1921 = vlaneseq
      %v1922 = vshrl.u32 %v1921, 7
      %v1923 = vsub.s32 2, %v1922
      %v1924 = vrot.slane %v679, %v1923
      %1926 = vbcast.lane.b32.xlu0 %v1924, 256
      %v1927 = vpop.permute.xlu0 %1926
      %s1929 = sor.u32 256, 8
      %1930 = vbcast.lane.b32.xlu0 %v1924, %s1929
      %v1931 = vpop.permute.xlu0 %1930
      %v1932 = vlaneseq
      %v1933 = vshrl.u32 %v1932, 7
      %v1934 = vsub.s32 3, %v1933
      %v1935 = vrot.slane %v679, %v1934
      %1937 = vbcast.lane.b32.xlu0 %v1935, 256
      %v1938 = vpop.permute.xlu0 %1937
      %s1940 = sor.u32 256, 8
      %1941 = vbcast.lane.b32.xlu0 %v1935, %s1940
      %v1942 = vpop.permute.xlu0 %1941
      %v1943 = vlaneseq
      %v1944 = vshrl.u32 %v1943, 7
      %v1945 = vsub.s32 4, %v1944
      %v1946 = vrot.slane %v679, %v1945
      %1948 = vbcast.lane.b32.xlu0 %v1946, 256
      %v1949 = vpop.permute.xlu0 %1948
      %s1951 = sor.u32 256, 8
      %1952 = vbcast.lane.b32.xlu0 %v1946, %s1951
      %v1953 = vpop.permute.xlu0 %1952
      %v1954 = vlaneseq
      %v1955 = vshrl.u32 %v1954, 7
      %v1956 = vsub.s32 5, %v1955
      %v1957 = vrot.slane %v679, %v1956
      %1959 = vbcast.lane.b32.xlu0 %v1957, 256
      %v1960 = vpop.permute.xlu0 %1959
      %s1962 = sor.u32 256, 8
      %1963 = vbcast.lane.b32.xlu0 %v1957, %s1962
      %v1964 = vpop.permute.xlu0 %1963
      %v1965 = vlaneseq
      %v1966 = vshrl.u32 %v1965, 7
      %v1967 = vsub.s32 6, %v1966
      %v1968 = vrot.slane %v679, %v1967
      %1970 = vbcast.lane.b32.xlu0 %v1968, 256
      %v1971 = vpop.permute.xlu0 %1970
      %s1973 = sor.u32 256, 8
      %1974 = vbcast.lane.b32.xlu0 %v1968, %s1973
      %v1975 = vpop.permute.xlu0 %1974
      %v1976 = vlaneseq
      %v1977 = vshrl.u32 %v1976, 7
      %v1978 = vsub.s32 7, %v1977
      %v1979 = vrot.slane %v679, %v1978
      %1981 = vbcast.lane.b32.xlu0 %v1979, 256
      %v1982 = vpop.permute.xlu0 %1981
      %s1984 = sor.u32 256, 8
      %1985 = vbcast.lane.b32.xlu0 %v1979, %s1984
      %v1986 = vpop.permute.xlu0 %1985
      %v1987 = vlaneseq
      %v1988 = vshrl.u32 %v1987, 7
      %v1989 = vsub.s32 0, %v1988
      %v1990 = vrot.slane %v680, %v1989
      %1992 = vbcast.lane.b32.xlu0 %v1990, 256
      %v1993 = vpop.permute.xlu0 %1992
      %s1995 = sor.u32 256, 8
      %1996 = vbcast.lane.b32.xlu0 %v1990, %s1995
      %v1997 = vpop.permute.xlu0 %1996
      %v1998 = vlaneseq
      %v1999 = vshrl.u32 %v1998, 7
      %v2000 = vsub.s32 1, %v1999
      %v2001 = vrot.slane %v680, %v2000
      %2003 = vbcast.lane.b32.xlu0 %v2001, 256
      %v2004 = vpop.permute.xlu0 %2003
      %s2006 = sor.u32 256, 8
      %2007 = vbcast.lane.b32.xlu0 %v2001, %s2006
      %v2008 = vpop.permute.xlu0 %2007
      %v2009 = vlaneseq
      %v2010 = vshrl.u32 %v2009, 7
      %v2011 = vsub.s32 2, %v2010
      %v2012 = vrot.slane %v680, %v2011
      %2014 = vbcast.lane.b32.xlu0 %v2012, 256
      %v2015 = vpop.permute.xlu0 %2014
      %s2017 = sor.u32 256, 8
      %2018 = vbcast.lane.b32.xlu0 %v2012, %s2017
      %v2019 = vpop.permute.xlu0 %2018
      %v2020 = vlaneseq
      %v2021 = vshrl.u32 %v2020, 7
      %v2022 = vsub.s32 3, %v2021
      %v2023 = vrot.slane %v680, %v2022
      %2025 = vbcast.lane.b32.xlu0 %v2023, 256
      %v2026 = vpop.permute.xlu0 %2025
      %s2028 = sor.u32 256, 8
      %2029 = vbcast.lane.b32.xlu0 %v2023, %s2028
      %v2030 = vpop.permute.xlu0 %2029
      %v2031 = vlaneseq
      %v2032 = vshrl.u32 %v2031, 7
      %v2033 = vsub.s32 4, %v2032
      %v2034 = vrot.slane %v680, %v2033
      %2036 = vbcast.lane.b32.xlu0 %v2034, 256
      %v2037 = vpop.permute.xlu0 %2036
      %s2039 = sor.u32 256, 8
      %2040 = vbcast.lane.b32.xlu0 %v2034, %s2039
      %v2041 = vpop.permute.xlu0 %2040
      %v2042 = vlaneseq
      %v2043 = vshrl.u32 %v2042, 7
      %v2044 = vsub.s32 5, %v2043
      %v2045 = vrot.slane %v680, %v2044
      %2047 = vbcast.lane.b32.xlu0 %v2045, 256
      %v2048 = vpop.permute.xlu0 %2047
      %s2050 = sor.u32 256, 8
      %2051 = vbcast.lane.b32.xlu0 %v2045, %s2050
      %v2052 = vpop.permute.xlu0 %2051
      %v2053 = vlaneseq
      %v2054 = vshrl.u32 %v2053, 7
      %v2055 = vsub.s32 6, %v2054
      %v2056 = vrot.slane %v680, %v2055
      %2058 = vbcast.lane.b32.xlu0 %v2056, 256
      %v2059 = vpop.permute.xlu0 %2058
      %s2061 = sor.u32 256, 8
      %2062 = vbcast.lane.b32.xlu0 %v2056, %s2061
      %v2063 = vpop.permute.xlu0 %2062
      %v2064 = vlaneseq
      %v2065 = vshrl.u32 %v2064, 7
      %v2066 = vsub.s32 7, %v2065
      %v2067 = vrot.slane %v680, %v2066
      %2069 = vbcast.lane.b32.xlu0 %v2067, 256
      %v2070 = vpop.permute.xlu0 %2069
      %s2072 = sor.u32 256, 8
      %2073 = vbcast.lane.b32.xlu0 %v2067, %s2072
      %v2074 = vpop.permute.xlu0 %2073
      %v2107 = vsel %vm1769, %v1905, 0.0
      %v2108 = vsel %vm1770, %v1909, 0.0
      %v2109 = vsel %vm1771, %v1916, 0.0
      %v2110 = vsel %vm1772, %v1920, 0.0
      %v2111 = vsel %vm1773, %v1927, 0.0
      %v2112 = vsel %vm1774, %v1931, 0.0
      %v2113 = vsel %vm1775, %v1938, 0.0
      %v2114 = vsel %vm1776, %v1942, 0.0
      %v2115 = vsel %vm1777, %v1949, 0.0
      %v2116 = vsel %vm1778, %v1953, 0.0
      %v2117 = vsel %vm1779, %v1960, 0.0
      %v2118 = vsel %vm1780, %v1964, 0.0
      %v2119 = vsel %vm1781, %v1971, 0.0
      %v2120 = vsel %vm1782, %v1975, 0.0
      %v2121 = vsel %vm1783, %v1982, 0.0
      %v2122 = vsel %vm1784, %v1986, 0.0
      %v2123 = vsel %vm1785, %v1993, 0.0
      %v2124 = vsel %vm1786, %v1997, 0.0
      %v2125 = vsel %vm1787, %v2004, 0.0
      %v2126 = vsel %vm1788, %v2008, 0.0
      %v2127 = vsel %vm1789, %v2015, 0.0
      %v2128 = vsel %vm1790, %v2019, 0.0
      %v2129 = vsel %vm1791, %v2026, 0.0
      %v2130 = vsel %vm1792, %v2030, 0.0
      %v2131 = vsel %vm1793, %v2037, 0.0
      %v2132 = vsel %vm1794, %v2041, 0.0
      %v2133 = vsel %vm1795, %v2048, 0.0
      %v2134 = vsel %vm1796, %v2052, 0.0
      %v2135 = vsel %vm1797, %v2059, 0.0
      %v2136 = vsel %vm1798, %v2063, 0.0
      %v2137 = vsel %vm1799, %v2070, 0.0
      %v2138 = vsel %vm1800, %v2074, 0.0
      %v2139 = vsel %vm1801, %v1905, 0.0
      %v2140 = vsel %vm1802, %v1909, 0.0
      %v2141 = vsel %vm1803, %v1916, 0.0
      %v2142 = vsel %vm1804, %v1920, 0.0
      %v2143 = vsel %vm1805, %v1927, 0.0
      %v2144 = vsel %vm1806, %v1931, 0.0
      %v2145 = vsel %vm1807, %v1938, 0.0
      %v2146 = vsel %vm1808, %v1942, 0.0
      %v2147 = vsel %vm1809, %v1949, 0.0
      %v2148 = vsel %vm1810, %v1953, 0.0
      %v2149 = vsel %vm1811, %v1960, 0.0
      %v2150 = vsel %vm1812, %v1964, 0.0
      %v2151 = vsel %vm1813, %v1971, 0.0
      %v2152 = vsel %vm1814, %v1975, 0.0
      %v2153 = vsel %vm1815, %v1982, 0.0
      %v2154 = vsel %vm1816, %v1986, 0.0
      %v2155 = vsel %vm1817, %v1993, 0.0
      %v2156 = vsel %vm1818, %v1997, 0.0
      %v2157 = vsel %vm1819, %v2004, 0.0
      %v2158 = vsel %vm1820, %v2008, 0.0
      %v2159 = vsel %vm1821, %v2015, 0.0
      %v2160 = vsel %vm1822, %v2019, 0.0
      %v2161 = vsel %vm1823, %v2026, 0.0
      %v2162 = vsel %vm1824, %v2030, 0.0
      %v2163 = vsel %vm1825, %v2037, 0.0
      %v2164 = vsel %vm1826, %v2041, 0.0
      %v2165 = vsel %vm1827, %v2048, 0.0
      %v2166 = vsel %vm1828, %v2052, 0.0
      %v2167 = vsel %vm1829, %v2059, 0.0
      %v2168 = vsel %vm1830, %v2063, 0.0
      %v2169 = vsel %vm1831, %v2070, 0.0
      %v2170 = vsel %vm1832, %v2074, 0.0
      %v2171 = vsel %vm1833, %v1905, 0.0
      %v2172 = vsel %vm1834, %v1909, 0.0
      %v2173 = vsel %vm1835, %v1916, 0.0
      %v2174 = vsel %vm1836, %v1920, 0.0
      %v2175 = vsel %vm1837, %v1927, 0.0
      %v2176 = vsel %vm1838, %v1931, 0.0
      %v2177 = vsel %vm1839, %v1938, 0.0
      %v2178 = vsel %vm1840, %v1942, 0.0
      %v2179 = vsel %vm1841, %v1949, 0.0
      %v2180 = vsel %vm1842, %v1953, 0.0
      %v2181 = vsel %vm1843, %v1960, 0.0
      %v2182 = vsel %vm1844, %v1964, 0.0
      %v2183 = vsel %vm1845, %v1971, 0.0
      %v2184 = vsel %vm1846, %v1975, 0.0
      %v2185 = vsel %vm1847, %v1982, 0.0
      %v2186 = vsel %vm1848, %v1986, 0.0
      %v2187 = vsel %vm1849, %v1993, 0.0
      %v2188 = vsel %vm1850, %v1997, 0.0
      %v2189 = vsel %vm1851, %v2004, 0.0
      %v2190 = vsel %vm1852, %v2008, 0.0
      %v2191 = vsel %vm1853, %v2015, 0.0
      %v2192 = vsel %vm1854, %v2019, 0.0
      %v2193 = vsel %vm1855, %v2026, 0.0
      %v2194 = vsel %vm1856, %v2030, 0.0
      %v2195 = vsel %vm1857, %v2037, 0.0
      %v2196 = vsel %vm1858, %v2041, 0.0
      %v2197 = vsel %vm1859, %v2048, 0.0
      %v2198 = vsel %vm1860, %v2052, 0.0
      %v2199 = vsel %vm1861, %v2059, 0.0
      %v2200 = vsel %vm1862, %v2063, 0.0
      %v2201 = vsel %vm1863, %v2070, 0.0
      %v2202 = vsel %vm1864, %v2074, 0.0
      %v2203 = vsel %vm1865, %v1905, 0.0
      %v2204 = vsel %vm1866, %v1909, 0.0
      %v2205 = vsel %vm1867, %v1916, 0.0
      %v2206 = vsel %vm1868, %v1920, 0.0
      %v2207 = vsel %vm1869, %v1927, 0.0
      %v2208 = vsel %vm1870, %v1931, 0.0
      %v2209 = vsel %vm1871, %v1938, 0.0
      %v2210 = vsel %vm1872, %v1942, 0.0
      %v2211 = vsel %vm1873, %v1949, 0.0
      %v2212 = vsel %vm1874, %v1953, 0.0
      %v2213 = vsel %vm1875, %v1960, 0.0
      %v2214 = vsel %vm1876, %v1964, 0.0
      %v2215 = vsel %vm1877, %v1971, 0.0
      %v2216 = vsel %vm1878, %v1975, 0.0
      %v2217 = vsel %vm1879, %v1982, 0.0
      %v2218 = vsel %vm1880, %v1986, 0.0
      %v2219 = vsel %vm1881, %v1993, 0.0
      %v2220 = vsel %vm1882, %v1997, 0.0
      %v2221 = vsel %vm1883, %v2004, 0.0
      %v2222 = vsel %vm1884, %v2008, 0.0
      %v2223 = vsel %vm1885, %v2015, 0.0
      %v2224 = vsel %vm1886, %v2019, 0.0
      %v2225 = vsel %vm1887, %v2026, 0.0
      %v2226 = vsel %vm1888, %v2030, 0.0
      %v2227 = vsel %vm1889, %v2037, 0.0
      %v2228 = vsel %vm1890, %v2041, 0.0
      %v2229 = vsel %vm1891, %v2048, 0.0
      %v2230 = vsel %vm1892, %v2052, 0.0
      %v2231 = vsel %vm1893, %v2059, 0.0
      %v2232 = vsel %vm1894, %v2063, 0.0
      %v2233 = vsel %vm1895, %v2070, 0.0
      %v2234 = vsel %vm1896, %v2074, 0.0
      %v2235 = vsel %vm1641, 1.0, %v2107
      %v2236 = vsel %vm1642, 1.0, %v2108
      %v2237 = vsel %vm1643, 1.0, %v2109
      %v2238 = vsel %vm1644, 1.0, %v2110
      %v2239 = vsel %vm1645, 1.0, %v2111
      %v2240 = vsel %vm1646, 1.0, %v2112
      %v2241 = vsel %vm1647, 1.0, %v2113
      %v2242 = vsel %vm1648, 1.0, %v2114
      %v2243 = vsel %vm1649, 1.0, %v2115
      %v2244 = vsel %vm1650, 1.0, %v2116
      %v2245 = vsel %vm1651, 1.0, %v2117
      %v2246 = vsel %vm1652, 1.0, %v2118
      %v2247 = vsel %vm1653, 1.0, %v2119
      %v2248 = vsel %vm1654, 1.0, %v2120
      %v2249 = vsel %vm1655, 1.0, %v2121
      %v2250 = vsel %vm1656, 1.0, %v2122
      %v2251 = vsel %vm1657, 1.0, %v2123
      %v2252 = vsel %vm1658, 1.0, %v2124
      %v2253 = vsel %vm1659, 1.0, %v2125
      %v2254 = vsel %vm1660, 1.0, %v2126
      %v2255 = vsel %vm1661, 1.0, %v2127
      %v2256 = vsel %vm1662, 1.0, %v2128
      %v2257 = vsel %vm1663, 1.0, %v2129
      %v2258 = vsel %vm1664, 1.0, %v2130
      %v2259 = vsel %vm1665, 1.0, %v2131
      %v2260 = vsel %vm1666, 1.0, %v2132
      %v2261 = vsel %vm1667, 1.0, %v2133
      %v2262 = vsel %vm1668, 1.0, %v2134
      %v2263 = vsel %vm1669, 1.0, %v2135
      %v2264 = vsel %vm1670, 1.0, %v2136
      %v2265 = vsel %vm1671, 1.0, %v2137
      %v2266 = vsel %vm1672, 1.0, %v2138
      %v2267 = vsel %vm1673, 1.0, %v2139
      %v2268 = vsel %vm1674, 1.0, %v2140
      %v2269 = vsel %vm1675, 1.0, %v2141
      %v2270 = vsel %vm1676, 1.0, %v2142
      %v2271 = vsel %vm1677, 1.0, %v2143
      %v2272 = vsel %vm1678, 1.0, %v2144
      %v2273 = vsel %vm1679, 1.0, %v2145
      %v2274 = vsel %vm1680, 1.0, %v2146
      %v2275 = vsel %vm1681, 1.0, %v2147
      %v2276 = vsel %vm1682, 1.0, %v2148
      %v2277 = vsel %vm1683, 1.0, %v2149
      %v2278 = vsel %vm1684, 1.0, %v2150
      %v2279 = vsel %vm1685, 1.0, %v2151
      %v2280 = vsel %vm1686, 1.0, %v2152
      %v2281 = vsel %vm1687, 1.0, %v2153
      %v2282 = vsel %vm1688, 1.0, %v2154
      %v2283 = vsel %vm1689, 1.0, %v2155
      %v2284 = vsel %vm1690, 1.0, %v2156
      %v2285 = vsel %vm1691, 1.0, %v2157
      %v2286 = vsel %vm1692, 1.0, %v2158
      %v2287 = vsel %vm1693, 1.0, %v2159
      %v2288 = vsel %vm1694, 1.0, %v2160
      %v2289 = vsel %vm1695, 1.0, %v2161
      %v2290 = vsel %vm1696, 1.0, %v2162
      %v2291 = vsel %vm1697, 1.0, %v2163
      %v2292 = vsel %vm1698, 1.0, %v2164
      %v2293 = vsel %vm1699, 1.0, %v2165
      %v2294 = vsel %vm1700, 1.0, %v2166
      %v2295 = vsel %vm1701, 1.0, %v2167
      %v2296 = vsel %vm1702, 1.0, %v2168
      %v2297 = vsel %vm1703, 1.0, %v2169
      %v2298 = vsel %vm1704, 1.0, %v2170
      %v2299 = vsel %vm1705, 1.0, %v2171
      %v2300 = vsel %vm1706, 1.0, %v2172
      %v2301 = vsel %vm1707, 1.0, %v2173
      %v2302 = vsel %vm1708, 1.0, %v2174
      %v2303 = vsel %vm1709, 1.0, %v2175
      %v2304 = vsel %vm1710, 1.0, %v2176
      %v2305 = vsel %vm1711, 1.0, %v2177
      %v2306 = vsel %vm1712, 1.0, %v2178
      %v2307 = vsel %vm1713, 1.0, %v2179
      %v2308 = vsel %vm1714, 1.0, %v2180
      %v2309 = vsel %vm1715, 1.0, %v2181
      %v2310 = vsel %vm1716, 1.0, %v2182
      %v2311 = vsel %vm1717, 1.0, %v2183
      %v2312 = vsel %vm1718, 1.0, %v2184
      %v2313 = vsel %vm1719, 1.0, %v2185
      %v2314 = vsel %vm1720, 1.0, %v2186
      %v2315 = vsel %vm1721, 1.0, %v2187
      %v2316 = vsel %vm1722, 1.0, %v2188
      %v2317 = vsel %vm1723, 1.0, %v2189
      %v2318 = vsel %vm1724, 1.0, %v2190
      %v2319 = vsel %vm1725, 1.0, %v2191
      %v2320 = vsel %vm1726, 1.0, %v2192
      %v2321 = vsel %vm1727, 1.0, %v2193
      %v2322 = vsel %vm1728, 1.0, %v2194
      %v2323 = vsel %vm1729, 1.0, %v2195
      %v2324 = vsel %vm1730, 1.0, %v2196
      %v2325 = vsel %vm1731, 1.0, %v2197
      %v2326 = vsel %vm1732, 1.0, %v2198
      %v2327 = vsel %vm1733, 1.0, %v2199
      %v2328 = vsel %vm1734, 1.0, %v2200
      %v2329 = vsel %vm1735, 1.0, %v2201
      %v2330 = vsel %vm1736, 1.0, %v2202
      %v2331 = vsel %vm1737, 1.0, %v2203
      %v2332 = vsel %vm1738, 1.0, %v2204
      %v2333 = vsel %vm1739, 1.0, %v2205
      %v2334 = vsel %vm1740, 1.0, %v2206
      %v2335 = vsel %vm1741, 1.0, %v2207
      %v2336 = vsel %vm1742, 1.0, %v2208
      %v2337 = vsel %vm1743, 1.0, %v2209
      %v2338 = vsel %vm1744, 1.0, %v2210
      %v2339 = vsel %vm1745, 1.0, %v2211
      %v2340 = vsel %vm1746, 1.0, %v2212
      %v2341 = vsel %vm1747, 1.0, %v2213
      %v2342 = vsel %vm1748, 1.0, %v2214
      %v2343 = vsel %vm1749, 1.0, %v2215
      %v2344 = vsel %vm1750, 1.0, %v2216
      %v2345 = vsel %vm1751, 1.0, %v2217
      %v2346 = vsel %vm1752, 1.0, %v2218
      %v2347 = vsel %vm1753, 1.0, %v2219
      %v2348 = vsel %vm1754, 1.0, %v2220
      %v2349 = vsel %vm1755, 1.0, %v2221
      %v2350 = vsel %vm1756, 1.0, %v2222
      %v2351 = vsel %vm1757, 1.0, %v2223
      %v2352 = vsel %vm1758, 1.0, %v2224
      %v2353 = vsel %vm1759, 1.0, %v2225
      %v2354 = vsel %vm1760, 1.0, %v2226
      %v2355 = vsel %vm1761, 1.0, %v2227
      %v2356 = vsel %vm1762, 1.0, %v2228
      %v2357 = vsel %vm1763, 1.0, %v2229
      %v2358 = vsel %vm1764, 1.0, %v2230
      %v2359 = vsel %vm1765, 1.0, %v2231
      %v2360 = vsel %vm1766, 1.0, %v2232
      %v2361 = vsel %vm1767, 1.0, %v2233
      %v2362 = vsel %vm1768, 1.0, %v2234
      %2491 = vset.pattern.permute.xlu0 0
      %2492 = vperm.xlu0 %2491, %v2235
      %v2493 = vpop.permute.xlu0 %2492
      %2494 = vset.pattern.permute.xlu0 0
      %2495 = vperm.xlu0 %2494, %v2236
      %v2496 = vpop.permute.xlu0 %2495
      %2497 = vset.pattern.permute.xlu0 0
      %2498 = vperm.xlu0 %2497, %v2237
      %v2499 = vpop.permute.xlu0 %2498
      %2500 = vset.pattern.permute.xlu0 0
      %2501 = vperm.xlu0 %2500, %v2238
      %v2502 = vpop.permute.xlu0 %2501
      %2503 = vset.pattern.permute.xlu0 0
      %2504 = vperm.xlu0 %2503, %v2239
      %v2505 = vpop.permute.xlu0 %2504
      %2506 = vset.pattern.permute.xlu0 0
      %2507 = vperm.xlu0 %2506, %v2240
      %v2508 = vpop.permute.xlu0 %2507
      %2509 = vset.pattern.permute.xlu0 0
      %2510 = vperm.xlu0 %2509, %v2241
      %v2511 = vpop.permute.xlu0 %2510
      %2512 = vset.pattern.permute.xlu0 0
      %2513 = vperm.xlu0 %2512, %v2242
      %v2514 = vpop.permute.xlu0 %2513
      %2515 = vset.pattern.permute.xlu0 0
      %2516 = vperm.xlu0 %2515, %v2243
      %v2517 = vpop.permute.xlu0 %2516
      %2518 = vset.pattern.permute.xlu0 0
      %2519 = vperm.xlu0 %2518, %v2244
      %v2520 = vpop.permute.xlu0 %2519
      %2521 = vset.pattern.permute.xlu0 0
      %2522 = vperm.xlu0 %2521, %v2245
      %v2523 = vpop.permute.xlu0 %2522
      %2524 = vset.pattern.permute.xlu0 0
      %2525 = vperm.xlu0 %2524, %v2246
      %v2526 = vpop.permute.xlu0 %2525
      %2527 = vset.pattern.permute.xlu0 0
      %2528 = vperm.xlu0 %2527, %v2247
      %v2529 = vpop.permute.xlu0 %2528
      %2530 = vset.pattern.permute.xlu0 0
      %2531 = vperm.xlu0 %2530, %v2248
      %v2532 = vpop.permute.xlu0 %2531
      %2533 = vset.pattern.permute.xlu0 0
      %2534 = vperm.xlu0 %2533, %v2249
      %v2535 = vpop.permute.xlu0 %2534
      %2536 = vset.pattern.permute.xlu0 0
      %2537 = vperm.xlu0 %2536, %v2250
      %v2538 = vpop.permute.xlu0 %2537
      %2539 = vset.pattern.permute.xlu0 0
      %2540 = vperm.xlu0 %2539, %v2251
      %v2541 = vpop.permute.xlu0 %2540
      %2542 = vset.pattern.permute.xlu0 0
      %2543 = vperm.xlu0 %2542, %v2252
      %v2544 = vpop.permute.xlu0 %2543
      %2545 = vset.pattern.permute.xlu0 0
      %2546 = vperm.xlu0 %2545, %v2253
      %v2547 = vpop.permute.xlu0 %2546
      %2548 = vset.pattern.permute.xlu0 0
      %2549 = vperm.xlu0 %2548, %v2254
      %v2550 = vpop.permute.xlu0 %2549
      %2551 = vset.pattern.permute.xlu0 0
      %2552 = vperm.xlu0 %2551, %v2255
      %v2553 = vpop.permute.xlu0 %2552
      %2554 = vset.pattern.permute.xlu0 0
      %2555 = vperm.xlu0 %2554, %v2256
      %v2556 = vpop.permute.xlu0 %2555
      %2557 = vset.pattern.permute.xlu0 0
      %2558 = vperm.xlu0 %2557, %v2257
      %v2559 = vpop.permute.xlu0 %2558
      %2560 = vset.pattern.permute.xlu0 0
      %2561 = vperm.xlu0 %2560, %v2258
      %v2562 = vpop.permute.xlu0 %2561
      %2563 = vset.pattern.permute.xlu0 0
      %2564 = vperm.xlu0 %2563, %v2259
      %v2565 = vpop.permute.xlu0 %2564
      %2566 = vset.pattern.permute.xlu0 0
      %2567 = vperm.xlu0 %2566, %v2260
      %v2568 = vpop.permute.xlu0 %2567
      %2569 = vset.pattern.permute.xlu0 0
      %2570 = vperm.xlu0 %2569, %v2261
      %v2571 = vpop.permute.xlu0 %2570
      %2572 = vset.pattern.permute.xlu0 0
      %2573 = vperm.xlu0 %2572, %v2262
      %v2574 = vpop.permute.xlu0 %2573
      %2575 = vset.pattern.permute.xlu0 0
      %2576 = vperm.xlu0 %2575, %v2263
      %v2577 = vpop.permute.xlu0 %2576
      %2578 = vset.pattern.permute.xlu0 0
      %2579 = vperm.xlu0 %2578, %v2264
      %v2580 = vpop.permute.xlu0 %2579
      %2581 = vset.pattern.permute.xlu0 0
      %2582 = vperm.xlu0 %2581, %v2265
      %v2583 = vpop.permute.xlu0 %2582
      %2584 = vset.pattern.permute.xlu0 0
      %2585 = vperm.xlu0 %2584, %v2266
      %v2586 = vpop.permute.xlu0 %2585
      %2587 = vset.pattern.permute.xlu0 0
      %2588 = vperm.xlu0 %2587, %v2267
      %v2589 = vpop.permute.xlu0 %2588
      %2590 = vset.pattern.permute.xlu0 0
      %2591 = vperm.xlu0 %2590, %v2268
      %v2592 = vpop.permute.xlu0 %2591
      %2593 = vset.pattern.permute.xlu0 0
      %2594 = vperm.xlu0 %2593, %v2269
      %v2595 = vpop.permute.xlu0 %2594
      %2596 = vset.pattern.permute.xlu0 0
      %2597 = vperm.xlu0 %2596, %v2270
      %v2598 = vpop.permute.xlu0 %2597
      %2599 = vset.pattern.permute.xlu0 0
      %2600 = vperm.xlu0 %2599, %v2271
      %v2601 = vpop.permute.xlu0 %2600
      %2602 = vset.pattern.permute.xlu0 0
      %2603 = vperm.xlu0 %2602, %v2272
      %v2604 = vpop.permute.xlu0 %2603
      %2605 = vset.pattern.permute.xlu0 0
      %2606 = vperm.xlu0 %2605, %v2273
      %v2607 = vpop.permute.xlu0 %2606
      %2608 = vset.pattern.permute.xlu0 0
      %2609 = vperm.xlu0 %2608, %v2274
      %v2610 = vpop.permute.xlu0 %2609
      %2611 = vset.pattern.permute.xlu0 0
      %2612 = vperm.xlu0 %2611, %v2275
      %v2613 = vpop.permute.xlu0 %2612
      %2614 = vset.pattern.permute.xlu0 0
      %2615 = vperm.xlu0 %2614, %v2276
      %v2616 = vpop.permute.xlu0 %2615
      %2617 = vset.pattern.permute.xlu0 0
      %2618 = vperm.xlu0 %2617, %v2277
      %v2619 = vpop.permute.xlu0 %2618
      %2620 = vset.pattern.permute.xlu0 0
      %2621 = vperm.xlu0 %2620, %v2278
      %v2622 = vpop.permute.xlu0 %2621
      %2623 = vset.pattern.permute.xlu0 0
      %2624 = vperm.xlu0 %2623, %v2279
      %v2625 = vpop.permute.xlu0 %2624
      %2626 = vset.pattern.permute.xlu0 0
      %2627 = vperm.xlu0 %2626, %v2280
      %v2628 = vpop.permute.xlu0 %2627
      %2629 = vset.pattern.permute.xlu0 0
      %2630 = vperm.xlu0 %2629, %v2281
      %v2631 = vpop.permute.xlu0 %2630
      %2632 = vset.pattern.permute.xlu0 0
      %2633 = vperm.xlu0 %2632, %v2282
      %v2634 = vpop.permute.xlu0 %2633
      %2635 = vset.pattern.permute.xlu0 0
      %2636 = vperm.xlu0 %2635, %v2283
      %v2637 = vpop.permute.xlu0 %2636
      %2638 = vset.pattern.permute.xlu0 0
      %2639 = vperm.xlu0 %2638, %v2284
      %v2640 = vpop.permute.xlu0 %2639
      %2641 = vset.pattern.permute.xlu0 0
      %2642 = vperm.xlu0 %2641, %v2285
      %v2643 = vpop.permute.xlu0 %2642
      %2644 = vset.pattern.permute.xlu0 0
      %2645 = vperm.xlu0 %2644, %v2286
      %v2646 = vpop.permute.xlu0 %2645
      %2647 = vset.pattern.permute.xlu0 0
      %2648 = vperm.xlu0 %2647, %v2287
      %v2649 = vpop.permute.xlu0 %2648
      %2650 = vset.pattern.permute.xlu0 0
      %2651 = vperm.xlu0 %2650, %v2288
      %v2652 = vpop.permute.xlu0 %2651
      %2653 = vset.pattern.permute.xlu0 0
      %2654 = vperm.xlu0 %2653, %v2289
      %v2655 = vpop.permute.xlu0 %2654
      %2656 = vset.pattern.permute.xlu0 0
      %2657 = vperm.xlu0 %2656, %v2290
      %v2658 = vpop.permute.xlu0 %2657
      %2659 = vset.pattern.permute.xlu0 0
      %2660 = vperm.xlu0 %2659, %v2291
      %v2661 = vpop.permute.xlu0 %2660
      %2662 = vset.pattern.permute.xlu0 0
      %2663 = vperm.xlu0 %2662, %v2292
      %v2664 = vpop.permute.xlu0 %2663
      %2665 = vset.pattern.permute.xlu0 0
      %2666 = vperm.xlu0 %2665, %v2293
      %v2667 = vpop.permute.xlu0 %2666
      %2668 = vset.pattern.permute.xlu0 0
      %2669 = vperm.xlu0 %2668, %v2294
      %v2670 = vpop.permute.xlu0 %2669
      %2671 = vset.pattern.permute.xlu0 0
      %2672 = vperm.xlu0 %2671, %v2295
      %v2673 = vpop.permute.xlu0 %2672
      %2674 = vset.pattern.permute.xlu0 0
      %2675 = vperm.xlu0 %2674, %v2296
      %v2676 = vpop.permute.xlu0 %2675
      %2677 = vset.pattern.permute.xlu0 0
      %2678 = vperm.xlu0 %2677, %v2297
      %v2679 = vpop.permute.xlu0 %2678
      %2680 = vset.pattern.permute.xlu0 0
      %2681 = vperm.xlu0 %2680, %v2298
      %v2682 = vpop.permute.xlu0 %2681
      %2683 = vset.pattern.permute.xlu0 0
      %2684 = vperm.xlu0 %2683, %v2299
      %v2685 = vpop.permute.xlu0 %2684
      %2686 = vset.pattern.permute.xlu0 0
      %2687 = vperm.xlu0 %2686, %v2300
      %v2688 = vpop.permute.xlu0 %2687
      %2689 = vset.pattern.permute.xlu0 0
      %2690 = vperm.xlu0 %2689, %v2301
      %v2691 = vpop.permute.xlu0 %2690
      %2692 = vset.pattern.permute.xlu0 0
      %2693 = vperm.xlu0 %2692, %v2302
      %v2694 = vpop.permute.xlu0 %2693
      %2695 = vset.pattern.permute.xlu0 0
      %2696 = vperm.xlu0 %2695, %v2303
      %v2697 = vpop.permute.xlu0 %2696
      %2698 = vset.pattern.permute.xlu0 0
      %2699 = vperm.xlu0 %2698, %v2304
      %v2700 = vpop.permute.xlu0 %2699
      %2701 = vset.pattern.permute.xlu0 0
      %2702 = vperm.xlu0 %2701, %v2305
      %v2703 = vpop.permute.xlu0 %2702
      %2704 = vset.pattern.permute.xlu0 0
      %2705 = vperm.xlu0 %2704, %v2306
      %v2706 = vpop.permute.xlu0 %2705
      %2707 = vset.pattern.permute.xlu0 0
      %2708 = vperm.xlu0 %2707, %v2307
      %v2709 = vpop.permute.xlu0 %2708
      %2710 = vset.pattern.permute.xlu0 0
      %2711 = vperm.xlu0 %2710, %v2308
      %v2712 = vpop.permute.xlu0 %2711
      %2713 = vset.pattern.permute.xlu0 0
      %2714 = vperm.xlu0 %2713, %v2309
      %v2715 = vpop.permute.xlu0 %2714
      %2716 = vset.pattern.permute.xlu0 0
      %2717 = vperm.xlu0 %2716, %v2310
      %v2718 = vpop.permute.xlu0 %2717
      %2719 = vset.pattern.permute.xlu0 0
      %2720 = vperm.xlu0 %2719, %v2311
      %v2721 = vpop.permute.xlu0 %2720
      %2722 = vset.pattern.permute.xlu0 0
      %2723 = vperm.xlu0 %2722, %v2312
      %v2724 = vpop.permute.xlu0 %2723
      %2725 = vset.pattern.permute.xlu0 0
      %2726 = vperm.xlu0 %2725, %v2313
      %v2727 = vpop.permute.xlu0 %2726
      %2728 = vset.pattern.permute.xlu0 0
      %2729 = vperm.xlu0 %2728, %v2314
      %v2730 = vpop.permute.xlu0 %2729
      %2731 = vset.pattern.permute.xlu0 0
      %2732 = vperm.xlu0 %2731, %v2315
      %v2733 = vpop.permute.xlu0 %2732
      %2734 = vset.pattern.permute.xlu0 0
      %2735 = vperm.xlu0 %2734, %v2316
      %v2736 = vpop.permute.xlu0 %2735
      %2737 = vset.pattern.permute.xlu0 0
      %2738 = vperm.xlu0 %2737, %v2317
      %v2739 = vpop.permute.xlu0 %2738
      %2740 = vset.pattern.permute.xlu0 0
      %2741 = vperm.xlu0 %2740, %v2318
      %v2742 = vpop.permute.xlu0 %2741
      %2743 = vset.pattern.permute.xlu0 0
      %2744 = vperm.xlu0 %2743, %v2319
      %v2745 = vpop.permute.xlu0 %2744
      %2746 = vset.pattern.permute.xlu0 0
      %2747 = vperm.xlu0 %2746, %v2320
      %v2748 = vpop.permute.xlu0 %2747
      %2749 = vset.pattern.permute.xlu0 0
      %2750 = vperm.xlu0 %2749, %v2321
      %v2751 = vpop.permute.xlu0 %2750
      %2752 = vset.pattern.permute.xlu0 0
      %2753 = vperm.xlu0 %2752, %v2322
      %v2754 = vpop.permute.xlu0 %2753
      %2755 = vset.pattern.permute.xlu0 0
      %2756 = vperm.xlu0 %2755, %v2323
      %v2757 = vpop.permute.xlu0 %2756
      %2758 = vset.pattern.permute.xlu0 0
      %2759 = vperm.xlu0 %2758, %v2324
      %v2760 = vpop.permute.xlu0 %2759
      %2761 = vset.pattern.permute.xlu0 0
      %2762 = vperm.xlu0 %2761, %v2325
      %v2763 = vpop.permute.xlu0 %2762
      %2764 = vset.pattern.permute.xlu0 0
      %2765 = vperm.xlu0 %2764, %v2326
      %v2766 = vpop.permute.xlu0 %2765
      %2767 = vset.pattern.permute.xlu0 0
      %2768 = vperm.xlu0 %2767, %v2327
      %v2769 = vpop.permute.xlu0 %2768
      %2770 = vset.pattern.permute.xlu0 0
      %2771 = vperm.xlu0 %2770, %v2328
      %v2772 = vpop.permute.xlu0 %2771
      %2773 = vset.pattern.permute.xlu0 0
      %2774 = vperm.xlu0 %2773, %v2329
      %v2775 = vpop.permute.xlu0 %2774
      %2776 = vset.pattern.permute.xlu0 0
      %2777 = vperm.xlu0 %2776, %v2330
      %v2778 = vpop.permute.xlu0 %2777
      %2779 = vset.pattern.permute.xlu0 0
      %2780 = vperm.xlu0 %2779, %v2331
      %v2781 = vpop.permute.xlu0 %2780
      %2782 = vset.pattern.permute.xlu0 0
      %2783 = vperm.xlu0 %2782, %v2332
      %v2784 = vpop.permute.xlu0 %2783
      %2785 = vset.pattern.permute.xlu0 0
      %2786 = vperm.xlu0 %2785, %v2333
      %v2787 = vpop.permute.xlu0 %2786
      %2788 = vset.pattern.permute.xlu0 0
      %2789 = vperm.xlu0 %2788, %v2334
      %v2790 = vpop.permute.xlu0 %2789
      %2791 = vset.pattern.permute.xlu0 0
      %2792 = vperm.xlu0 %2791, %v2335
      %v2793 = vpop.permute.xlu0 %2792
      %2794 = vset.pattern.permute.xlu0 0
      %2795 = vperm.xlu0 %2794, %v2336
      %v2796 = vpop.permute.xlu0 %2795
      %2797 = vset.pattern.permute.xlu0 0
      %2798 = vperm.xlu0 %2797, %v2337
      %v2799 = vpop.permute.xlu0 %2798
      %2800 = vset.pattern.permute.xlu0 0
      %2801 = vperm.xlu0 %2800, %v2338
      %v2802 = vpop.permute.xlu0 %2801
      %2803 = vset.pattern.permute.xlu0 0
      %2804 = vperm.xlu0 %2803, %v2339
      %v2805 = vpop.permute.xlu0 %2804
      %2806 = vset.pattern.permute.xlu0 0
      %2807 = vperm.xlu0 %2806, %v2340
      %v2808 = vpop.permute.xlu0 %2807
      %2809 = vset.pattern.permute.xlu0 0
      %2810 = vperm.xlu0 %2809, %v2341
      %v2811 = vpop.permute.xlu0 %2810
      %2812 = vset.pattern.permute.xlu0 0
      %2813 = vperm.xlu0 %2812, %v2342
      %v2814 = vpop.permute.xlu0 %2813
      %2815 = vset.pattern.permute.xlu0 0
      %2816 = vperm.xlu0 %2815, %v2343
      %v2817 = vpop.permute.xlu0 %2816
      %2818 = vset.pattern.permute.xlu0 0
      %2819 = vperm.xlu0 %2818, %v2344
      %v2820 = vpop.permute.xlu0 %2819
      %2821 = vset.pattern.permute.xlu0 0
      %2822 = vperm.xlu0 %2821, %v2345
      %v2823 = vpop.permute.xlu0 %2822
      %2824 = vset.pattern.permute.xlu0 0
      %2825 = vperm.xlu0 %2824, %v2346
      %v2826 = vpop.permute.xlu0 %2825
      %2827 = vset.pattern.permute.xlu0 0
      %2828 = vperm.xlu0 %2827, %v2347
      %v2829 = vpop.permute.xlu0 %2828
      %2830 = vset.pattern.permute.xlu0 0
      %2831 = vperm.xlu0 %2830, %v2348
      %v2832 = vpop.permute.xlu0 %2831
      %2833 = vset.pattern.permute.xlu0 0
      %2834 = vperm.xlu0 %2833, %v2349
      %v2835 = vpop.permute.xlu0 %2834
      %2836 = vset.pattern.permute.xlu0 0
      %2837 = vperm.xlu0 %2836, %v2350
      %v2838 = vpop.permute.xlu0 %2837
      %2839 = vset.pattern.permute.xlu0 0
      %2840 = vperm.xlu0 %2839, %v2351
      %v2841 = vpop.permute.xlu0 %2840
      %2842 = vset.pattern.permute.xlu0 0
      %2843 = vperm.xlu0 %2842, %v2352
      %v2844 = vpop.permute.xlu0 %2843
      %2845 = vset.pattern.permute.xlu0 0
      %2846 = vperm.xlu0 %2845, %v2353
      %v2847 = vpop.permute.xlu0 %2846
      %2848 = vset.pattern.permute.xlu0 0
      %2849 = vperm.xlu0 %2848, %v2354
      %v2850 = vpop.permute.xlu0 %2849
      %2851 = vset.pattern.permute.xlu0 0
      %2852 = vperm.xlu0 %2851, %v2355
      %v2853 = vpop.permute.xlu0 %2852
      %2854 = vset.pattern.permute.xlu0 0
      %2855 = vperm.xlu0 %2854, %v2356
      %v2856 = vpop.permute.xlu0 %2855
      %2857 = vset.pattern.permute.xlu0 0
      %2858 = vperm.xlu0 %2857, %v2357
      %v2859 = vpop.permute.xlu0 %2858
      %2860 = vset.pattern.permute.xlu0 0
      %2861 = vperm.xlu0 %2860, %v2358
      %v2862 = vpop.permute.xlu0 %2861
      %2863 = vset.pattern.permute.xlu0 0
      %2864 = vperm.xlu0 %2863, %v2359
      %v2865 = vpop.permute.xlu0 %2864
      %2866 = vset.pattern.permute.xlu0 0
      %2867 = vperm.xlu0 %2866, %v2360
      %v2868 = vpop.permute.xlu0 %2867
      %2869 = vset.pattern.permute.xlu0 0
      %2870 = vperm.xlu0 %2869, %v2361
      %v2871 = vpop.permute.xlu0 %2870
      %2872 = vset.pattern.permute.xlu0 0
      %2873 = vperm.xlu0 %2872, %v2362
      %v2874 = vpop.permute.xlu0 %2873
      %v2875 = vlaneseq
      %v2876 = vand.u32 %v2875, 127
      %v2877 = vlaneseq
      %v2878 = vshrl.u32 %v2877, 7
      %v2879 = vsub.s32 %v2876, %v2878
      %v2880 = vrot.slane %v2493, %v2879
      %v2881 = vadd.s32 %v2876, 4294967288
      %v2882 = vlaneseq
      %v2883 = vshrl.u32 %v2882, 7
      %v2884 = vsub.s32 %v2881, %v2883
      %v2885 = vrot.slane %v2496, %v2884
      %vm2886 = vcmask 130112
      %v2887 = vsel %vm2886, %v2885, %v2880
      %v2888 = vlaneseq
      %v2889 = vshrl.u32 %v2888, 7
      %v2890 = vsub.s32 %v2876, %v2889
      %v2891 = vrot.slane %v2499, %v2890
      %v2892 = vlaneseq
      %v2893 = vshrl.u32 %v2892, 7
      %v2894 = vsub.s32 %v2881, %v2893
      %v2895 = vrot.slane %v2502, %v2894
      %v2896 = vsel %vm2886, %v2895, %v2891
      %v2897 = vlaneseq
      %v2898 = vshrl.u32 %v2897, 7
      %v2899 = vsub.s32 %v2876, %v2898
      %v2900 = vrot.slane %v2505, %v2899
      %v2901 = vlaneseq
      %v2902 = vshrl.u32 %v2901, 7
      %v2903 = vsub.s32 %v2881, %v2902
      %v2904 = vrot.slane %v2508, %v2903
      %v2905 = vsel %vm2886, %v2904, %v2900
      %v2906 = vlaneseq
      %v2907 = vshrl.u32 %v2906, 7
      %v2908 = vsub.s32 %v2876, %v2907
      %v2909 = vrot.slane %v2511, %v2908
      %v2910 = vlaneseq
      %v2911 = vshrl.u32 %v2910, 7
      %v2912 = vsub.s32 %v2881, %v2911
      %v2913 = vrot.slane %v2514, %v2912
      %v2914 = vsel %vm2886, %v2913, %v2909
      %v2915 = vlaneseq
      %v2916 = vshrl.u32 %v2915, 7
      %v2917 = vsub.s32 %v2876, %v2916
      %v2918 = vrot.slane %v2517, %v2917
      %v2919 = vlaneseq
      %v2920 = vshrl.u32 %v2919, 7
      %v2921 = vsub.s32 %v2881, %v2920
      %v2922 = vrot.slane %v2520, %v2921
      %v2923 = vsel %vm2886, %v2922, %v2918
      %v2924 = vlaneseq
      %v2925 = vshrl.u32 %v2924, 7
      %v2926 = vsub.s32 %v2876, %v2925
      %v2927 = vrot.slane %v2523, %v2926
      %v2928 = vlaneseq
      %v2929 = vshrl.u32 %v2928, 7
      %v2930 = vsub.s32 %v2881, %v2929
      %v2931 = vrot.slane %v2526, %v2930
      %v2932 = vsel %vm2886, %v2931, %v2927
      %v2933 = vlaneseq
      %v2934 = vshrl.u32 %v2933, 7
      %v2935 = vsub.s32 %v2876, %v2934
      %v2936 = vrot.slane %v2529, %v2935
      %v2937 = vlaneseq
      %v2938 = vshrl.u32 %v2937, 7
      %v2939 = vsub.s32 %v2881, %v2938
      %v2940 = vrot.slane %v2532, %v2939
      %v2941 = vsel %vm2886, %v2940, %v2936
      %v2942 = vlaneseq
      %v2943 = vshrl.u32 %v2942, 7
      %v2944 = vsub.s32 %v2876, %v2943
      %v2945 = vrot.slane %v2535, %v2944
      %v2946 = vlaneseq
      %v2947 = vshrl.u32 %v2946, 7
      %v2948 = vsub.s32 %v2881, %v2947
      %v2949 = vrot.slane %v2538, %v2948
      %v2950 = vsel %vm2886, %v2949, %v2945
      %v2951 = vlaneseq
      %v2952 = vshrl.u32 %v2951, 7
      %v2953 = vsub.s32 %v2876, %v2952
      %v2954 = vrot.slane %v2541, %v2953
      %v2955 = vlaneseq
      %v2956 = vshrl.u32 %v2955, 7
      %v2957 = vsub.s32 %v2881, %v2956
      %v2958 = vrot.slane %v2544, %v2957
      %v2959 = vsel %vm2886, %v2958, %v2954
      %v2960 = vlaneseq
      %v2961 = vshrl.u32 %v2960, 7
      %v2962 = vsub.s32 %v2876, %v2961
      %v2963 = vrot.slane %v2547, %v2962
      %v2964 = vlaneseq
      %v2965 = vshrl.u32 %v2964, 7
      %v2966 = vsub.s32 %v2881, %v2965
      %v2967 = vrot.slane %v2550, %v2966
      %v2968 = vsel %vm2886, %v2967, %v2963
      %v2969 = vlaneseq
      %v2970 = vshrl.u32 %v2969, 7
      %v2971 = vsub.s32 %v2876, %v2970
      %v2972 = vrot.slane %v2553, %v2971
      %v2973 = vlaneseq
      %v2974 = vshrl.u32 %v2973, 7
      %v2975 = vsub.s32 %v2881, %v2974
      %v2976 = vrot.slane %v2556, %v2975
      %v2977 = vsel %vm2886, %v2976, %v2972
      %v2978 = vlaneseq
      %v2979 = vshrl.u32 %v2978, 7
      %v2980 = vsub.s32 %v2876, %v2979
      %v2981 = vrot.slane %v2559, %v2980
      %v2982 = vlaneseq
      %v2983 = vshrl.u32 %v2982, 7
      %v2984 = vsub.s32 %v2881, %v2983
      %v2985 = vrot.slane %v2562, %v2984
      %v2986 = vsel %vm2886, %v2985, %v2981
      %v2987 = vlaneseq
      %v2988 = vshrl.u32 %v2987, 7
      %v2989 = vsub.s32 %v2876, %v2988
      %v2990 = vrot.slane %v2565, %v2989
      %v2991 = vlaneseq
      %v2992 = vshrl.u32 %v2991, 7
      %v2993 = vsub.s32 %v2881, %v2992
      %v2994 = vrot.slane %v2568, %v2993
      %v2995 = vsel %vm2886, %v2994, %v2990
      %v2996 = vlaneseq
      %v2997 = vshrl.u32 %v2996, 7
      %v2998 = vsub.s32 %v2876, %v2997
      %v2999 = vrot.slane %v2571, %v2998
      %v3000 = vlaneseq
      %v3001 = vshrl.u32 %v3000, 7
      %v3002 = vsub.s32 %v2881, %v3001
      %v3003 = vrot.slane %v2574, %v3002
      %v3004 = vsel %vm2886, %v3003, %v2999
      %v3005 = vlaneseq
      %v3006 = vshrl.u32 %v3005, 7
      %v3007 = vsub.s32 %v2876, %v3006
      %v3008 = vrot.slane %v2577, %v3007
      %v3009 = vlaneseq
      %v3010 = vshrl.u32 %v3009, 7
      %v3011 = vsub.s32 %v2881, %v3010
      %v3012 = vrot.slane %v2580, %v3011
      %v3013 = vsel %vm2886, %v3012, %v3008
      %v3014 = vlaneseq
      %v3015 = vshrl.u32 %v3014, 7
      %v3016 = vsub.s32 %v2876, %v3015
      %v3017 = vrot.slane %v2583, %v3016
      %v3018 = vlaneseq
      %v3019 = vshrl.u32 %v3018, 7
      %v3020 = vsub.s32 %v2881, %v3019
      %v3021 = vrot.slane %v2586, %v3020
      %v3022 = vsel %vm2886, %v3021, %v3017
      %v3023 = vlaneseq
      %v3024 = vshrl.u32 %v3023, 7
      %v3025 = vsub.s32 %v2876, %v3024
      %v3026 = vrot.slane %v2589, %v3025
      %v3027 = vlaneseq
      %v3028 = vshrl.u32 %v3027, 7
      %v3029 = vsub.s32 %v2881, %v3028
      %v3030 = vrot.slane %v2592, %v3029
      %v3031 = vsel %vm2886, %v3030, %v3026
      %v3032 = vlaneseq
      %v3033 = vshrl.u32 %v3032, 7
      %v3034 = vsub.s32 %v2876, %v3033
      %v3035 = vrot.slane %v2595, %v3034
      %v3036 = vlaneseq
      %v3037 = vshrl.u32 %v3036, 7
      %v3038 = vsub.s32 %v2881, %v3037
      %v3039 = vrot.slane %v2598, %v3038
      %v3040 = vsel %vm2886, %v3039, %v3035
      %v3041 = vlaneseq
      %v3042 = vshrl.u32 %v3041, 7
      %v3043 = vsub.s32 %v2876, %v3042
      %v3044 = vrot.slane %v2601, %v3043
      %v3045 = vlaneseq
      %v3046 = vshrl.u32 %v3045, 7
      %v3047 = vsub.s32 %v2881, %v3046
      %v3048 = vrot.slane %v2604, %v3047
      %v3049 = vsel %vm2886, %v3048, %v3044
      %v3050 = vlaneseq
      %v3051 = vshrl.u32 %v3050, 7
      %v3052 = vsub.s32 %v2876, %v3051
      %v3053 = vrot.slane %v2607, %v3052
      %v3054 = vlaneseq
      %v3055 = vshrl.u32 %v3054, 7
      %v3056 = vsub.s32 %v2881, %v3055
      %v3057 = vrot.slane %v2610, %v3056
      %v3058 = vsel %vm2886, %v3057, %v3053
      %v3059 = vlaneseq
      %v3060 = vshrl.u32 %v3059, 7
      %v3061 = vsub.s32 %v2876, %v3060
      %v3062 = vrot.slane %v2613, %v3061
      %v3063 = vlaneseq
      %v3064 = vshrl.u32 %v3063, 7
      %v3065 = vsub.s32 %v2881, %v3064
      %v3066 = vrot.slane %v2616, %v3065
      %v3067 = vsel %vm2886, %v3066, %v3062
      %v3068 = vlaneseq
      %v3069 = vshrl.u32 %v3068, 7
      %v3070 = vsub.s32 %v2876, %v3069
      %v3071 = vrot.slane %v2619, %v3070
      %v3072 = vlaneseq
      %v3073 = vshrl.u32 %v3072, 7
      %v3074 = vsub.s32 %v2881, %v3073
      %v3075 = vrot.slane %v2622, %v3074
      %v3076 = vsel %vm2886, %v3075, %v3071
      %v3077 = vlaneseq
      %v3078 = vshrl.u32 %v3077, 7
      %v3079 = vsub.s32 %v2876, %v3078
      %v3080 = vrot.slane %v2625, %v3079
      %v3081 = vlaneseq
      %v3082 = vshrl.u32 %v3081, 7
      %v3083 = vsub.s32 %v2881, %v3082
      %v3084 = vrot.slane %v2628, %v3083
      %v3085 = vsel %vm2886, %v3084, %v3080
      %v3086 = vlaneseq
      %v3087 = vshrl.u32 %v3086, 7
      %v3088 = vsub.s32 %v2876, %v3087
      %v3089 = vrot.slane %v2631, %v3088
      %v3090 = vlaneseq
      %v3091 = vshrl.u32 %v3090, 7
      %v3092 = vsub.s32 %v2881, %v3091
      %v3093 = vrot.slane %v2634, %v3092
      %v3094 = vsel %vm2886, %v3093, %v3089
      %v3095 = vlaneseq
      %v3096 = vshrl.u32 %v3095, 7
      %v3097 = vsub.s32 %v2876, %v3096
      %v3098 = vrot.slane %v2637, %v3097
      %v3099 = vlaneseq
      %v3100 = vshrl.u32 %v3099, 7
      %v3101 = vsub.s32 %v2881, %v3100
      %v3102 = vrot.slane %v2640, %v3101
      %v3103 = vsel %vm2886, %v3102, %v3098
      %v3104 = vlaneseq
      %v3105 = vshrl.u32 %v3104, 7
      %v3106 = vsub.s32 %v2876, %v3105
      %v3107 = vrot.slane %v2643, %v3106
      %v3108 = vlaneseq
      %v3109 = vshrl.u32 %v3108, 7
      %v3110 = vsub.s32 %v2881, %v3109
      %v3111 = vrot.slane %v2646, %v3110
      %v3112 = vsel %vm2886, %v3111, %v3107
      %v3113 = vlaneseq
      %v3114 = vshrl.u32 %v3113, 7
      %v3115 = vsub.s32 %v2876, %v3114
      %v3116 = vrot.slane %v2649, %v3115
      %v3117 = vlaneseq
      %v3118 = vshrl.u32 %v3117, 7
      %v3119 = vsub.s32 %v2881, %v3118
      %v3120 = vrot.slane %v2652, %v3119
      %v3121 = vsel %vm2886, %v3120, %v3116
      %v3122 = vlaneseq
      %v3123 = vshrl.u32 %v3122, 7
      %v3124 = vsub.s32 %v2876, %v3123
      %v3125 = vrot.slane %v2655, %v3124
      %v3126 = vlaneseq
      %v3127 = vshrl.u32 %v3126, 7
      %v3128 = vsub.s32 %v2881, %v3127
      %v3129 = vrot.slane %v2658, %v3128
      %v3130 = vsel %vm2886, %v3129, %v3125
      %v3131 = vlaneseq
      %v3132 = vshrl.u32 %v3131, 7
      %v3133 = vsub.s32 %v2876, %v3132
      %v3134 = vrot.slane %v2661, %v3133
      %v3135 = vlaneseq
      %v3136 = vshrl.u32 %v3135, 7
      %v3137 = vsub.s32 %v2881, %v3136
      %v3138 = vrot.slane %v2664, %v3137
      %v3139 = vsel %vm2886, %v3138, %v3134
      %v3140 = vlaneseq
      %v3141 = vshrl.u32 %v3140, 7
      %v3142 = vsub.s32 %v2876, %v3141
      %v3143 = vrot.slane %v2667, %v3142
      %v3144 = vlaneseq
      %v3145 = vshrl.u32 %v3144, 7
      %v3146 = vsub.s32 %v2881, %v3145
      %v3147 = vrot.slane %v2670, %v3146
      %v3148 = vsel %vm2886, %v3147, %v3143
      %v3149 = vlaneseq
      %v3150 = vshrl.u32 %v3149, 7
      %v3151 = vsub.s32 %v2876, %v3150
      %v3152 = vrot.slane %v2673, %v3151
      %v3153 = vlaneseq
      %v3154 = vshrl.u32 %v3153, 7
      %v3155 = vsub.s32 %v2881, %v3154
      %v3156 = vrot.slane %v2676, %v3155
      %v3157 = vsel %vm2886, %v3156, %v3152
      %v3158 = vlaneseq
      %v3159 = vshrl.u32 %v3158, 7
      %v3160 = vsub.s32 %v2876, %v3159
      %v3161 = vrot.slane %v2679, %v3160
      %v3162 = vlaneseq
      %v3163 = vshrl.u32 %v3162, 7
      %v3164 = vsub.s32 %v2881, %v3163
      %v3165 = vrot.slane %v2682, %v3164
      %v3166 = vsel %vm2886, %v3165, %v3161
      %v3167 = vlaneseq
      %v3168 = vshrl.u32 %v3167, 7
      %v3169 = vsub.s32 %v2876, %v3168
      %v3170 = vrot.slane %v2685, %v3169
      %v3171 = vlaneseq
      %v3172 = vshrl.u32 %v3171, 7
      %v3173 = vsub.s32 %v2881, %v3172
      %v3174 = vrot.slane %v2688, %v3173
      %v3175 = vsel %vm2886, %v3174, %v3170
      %v3176 = vlaneseq
      %v3177 = vshrl.u32 %v3176, 7
      %v3178 = vsub.s32 %v2876, %v3177
      %v3179 = vrot.slane %v2691, %v3178
      %v3180 = vlaneseq
      %v3181 = vshrl.u32 %v3180, 7
      %v3182 = vsub.s32 %v2881, %v3181
      %v3183 = vrot.slane %v2694, %v3182
      %v3184 = vsel %vm2886, %v3183, %v3179
      %v3185 = vlaneseq
      %v3186 = vshrl.u32 %v3185, 7
      %v3187 = vsub.s32 %v2876, %v3186
      %v3188 = vrot.slane %v2697, %v3187
      %v3189 = vlaneseq
      %v3190 = vshrl.u32 %v3189, 7
      %v3191 = vsub.s32 %v2881, %v3190
      %v3192 = vrot.slane %v2700, %v3191
      %v3193 = vsel %vm2886, %v3192, %v3188
      %v3194 = vlaneseq
      %v3195 = vshrl.u32 %v3194, 7
      %v3196 = vsub.s32 %v2876, %v3195
      %v3197 = vrot.slane %v2703, %v3196
      %v3198 = vlaneseq
      %v3199 = vshrl.u32 %v3198, 7
      %v3200 = vsub.s32 %v2881, %v3199
      %v3201 = vrot.slane %v2706, %v3200
      %v3202 = vsel %vm2886, %v3201, %v3197
      %v3203 = vlaneseq
      %v3204 = vshrl.u32 %v3203, 7
      %v3205 = vsub.s32 %v2876, %v3204
      %v3206 = vrot.slane %v2709, %v3205
      %v3207 = vlaneseq
      %v3208 = vshrl.u32 %v3207, 7
      %v3209 = vsub.s32 %v2881, %v3208
      %v3210 = vrot.slane %v2712, %v3209
      %v3211 = vsel %vm2886, %v3210, %v3206
      %v3212 = vlaneseq
      %v3213 = vshrl.u32 %v3212, 7
      %v3214 = vsub.s32 %v2876, %v3213
      %v3215 = vrot.slane %v2715, %v3214
      %v3216 = vlaneseq
      %v3217 = vshrl.u32 %v3216, 7
      %v3218 = vsub.s32 %v2881, %v3217
      %v3219 = vrot.slane %v2718, %v3218
      %v3220 = vsel %vm2886, %v3219, %v3215
      %v3221 = vlaneseq
      %v3222 = vshrl.u32 %v3221, 7
      %v3223 = vsub.s32 %v2876, %v3222
      %v3224 = vrot.slane %v2721, %v3223
      %v3225 = vlaneseq
      %v3226 = vshrl.u32 %v3225, 7
      %v3227 = vsub.s32 %v2881, %v3226
      %v3228 = vrot.slane %v2724, %v3227
      %v3229 = vsel %vm2886, %v3228, %v3224
      %v3230 = vlaneseq
      %v3231 = vshrl.u32 %v3230, 7
      %v3232 = vsub.s32 %v2876, %v3231
      %v3233 = vrot.slane %v2727, %v3232
      %v3234 = vlaneseq
      %v3235 = vshrl.u32 %v3234, 7
      %v3236 = vsub.s32 %v2881, %v3235
      %v3237 = vrot.slane %v2730, %v3236
      %v3238 = vsel %vm2886, %v3237, %v3233
      %v3239 = vlaneseq
      %v3240 = vshrl.u32 %v3239, 7
      %v3241 = vsub.s32 %v2876, %v3240
      %v3242 = vrot.slane %v2733, %v3241
      %v3243 = vlaneseq
      %v3244 = vshrl.u32 %v3243, 7
      %v3245 = vsub.s32 %v2881, %v3244
      %v3246 = vrot.slane %v2736, %v3245
      %v3247 = vsel %vm2886, %v3246, %v3242
      %v3248 = vlaneseq
      %v3249 = vshrl.u32 %v3248, 7
      %v3250 = vsub.s32 %v2876, %v3249
      %v3251 = vrot.slane %v2739, %v3250
      %v3252 = vlaneseq
      %v3253 = vshrl.u32 %v3252, 7
      %v3254 = vsub.s32 %v2881, %v3253
      %v3255 = vrot.slane %v2742, %v3254
      %v3256 = vsel %vm2886, %v3255, %v3251
      %v3257 = vlaneseq
      %v3258 = vshrl.u32 %v3257, 7
      %v3259 = vsub.s32 %v2876, %v3258
      %v3260 = vrot.slane %v2745, %v3259
      %v3261 = vlaneseq
      %v3262 = vshrl.u32 %v3261, 7
      %v3263 = vsub.s32 %v2881, %v3262
      %v3264 = vrot.slane %v2748, %v3263
      %v3265 = vsel %vm2886, %v3264, %v3260
      %v3266 = vlaneseq
      %v3267 = vshrl.u32 %v3266, 7
      %v3268 = vsub.s32 %v2876, %v3267
      %v3269 = vrot.slane %v2751, %v3268
      %v3270 = vlaneseq
      %v3271 = vshrl.u32 %v3270, 7
      %v3272 = vsub.s32 %v2881, %v3271
      %v3273 = vrot.slane %v2754, %v3272
      %v3274 = vsel %vm2886, %v3273, %v3269
      %v3275 = vlaneseq
      %v3276 = vshrl.u32 %v3275, 7
      %v3277 = vsub.s32 %v2876, %v3276
      %v3278 = vrot.slane %v2757, %v3277
      %v3279 = vlaneseq
      %v3280 = vshrl.u32 %v3279, 7
      %v3281 = vsub.s32 %v2881, %v3280
      %v3282 = vrot.slane %v2760, %v3281
      %v3283 = vsel %vm2886, %v3282, %v3278
      %v3284 = vlaneseq
      %v3285 = vshrl.u32 %v3284, 7
      %v3286 = vsub.s32 %v2876, %v3285
      %v3287 = vrot.slane %v2763, %v3286
      %v3288 = vlaneseq
      %v3289 = vshrl.u32 %v3288, 7
      %v3290 = vsub.s32 %v2881, %v3289
      %v3291 = vrot.slane %v2766, %v3290
      %v3292 = vsel %vm2886, %v3291, %v3287
      %v3293 = vlaneseq
      %v3294 = vshrl.u32 %v3293, 7
      %v3295 = vsub.s32 %v2876, %v3294
      %v3296 = vrot.slane %v2769, %v3295
      %v3297 = vlaneseq
      %v3298 = vshrl.u32 %v3297, 7
      %v3299 = vsub.s32 %v2881, %v3298
      %v3300 = vrot.slane %v2772, %v3299
      %v3301 = vsel %vm2886, %v3300, %v3296
      %v3302 = vlaneseq
      %v3303 = vshrl.u32 %v3302, 7
      %v3304 = vsub.s32 %v2876, %v3303
      %v3305 = vrot.slane %v2775, %v3304
      %v3306 = vlaneseq
      %v3307 = vshrl.u32 %v3306, 7
      %v3308 = vsub.s32 %v2881, %v3307
      %v3309 = vrot.slane %v2778, %v3308
      %v3310 = vsel %vm2886, %v3309, %v3305
      %v3311 = vlaneseq
      %v3312 = vshrl.u32 %v3311, 7
      %v3313 = vsub.s32 %v2876, %v3312
      %v3314 = vrot.slane %v2781, %v3313
      %v3315 = vlaneseq
      %v3316 = vshrl.u32 %v3315, 7
      %v3317 = vsub.s32 %v2881, %v3316
      %v3318 = vrot.slane %v2784, %v3317
      %v3319 = vsel %vm2886, %v3318, %v3314
      %v3320 = vlaneseq
      %v3321 = vshrl.u32 %v3320, 7
      %v3322 = vsub.s32 %v2876, %v3321
      %v3323 = vrot.slane %v2787, %v3322
      %v3324 = vlaneseq
      %v3325 = vshrl.u32 %v3324, 7
      %v3326 = vsub.s32 %v2881, %v3325
      %v3327 = vrot.slane %v2790, %v3326
      %v3328 = vsel %vm2886, %v3327, %v3323
      %v3329 = vlaneseq
      %v3330 = vshrl.u32 %v3329, 7
      %v3331 = vsub.s32 %v2876, %v3330
      %v3332 = vrot.slane %v2793, %v3331
      %v3333 = vlaneseq
      %v3334 = vshrl.u32 %v3333, 7
      %v3335 = vsub.s32 %v2881, %v3334
      %v3336 = vrot.slane %v2796, %v3335
      %v3337 = vsel %vm2886, %v3336, %v3332
      %v3338 = vlaneseq
      %v3339 = vshrl.u32 %v3338, 7
      %v3340 = vsub.s32 %v2876, %v3339
      %v3341 = vrot.slane %v2799, %v3340
      %v3342 = vlaneseq
      %v3343 = vshrl.u32 %v3342, 7
      %v3344 = vsub.s32 %v2881, %v3343
      %v3345 = vrot.slane %v2802, %v3344
      %v3346 = vsel %vm2886, %v3345, %v3341
      %v3347 = vlaneseq
      %v3348 = vshrl.u32 %v3347, 7
      %v3349 = vsub.s32 %v2876, %v3348
      %v3350 = vrot.slane %v2805, %v3349
      %v3351 = vlaneseq
      %v3352 = vshrl.u32 %v3351, 7
      %v3353 = vsub.s32 %v2881, %v3352
      %v3354 = vrot.slane %v2808, %v3353
      %v3355 = vsel %vm2886, %v3354, %v3350
      %v3356 = vlaneseq
      %v3357 = vshrl.u32 %v3356, 7
      %v3358 = vsub.s32 %v2876, %v3357
      %v3359 = vrot.slane %v2811, %v3358
      %v3360 = vlaneseq
      %v3361 = vshrl.u32 %v3360, 7
      %v3362 = vsub.s32 %v2881, %v3361
      %v3363 = vrot.slane %v2814, %v3362
      %v3364 = vsel %vm2886, %v3363, %v3359
      %v3365 = vlaneseq
      %v3366 = vshrl.u32 %v3365, 7
      %v3367 = vsub.s32 %v2876, %v3366
      %v3368 = vrot.slane %v2817, %v3367
      %v3369 = vlaneseq
      %v3370 = vshrl.u32 %v3369, 7
      %v3371 = vsub.s32 %v2881, %v3370
      %v3372 = vrot.slane %v2820, %v3371
      %v3373 = vsel %vm2886, %v3372, %v3368
      %v3374 = vlaneseq
      %v3375 = vshrl.u32 %v3374, 7
      %v3376 = vsub.s32 %v2876, %v3375
      %v3377 = vrot.slane %v2823, %v3376
      %v3378 = vlaneseq
      %v3379 = vshrl.u32 %v3378, 7
      %v3380 = vsub.s32 %v2881, %v3379
      %v3381 = vrot.slane %v2826, %v3380
      %v3382 = vsel %vm2886, %v3381, %v3377
      %v3383 = vlaneseq
      %v3384 = vshrl.u32 %v3383, 7
      %v3385 = vsub.s32 %v2876, %v3384
      %v3386 = vrot.slane %v2829, %v3385
      %v3387 = vlaneseq
      %v3388 = vshrl.u32 %v3387, 7
      %v3389 = vsub.s32 %v2881, %v3388
      %v3390 = vrot.slane %v2832, %v3389
      %v3391 = vsel %vm2886, %v3390, %v3386
      %v3392 = vlaneseq
      %v3393 = vshrl.u32 %v3392, 7
      %v3394 = vsub.s32 %v2876, %v3393
      %v3395 = vrot.slane %v2835, %v3394
      %v3396 = vlaneseq
      %v3397 = vshrl.u32 %v3396, 7
      %v3398 = vsub.s32 %v2881, %v3397
      %v3399 = vrot.slane %v2838, %v3398
      %v3400 = vsel %vm2886, %v3399, %v3395
      %v3401 = vlaneseq
      %v3402 = vshrl.u32 %v3401, 7
      %v3403 = vsub.s32 %v2876, %v3402
      %v3404 = vrot.slane %v2841, %v3403
      %v3405 = vlaneseq
      %v3406 = vshrl.u32 %v3405, 7
      %v3407 = vsub.s32 %v2881, %v3406
      %v3408 = vrot.slane %v2844, %v3407
      %v3409 = vsel %vm2886, %v3408, %v3404
      %v3410 = vlaneseq
      %v3411 = vshrl.u32 %v3410, 7
      %v3412 = vsub.s32 %v2876, %v3411
      %v3413 = vrot.slane %v2847, %v3412
      %v3414 = vlaneseq
      %v3415 = vshrl.u32 %v3414, 7
      %v3416 = vsub.s32 %v2881, %v3415
      %v3417 = vrot.slane %v2850, %v3416
      %v3418 = vsel %vm2886, %v3417, %v3413
      %v3419 = vlaneseq
      %v3420 = vshrl.u32 %v3419, 7
      %v3421 = vsub.s32 %v2876, %v3420
      %v3422 = vrot.slane %v2853, %v3421
      %v3423 = vlaneseq
      %v3424 = vshrl.u32 %v3423, 7
      %v3425 = vsub.s32 %v2881, %v3424
      %v3426 = vrot.slane %v2856, %v3425
      %v3427 = vsel %vm2886, %v3426, %v3422
      %v3428 = vlaneseq
      %v3429 = vshrl.u32 %v3428, 7
      %v3430 = vsub.s32 %v2876, %v3429
      %v3431 = vrot.slane %v2859, %v3430
      %v3432 = vlaneseq
      %v3433 = vshrl.u32 %v3432, 7
      %v3434 = vsub.s32 %v2881, %v3433
      %v3435 = vrot.slane %v2862, %v3434
      %v3436 = vsel %vm2886, %v3435, %v3431
      %v3437 = vlaneseq
      %v3438 = vshrl.u32 %v3437, 7
      %v3439 = vsub.s32 %v2876, %v3438
      %v3440 = vrot.slane %v2865, %v3439
      %v3441 = vlaneseq
      %v3442 = vshrl.u32 %v3441, 7
      %v3443 = vsub.s32 %v2881, %v3442
      %v3444 = vrot.slane %v2868, %v3443
      %v3445 = vsel %vm2886, %v3444, %v3440
      %v3446 = vlaneseq
      %v3447 = vshrl.u32 %v3446, 7
      %v3448 = vsub.s32 %v2876, %v3447
      %v3449 = vrot.slane %v2871, %v3448
      %v3450 = vlaneseq
      %v3451 = vshrl.u32 %v3450, 7
      %v3452 = vsub.s32 %v2881, %v3451
      %v3453 = vrot.slane %v2874, %v3452
      %v3454 = vsel %vm2886, %v3453, %v3449
      %vm3455 = vcmask 1041409
      %v3456 = vsel %vm3455, %v2896, %v2887
      %vm3457 = vcmask 1042434
      %v3458 = vsel %vm3457, %v2905, %v3456
      %vm3459 = vcmask 1043459
      %v3460 = vsel %vm3459, %v2914, %v3458
      %vm3461 = vcmask 1044484
      %v3462 = vsel %vm3461, %v2923, %v3460
      %vm3463 = vcmask 1045509
      %v3464 = vsel %vm3463, %v2932, %v3462
      %vm3465 = vcmask 1046534
      %v3466 = vsel %vm3465, %v2941, %v3464
      %vm3467 = vcmask 1047559
      %v3468 = vsel %vm3467, %v2950, %v3466
      %v3469 = vsel %vm3455, %v2968, %v2959
      %v3470 = vsel %vm3457, %v2977, %v3469
      %v3471 = vsel %vm3459, %v2986, %v3470
      %v3472 = vsel %vm3461, %v2995, %v3471
      %v3473 = vsel %vm3463, %v3004, %v3472
      %v3474 = vsel %vm3465, %v3013, %v3473
      %v3475 = vsel %vm3467, %v3022, %v3474
      %v3476 = vsel %vm3455, %v3040, %v3031
      %v3477 = vsel %vm3457, %v3049, %v3476
      %v3478 = vsel %vm3459, %v3058, %v3477
      %v3479 = vsel %vm3461, %v3067, %v3478
      %v3480 = vsel %vm3463, %v3076, %v3479
      %v3481 = vsel %vm3465, %v3085, %v3480
      %v3482 = vsel %vm3467, %v3094, %v3481
      %v3483 = vsel %vm3455, %v3112, %v3103
      %v3484 = vsel %vm3457, %v3121, %v3483
      %v3485 = vsel %vm3459, %v3130, %v3484
      %v3486 = vsel %vm3461, %v3139, %v3485
      %v3487 = vsel %vm3463, %v3148, %v3486
      %v3488 = vsel %vm3465, %v3157, %v3487
      %v3489 = vsel %vm3467, %v3166, %v3488
      %v3490 = vsel %vm3455, %v3184, %v3175
      %v3491 = vsel %vm3457, %v3193, %v3490
      %v3492 = vsel %vm3459, %v3202, %v3491
      %v3493 = vsel %vm3461, %v3211, %v3492
      %v3494 = vsel %vm3463, %v3220, %v3493
      %v3495 = vsel %vm3465, %v3229, %v3494
      %v3496 = vsel %vm3467, %v3238, %v3495
      %v3497 = vsel %vm3455, %v3256, %v3247
      %v3498 = vsel %vm3457, %v3265, %v3497
      %v3499 = vsel %vm3459, %v3274, %v3498
      %v3500 = vsel %vm3461, %v3283, %v3499
      %v3501 = vsel %vm3463, %v3292, %v3500
      %v3502 = vsel %vm3465, %v3301, %v3501
      %v3503 = vsel %vm3467, %v3310, %v3502
      %v3504 = vsel %vm3455, %v3328, %v3319
      %v3505 = vsel %vm3457, %v3337, %v3504
      %v3506 = vsel %vm3459, %v3346, %v3505
      %v3507 = vsel %vm3461, %v3355, %v3506
      %v3508 = vsel %vm3463, %v3364, %v3507
      %v3509 = vsel %vm3465, %v3373, %v3508
      %v3510 = vsel %vm3467, %v3382, %v3509
      %v3511 = vsel %vm3455, %v3400, %v3391
      %v3512 = vsel %vm3457, %v3409, %v3511
      %v3513 = vsel %vm3459, %v3418, %v3512
      %v3514 = vsel %vm3461, %v3427, %v3513
      %v3515 = vsel %vm3463, %v3436, %v3514
      %v3516 = vsel %vm3465, %v3445, %v3515
      %v3517 = vsel %vm3467, %v3454, %v3516
      %v3526 = vsel %vm693, %v3468, 0.0
      %3527 = vadd.xlane.f32.xlu0 %v3526
      %v3528 = vpop.xlane.xlu0 %3527
      %v3529 = vsel %vm693, %v3475, 0.0
      %3530 = vadd.xlane.f32.xlu0 %v3529
      %v3531 = vpop.xlane.xlu0 %3530
      %v3532 = vsel %vm693, %v3482, 0.0
      %3533 = vadd.xlane.f32.xlu0 %v3532
      %v3534 = vpop.xlane.xlu0 %3533
      %v3535 = vsel %vm693, %v3489, 0.0
      %3536 = vadd.xlane.f32.xlu0 %v3535
      %v3537 = vpop.xlane.xlu0 %3536
      %v3538 = vsel %vm693, %v3496, 0.0
      %3539 = vadd.xlane.f32.xlu0 %v3538
      %v3540 = vpop.xlane.xlu0 %3539
      %v3541 = vsel %vm693, %v3503, 0.0
      %3542 = vadd.xlane.f32.xlu0 %v3541
      %v3543 = vpop.xlane.xlu0 %3542
      %v3544 = vsel %vm693, %v3510, 0.0
      %3545 = vadd.xlane.f32.xlu0 %v3544
      %v3546 = vpop.xlane.xlu0 %3545
      %v3547 = vsel %vm693, %v3517, 0.0
      %3548 = vadd.xlane.f32.xlu0 %v3547
      %v3549 = vpop.xlane.xlu0 %3548
      %vm3550 = vcmp.lt.f32.partialorder %v3528, 8.0
      %vm3551 = vcmp.lt.f32.partialorder %v3531, 8.0
      %vm3552 = vcmp.lt.f32.partialorder %v3534, 8.0
      %vm3553 = vcmp.lt.f32.partialorder %v3537, 8.0
      %vm3554 = vcmp.lt.f32.partialorder %v3540, 8.0
      %vm3555 = vcmp.lt.f32.partialorder %v3543, 8.0
      %vm3556 = vcmp.lt.f32.partialorder %v3546, 8.0
      %vm3557 = vcmp.lt.f32.partialorder %v3549, 8.0
      %vm3558 = vmand %vm3550, %vm1304
      %vm3559 = vmand %vm3551, %vm1304
      %vm3560 = vmand %vm3552, %vm1304
      %vm3561 = vmand %vm3553, %vm1304
      %vm3562 = vmand %vm3554, %vm1304
      %vm3563 = vmand %vm3555, %vm1304
      %vm3564 = vmand %vm3556, %vm1304
      %vm3565 = vmand %vm3557, %vm1304
      %v3566 = vsel %vm3558, 1.0, 0.0
      %v3567 = vsel %vm3559, 1.0, 0.0
      %v3568 = vsel %vm3560, 1.0, 0.0
      %v3569 = vsel %vm3561, 1.0, 0.0
      %v3570 = vsel %vm3562, 1.0, 0.0
      %v3571 = vsel %vm3563, 1.0, 0.0
      %v3572 = vsel %vm3564, 1.0, 0.0
      %v3573 = vsel %vm3565, 1.0, 0.0
      %v3574 = vtanh.pop %v1282
      %v3575 = vtanh.pop %v1285
      %v3576 = vtanh.pop %v1288
      %v3577 = vtanh.pop %v1291
      %v3578 = vtanh.pop %v1294
      %v3579 = vtanh.pop %v1297
      %v3580 = vtanh.pop %v1300
      %v3581 = vtanh.pop %v1303
      %v3582 = vmul.f32 %v3574, %v3566
      %v3583 = vmul.f32 %v3575, %v3567
      %v3584 = vmul.f32 %v3576, %v3568
      %v3585 = vmul.f32 %v3577, %v3569
      %v3586 = vmul.f32 %v3578, %v3570
      %v3587 = vmul.f32 %v3579, %v3571
      %v3588 = vmul.f32 %v3580, %v3572
      %v3589 = vmul.f32 %v3581, %v3573
      %v3590 = vmul.f32 %v1257, %v3582
      %v3591 = vmul.f32 %v1258, %v3583
      %v3592 = vmul.f32 %v1259, %v3584
      %v3593 = vmul.f32 %v1260, %v3585
      %v3594 = vmul.f32 %v1261, %v3586
      %v3595 = vmul.f32 %v1262, %v3587
      %v3596 = vmul.f32 %v1263, %v3588
      %v3597 = vmul.f32 %v1264, %v3589
      %vm3598 = vcmp.gt.f32.partialorder %v3566, 0.0
      %vm3599 = vcmp.gt.f32.partialorder %v3567, 0.0
      %vm3600 = vcmp.gt.f32.partialorder %v3568, 0.0
      %vm3601 = vcmp.gt.f32.partialorder %v3569, 0.0
      %vm3602 = vcmp.gt.f32.partialorder %v3570, 0.0
      %vm3603 = vcmp.gt.f32.partialorder %v3571, 0.0
      %vm3604 = vcmp.gt.f32.partialorder %v3572, 0.0
      %vm3605 = vcmp.gt.f32.partialorder %v3573, 0.0
      %v3606 = vsel %vm3598, 1, 0
      %v3607 = vsel %vm3599, 1, 0
      %v3608 = vsel %vm3600, 1, 0
      %v3609 = vsel %vm3601, 1, 0
      %v3610 = vsel %vm3602, 1, 0
      %v3611 = vsel %vm3603, 1, 0
      %v3612 = vsel %vm3604, 1, 0
      %v3613 = vsel %vm3605, 1, 0
      %vm3614 = vcmp.eq.s32.totalorder %v3606, 1
      %vm3615 = vcmp.eq.s32.totalorder %v3607, 1
      %vm3616 = vcmp.eq.s32.totalorder %v3608, 1
      %vm3617 = vcmp.eq.s32.totalorder %v3609, 1
      %vm3618 = vcmp.eq.s32.totalorder %v3610, 1
      %vm3619 = vcmp.eq.s32.totalorder %v3611, 1
      %vm3620 = vcmp.eq.s32.totalorder %v3612, 1
      %vm3621 = vcmp.eq.s32.totalorder %v3613, 1
      %v3622 = vsel %vm3614, %v3590, -1e+30
      %v3623 = vsel %vm3615, %v3591, -1e+30
      %v3624 = vsel %vm3616, %v3592, -1e+30
      %v3625 = vsel %vm3617, %v3593, -1e+30
      %v3626 = vsel %vm3618, %v3594, -1e+30
      %v3627 = vsel %vm3619, %v3595, -1e+30
      %v3628 = vsel %vm3620, %v3596, -1e+30
      %v3629 = vsel %vm3621, %v3597, -1e+30
      %v3630 = vsel %vm1279, %v3622, -inf
      %v3631 = vsel %vm1279, %v3623, -inf
      %v3632 = vmax.f32 %v3630, %v3631
      %v3633 = vrot.slane %v3632, 4
      %v3634 = vmax.f32 %v3632, %v3633
      %v3635 = vrot.slane %v3634, 2
      %v3636 = vmax.f32 %v3634, %v3635
      %v3637 = vrot.slane %v3636, 1
      %v3638 = vmax.f32 %v3636, %v3637
      %v3639 = vsel %vm1279, %v3624, -inf
      %v3640 = vsel %vm1279, %v3625, -inf
      %v3641 = vmax.f32 %v3639, %v3640
      %v3642 = vrot.slane %v3641, 4
      %v3643 = vmax.f32 %v3641, %v3642
      %v3644 = vrot.slane %v3643, 2
      %v3645 = vmax.f32 %v3643, %v3644
      %v3646 = vrot.slane %v3645, 1
      %v3647 = vmax.f32 %v3645, %v3646
      %v3648 = vsel %vm1279, %v3626, -inf
      %v3649 = vsel %vm1279, %v3627, -inf
      %v3650 = vmax.f32 %v3648, %v3649
      %v3651 = vrot.slane %v3650, 4
      %v3652 = vmax.f32 %v3650, %v3651
      %v3653 = vrot.slane %v3652, 2
      %v3654 = vmax.f32 %v3652, %v3653
      %v3655 = vrot.slane %v3654, 1
      %v3656 = vmax.f32 %v3654, %v3655
      %v3657 = vsel %vm1279, %v3628, -inf
      %v3658 = vsel %vm1279, %v3629, -inf
      %v3659 = vmax.f32 %v3657, %v3658
      %v3660 = vrot.slane %v3659, 4
      %v3661 = vmax.f32 %v3659, %v3660
      %v3662 = vrot.slane %v3661, 2
      %v3663 = vmax.f32 %v3661, %v3662
      %v3664 = vrot.slane %v3663, 1
      %v3665 = vmax.f32 %v3663, %v3664
      %v3666 = vsel %vm1279, %v3590, 0.0
      %v3667 = vsel %vm1279, %v3591, 0.0
      %v3668 = vadd.f32 %v3666, %v3667
      %v3669 = vrot.slane %v3668, 4
      %v3670 = vadd.f32 %v3668, %v3669
      %v3671 = vrot.slane %v3670, 2
      %v3672 = vadd.f32 %v3670, %v3671
      %v3673 = vrot.slane %v3672, 1
      %v3674 = vadd.f32 %v3672, %v3673
      %v3675 = vsel %vm1279, %v3592, 0.0
      %v3676 = vsel %vm1279, %v3593, 0.0
      %v3677 = vadd.f32 %v3675, %v3676
      %v3678 = vrot.slane %v3677, 4
      %v3679 = vadd.f32 %v3677, %v3678
      %v3680 = vrot.slane %v3679, 2
      %v3681 = vadd.f32 %v3679, %v3680
      %v3682 = vrot.slane %v3681, 1
      %v3683 = vadd.f32 %v3681, %v3682
      %v3684 = vsel %vm1279, %v3594, 0.0
      %v3685 = vsel %vm1279, %v3595, 0.0
      %v3686 = vadd.f32 %v3684, %v3685
      %v3687 = vrot.slane %v3686, 4
      %v3688 = vadd.f32 %v3686, %v3687
      %v3689 = vrot.slane %v3688, 2
      %v3690 = vadd.f32 %v3688, %v3689
      %v3691 = vrot.slane %v3690, 1
      %v3692 = vadd.f32 %v3690, %v3691
      %v3693 = vsel %vm1279, %v3596, 0.0
      %v3694 = vsel %vm1279, %v3597, 0.0
      %v3695 = vadd.f32 %v3693, %v3694
      %v3696 = vrot.slane %v3695, 4
      %v3697 = vadd.f32 %v3695, %v3696
      %v3698 = vrot.slane %v3697, 2
      %v3699 = vadd.f32 %v3697, %v3698
      %v3700 = vrot.slane %v3699, 1
      %v3701 = vadd.f32 %v3699, %v3700
      %v3710 = vlaneseq
      %v3711 = vshrl.u32 %v3710, 7
      %v3712 = vsub.s32 %v2876, %v3711
      %v3713 = vrot.slane %v3566, %v3712
      %v3714 = vlaneseq
      %v3715 = vshrl.u32 %v3714, 7
      %v3716 = vsub.s32 %v2881, %v3715
      %v3717 = vrot.slane %v3567, %v3716
      %v3718 = vsel %vm2886, %v3717, %v3713
      %v3719 = vlaneseq
      %v3720 = vshrl.u32 %v3719, 7
      %v3721 = vsub.s32 %v2876, %v3720
      %v3722 = vrot.slane %v3568, %v3721
      %v3723 = vlaneseq
      %v3724 = vshrl.u32 %v3723, 7
      %v3725 = vsub.s32 %v2881, %v3724
      %v3726 = vrot.slane %v3569, %v3725
      %v3727 = vsel %vm2886, %v3726, %v3722
      %v3728 = vlaneseq
      %v3729 = vshrl.u32 %v3728, 7
      %v3730 = vsub.s32 %v2876, %v3729
      %v3731 = vrot.slane %v3570, %v3730
      %v3732 = vlaneseq
      %v3733 = vshrl.u32 %v3732, 7
      %v3734 = vsub.s32 %v2881, %v3733
      %v3735 = vrot.slane %v3571, %v3734
      %v3736 = vsel %vm2886, %v3735, %v3731
      %v3737 = vlaneseq
      %v3738 = vshrl.u32 %v3737, 7
      %v3739 = vsub.s32 %v2876, %v3738
      %v3740 = vrot.slane %v3572, %v3739
      %v3741 = vlaneseq
      %v3742 = vshrl.u32 %v3741, 7
      %v3743 = vsub.s32 %v2881, %v3742
      %v3744 = vrot.slane %v3573, %v3743
      %v3745 = vsel %vm2886, %v3744, %v3740
      %v3746 = vsel %vm3455, %v3727, %v3718
      %v3747 = vsel %vm3457, %v3736, %v3746
      %v3748 = vsel %vm3459, %v3745, %v3747
      %vm3750 = vcmask 125952
      %v3751 = vsel %vm3750, %v3748, 0.0
      %3752 = vadd.xlane.f32.xlu0 %v3751
      %v3753 = vpop.xlane.xlu0 %3752
      %v3755 = vrot.slane %v3753, 1
      %v3756 = vrot.slane %v3753, 2
      %v3757 = vrot.slane %v3753, 3
      %v3762 = vrcp.pop %v3753
      %v3763 = vmul.f32 %v3674, %v3762
      %v3764 = vrcp.pop %v3755
      %v3765 = vmul.f32 %v3683, %v3764
      %v3766 = vrcp.pop %v3756
      %v3767 = vmul.f32 %v3692, %v3766
      %v3768 = vrcp.pop %v3757
      %v3769 = vmul.f32 %v3701, %v3768
      %v3770 = vadd.f32 %v3638, 0.0
      %v3771 = vadd.f32 %v3647, 0.0
      %v3772 = vadd.f32 %v3656, 0.0
      %v3773 = vadd.f32 %v3665, 0.0
      %v3774 = vadd.f32 %v3763, 0.0
      %v3775 = vadd.f32 %v3765, 0.0
      %v3776 = vadd.f32 %v3767, 0.0
      %v3777 = vadd.f32 %v3769, 0.0
      %v3778 = vld [vmem:[%s636] sm:$0xff]
      %v3779 = vld [vmem:[%s636 + $0x8] sm:$0xff]
      %v3780 = vld [vmem:[%s636 + $0x10] sm:$0xff]
      %v3781 = vld [vmem:[%s636 + $0x18] sm:$0xff]
      %v3782 = vld [vmem:[%s639] sm:$0x1]
      %v3783 = vld [vmem:[%s642] sm:$0x1]
      %v3784 = vsel %vm3457, %v3718, %v3718
      %v3785 = vsel %vm3459, %v3718, %v3784
      %v3786 = vsel %vm3461, %v3718, %v3785
      %v3787 = vsel %vm3463, %v3718, %v3786
      %v3788 = vsel %vm3465, %v3718, %v3787
      %v3789 = vsel %vm3467, %v3718, %v3788
      %v3790 = vsel %vm3457, %v3727, %v3727
      %v3791 = vsel %vm3459, %v3727, %v3790
      %v3792 = vsel %vm3461, %v3727, %v3791
      %v3793 = vsel %vm3463, %v3727, %v3792
      %v3794 = vsel %vm3465, %v3727, %v3793
      %v3795 = vsel %vm3467, %v3727, %v3794
      %v3796 = vsel %vm3457, %v3736, %v3736
      %v3797 = vsel %vm3459, %v3736, %v3796
      %v3798 = vsel %vm3461, %v3736, %v3797
      %v3799 = vsel %vm3463, %v3736, %v3798
      %v3800 = vsel %vm3465, %v3736, %v3799
      %v3801 = vsel %vm3467, %v3736, %v3800
      %v3802 = vsel %vm3457, %v3745, %v3745
      %v3803 = vsel %vm3459, %v3745, %v3802
      %v3804 = vsel %vm3461, %v3745, %v3803
      %v3805 = vsel %vm3463, %v3745, %v3804
      %v3806 = vsel %vm3465, %v3745, %v3805
      %v3807 = vsel %vm3467, %v3745, %v3806
      %v3812 = vmul.f32 %v671, %v3789
      %v3813 = vmul.f32 %v672, %v3789
      %v3814 = vmul.f32 %v673, %v3795
      %v3815 = vmul.f32 %v674, %v3795
      %v3816 = vmul.f32 %v675, %v3801
      %v3817 = vmul.f32 %v676, %v3801
      %v3818 = vmul.f32 %v677, %v3807
      %v3819 = vmul.f32 %v678, %v3807
      %v3820 = vsel %vm693, %v3812, 0.0
      %3821 = vadd.xlane.f32.xlu0 %v3820
      %v3822 = vpop.xlane.xlu0 %3821
      %v3823 = vsel %vm693, %v3813, 0.0
      %3824 = vadd.xlane.f32.xlu0 %v3823
      %v3825 = vpop.xlane.xlu0 %3824
      %v3826 = vsel %vm693, %v3814, 0.0
      %3827 = vadd.xlane.f32.xlu0 %v3826
      %v3828 = vpop.xlane.xlu0 %3827
      %v3829 = vsel %vm693, %v3815, 0.0
      %3830 = vadd.xlane.f32.xlu0 %v3829
      %v3831 = vpop.xlane.xlu0 %3830
      %v3832 = vsel %vm693, %v3816, 0.0
      %3833 = vadd.xlane.f32.xlu0 %v3832
      %v3834 = vpop.xlane.xlu0 %3833
      %v3835 = vsel %vm693, %v3817, 0.0
      %3836 = vadd.xlane.f32.xlu0 %v3835
      %v3837 = vpop.xlane.xlu0 %3836
      %v3838 = vsel %vm693, %v3818, 0.0
      %3839 = vadd.xlane.f32.xlu0 %v3838
      %v3840 = vpop.xlane.xlu0 %3839
      %v3841 = vsel %vm693, %v3819, 0.0
      %3842 = vadd.xlane.f32.xlu0 %v3841
      %v3843 = vpop.xlane.xlu0 %3842
      %v3844 = vadd.f32 %v3822, %v3566
      %v3845 = vadd.f32 %v3825, %v3567
      %v3846 = vadd.f32 %v3828, %v3568
      %v3847 = vadd.f32 %v3831, %v3569
      %v3848 = vadd.f32 %v3834, %v3570
      %v3849 = vadd.f32 %v3837, %v3571
      %v3850 = vadd.f32 %v3840, %v3572
      %v3851 = vadd.f32 %v3843, %v3573
      %vm3852 = vcmp.gt.f32.partialorder %v3844, 0.0
      %vm3853 = vcmp.gt.f32.partialorder %v3845, 0.0
      %vm3854 = vcmp.gt.f32.partialorder %v3846, 0.0
      %vm3855 = vcmp.gt.f32.partialorder %v3847, 0.0
      %vm3856 = vcmp.gt.f32.partialorder %v3848, 0.0
      %vm3857 = vcmp.gt.f32.partialorder %v3849, 0.0
      %vm3858 = vcmp.gt.f32.partialorder %v3850, 0.0
      %vm3859 = vcmp.gt.f32.partialorder %v3851, 0.0
      %v3860 = vrsqrt.pop %v3844
      %v3861 = vrsqrt.pop %v3845
      %v3862 = vrsqrt.pop %v3846
      %v3863 = vrsqrt.pop %v3847
      %v3864 = vrsqrt.pop %v3848
      %v3865 = vrsqrt.pop %v3849
      %v3866 = vrsqrt.pop %v3850
      %v3867 = vrsqrt.pop %v3851
      %v3868 = vsel %vm3852, %v3860, 0.0
      %v3869 = vsel %vm3853, %v3861, 0.0
      %v3870 = vsel %vm3854, %v3862, 0.0
      %v3871 = vsel %vm3855, %v3863, 0.0
      %v3872 = vsel %vm3856, %v3864, 0.0
      %v3873 = vsel %vm3857, %v3865, 0.0
      %v3874 = vsel %vm3858, %v3866, 0.0
      %v3875 = vsel %vm3859, %v3867, 0.0
      %v3877 = vsel %vm1279, %v3590, 0
      %v3880 = vsel %vm1279, %v3591, 0
      %v3883 = vsel %vm1279, %v3592, 0
      %v3886 = vsel %vm1279, %v3593, 0
      %v3889 = vsel %vm1279, %v3594, 0
      %v3892 = vsel %vm1279, %v3595, 0
      %v3895 = vsel %vm1279, %v3596, 0
      %v3898 = vsel %vm1279, %v3597, 0
      %3900 = vmatprep.subr.mxu0 0.0
      %3901 = vmatpush1.msra.mxu0 0.0
      %3902 = vmatprep.subr.mxu0 0.0
      %3903 = vmatpush1.msra.mxu0 0.0
      %3904 = vmatprep.subr.mxu0 0.0
      %3905 = vmatpush1.msra.mxu0 0.0
      %3906 = vmatprep.subr.mxu0 0.0
      %3907 = vmatpush1.msra.mxu0 0.0
      %3908 = vmatprep.subr.mxu0 0.0
      %3909 = vmatpush1.msra.mxu0 0.0
      %3910 = vmatprep.subr.mxu0 0.0
      %3911 = vmatpush1.msra.mxu0 0.0
      %3912 = vmatprep.subr.mxu0 0.0
      %3913 = vmatpush1.msra.mxu0 0.0
      %3914 = vmatprep.subr.mxu0 0.0
      %3915 = vmatpush1.msra.mxu0 0.0
      %3916 = vmatprep.subr.mxu0 0.0
      %3917 = vmatpush1.msra.mxu0 0.0
      %3918 = vmatprep.subr.mxu0 0.0
      %3919 = vmatpush1.msra.mxu0 0.0
      %3920 = vmatprep.subr.mxu0 0.0
      %3921 = vmatpush1.msra.mxu0 0.0
      %3922 = vmatprep.subr.mxu0 0.0
      %3923 = vmatpush1.msra.mxu0 0.0
      %3924 = vmatprep.subr.mxu0 0.0
      %3925 = vmatpush1.msra.mxu0 %v3781
      %3926 = vmatprep.subr.mxu0 0.0
      %3927 = vmatpush1.msra.mxu0 %v3780
      %3928 = vmatprep.subr.mxu0 0.0
      %3929 = vmatpush1.msra.mxu0 %v3779
      %3930 = vmatprep.subr.mxu0 0.0
      %3931 = vmatpush1.msra.mxu0 %v3778
      %3932 = vmatprep.subr.mxu0 0.0
      %3933 = vmatpush2.msra.mxu0 0.0
      %3934 = vmatprep.subr.mxu0 0.0
      %3935 = vmatpush2.msra.mxu0 0.0
      %3936 = vmatprep.subr.mxu0 0.0
      %3937 = vmatpush2.msra.mxu0 0.0
      %3938 = vmatprep.subr.mxu0 0.0
      %3939 = vmatpush2.msra.mxu0 0.0
      %3940 = vmatprep.subr.mxu0 0.0
      %3941 = vmatpush2.msra.mxu0 0.0
      %3942 = vmatprep.subr.mxu0 0.0
      %3943 = vmatpush2.msra.mxu0 0.0
      %3944 = vmatprep.subr.mxu0 0.0
      %3945 = vmatpush2.msra.mxu0 0.0
      %3946 = vmatprep.subr.mxu0 0.0
      %3947 = vmatpush2.msra.mxu0 0.0
      %3948 = vmatprep.subr.mxu0 0.0
      %3949 = vmatpush2.msra.mxu0 0.0
      %3950 = vmatprep.subr.mxu0 0.0
      %3951 = vmatpush2.msra.mxu0 0.0
      %3952 = vmatprep.subr.mxu0 0.0
      %3953 = vmatpush2.msra.mxu0 0.0
      %3954 = vmatprep.subr.mxu0 0.0
      %3955 = vmatpush2.msra.mxu0 0.0
      %3956 = vmatprep.subr.mxu0 0.0
      %3957 = vmatpush2.msra.mxu0 0.0
      %3958 = vmatprep.subr.mxu0 0.0
      %3959 = vmatpush2.msra.mxu0 0.0
      %3960 = vmatprep.subr.mxu0 0.0
      %3961 = vmatpush2.msra.mxu0 0.0
      %3962 = vmatprep.subr.mxu0 0.0
      %3963 = vmatpush2.msra.mxu0 0.0
      %3964 = vmatprep.mubr.f32.mxu0 0.0
      %3965 = vmatmul.mubr.f32.gmra.mxu0 %v3877
      %v3966 = vpop.f32.mrf.mxu0
      %v3967 = vadd.f32 0.0, %v3966
      %v3968 = vpop.f32.mrf.mxu0
      %3969 = vmatprep.mubr.f32.mxu0 0.0
      %3970 = vmatmul.mubr.f32.gmra.mxu0 %v3880
      %v3971 = vpop.f32.mrf.mxu0
      %v3972 = vadd.f32 0.0, %v3971
      %v3973 = vpop.f32.mrf.mxu0
      %3974 = vmatprep.mubr.f32.mxu0 0.0
      %3975 = vmatmul.mubr.f32.gmra.mxu0 %v3883
      %v3976 = vpop.f32.mrf.mxu0
      %v3977 = vadd.f32 0.0, %v3976
      %v3978 = vpop.f32.mrf.mxu0
      %3979 = vmatprep.mubr.f32.mxu0 0.0
      %3980 = vmatmul.mubr.f32.gmra.mxu0 %v3886
      %v3981 = vpop.f32.mrf.mxu0
      %v3982 = vadd.f32 0.0, %v3981
      %v3983 = vpop.f32.mrf.mxu0
      %3984 = vmatprep.mubr.f32.mxu0 0.0
      %3985 = vmatmul.mubr.f32.gmra.mxu0 %v3889
      %v3986 = vpop.f32.mrf.mxu0
      %v3987 = vadd.f32 0.0, %v3986
      %v3988 = vpop.f32.mrf.mxu0
      %3989 = vmatprep.mubr.f32.mxu0 0.0
      %3990 = vmatmul.mubr.f32.gmra.mxu0 %v3892
      %v3991 = vpop.f32.mrf.mxu0
      %v3992 = vadd.f32 0.0, %v3991
      %v3993 = vpop.f32.mrf.mxu0
      %3994 = vmatprep.mubr.f32.mxu0 0.0
      %3995 = vmatmul.mubr.f32.gmra.mxu0 %v3895
      %v3996 = vpop.f32.mrf.mxu0
      %v3997 = vadd.f32 0.0, %v3996
      %v3998 = vpop.f32.mrf.mxu0
      %3999 = vmatprep.mubr.f32.mxu0 0.0
      %4000 = vmatmul.mubr.f32.gmra.mxu0 %v3898
      %v4001 = vpop.f32.mrf.mxu0
      %v4002 = vadd.f32 0.0, %v4001
      %v4003 = vpop.f32.mrf.mxu0
      %4004 = vdwg.mxu0
      %v4005 = vmul.f32 %v3868, %v3967
      %v4006 = vmul.f32 %v3869, %v3972
      %v4007 = vmul.f32 %v3870, %v3977
      %v4008 = vmul.f32 %v3871, %v3982
      %v4009 = vmul.f32 %v3872, %v3987
      %v4010 = vmul.f32 %v3873, %v3992
      %v4011 = vmul.f32 %v3874, %v3997
      %v4012 = vmul.f32 %v3875, %v4002
      %v4014 = vsel %vm693, %v3812, 0
      %v4017 = vsel %vm693, %v3813, 0
      %4019 = vmatprep.subr.mxu0 0.0
      %4020 = vmatpush1.msra.mxu0 0.0
      %4021 = vmatprep.subr.mxu0 0.0
      %4022 = vmatpush1.msra.mxu0 0.0
      %4023 = vmatprep.subr.mxu0 0.0
      %4024 = vmatpush1.msra.mxu0 0.0
      %4025 = vmatprep.subr.mxu0 0.0
      %4026 = vmatpush1.msra.mxu0 0.0
      %4027 = vmatprep.subr.mxu0 0.0
      %4028 = vmatpush1.msra.mxu0 0.0
      %4029 = vmatprep.subr.mxu0 0.0
      %4030 = vmatpush1.msra.mxu0 0.0
      %4031 = vmatprep.subr.mxu0 0.0
      %4032 = vmatpush1.msra.mxu0 0.0
      %4033 = vmatprep.subr.mxu0 0.0
      %4034 = vmatpush1.msra.mxu0 0.0
      %4035 = vmatprep.subr.mxu0 0.0
      %4036 = vmatpush1.msra.mxu0 0.0
      %4037 = vmatprep.subr.mxu0 0.0
      %4038 = vmatpush1.msra.mxu0 0.0
      %4039 = vmatprep.subr.mxu0 0.0
      %4040 = vmatpush1.msra.mxu0 0.0
      %4041 = vmatprep.subr.mxu0 0.0
      %4042 = vmatpush1.msra.mxu0 0.0
      %4043 = vmatprep.subr.mxu0 0.0
      %4044 = vmatpush1.msra.mxu0 0.0
      %4045 = vmatprep.subr.mxu0 0.0
      %4046 = vmatpush1.msra.mxu0 0.0
      %4047 = vmatprep.subr.mxu0 0.0
      %4048 = vmatpush1.msra.mxu0 %v4006
      %4049 = vmatprep.subr.mxu0 0.0
      %4050 = vmatpush1.msra.mxu0 %v4005
      %4051 = vmatprep.subr.mxu0 0.0
      %4052 = vmatpush2.msra.mxu0 0.0
      %4053 = vmatprep.subr.mxu0 0.0
      %4054 = vmatpush2.msra.mxu0 0.0
      %4055 = vmatprep.subr.mxu0 0.0
      %4056 = vmatpush2.msra.mxu0 0.0
      %4057 = vmatprep.subr.mxu0 0.0
      %4058 = vmatpush2.msra.mxu0 0.0
      %4059 = vmatprep.subr.mxu0 0.0
      %4060 = vmatpush2.msra.mxu0 0.0
      %4061 = vmatprep.subr.mxu0 0.0
      %4062 = vmatpush2.msra.mxu0 0.0
      %4063 = vmatprep.subr.mxu0 0.0
      %4064 = vmatpush2.msra.mxu0 0.0
      %4065 = vmatprep.subr.mxu0 0.0
      %4066 = vmatpush2.msra.mxu0 0.0
      %4067 = vmatprep.subr.mxu0 0.0
      %4068 = vmatpush2.msra.mxu0 0.0
      %4069 = vmatprep.subr.mxu0 0.0
      %4070 = vmatpush2.msra.mxu0 0.0
      %4071 = vmatprep.subr.mxu0 0.0
      %4072 = vmatpush2.msra.mxu0 0.0
      %4073 = vmatprep.subr.mxu0 0.0
      %4074 = vmatpush2.msra.mxu0 0.0
      %4075 = vmatprep.subr.mxu0 0.0
      %4076 = vmatpush2.msra.mxu0 0.0
      %4077 = vmatprep.subr.mxu0 0.0
      %4078 = vmatpush2.msra.mxu0 0.0
      %4079 = vmatprep.subr.mxu0 0.0
      %4080 = vmatpush2.msra.mxu0 0.0
      %4081 = vmatprep.subr.mxu0 0.0
      %4082 = vmatpush2.msra.mxu0 0.0
      %4083 = vmatprep.mubr.f32.mxu0 0.0
      %4084 = vmatmul.mubr.f32.gmra.mxu0 %v4014
      %v4085 = vpop.f32.mrf.mxu0
      %v4086 = vadd.f32 0.0, %v4085
      %v4087 = vpop.f32.mrf.mxu0
      %4088 = vmatprep.mubr.f32.mxu0 0.0
      %4089 = vmatmul.mubr.f32.gmra.mxu0 %v4017
      %v4090 = vpop.f32.mrf.mxu0
      %v4091 = vadd.f32 0.0, %v4090
      %v4092 = vpop.f32.mrf.mxu0
      %4093 = vdwg.mxu0
      %v4095 = vsel %vm693, %v3814, 0
      %v4098 = vsel %vm693, %v3815, 0
      %4100 = vmatprep.subr.mxu0 0.0
      %4101 = vmatpush1.msra.mxu0 0.0
      %4102 = vmatprep.subr.mxu0 0.0
      %4103 = vmatpush1.msra.mxu0 0.0
      %4104 = vmatprep.subr.mxu0 0.0
      %4105 = vmatpush1.msra.mxu0 0.0
      %4106 = vmatprep.subr.mxu0 0.0
      %4107 = vmatpush1.msra.mxu0 0.0
      %4108 = vmatprep.subr.mxu0 0.0
      %4109 = vmatpush1.msra.mxu0 0.0
      %4110 = vmatprep.subr.mxu0 0.0
      %4111 = vmatpush1.msra.mxu0 0.0
      %4112 = vmatprep.subr.mxu0 0.0
      %4113 = vmatpush1.msra.mxu0 0.0
      %4114 = vmatprep.subr.mxu0 0.0
      %4115 = vmatpush1.msra.mxu0 0.0
      %4116 = vmatprep.subr.mxu0 0.0
      %4117 = vmatpush1.msra.mxu0 0.0
      %4118 = vmatprep.subr.mxu0 0.0
      %4119 = vmatpush1.msra.mxu0 0.0
      %4120 = vmatprep.subr.mxu0 0.0
      %4121 = vmatpush1.msra.mxu0 0.0
      %4122 = vmatprep.subr.mxu0 0.0
      %4123 = vmatpush1.msra.mxu0 0.0
      %4124 = vmatprep.subr.mxu0 0.0
      %4125 = vmatpush1.msra.mxu0 0.0
      %4126 = vmatprep.subr.mxu0 0.0
      %4127 = vmatpush1.msra.mxu0 0.0
      %4128 = vmatprep.subr.mxu0 0.0
      %4129 = vmatpush1.msra.mxu0 %v4008
      %4130 = vmatprep.subr.mxu0 0.0
      %4131 = vmatpush1.msra.mxu0 %v4007
      %4132 = vmatprep.subr.mxu0 0.0
      %4133 = vmatpush2.msra.mxu0 0.0
      %4134 = vmatprep.subr.mxu0 0.0
      %4135 = vmatpush2.msra.mxu0 0.0
      %4136 = vmatprep.subr.mxu0 0.0
      %4137 = vmatpush2.msra.mxu0 0.0
      %4138 = vmatprep.subr.mxu0 0.0
      %4139 = vmatpush2.msra.mxu0 0.0
      %4140 = vmatprep.subr.mxu0 0.0
      %4141 = vmatpush2.msra.mxu0 0.0
      %4142 = vmatprep.subr.mxu0 0.0
      %4143 = vmatpush2.msra.mxu0 0.0
      %4144 = vmatprep.subr.mxu0 0.0
      %4145 = vmatpush2.msra.mxu0 0.0
      %4146 = vmatprep.subr.mxu0 0.0
      %4147 = vmatpush2.msra.mxu0 0.0
      %4148 = vmatprep.subr.mxu0 0.0
      %4149 = vmatpush2.msra.mxu0 0.0
      %4150 = vmatprep.subr.mxu0 0.0
      %4151 = vmatpush2.msra.mxu0 0.0
      %4152 = vmatprep.subr.mxu0 0.0
      %4153 = vmatpush2.msra.mxu0 0.0
      %4154 = vmatprep.subr.mxu0 0.0
      %4155 = vmatpush2.msra.mxu0 0.0
      %4156 = vmatprep.subr.mxu0 0.0
      %4157 = vmatpush2.msra.mxu0 0.0
      %4158 = vmatprep.subr.mxu0 0.0
      %4159 = vmatpush2.msra.mxu0 0.0
      %4160 = vmatprep.subr.mxu0 0.0
      %4161 = vmatpush2.msra.mxu0 0.0
      %4162 = vmatprep.subr.mxu0 0.0
      %4163 = vmatpush2.msra.mxu0 0.0
      %4164 = vmatprep.mubr.f32.mxu0 0.0
      %4165 = vmatmul.mubr.f32.gmra.mxu0 %v4095
      %v4166 = vpop.f32.mrf.mxu0
      %v4167 = vadd.f32 0.0, %v4166
      %v4168 = vpop.f32.mrf.mxu0
      %4169 = vmatprep.mubr.f32.mxu0 0.0
      %4170 = vmatmul.mubr.f32.gmra.mxu0 %v4098
      %v4171 = vpop.f32.mrf.mxu0
      %v4172 = vadd.f32 0.0, %v4171
      %v4173 = vpop.f32.mrf.mxu0
      %4174 = vdwg.mxu0
      %v4176 = vsel %vm693, %v3816, 0
      %v4179 = vsel %vm693, %v3817, 0
      %4181 = vmatprep.subr.mxu0 0.0
      %4182 = vmatpush1.msra.mxu0 0.0
      %4183 = vmatprep.subr.mxu0 0.0
      %4184 = vmatpush1.msra.mxu0 0.0
      %4185 = vmatprep.subr.mxu0 0.0
      %4186 = vmatpush1.msra.mxu0 0.0
      %4187 = vmatprep.subr.mxu0 0.0
      %4188 = vmatpush1.msra.mxu0 0.0
      %4189 = vmatprep.subr.mxu0 0.0
      %4190 = vmatpush1.msra.mxu0 0.0
      %4191 = vmatprep.subr.mxu0 0.0
      %4192 = vmatpush1.msra.mxu0 0.0
      %4193 = vmatprep.subr.mxu0 0.0
      %4194 = vmatpush1.msra.mxu0 0.0
      %4195 = vmatprep.subr.mxu0 0.0
      %4196 = vmatpush1.msra.mxu0 0.0
      %4197 = vmatprep.subr.mxu0 0.0
      %4198 = vmatpush1.msra.mxu0 0.0
      %4199 = vmatprep.subr.mxu0 0.0
      %4200 = vmatpush1.msra.mxu0 0.0
      %4201 = vmatprep.subr.mxu0 0.0
      %4202 = vmatpush1.msra.mxu0 0.0
      %4203 = vmatprep.subr.mxu0 0.0
      %4204 = vmatpush1.msra.mxu0 0.0
      %4205 = vmatprep.subr.mxu0 0.0
      %4206 = vmatpush1.msra.mxu0 0.0
      %4207 = vmatprep.subr.mxu0 0.0
      %4208 = vmatpush1.msra.mxu0 0.0
      %4209 = vmatprep.subr.mxu0 0.0
      %4210 = vmatpush1.msra.mxu0 %v4010
      %4211 = vmatprep.subr.mxu0 0.0
      %4212 = vmatpush1.msra.mxu0 %v4009
      %4213 = vmatprep.subr.mxu0 0.0
      %4214 = vmatpush2.msra.mxu0 0.0
      %4215 = vmatprep.subr.mxu0 0.0
      %4216 = vmatpush2.msra.mxu0 0.0
      %4217 = vmatprep.subr.mxu0 0.0
      %4218 = vmatpush2.msra.mxu0 0.0
      %4219 = vmatprep.subr.mxu0 0.0
      %4220 = vmatpush2.msra.mxu0 0.0
      %4221 = vmatprep.subr.mxu0 0.0
      %4222 = vmatpush2.msra.mxu0 0.0
      %4223 = vmatprep.subr.mxu0 0.0
      %4224 = vmatpush2.msra.mxu0 0.0
      %4225 = vmatprep.subr.mxu0 0.0
      %4226 = vmatpush2.msra.mxu0 0.0
      %4227 = vmatprep.subr.mxu0 0.0
      %4228 = vmatpush2.msra.mxu0 0.0
      %4229 = vmatprep.subr.mxu0 0.0
      %4230 = vmatpush2.msra.mxu0 0.0
      %4231 = vmatprep.subr.mxu0 0.0
      %4232 = vmatpush2.msra.mxu0 0.0
      %4233 = vmatprep.subr.mxu0 0.0
      %4234 = vmatpush2.msra.mxu0 0.0
      %4235 = vmatprep.subr.mxu0 0.0
      %4236 = vmatpush2.msra.mxu0 0.0
      %4237 = vmatprep.subr.mxu0 0.0
      %4238 = vmatpush2.msra.mxu0 0.0
      %4239 = vmatprep.subr.mxu0 0.0
      %4240 = vmatpush2.msra.mxu0 0.0
      %4241 = vmatprep.subr.mxu0 0.0
      %4242 = vmatpush2.msra.mxu0 0.0
      %4243 = vmatprep.subr.mxu0 0.0
      %4244 = vmatpush2.msra.mxu0 0.0
      %4245 = vmatprep.mubr.f32.mxu0 0.0
      %4246 = vmatmul.mubr.f32.gmra.mxu0 %v4176
      %v4247 = vpop.f32.mrf.mxu0
      %v4248 = vadd.f32 0.0, %v4247
      %v4249 = vpop.f32.mrf.mxu0
      %4250 = vmatprep.mubr.f32.mxu0 0.0
      %4251 = vmatmul.mubr.f32.gmra.mxu0 %v4179
      %v4252 = vpop.f32.mrf.mxu0
      %v4253 = vadd.f32 0.0, %v4252
      %v4254 = vpop.f32.mrf.mxu0
      %4255 = vdwg.mxu0
      %v4257 = vsel %vm693, %v3818, 0
      %v4260 = vsel %vm693, %v3819, 0
      %4262 = vmatprep.subr.mxu0 0.0
      %4263 = vmatpush1.msra.mxu0 0.0
      %4264 = vmatprep.subr.mxu0 0.0
      %4265 = vmatpush1.msra.mxu0 0.0
      %4266 = vmatprep.subr.mxu0 0.0
      %4267 = vmatpush1.msra.mxu0 0.0
      %4268 = vmatprep.subr.mxu0 0.0
      %4269 = vmatpush1.msra.mxu0 0.0
      %4270 = vmatprep.subr.mxu0 0.0
      %4271 = vmatpush1.msra.mxu0 0.0
      %4272 = vmatprep.subr.mxu0 0.0
      %4273 = vmatpush1.msra.mxu0 0.0
      %4274 = vmatprep.subr.mxu0 0.0
      %4275 = vmatpush1.msra.mxu0 0.0
      %4276 = vmatprep.subr.mxu0 0.0
      %4277 = vmatpush1.msra.mxu0 0.0
      %4278 = vmatprep.subr.mxu0 0.0
      %4279 = vmatpush1.msra.mxu0 0.0
      %4280 = vmatprep.subr.mxu0 0.0
      %4281 = vmatpush1.msra.mxu0 0.0
      %4282 = vmatprep.subr.mxu0 0.0
      %4283 = vmatpush1.msra.mxu0 0.0
      %4284 = vmatprep.subr.mxu0 0.0
      %4285 = vmatpush1.msra.mxu0 0.0
      %4286 = vmatprep.subr.mxu0 0.0
      %4287 = vmatpush1.msra.mxu0 0.0
      %4288 = vmatprep.subr.mxu0 0.0
      %4289 = vmatpush1.msra.mxu0 0.0
      %4290 = vmatprep.subr.mxu0 0.0
      %4291 = vmatpush1.msra.mxu0 %v4012
      %4292 = vmatprep.subr.mxu0 0.0
      %4293 = vmatpush1.msra.mxu0 %v4011
      %4294 = vmatprep.subr.mxu0 0.0
      %4295 = vmatpush2.msra.mxu0 0.0
      %4296 = vmatprep.subr.mxu0 0.0
      %4297 = vmatpush2.msra.mxu0 0.0
      %4298 = vmatprep.subr.mxu0 0.0
      %4299 = vmatpush2.msra.mxu0 0.0
      %4300 = vmatprep.subr.mxu0 0.0
      %4301 = vmatpush2.msra.mxu0 0.0
      %4302 = vmatprep.subr.mxu0 0.0
      %4303 = vmatpush2.msra.mxu0 0.0
      %4304 = vmatprep.subr.mxu0 0.0
      %4305 = vmatpush2.msra.mxu0 0.0
      %4306 = vmatprep.subr.mxu0 0.0
      %4307 = vmatpush2.msra.mxu0 0.0
      %4308 = vmatprep.subr.mxu0 0.0
      %4309 = vmatpush2.msra.mxu0 0.0
      %4310 = vmatprep.subr.mxu0 0.0
      %4311 = vmatpush2.msra.mxu0 0.0
      %4312 = vmatprep.subr.mxu0 0.0
      %4313 = vmatpush2.msra.mxu0 0.0
      %4314 = vmatprep.subr.mxu0 0.0
      %4315 = vmatpush2.msra.mxu0 0.0
      %4316 = vmatprep.subr.mxu0 0.0
      %4317 = vmatpush2.msra.mxu0 0.0
      %4318 = vmatprep.subr.mxu0 0.0
      %4319 = vmatpush2.msra.mxu0 0.0
      %4320 = vmatprep.subr.mxu0 0.0
      %4321 = vmatpush2.msra.mxu0 0.0
      %4322 = vmatprep.subr.mxu0 0.0
      %4323 = vmatpush2.msra.mxu0 0.0
      %4324 = vmatprep.subr.mxu0 0.0
      %4325 = vmatpush2.msra.mxu0 0.0
      %4326 = vmatprep.mubr.f32.mxu0 0.0
      %4327 = vmatmul.mubr.f32.gmra.mxu0 %v4257
      %v4328 = vpop.f32.mrf.mxu0
      %v4329 = vadd.f32 0.0, %v4328
      %v4330 = vpop.f32.mrf.mxu0
      %4331 = vmatprep.mubr.f32.mxu0 0.0
      %4332 = vmatmul.mubr.f32.gmra.mxu0 %v4260
      %v4333 = vpop.f32.mrf.mxu0
      %v4334 = vadd.f32 0.0, %v4333
      %v4335 = vpop.f32.mrf.mxu0
      %4336 = vdwg.mxu0
      %v4337 = vmul.f32 %v3868, %v4086
      %v4338 = vmul.f32 %v3869, %v4091
      %v4339 = vmul.f32 %v3870, %v4167
      %v4340 = vmul.f32 %v3871, %v4172
      %v4341 = vmul.f32 %v3872, %v4248
      %v4342 = vmul.f32 %v3873, %v4253
      %v4343 = vmul.f32 %v3874, %v4329
      %v4344 = vmul.f32 %v3875, %v4334
      %v4345 = vmul.f32 %v3868, %v3868
      %v4346 = vmul.f32 %v3869, %v3869
      %v4347 = vmul.f32 %v3870, %v3870
      %v4348 = vmul.f32 %v3871, %v3871
      %v4349 = vmul.f32 %v3872, %v3872
      %v4350 = vmul.f32 %v3873, %v3873
      %v4351 = vmul.f32 %v3874, %v3874
      %v4352 = vmul.f32 %v3875, %v3875
      %v4353 = vmul.f32 %v4345, %v3566
      %v4354 = vmul.f32 %v4346, %v3567
      %v4355 = vmul.f32 %v4347, %v3568
      %v4356 = vmul.f32 %v4348, %v3569
      %v4357 = vmul.f32 %v4349, %v3570
      %v4358 = vmul.f32 %v4350, %v3571
      %v4359 = vmul.f32 %v4351, %v3572
      %v4360 = vmul.f32 %v4352, %v3573
      %v4361 = vmul.f32 %v4353, %v3967
      %v4362 = vmul.f32 %v4354, %v3972
      %v4363 = vmul.f32 %v4355, %v3977
      %v4364 = vmul.f32 %v4356, %v3982
      %v4365 = vmul.f32 %v4357, %v3987
      %v4366 = vmul.f32 %v4358, %v3992
      %v4367 = vmul.f32 %v4359, %v3997
      %v4368 = vmul.f32 %v4360, %v4002
      %v4369 = vadd.f32 %v4337, %v4361
      %v4370 = vadd.f32 %v4338, %v4362
      %v4371 = vadd.f32 %v4339, %v4363
      %v4372 = vadd.f32 %v4340, %v4364
      %v4373 = vadd.f32 %v4341, %v4365
      %v4374 = vadd.f32 %v4342, %v4366
      %v4375 = vadd.f32 %v4343, %v4367
      %v4376 = vadd.f32 %v4344, %v4368
      %v4378 = vlaneseq
      %v4379 = vshrl.u32 %v4378, 7
      %v4380 = vsub.s32 0, %v4379
      %v4381 = vrot.slane %v3782, %v4380
      %v4383 = vadd.f32 %v4369, %v4381
      %v4384 = vadd.f32 %v4370, %v4381
      %v4385 = vadd.f32 %v4371, %v4381
      %v4386 = vadd.f32 %v4372, %v4381
      %v4387 = vadd.f32 %v4373, %v4381
      %v4388 = vadd.f32 %v4374, %v4381
      %v4389 = vadd.f32 %v4375, %v4381
      %v4390 = vadd.f32 %v4376, %v4381
      %v4391 = vmax.f32 %v4383, 0.0
      %v4392 = vmax.f32 %v4384, 0.0
      %v4393 = vmax.f32 %v4385, 0.0
      %v4394 = vmax.f32 %v4386, 0.0
      %v4395 = vmax.f32 %v4387, 0.0
      %v4396 = vmax.f32 %v4388, 0.0
      %v4397 = vmax.f32 %v4389, 0.0
      %v4398 = vmax.f32 %v4390, 0.0
      %v4400 = vlaneseq
      %v4401 = vshrl.u32 %v4400, 7
      %v4402 = vsub.s32 0, %v4401
      %v4403 = vrot.slane %v3783, %v4402
      %v4405 = vmul.f32 %v4391, %v4403
      %v4406 = vmul.f32 %v4392, %v4403
      %v4407 = vmul.f32 %v4393, %v4403
      %v4408 = vmul.f32 %v4394, %v4403
      %v4409 = vmul.f32 %v4395, %v4403
      %v4410 = vmul.f32 %v4396, %v4403
      %v4411 = vmul.f32 %v4397, %v4403
      %v4412 = vmul.f32 %v4398, %v4403
      %v4413 = vsel %vm1279, %v4405, 0.0
      %4414 = vadd.xlane.f32.xlu0 %v4413
      %v4415 = vpop.xlane.xlu0 %4414
      %v4416 = vsel %vm1279, %v4406, 0.0
      %4417 = vadd.xlane.f32.xlu0 %v4416
      %v4418 = vpop.xlane.xlu0 %4417
      %v4419 = vsel %vm1279, %v4407, 0.0
      %4420 = vadd.xlane.f32.xlu0 %v4419
      %v4421 = vpop.xlane.xlu0 %4420
      %v4422 = vsel %vm1279, %v4408, 0.0
      %4423 = vadd.xlane.f32.xlu0 %v4422
      %v4424 = vpop.xlane.xlu0 %4423
      %v4425 = vsel %vm1279, %v4409, 0.0
      %4426 = vadd.xlane.f32.xlu0 %v4425
      %v4427 = vpop.xlane.xlu0 %4426
      %v4428 = vsel %vm1279, %v4410, 0.0
      %4429 = vadd.xlane.f32.xlu0 %v4428
      %v4430 = vpop.xlane.xlu0 %4429
      %v4431 = vsel %vm1279, %v4411, 0.0
      %4432 = vadd.xlane.f32.xlu0 %v4431
      %v4433 = vpop.xlane.xlu0 %4432
      %v4434 = vsel %vm1279, %v4412, 0.0
      %4435 = vadd.xlane.f32.xlu0 %v4434
      %v4436 = vpop.xlane.xlu0 %4435
      %v4437 = vsel %vm3598, %v4415, -1e+30
      %v4438 = vsel %vm3599, %v4418, -1e+30
      %v4439 = vsel %vm3600, %v4421, -1e+30
      %v4440 = vsel %vm3601, %v4424, -1e+30
      %v4441 = vsel %vm3602, %v4427, -1e+30
      %v4442 = vsel %vm3603, %v4430, -1e+30
      %v4443 = vsel %vm3604, %v4433, -1e+30
      %v4444 = vsel %vm3605, %v4436, -1e+30
      %v4453 = vlaneseq
      %v4454 = vshrl.u32 %v4453, 7
      %v4455 = vsub.s32 0, %v4454
      %v4456 = vrot.slane %v4437, %v4455
      %v4457 = vlaneseq
      %v4458 = vshrl.u32 %v4457, 7
      %v4459 = vsub.s32 1, %v4458
      %v4460 = vrot.slane %v4437, %v4459
      %v4461 = vlaneseq
      %v4462 = vshrl.u32 %v4461, 7
      %v4463 = vsub.s32 2, %v4462
      %v4464 = vrot.slane %v4437, %v4463
      %v4465 = vlaneseq
      %v4466 = vshrl.u32 %v4465, 7
      %v4467 = vsub.s32 3, %v4466
      %v4468 = vrot.slane %v4437, %v4467
      %v4469 = vlaneseq
      %v4470 = vshrl.u32 %v4469, 7
      %v4471 = vsub.s32 4, %v4470
      %v4472 = vrot.slane %v4437, %v4471
      %v4473 = vlaneseq
      %v4474 = vshrl.u32 %v4473, 7
      %v4475 = vsub.s32 5, %v4474
      %v4476 = vrot.slane %v4437, %v4475
      %v4477 = vlaneseq
      %v4478 = vshrl.u32 %v4477, 7
      %v4479 = vsub.s32 6, %v4478
      %v4480 = vrot.slane %v4437, %v4479
      %v4481 = vlaneseq
      %v4482 = vshrl.u32 %v4481, 7
      %v4483 = vsub.s32 7, %v4482
      %v4484 = vrot.slane %v4437, %v4483
      %v4485 = vlaneseq
      %v4486 = vshrl.u32 %v4485, 7
      %v4487 = vsub.s32 0, %v4486
      %v4488 = vrot.slane %v4438, %v4487
      %v4489 = vlaneseq
      %v4490 = vshrl.u32 %v4489, 7
      %v4491 = vsub.s32 1, %v4490
      %v4492 = vrot.slane %v4438, %v4491
      %v4493 = vlaneseq
      %v4494 = vshrl.u32 %v4493, 7
      %v4495 = vsub.s32 2, %v4494
      %v4496 = vrot.slane %v4438, %v4495
      %v4497 = vlaneseq
      %v4498 = vshrl.u32 %v4497, 7
      %v4499 = vsub.s32 3, %v4498
      %v4500 = vrot.slane %v4438, %v4499
      %v4501 = vlaneseq
      %v4502 = vshrl.u32 %v4501, 7
      %v4503 = vsub.s32 4, %v4502
      %v4504 = vrot.slane %v4438, %v4503
      %v4505 = vlaneseq
      %v4506 = vshrl.u32 %v4505, 7
      %v4507 = vsub.s32 5, %v4506
      %v4508 = vrot.slane %v4438, %v4507
      %v4509 = vlaneseq
      %v4510 = vshrl.u32 %v4509, 7
      %v4511 = vsub.s32 6, %v4510
      %v4512 = vrot.slane %v4438, %v4511
      %v4513 = vlaneseq
      %v4514 = vshrl.u32 %v4513, 7
      %v4515 = vsub.s32 7, %v4514
      %v4516 = vrot.slane %v4438, %v4515
      %v4517 = vlaneseq
      %v4518 = vshrl.u32 %v4517, 7
      %v4519 = vsub.s32 0, %v4518
      %v4520 = vrot.slane %v4439, %v4519
      %v4521 = vlaneseq
      %v4522 = vshrl.u32 %v4521, 7
      %v4523 = vsub.s32 1, %v4522
      %v4524 = vrot.slane %v4439, %v4523
      %v4525 = vlaneseq
      %v4526 = vshrl.u32 %v4525, 7
      %v4527 = vsub.s32 2, %v4526
      %v4528 = vrot.slane %v4439, %v4527
      %v4529 = vlaneseq
      %v4530 = vshrl.u32 %v4529, 7
      %v4531 = vsub.s32 3, %v4530
      %v4532 = vrot.slane %v4439, %v4531
      %v4533 = vlaneseq
      %v4534 = vshrl.u32 %v4533, 7
      %v4535 = vsub.s32 4, %v4534
      %v4536 = vrot.slane %v4439, %v4535
      %v4537 = vlaneseq
      %v4538 = vshrl.u32 %v4537, 7
      %v4539 = vsub.s32 5, %v4538
      %v4540 = vrot.slane %v4439, %v4539
      %v4541 = vlaneseq
      %v4542 = vshrl.u32 %v4541, 7
      %v4543 = vsub.s32 6, %v4542
      %v4544 = vrot.slane %v4439, %v4543
      %v4545 = vlaneseq
      %v4546 = vshrl.u32 %v4545, 7
      %v4547 = vsub.s32 7, %v4546
      %v4548 = vrot.slane %v4439, %v4547
      %v4549 = vlaneseq
      %v4550 = vshrl.u32 %v4549, 7
      %v4551 = vsub.s32 0, %v4550
      %v4552 = vrot.slane %v4440, %v4551
      %v4553 = vlaneseq
      %v4554 = vshrl.u32 %v4553, 7
      %v4555 = vsub.s32 1, %v4554
      %v4556 = vrot.slane %v4440, %v4555
      %v4557 = vlaneseq
      %v4558 = vshrl.u32 %v4557, 7
      %v4559 = vsub.s32 2, %v4558
      %v4560 = vrot.slane %v4440, %v4559
      %v4561 = vlaneseq
      %v4562 = vshrl.u32 %v4561, 7
      %v4563 = vsub.s32 3, %v4562
      %v4564 = vrot.slane %v4440, %v4563
      %v4565 = vlaneseq
      %v4566 = vshrl.u32 %v4565, 7
      %v4567 = vsub.s32 4, %v4566
      %v4568 = vrot.slane %v4440, %v4567
      %v4569 = vlaneseq
      %v4570 = vshrl.u32 %v4569, 7
      %v4571 = vsub.s32 5, %v4570
      %v4572 = vrot.slane %v4440, %v4571
      %v4573 = vlaneseq
      %v4574 = vshrl.u32 %v4573, 7
      %v4575 = vsub.s32 6, %v4574
      %v4576 = vrot.slane %v4440, %v4575
      %v4577 = vlaneseq
      %v4578 = vshrl.u32 %v4577, 7
      %v4579 = vsub.s32 7, %v4578
      %v4580 = vrot.slane %v4440, %v4579
      %v4581 = vlaneseq
      %v4582 = vshrl.u32 %v4581, 7
      %v4583 = vsub.s32 0, %v4582
      %v4584 = vrot.slane %v4441, %v4583
      %v4585 = vlaneseq
      %v4586 = vshrl.u32 %v4585, 7
      %v4587 = vsub.s32 1, %v4586
      %v4588 = vrot.slane %v4441, %v4587
      %v4589 = vlaneseq
      %v4590 = vshrl.u32 %v4589, 7
      %v4591 = vsub.s32 2, %v4590
      %v4592 = vrot.slane %v4441, %v4591
      %v4593 = vlaneseq
      %v4594 = vshrl.u32 %v4593, 7
      %v4595 = vsub.s32 3, %v4594
      %v4596 = vrot.slane %v4441, %v4595
      %v4597 = vlaneseq
      %v4598 = vshrl.u32 %v4597, 7
      %v4599 = vsub.s32 4, %v4598
      %v4600 = vrot.slane %v4441, %v4599
      %v4601 = vlaneseq
      %v4602 = vshrl.u32 %v4601, 7
      %v4603 = vsub.s32 5, %v4602
      %v4604 = vrot.slane %v4441, %v4603
      %v4605 = vlaneseq
      %v4606 = vshrl.u32 %v4605, 7
      %v4607 = vsub.s32 6, %v4606
      %v4608 = vrot.slane %v4441, %v4607
      %v4609 = vlaneseq
      %v4610 = vshrl.u32 %v4609, 7
      %v4611 = vsub.s32 7, %v4610
      %v4612 = vrot.slane %v4441, %v4611
      %v4613 = vlaneseq
      %v4614 = vshrl.u32 %v4613, 7
      %v4615 = vsub.s32 0, %v4614
      %v4616 = vrot.slane %v4442, %v4615
      %v4617 = vlaneseq
      %v4618 = vshrl.u32 %v4617, 7
      %v4619 = vsub.s32 1, %v4618
      %v4620 = vrot.slane %v4442, %v4619
      %v4621 = vlaneseq
      %v4622 = vshrl.u32 %v4621, 7
      %v4623 = vsub.s32 2, %v4622
      %v4624 = vrot.slane %v4442, %v4623
      %v4625 = vlaneseq
      %v4626 = vshrl.u32 %v4625, 7
      %v4627 = vsub.s32 3, %v4626
      %v4628 = vrot.slane %v4442, %v4627
      %v4629 = vlaneseq
      %v4630 = vshrl.u32 %v4629, 7
      %v4631 = vsub.s32 4, %v4630
      %v4632 = vrot.slane %v4442, %v4631
      %v4633 = vlaneseq
      %v4634 = vshrl.u32 %v4633, 7
      %v4635 = vsub.s32 5, %v4634
      %v4636 = vrot.slane %v4442, %v4635
      %v4637 = vlaneseq
      %v4638 = vshrl.u32 %v4637, 7
      %v4639 = vsub.s32 6, %v4638
      %v4640 = vrot.slane %v4442, %v4639
      %v4641 = vlaneseq
      %v4642 = vshrl.u32 %v4641, 7
      %v4643 = vsub.s32 7, %v4642
      %v4644 = vrot.slane %v4442, %v4643
      %v4645 = vlaneseq
      %v4646 = vshrl.u32 %v4645, 7
      %v4647 = vsub.s32 0, %v4646
      %v4648 = vrot.slane %v4443, %v4647
      %v4649 = vlaneseq
      %v4650 = vshrl.u32 %v4649, 7
      %v4651 = vsub.s32 1, %v4650
      %v4652 = vrot.slane %v4443, %v4651
      %v4653 = vlaneseq
      %v4654 = vshrl.u32 %v4653, 7
      %v4655 = vsub.s32 2, %v4654
      %v4656 = vrot.slane %v4443, %v4655
      %v4657 = vlaneseq
      %v4658 = vshrl.u32 %v4657, 7
      %v4659 = vsub.s32 3, %v4658
      %v4660 = vrot.slane %v4443, %v4659
      %v4661 = vlaneseq
      %v4662 = vshrl.u32 %v4661, 7
      %v4663 = vsub.s32 4, %v4662
      %v4664 = vrot.slane %v4443, %v4663
      %v4665 = vlaneseq
      %v4666 = vshrl.u32 %v4665, 7
      %v4667 = vsub.s32 5, %v4666
      %v4668 = vrot.slane %v4443, %v4667
      %v4669 = vlaneseq
      %v4670 = vshrl.u32 %v4669, 7
      %v4671 = vsub.s32 6, %v4670
      %v4672 = vrot.slane %v4443, %v4671
      %v4673 = vlaneseq
      %v4674 = vshrl.u32 %v4673, 7
      %v4675 = vsub.s32 7, %v4674
      %v4676 = vrot.slane %v4443, %v4675
      %v4677 = vlaneseq
      %v4678 = vshrl.u32 %v4677, 7
      %v4679 = vsub.s32 0, %v4678
      %v4680 = vrot.slane %v4444, %v4679
      %v4681 = vlaneseq
      %v4682 = vshrl.u32 %v4681, 7
      %v4683 = vsub.s32 1, %v4682
      %v4684 = vrot.slane %v4444, %v4683
      %v4685 = vlaneseq
      %v4686 = vshrl.u32 %v4685, 7
      %v4687 = vsub.s32 2, %v4686
      %v4688 = vrot.slane %v4444, %v4687
      %v4689 = vlaneseq
      %v4690 = vshrl.u32 %v4689, 7
      %v4691 = vsub.s32 3, %v4690
      %v4692 = vrot.slane %v4444, %v4691
      %v4693 = vlaneseq
      %v4694 = vshrl.u32 %v4693, 7
      %v4695 = vsub.s32 4, %v4694
      %v4696 = vrot.slane %v4444, %v4695
      %v4697 = vlaneseq
      %v4698 = vshrl.u32 %v4697, 7
      %v4699 = vsub.s32 5, %v4698
      %v4700 = vrot.slane %v4444, %v4699
      %v4701 = vlaneseq
      %v4702 = vshrl.u32 %v4701, 7
      %v4703 = vsub.s32 6, %v4702
      %v4704 = vrot.slane %v4444, %v4703
      %v4705 = vlaneseq
      %v4706 = vshrl.u32 %v4705, 7
      %v4707 = vsub.s32 7, %v4706
      %v4708 = vrot.slane %v4444, %v4707
      %vm4773 = vcmp.gt.f32.partialorder %v4437, %v4456
      %vm4774 = vcmp.gt.f32.partialorder %v4438, %v4456
      %vm4775 = vcmp.gt.f32.partialorder %v4437, %v4460
      %vm4776 = vcmp.gt.f32.partialorder %v4438, %v4460
      %vm4777 = vcmp.gt.f32.partialorder %v4437, %v4464
      %vm4778 = vcmp.gt.f32.partialorder %v4438, %v4464
      %vm4779 = vcmp.gt.f32.partialorder %v4437, %v4468
      %vm4780 = vcmp.gt.f32.partialorder %v4438, %v4468
      %vm4781 = vcmp.gt.f32.partialorder %v4437, %v4472
      %vm4782 = vcmp.gt.f32.partialorder %v4438, %v4472
      %vm4783 = vcmp.gt.f32.partialorder %v4437, %v4476
      %vm4784 = vcmp.gt.f32.partialorder %v4438, %v4476
      %vm4785 = vcmp.gt.f32.partialorder %v4437, %v4480
      %vm4786 = vcmp.gt.f32.partialorder %v4438, %v4480
      %vm4787 = vcmp.gt.f32.partialorder %v4437, %v4484
      %vm4788 = vcmp.gt.f32.partialorder %v4438, %v4484
      %vm4789 = vcmp.gt.f32.partialorder %v4437, %v4488
      %vm4790 = vcmp.gt.f32.partialorder %v4438, %v4488
      %vm4791 = vcmp.gt.f32.partialorder %v4437, %v4492
      %vm4792 = vcmp.gt.f32.partialorder %v4438, %v4492
      %vm4793 = vcmp.gt.f32.partialorder %v4437, %v4496
      %vm4794 = vcmp.gt.f32.partialorder %v4438, %v4496
      %vm4795 = vcmp.gt.f32.partialorder %v4437, %v4500
      %vm4796 = vcmp.gt.f32.partialorder %v4438, %v4500
      %vm4797 = vcmp.gt.f32.partialorder %v4437, %v4504
      %vm4798 = vcmp.gt.f32.partialorder %v4438, %v4504
      %vm4799 = vcmp.gt.f32.partialorder %v4437, %v4508
      %vm4800 = vcmp.gt.f32.partialorder %v4438, %v4508
      %vm4801 = vcmp.gt.f32.partialorder %v4437, %v4512
      %vm4802 = vcmp.gt.f32.partialorder %v4438, %v4512
      %vm4803 = vcmp.gt.f32.partialorder %v4437, %v4516
      %vm4804 = vcmp.gt.f32.partialorder %v4438, %v4516
      %vm4805 = vcmp.gt.f32.partialorder %v4439, %v4520
      %vm4806 = vcmp.gt.f32.partialorder %v4440, %v4520
      %vm4807 = vcmp.gt.f32.partialorder %v4439, %v4524
      %vm4808 = vcmp.gt.f32.partialorder %v4440, %v4524
      %vm4809 = vcmp.gt.f32.partialorder %v4439, %v4528
      %vm4810 = vcmp.gt.f32.partialorder %v4440, %v4528
      %vm4811 = vcmp.gt.f32.partialorder %v4439, %v4532
      %vm4812 = vcmp.gt.f32.partialorder %v4440, %v4532
      %vm4813 = vcmp.gt.f32.partialorder %v4439, %v4536
      %vm4814 = vcmp.gt.f32.partialorder %v4440, %v4536
      %vm4815 = vcmp.gt.f32.partialorder %v4439, %v4540
      %vm4816 = vcmp.gt.f32.partialorder %v4440, %v4540
      %vm4817 = vcmp.gt.f32.partialorder %v4439, %v4544
      %vm4818 = vcmp.gt.f32.partialorder %v4440, %v4544
      %vm4819 = vcmp.gt.f32.partialorder %v4439, %v4548
      %vm4820 = vcmp.gt.f32.partialorder %v4440, %v4548
      %vm4821 = vcmp.gt.f32.partialorder %v4439, %v4552
      %vm4822 = vcmp.gt.f32.partialorder %v4440, %v4552
      %vm4823 = vcmp.gt.f32.partialorder %v4439, %v4556
      %vm4824 = vcmp.gt.f32.partialorder %v4440, %v4556
      %vm4825 = vcmp.gt.f32.partialorder %v4439, %v4560
      %vm4826 = vcmp.gt.f32.partialorder %v4440, %v4560
      %vm4827 = vcmp.gt.f32.partialorder %v4439, %v4564
      %vm4828 = vcmp.gt.f32.partialorder %v4440, %v4564
      %vm4829 = vcmp.gt.f32.partialorder %v4439, %v4568
      %vm4830 = vcmp.gt.f32.partialorder %v4440, %v4568
      %vm4831 = vcmp.gt.f32.partialorder %v4439, %v4572
      %vm4832 = vcmp.gt.f32.partialorder %v4440, %v4572
      %vm4833 = vcmp.gt.f32.partialorder %v4439, %v4576
      %vm4834 = vcmp.gt.f32.partialorder %v4440, %v4576
      %vm4835 = vcmp.gt.f32.partialorder %v4439, %v4580
      %vm4836 = vcmp.gt.f32.partialorder %v4440, %v4580
      %vm4837 = vcmp.gt.f32.partialorder %v4441, %v4584
      %vm4838 = vcmp.gt.f32.partialorder %v4442, %v4584
      %vm4839 = vcmp.gt.f32.partialorder %v4441, %v4588
      %vm4840 = vcmp.gt.f32.partialorder %v4442, %v4588
      %vm4841 = vcmp.gt.f32.partialorder %v4441, %v4592
      %vm4842 = vcmp.gt.f32.partialorder %v4442, %v4592
      %vm4843 = vcmp.gt.f32.partialorder %v4441, %v4596
      %vm4844 = vcmp.gt.f32.partialorder %v4442, %v4596
      %vm4845 = vcmp.gt.f32.partialorder %v4441, %v4600
      %vm4846 = vcmp.gt.f32.partialorder %v4442, %v4600
      %vm4847 = vcmp.gt.f32.partialorder %v4441, %v4604
      %vm4848 = vcmp.gt.f32.partialorder %v4442, %v4604
      %vm4849 = vcmp.gt.f32.partialorder %v4441, %v4608
      %vm4850 = vcmp.gt.f32.partialorder %v4442, %v4608
      %vm4851 = vcmp.gt.f32.partialorder %v4441, %v4612
      %vm4852 = vcmp.gt.f32.partialorder %v4442, %v4612
      %vm4853 = vcmp.gt.f32.partialorder %v4441, %v4616
      %vm4854 = vcmp.gt.f32.partialorder %v4442, %v4616
      %vm4855 = vcmp.gt.f32.partialorder %v4441, %v4620
      %vm4856 = vcmp.gt.f32.partialorder %v4442, %v4620
      %vm4857 = vcmp.gt.f32.partialorder %v4441, %v4624
      %vm4858 = vcmp.gt.f32.partialorder %v4442, %v4624
      %vm4859 = vcmp.gt.f32.partialorder %v4441, %v4628
      %vm4860 = vcmp.gt.f32.partialorder %v4442, %v4628
      %vm4861 = vcmp.gt.f32.partialorder %v4441, %v4632
      %vm4862 = vcmp.gt.f32.partialorder %v4442, %v4632
      %vm4863 = vcmp.gt.f32.partialorder %v4441, %v4636
      %vm4864 = vcmp.gt.f32.partialorder %v4442, %v4636
      %vm4865 = vcmp.gt.f32.partialorder %v4441, %v4640
      %vm4866 = vcmp.gt.f32.partialorder %v4442, %v4640
      %vm4867 = vcmp.gt.f32.partialorder %v4441, %v4644
      %vm4868 = vcmp.gt.f32.partialorder %v4442, %v4644
      %vm4869 = vcmp.gt.f32.partialorder %v4443, %v4648
      %vm4870 = vcmp.gt.f32.partialorder %v4444, %v4648
      %vm4871 = vcmp.gt.f32.partialorder %v4443, %v4652
      %vm4872 = vcmp.gt.f32.partialorder %v4444, %v4652
      %vm4873 = vcmp.gt.f32.partialorder %v4443, %v4656
      %vm4874 = vcmp.gt.f32.partialorder %v4444, %v4656
      %vm4875 = vcmp.gt.f32.partialorder %v4443, %v4660
      %vm4876 = vcmp.gt.f32.partialorder %v4444, %v4660
      %vm4877 = vcmp.gt.f32.partialorder %v4443, %v4664
      %vm4878 = vcmp.gt.f32.partialorder %v4444, %v4664
      %vm4879 = vcmp.gt.f32.partialorder %v4443, %v4668
      %vm4880 = vcmp.gt.f32.partialorder %v4444, %v4668
      %vm4881 = vcmp.gt.f32.partialorder %v4443, %v4672
      %vm4882 = vcmp.gt.f32.partialorder %v4444, %v4672
      %vm4883 = vcmp.gt.f32.partialorder %v4443, %v4676
      %vm4884 = vcmp.gt.f32.partialorder %v4444, %v4676
      %vm4885 = vcmp.gt.f32.partialorder %v4443, %v4680
      %vm4886 = vcmp.gt.f32.partialorder %v4444, %v4680
      %vm4887 = vcmp.gt.f32.partialorder %v4443, %v4684
      %vm4888 = vcmp.gt.f32.partialorder %v4444, %v4684
      %vm4889 = vcmp.gt.f32.partialorder %v4443, %v4688
      %vm4890 = vcmp.gt.f32.partialorder %v4444, %v4688
      %vm4891 = vcmp.gt.f32.partialorder %v4443, %v4692
      %vm4892 = vcmp.gt.f32.partialorder %v4444, %v4692
      %vm4893 = vcmp.gt.f32.partialorder %v4443, %v4696
      %vm4894 = vcmp.gt.f32.partialorder %v4444, %v4696
      %vm4895 = vcmp.gt.f32.partialorder %v4443, %v4700
      %vm4896 = vcmp.gt.f32.partialorder %v4444, %v4700
      %vm4897 = vcmp.gt.f32.partialorder %v4443, %v4704
      %vm4898 = vcmp.gt.f32.partialorder %v4444, %v4704
      %vm4899 = vcmp.gt.f32.partialorder %v4443, %v4708
      %vm4900 = vcmp.gt.f32.partialorder %v4444, %v4708
      %vm4901 = vcmp.eq.f32.partialorder %v4437, %v4456
      %vm4902 = vcmp.eq.f32.partialorder %v4438, %v4456
      %vm4903 = vcmp.eq.f32.partialorder %v4437, %v4460
      %vm4904 = vcmp.eq.f32.partialorder %v4438, %v4460
      %vm4905 = vcmp.eq.f32.partialorder %v4437, %v4464
      %vm4906 = vcmp.eq.f32.partialorder %v4438, %v4464
      %vm4907 = vcmp.eq.f32.partialorder %v4437, %v4468
      %vm4908 = vcmp.eq.f32.partialorder %v4438, %v4468
      %vm4909 = vcmp.eq.f32.partialorder %v4437, %v4472
      %vm4910 = vcmp.eq.f32.partialorder %v4438, %v4472
      %vm4911 = vcmp.eq.f32.partialorder %v4437, %v4476
      %vm4912 = vcmp.eq.f32.partialorder %v4438, %v4476
      %vm4913 = vcmp.eq.f32.partialorder %v4437, %v4480
      %vm4914 = vcmp.eq.f32.partialorder %v4438, %v4480
      %vm4915 = vcmp.eq.f32.partialorder %v4437, %v4484
      %vm4916 = vcmp.eq.f32.partialorder %v4438, %v4484
      %vm4917 = vcmp.eq.f32.partialorder %v4437, %v4488
      %vm4918 = vcmp.eq.f32.partialorder %v4438, %v4488
      %vm4919 = vcmp.eq.f32.partialorder %v4437, %v4492
      %vm4920 = vcmp.eq.f32.partialorder %v4438, %v4492
      %vm4921 = vcmp.eq.f32.partialorder %v4437, %v4496
      %vm4922 = vcmp.eq.f32.partialorder %v4438, %v4496
      %vm4923 = vcmp.eq.f32.partialorder %v4437, %v4500
      %vm4924 = vcmp.eq.f32.partialorder %v4438, %v4500
      %vm4925 = vcmp.eq.f32.partialorder %v4437, %v4504
      %vm4926 = vcmp.eq.f32.partialorder %v4438, %v4504
      %vm4927 = vcmp.eq.f32.partialorder %v4437, %v4508
      %vm4928 = vcmp.eq.f32.partialorder %v4438, %v4508
      %vm4929 = vcmp.eq.f32.partialorder %v4437, %v4512
      %vm4930 = vcmp.eq.f32.partialorder %v4438, %v4512
      %vm4931 = vcmp.eq.f32.partialorder %v4437, %v4516
      %vm4932 = vcmp.eq.f32.partialorder %v4438, %v4516
      %vm4933 = vcmp.eq.f32.partialorder %v4439, %v4520
      %vm4934 = vcmp.eq.f32.partialorder %v4440, %v4520
      %vm4935 = vcmp.eq.f32.partialorder %v4439, %v4524
      %vm4936 = vcmp.eq.f32.partialorder %v4440, %v4524
      %vm4937 = vcmp.eq.f32.partialorder %v4439, %v4528
      %vm4938 = vcmp.eq.f32.partialorder %v4440, %v4528
      %vm4939 = vcmp.eq.f32.partialorder %v4439, %v4532
      %vm4940 = vcmp.eq.f32.partialorder %v4440, %v4532
      %vm4941 = vcmp.eq.f32.partialorder %v4439, %v4536
      %vm4942 = vcmp.eq.f32.partialorder %v4440, %v4536
      %vm4943 = vcmp.eq.f32.partialorder %v4439, %v4540
      %vm4944 = vcmp.eq.f32.partialorder %v4440, %v4540
      %vm4945 = vcmp.eq.f32.partialorder %v4439, %v4544
      %vm4946 = vcmp.eq.f32.partialorder %v4440, %v4544
      %vm4947 = vcmp.eq.f32.partialorder %v4439, %v4548
      %vm4948 = vcmp.eq.f32.partialorder %v4440, %v4548
      %vm4949 = vcmp.eq.f32.partialorder %v4439, %v4552
      %vm4950 = vcmp.eq.f32.partialorder %v4440, %v4552
      %vm4951 = vcmp.eq.f32.partialorder %v4439, %v4556
      %vm4952 = vcmp.eq.f32.partialorder %v4440, %v4556
      %vm4953 = vcmp.eq.f32.partialorder %v4439, %v4560
      %vm4954 = vcmp.eq.f32.partialorder %v4440, %v4560
      %vm4955 = vcmp.eq.f32.partialorder %v4439, %v4564
      %vm4956 = vcmp.eq.f32.partialorder %v4440, %v4564
      %vm4957 = vcmp.eq.f32.partialorder %v4439, %v4568
      %vm4958 = vcmp.eq.f32.partialorder %v4440, %v4568
      %vm4959 = vcmp.eq.f32.partialorder %v4439, %v4572
      %vm4960 = vcmp.eq.f32.partialorder %v4440, %v4572
      %vm4961 = vcmp.eq.f32.partialorder %v4439, %v4576
      %vm4962 = vcmp.eq.f32.partialorder %v4440, %v4576
      %vm4963 = vcmp.eq.f32.partialorder %v4439, %v4580
      %vm4964 = vcmp.eq.f32.partialorder %v4440, %v4580
      %vm4965 = vcmp.eq.f32.partialorder %v4441, %v4584
      %vm4966 = vcmp.eq.f32.partialorder %v4442, %v4584
      %vm4967 = vcmp.eq.f32.partialorder %v4441, %v4588
      %vm4968 = vcmp.eq.f32.partialorder %v4442, %v4588
      %vm4969 = vcmp.eq.f32.partialorder %v4441, %v4592
      %vm4970 = vcmp.eq.f32.partialorder %v4442, %v4592
      %vm4971 = vcmp.eq.f32.partialorder %v4441, %v4596
      %vm4972 = vcmp.eq.f32.partialorder %v4442, %v4596
      %vm4973 = vcmp.eq.f32.partialorder %v4441, %v4600
      %vm4974 = vcmp.eq.f32.partialorder %v4442, %v4600
      %vm4975 = vcmp.eq.f32.partialorder %v4441, %v4604
      %vm4976 = vcmp.eq.f32.partialorder %v4442, %v4604
      %vm4977 = vcmp.eq.f32.partialorder %v4441, %v4608
      %vm4978 = vcmp.eq.f32.partialorder %v4442, %v4608
      %vm4979 = vcmp.eq.f32.partialorder %v4441, %v4612
      %vm4980 = vcmp.eq.f32.partialorder %v4442, %v4612
      %vm4981 = vcmp.eq.f32.partialorder %v4441, %v4616
      %vm4982 = vcmp.eq.f32.partialorder %v4442, %v4616
      %vm4983 = vcmp.eq.f32.partialorder %v4441, %v4620
      %vm4984 = vcmp.eq.f32.partialorder %v4442, %v4620
      %vm4985 = vcmp.eq.f32.partialorder %v4441, %v4624
      %vm4986 = vcmp.eq.f32.partialorder %v4442, %v4624
      %vm4987 = vcmp.eq.f32.partialorder %v4441, %v4628
      %vm4988 = vcmp.eq.f32.partialorder %v4442, %v4628
      %vm4989 = vcmp.eq.f32.partialorder %v4441, %v4632
      %vm4990 = vcmp.eq.f32.partialorder %v4442, %v4632
      %vm4991 = vcmp.eq.f32.partialorder %v4441, %v4636
      %vm4992 = vcmp.eq.f32.partialorder %v4442, %v4636
      %vm4993 = vcmp.eq.f32.partialorder %v4441, %v4640
      %vm4994 = vcmp.eq.f32.partialorder %v4442, %v4640
      %vm4995 = vcmp.eq.f32.partialorder %v4441, %v4644
      %vm4996 = vcmp.eq.f32.partialorder %v4442, %v4644
      %vm4997 = vcmp.eq.f32.partialorder %v4443, %v4648
      %vm4998 = vcmp.eq.f32.partialorder %v4444, %v4648
      %vm4999 = vcmp.eq.f32.partialorder %v4443, %v4652
      %vm5000 = vcmp.eq.f32.partialorder %v4444, %v4652
      %vm5001 = vcmp.eq.f32.partialorder %v4443, %v4656
      %vm5002 = vcmp.eq.f32.partialorder %v4444, %v4656
      %vm5003 = vcmp.eq.f32.partialorder %v4443, %v4660
      %vm5004 = vcmp.eq.f32.partialorder %v4444, %v4660
      %vm5005 = vcmp.eq.f32.partialorder %v4443, %v4664
      %vm5006 = vcmp.eq.f32.partialorder %v4444, %v4664
      %vm5007 = vcmp.eq.f32.partialorder %v4443, %v4668
      %vm5008 = vcmp.eq.f32.partialorder %v4444, %v4668
      %vm5009 = vcmp.eq.f32.partialorder %v4443, %v4672
      %vm5010 = vcmp.eq.f32.partialorder %v4444, %v4672
      %vm5011 = vcmp.eq.f32.partialorder %v4443, %v4676
      %vm5012 = vcmp.eq.f32.partialorder %v4444, %v4676
      %vm5013 = vcmp.eq.f32.partialorder %v4443, %v4680
      %vm5014 = vcmp.eq.f32.partialorder %v4444, %v4680
      %vm5015 = vcmp.eq.f32.partialorder %v4443, %v4684
      %vm5016 = vcmp.eq.f32.partialorder %v4444, %v4684
      %vm5017 = vcmp.eq.f32.partialorder %v4443, %v4688
      %vm5018 = vcmp.eq.f32.partialorder %v4444, %v4688
      %vm5019 = vcmp.eq.f32.partialorder %v4443, %v4692
      %vm5020 = vcmp.eq.f32.partialorder %v4444, %v4692
      %vm5021 = vcmp.eq.f32.partialorder %v4443, %v4696
      %vm5022 = vcmp.eq.f32.partialorder %v4444, %v4696
      %vm5023 = vcmp.eq.f32.partialorder %v4443, %v4700
      %vm5024 = vcmp.eq.f32.partialorder %v4444, %v4700
      %vm5025 = vcmp.eq.f32.partialorder %v4443, %v4704
      %vm5026 = vcmp.eq.f32.partialorder %v4444, %v4704
      %vm5027 = vcmp.eq.f32.partialorder %v4443, %v4708
      %vm5028 = vcmp.eq.f32.partialorder %v4444, %v4708
      %v5029 = vsel %vm4901, %v1905, 0.0
      %v5030 = vsel %vm4902, %v1909, 0.0
      %v5031 = vsel %vm4903, %v1916, 0.0
      %v5032 = vsel %vm4904, %v1920, 0.0
      %v5033 = vsel %vm4905, %v1927, 0.0
      %v5034 = vsel %vm4906, %v1931, 0.0
      %v5035 = vsel %vm4907, %v1938, 0.0
      %v5036 = vsel %vm4908, %v1942, 0.0
      %v5037 = vsel %vm4909, %v1949, 0.0
      %v5038 = vsel %vm4910, %v1953, 0.0
      %v5039 = vsel %vm4911, %v1960, 0.0
      %v5040 = vsel %vm4912, %v1964, 0.0
      %v5041 = vsel %vm4913, %v1971, 0.0
      %v5042 = vsel %vm4914, %v1975, 0.0
      %v5043 = vsel %vm4915, %v1982, 0.0
      %v5044 = vsel %vm4916, %v1986, 0.0
      %v5045 = vsel %vm4917, %v1993, 0.0
      %v5046 = vsel %vm4918, %v1997, 0.0
      %v5047 = vsel %vm4919, %v2004, 0.0
      %v5048 = vsel %vm4920, %v2008, 0.0
      %v5049 = vsel %vm4921, %v2015, 0.0
      %v5050 = vsel %vm4922, %v2019, 0.0
      %v5051 = vsel %vm4923, %v2026, 0.0
      %v5052 = vsel %vm4924, %v2030, 0.0
      %v5053 = vsel %vm4925, %v2037, 0.0
      %v5054 = vsel %vm4926, %v2041, 0.0
      %v5055 = vsel %vm4927, %v2048, 0.0
      %v5056 = vsel %vm4928, %v2052, 0.0
      %v5057 = vsel %vm4929, %v2059, 0.0
      %v5058 = vsel %vm4930, %v2063, 0.0
      %v5059 = vsel %vm4931, %v2070, 0.0
      %v5060 = vsel %vm4932, %v2074, 0.0
      %v5061 = vsel %vm4933, %v1905, 0.0
      %v5062 = vsel %vm4934, %v1909, 0.0
      %v5063 = vsel %vm4935, %v1916, 0.0
      %v5064 = vsel %vm4936, %v1920, 0.0
      %v5065 = vsel %vm4937, %v1927, 0.0
      %v5066 = vsel %vm4938, %v1931, 0.0
      %v5067 = vsel %vm4939, %v1938, 0.0
      %v5068 = vsel %vm4940, %v1942, 0.0
      %v5069 = vsel %vm4941, %v1949, 0.0
      %v5070 = vsel %vm4942, %v1953, 0.0
      %v5071 = vsel %vm4943, %v1960, 0.0
      %v5072 = vsel %vm4944, %v1964, 0.0
      %v5073 = vsel %vm4945, %v1971, 0.0
      %v5074 = vsel %vm4946, %v1975, 0.0
      %v5075 = vsel %vm4947, %v1982, 0.0
      %v5076 = vsel %vm4948, %v1986, 0.0
      %v5077 = vsel %vm4949, %v1993, 0.0
      %v5078 = vsel %vm4950, %v1997, 0.0
      %v5079 = vsel %vm4951, %v2004, 0.0
      %v5080 = vsel %vm4952, %v2008, 0.0
      %v5081 = vsel %vm4953, %v2015, 0.0
      %v5082 = vsel %vm4954, %v2019, 0.0
      %v5083 = vsel %vm4955, %v2026, 0.0
      %v5084 = vsel %vm4956, %v2030, 0.0
      %v5085 = vsel %vm4957, %v2037, 0.0
      %v5086 = vsel %vm4958, %v2041, 0.0
      %v5087 = vsel %vm4959, %v2048, 0.0
      %v5088 = vsel %vm4960, %v2052, 0.0
      %v5089 = vsel %vm4961, %v2059, 0.0
      %v5090 = vsel %vm4962, %v2063, 0.0
      %v5091 = vsel %vm4963, %v2070, 0.0
      %v5092 = vsel %vm4964, %v2074, 0.0
      %v5093 = vsel %vm4965, %v1905, 0.0
      %v5094 = vsel %vm4966, %v1909, 0.0
      %v5095 = vsel %vm4967, %v1916, 0.0
      %v5096 = vsel %vm4968, %v1920, 0.0
      %v5097 = vsel %vm4969, %v1927, 0.0
      %v5098 = vsel %vm4970, %v1931, 0.0
      %v5099 = vsel %vm4971, %v1938, 0.0
      %v5100 = vsel %vm4972, %v1942, 0.0
      %v5101 = vsel %vm4973, %v1949, 0.0
      %v5102 = vsel %vm4974, %v1953, 0.0
      %v5103 = vsel %vm4975, %v1960, 0.0
      %v5104 = vsel %vm4976, %v1964, 0.0
      %v5105 = vsel %vm4977, %v1971, 0.0
      %v5106 = vsel %vm4978, %v1975, 0.0
      %v5107 = vsel %vm4979, %v1982, 0.0
      %v5108 = vsel %vm4980, %v1986, 0.0
      %v5109 = vsel %vm4981, %v1993, 0.0
      %v5110 = vsel %vm4982, %v1997, 0.0
      %v5111 = vsel %vm4983, %v2004, 0.0
      %v5112 = vsel %vm4984, %v2008, 0.0
      %v5113 = vsel %vm4985, %v2015, 0.0
      %v5114 = vsel %vm4986, %v2019, 0.0
      %v5115 = vsel %vm4987, %v2026, 0.0
      %v5116 = vsel %vm4988, %v2030, 0.0
      %v5117 = vsel %vm4989, %v2037, 0.0
      %v5118 = vsel %vm4990, %v2041, 0.0
      %v5119 = vsel %vm4991, %v2048, 0.0
      %v5120 = vsel %vm4992, %v2052, 0.0
      %v5121 = vsel %vm4993, %v2059, 0.0
      %v5122 = vsel %vm4994, %v2063, 0.0
      %v5123 = vsel %vm4995, %v2070, 0.0
      %v5124 = vsel %vm4996, %v2074, 0.0
      %v5125 = vsel %vm4997, %v1905, 0.0
      %v5126 = vsel %vm4998, %v1909, 0.0
      %v5127 = vsel %vm4999, %v1916, 0.0
      %v5128 = vsel %vm5000, %v1920, 0.0
      %v5129 = vsel %vm5001, %v1927, 0.0
      %v5130 = vsel %vm5002, %v1931, 0.0
      %v5131 = vsel %vm5003, %v1938, 0.0
      %v5132 = vsel %vm5004, %v1942, 0.0
      %v5133 = vsel %vm5005, %v1949, 0.0
      %v5134 = vsel %vm5006, %v1953, 0.0
      %v5135 = vsel %vm5007, %v1960, 0.0
      %v5136 = vsel %vm5008, %v1964, 0.0
      %v5137 = vsel %vm5009, %v1971, 0.0
      %v5138 = vsel %vm5010, %v1975, 0.0
      %v5139 = vsel %vm5011, %v1982, 0.0
      %v5140 = vsel %vm5012, %v1986, 0.0
      %v5141 = vsel %vm5013, %v1993, 0.0
      %v5142 = vsel %vm5014, %v1997, 0.0
      %v5143 = vsel %vm5015, %v2004, 0.0
      %v5144 = vsel %vm5016, %v2008, 0.0
      %v5145 = vsel %vm5017, %v2015, 0.0
      %v5146 = vsel %vm5018, %v2019, 0.0
      %v5147 = vsel %vm5019, %v2026, 0.0
      %v5148 = vsel %vm5020, %v2030, 0.0
      %v5149 = vsel %vm5021, %v2037, 0.0
      %v5150 = vsel %vm5022, %v2041, 0.0
      %v5151 = vsel %vm5023, %v2048, 0.0
      %v5152 = vsel %vm5024, %v2052, 0.0
      %v5153 = vsel %vm5025, %v2059, 0.0
      %v5154 = vsel %vm5026, %v2063, 0.0
      %v5155 = vsel %vm5027, %v2070, 0.0
      %v5156 = vsel %vm5028, %v2074, 0.0
      %v5157 = vsel %vm4773, 1.0, %v5029
      %v5158 = vsel %vm4774, 1.0, %v5030
      %v5159 = vsel %vm4775, 1.0, %v5031
      %v5160 = vsel %vm4776, 1.0, %v5032
      %v5161 = vsel %vm4777, 1.0, %v5033
      %v5162 = vsel %vm4778, 1.0, %v5034
      %v5163 = vsel %vm4779, 1.0, %v5035
      %v5164 = vsel %vm4780, 1.0, %v5036
      %v5165 = vsel %vm4781, 1.0, %v5037
      %v5166 = vsel %vm4782, 1.0, %v5038
      %v5167 = vsel %vm4783, 1.0, %v5039
      %v5168 = vsel %vm4784, 1.0, %v5040
      %v5169 = vsel %vm4785, 1.0, %v5041
      %v5170 = vsel %vm4786, 1.0, %v5042
      %v5171 = vsel %vm4787, 1.0, %v5043
      %v5172 = vsel %vm4788, 1.0, %v5044
      %v5173 = vsel %vm4789, 1.0, %v5045
      %v5174 = vsel %vm4790, 1.0, %v5046
      %v5175 = vsel %vm4791, 1.0, %v5047
      %v5176 = vsel %vm4792, 1.0, %v5048
      %v5177 = vsel %vm4793, 1.0, %v5049
      %v5178 = vsel %vm4794, 1.0, %v5050
      %v5179 = vsel %vm4795, 1.0, %v5051
      %v5180 = vsel %vm4796, 1.0, %v5052
      %v5181 = vsel %vm4797, 1.0, %v5053
      %v5182 = vsel %vm4798, 1.0, %v5054
      %v5183 = vsel %vm4799, 1.0, %v5055
      %v5184 = vsel %vm4800, 1.0, %v5056
      %v5185 = vsel %vm4801, 1.0, %v5057
      %v5186 = vsel %vm4802, 1.0, %v5058
      %v5187 = vsel %vm4803, 1.0, %v5059
      %v5188 = vsel %vm4804, 1.0, %v5060
      %v5189 = vsel %vm4805, 1.0, %v5061
      %v5190 = vsel %vm4806, 1.0, %v5062
      %v5191 = vsel %vm4807, 1.0, %v5063
      %v5192 = vsel %vm4808, 1.0, %v5064
      %v5193 = vsel %vm4809, 1.0, %v5065
      %v5194 = vsel %vm4810, 1.0, %v5066
      %v5195 = vsel %vm4811, 1.0, %v5067
      %v5196 = vsel %vm4812, 1.0, %v5068
      %v5197 = vsel %vm4813, 1.0, %v5069
      %v5198 = vsel %vm4814, 1.0, %v5070
      %v5199 = vsel %vm4815, 1.0, %v5071
      %v5200 = vsel %vm4816, 1.0, %v5072
      %v5201 = vsel %vm4817, 1.0, %v5073
      %v5202 = vsel %vm4818, 1.0, %v5074
      %v5203 = vsel %vm4819, 1.0, %v5075
      %v5204 = vsel %vm4820, 1.0, %v5076
      %v5205 = vsel %vm4821, 1.0, %v5077
      %v5206 = vsel %vm4822, 1.0, %v5078
      %v5207 = vsel %vm4823, 1.0, %v5079
      %v5208 = vsel %vm4824, 1.0, %v5080
      %v5209 = vsel %vm4825, 1.0, %v5081
      %v5210 = vsel %vm4826, 1.0, %v5082
      %v5211 = vsel %vm4827, 1.0, %v5083
      %v5212 = vsel %vm4828, 1.0, %v5084
      %v5213 = vsel %vm4829, 1.0, %v5085
      %v5214 = vsel %vm4830, 1.0, %v5086
      %v5215 = vsel %vm4831, 1.0, %v5087
      %v5216 = vsel %vm4832, 1.0, %v5088
      %v5217 = vsel %vm4833, 1.0, %v5089
      %v5218 = vsel %vm4834, 1.0, %v5090
      %v5219 = vsel %vm4835, 1.0, %v5091
      %v5220 = vsel %vm4836, 1.0, %v5092
      %v5221 = vsel %vm4837, 1.0, %v5093
      %v5222 = vsel %vm4838, 1.0, %v5094
      %v5223 = vsel %vm4839, 1.0, %v5095
      %v5224 = vsel %vm4840, 1.0, %v5096
      %v5225 = vsel %vm4841, 1.0, %v5097
      %v5226 = vsel %vm4842, 1.0, %v5098
      %v5227 = vsel %vm4843, 1.0, %v5099
      %v5228 = vsel %vm4844, 1.0, %v5100
      %v5229 = vsel %vm4845, 1.0, %v5101
      %v5230 = vsel %vm4846, 1.0, %v5102
      %v5231 = vsel %vm4847, 1.0, %v5103
      %v5232 = vsel %vm4848, 1.0, %v5104
      %v5233 = vsel %vm4849, 1.0, %v5105
      %v5234 = vsel %vm4850, 1.0, %v5106
      %v5235 = vsel %vm4851, 1.0, %v5107
      %v5236 = vsel %vm4852, 1.0, %v5108
      %v5237 = vsel %vm4853, 1.0, %v5109
      %v5238 = vsel %vm4854, 1.0, %v5110
      %v5239 = vsel %vm4855, 1.0, %v5111
      %v5240 = vsel %vm4856, 1.0, %v5112
      %v5241 = vsel %vm4857, 1.0, %v5113
      %v5242 = vsel %vm4858, 1.0, %v5114
      %v5243 = vsel %vm4859, 1.0, %v5115
      %v5244 = vsel %vm4860, 1.0, %v5116
      %v5245 = vsel %vm4861, 1.0, %v5117
      %v5246 = vsel %vm4862, 1.0, %v5118
      %v5247 = vsel %vm4863, 1.0, %v5119
      %v5248 = vsel %vm4864, 1.0, %v5120
      %v5249 = vsel %vm4865, 1.0, %v5121
      %v5250 = vsel %vm4866, 1.0, %v5122
      %v5251 = vsel %vm4867, 1.0, %v5123
      %v5252 = vsel %vm4868, 1.0, %v5124
      %v5253 = vsel %vm4869, 1.0, %v5125
      %v5254 = vsel %vm4870, 1.0, %v5126
      %v5255 = vsel %vm4871, 1.0, %v5127
      %v5256 = vsel %vm4872, 1.0, %v5128
      %v5257 = vsel %vm4873, 1.0, %v5129
      %v5258 = vsel %vm4874, 1.0, %v5130
      %v5259 = vsel %vm4875, 1.0, %v5131
      %v5260 = vsel %vm4876, 1.0, %v5132
      %v5261 = vsel %vm4877, 1.0, %v5133
      %v5262 = vsel %vm4878, 1.0, %v5134
      %v5263 = vsel %vm4879, 1.0, %v5135
      %v5264 = vsel %vm4880, 1.0, %v5136
      %v5265 = vsel %vm4881, 1.0, %v5137
      %v5266 = vsel %vm4882, 1.0, %v5138
      %v5267 = vsel %vm4883, 1.0, %v5139
      %v5268 = vsel %vm4884, 1.0, %v5140
      %v5269 = vsel %vm4885, 1.0, %v5141
      %v5270 = vsel %vm4886, 1.0, %v5142
      %v5271 = vsel %vm4887, 1.0, %v5143
      %v5272 = vsel %vm4888, 1.0, %v5144
      %v5273 = vsel %vm4889, 1.0, %v5145
      %v5274 = vsel %vm4890, 1.0, %v5146
      %v5275 = vsel %vm4891, 1.0, %v5147
      %v5276 = vsel %vm4892, 1.0, %v5148
      %v5277 = vsel %vm4893, 1.0, %v5149
      %v5278 = vsel %vm4894, 1.0, %v5150
      %v5279 = vsel %vm4895, 1.0, %v5151
      %v5280 = vsel %vm4896, 1.0, %v5152
      %v5281 = vsel %vm4897, 1.0, %v5153
      %v5282 = vsel %vm4898, 1.0, %v5154
      %v5283 = vsel %vm4899, 1.0, %v5155
      %v5284 = vsel %vm4900, 1.0, %v5156
      %5413 = vset.pattern.permute.xlu0 0
      %5414 = vperm.xlu0 %5413, %v5157
      %v5415 = vpop.permute.xlu0 %5414
      %5416 = vset.pattern.permute.xlu0 0
      %5417 = vperm.xlu0 %5416, %v5158
      %v5418 = vpop.permute.xlu0 %5417
      %5419 = vset.pattern.permute.xlu0 0
      %5420 = vperm.xlu0 %5419, %v5159
      %v5421 = vpop.permute.xlu0 %5420
      %5422 = vset.pattern.permute.xlu0 0
      %5423 = vperm.xlu0 %5422, %v5160
      %v5424 = vpop.permute.xlu0 %5423
      %5425 = vset.pattern.permute.xlu0 0
      %5426 = vperm.xlu0 %5425, %v5161
      %v5427 = vpop.permute.xlu0 %5426
      %5428 = vset.pattern.permute.xlu0 0
      %5429 = vperm.xlu0 %5428, %v5162
      %v5430 = vpop.permute.xlu0 %5429
      %5431 = vset.pattern.permute.xlu0 0
      %5432 = vperm.xlu0 %5431, %v5163
      %v5433 = vpop.permute.xlu0 %5432
      %5434 = vset.pattern.permute.xlu0 0
      %5435 = vperm.xlu0 %5434, %v5164
      %v5436 = vpop.permute.xlu0 %5435
      %5437 = vset.pattern.permute.xlu0 0
      %5438 = vperm.xlu0 %5437, %v5165
      %v5439 = vpop.permute.xlu0 %5438
      %5440 = vset.pattern.permute.xlu0 0
      %5441 = vperm.xlu0 %5440, %v5166
      %v5442 = vpop.permute.xlu0 %5441
      %5443 = vset.pattern.permute.xlu0 0
      %5444 = vperm.xlu0 %5443, %v5167
      %v5445 = vpop.permute.xlu0 %5444
      %5446 = vset.pattern.permute.xlu0 0
      %5447 = vperm.xlu0 %5446, %v5168
      %v5448 = vpop.permute.xlu0 %5447
      %5449 = vset.pattern.permute.xlu0 0
      %5450 = vperm.xlu0 %5449, %v5169
      %v5451 = vpop.permute.xlu0 %5450
      %5452 = vset.pattern.permute.xlu0 0
      %5453 = vperm.xlu0 %5452, %v5170
      %v5454 = vpop.permute.xlu0 %5453
      %5455 = vset.pattern.permute.xlu0 0
      %5456 = vperm.xlu0 %5455, %v5171
      %v5457 = vpop.permute.xlu0 %5456
      %5458 = vset.pattern.permute.xlu0 0
      %5459 = vperm.xlu0 %5458, %v5172
      %v5460 = vpop.permute.xlu0 %5459
      %5461 = vset.pattern.permute.xlu0 0
      %5462 = vperm.xlu0 %5461, %v5173
      %v5463 = vpop.permute.xlu0 %5462
      %5464 = vset.pattern.permute.xlu0 0
      %5465 = vperm.xlu0 %5464, %v5174
      %v5466 = vpop.permute.xlu0 %5465
      %5467 = vset.pattern.permute.xlu0 0
      %5468 = vperm.xlu0 %5467, %v5175
      %v5469 = vpop.permute.xlu0 %5468
      %5470 = vset.pattern.permute.xlu0 0
      %5471 = vperm.xlu0 %5470, %v5176
      %v5472 = vpop.permute.xlu0 %5471
      %5473 = vset.pattern.permute.xlu0 0
      %5474 = vperm.xlu0 %5473, %v5177
      %v5475 = vpop.permute.xlu0 %5474
      %5476 = vset.pattern.permute.xlu0 0
      %5477 = vperm.xlu0 %5476, %v5178
      %v5478 = vpop.permute.xlu0 %5477
      %5479 = vset.pattern.permute.xlu0 0
      %5480 = vperm.xlu0 %5479, %v5179
      %v5481 = vpop.permute.xlu0 %5480
      %5482 = vset.pattern.permute.xlu0 0
      %5483 = vperm.xlu0 %5482, %v5180
      %v5484 = vpop.permute.xlu0 %5483
      %5485 = vset.pattern.permute.xlu0 0
      %5486 = vperm.xlu0 %5485, %v5181
      %v5487 = vpop.permute.xlu0 %5486
      %5488 = vset.pattern.permute.xlu0 0
      %5489 = vperm.xlu0 %5488, %v5182
      %v5490 = vpop.permute.xlu0 %5489
      %5491 = vset.pattern.permute.xlu0 0
      %5492 = vperm.xlu0 %5491, %v5183
      %v5493 = vpop.permute.xlu0 %5492
      %5494 = vset.pattern.permute.xlu0 0
      %5495 = vperm.xlu0 %5494, %v5184
      %v5496 = vpop.permute.xlu0 %5495
      %5497 = vset.pattern.permute.xlu0 0
      %5498 = vperm.xlu0 %5497, %v5185
      %v5499 = vpop.permute.xlu0 %5498
      %5500 = vset.pattern.permute.xlu0 0
      %5501 = vperm.xlu0 %5500, %v5186
      %v5502 = vpop.permute.xlu0 %5501
      %5503 = vset.pattern.permute.xlu0 0
      %5504 = vperm.xlu0 %5503, %v5187
      %v5505 = vpop.permute.xlu0 %5504
      %5506 = vset.pattern.permute.xlu0 0
      %5507 = vperm.xlu0 %5506, %v5188
      %v5508 = vpop.permute.xlu0 %5507
      %5509 = vset.pattern.permute.xlu0 0
      %5510 = vperm.xlu0 %5509, %v5189
      %v5511 = vpop.permute.xlu0 %5510
      %5512 = vset.pattern.permute.xlu0 0
      %5513 = vperm.xlu0 %5512, %v5190
      %v5514 = vpop.permute.xlu0 %5513
      %5515 = vset.pattern.permute.xlu0 0
      %5516 = vperm.xlu0 %5515, %v5191
      %v5517 = vpop.permute.xlu0 %5516
      %5518 = vset.pattern.permute.xlu0 0
      %5519 = vperm.xlu0 %5518, %v5192
      %v5520 = vpop.permute.xlu0 %5519
      %5521 = vset.pattern.permute.xlu0 0
      %5522 = vperm.xlu0 %5521, %v5193
      %v5523 = vpop.permute.xlu0 %5522
      %5524 = vset.pattern.permute.xlu0 0
      %5525 = vperm.xlu0 %5524, %v5194
      %v5526 = vpop.permute.xlu0 %5525
      %5527 = vset.pattern.permute.xlu0 0
      %5528 = vperm.xlu0 %5527, %v5195
      %v5529 = vpop.permute.xlu0 %5528
      %5530 = vset.pattern.permute.xlu0 0
      %5531 = vperm.xlu0 %5530, %v5196
      %v5532 = vpop.permute.xlu0 %5531
      %5533 = vset.pattern.permute.xlu0 0
      %5534 = vperm.xlu0 %5533, %v5197
      %v5535 = vpop.permute.xlu0 %5534
      %5536 = vset.pattern.permute.xlu0 0
      %5537 = vperm.xlu0 %5536, %v5198
      %v5538 = vpop.permute.xlu0 %5537
      %5539 = vset.pattern.permute.xlu0 0
      %5540 = vperm.xlu0 %5539, %v5199
      %v5541 = vpop.permute.xlu0 %5540
      %5542 = vset.pattern.permute.xlu0 0
      %5543 = vperm.xlu0 %5542, %v5200
      %v5544 = vpop.permute.xlu0 %5543
      %5545 = vset.pattern.permute.xlu0 0
      %5546 = vperm.xlu0 %5545, %v5201
      %v5547 = vpop.permute.xlu0 %5546
      %5548 = vset.pattern.permute.xlu0 0
      %5549 = vperm.xlu0 %5548, %v5202
      %v5550 = vpop.permute.xlu0 %5549
      %5551 = vset.pattern.permute.xlu0 0
      %5552 = vperm.xlu0 %5551, %v5203
      %v5553 = vpop.permute.xlu0 %5552
      %5554 = vset.pattern.permute.xlu0 0
      %5555 = vperm.xlu0 %5554, %v5204
      %v5556 = vpop.permute.xlu0 %5555
      %5557 = vset.pattern.permute.xlu0 0
      %5558 = vperm.xlu0 %5557, %v5205
      %v5559 = vpop.permute.xlu0 %5558
      %5560 = vset.pattern.permute.xlu0 0
      %5561 = vperm.xlu0 %5560, %v5206
      %v5562 = vpop.permute.xlu0 %5561
      %5563 = vset.pattern.permute.xlu0 0
      %5564 = vperm.xlu0 %5563, %v5207
      %v5565 = vpop.permute.xlu0 %5564
      %5566 = vset.pattern.permute.xlu0 0
      %5567 = vperm.xlu0 %5566, %v5208
      %v5568 = vpop.permute.xlu0 %5567
      %5569 = vset.pattern.permute.xlu0 0
      %5570 = vperm.xlu0 %5569, %v5209
      %v5571 = vpop.permute.xlu0 %5570
      %5572 = vset.pattern.permute.xlu0 0
      %5573 = vperm.xlu0 %5572, %v5210
      %v5574 = vpop.permute.xlu0 %5573
      %5575 = vset.pattern.permute.xlu0 0
      %5576 = vperm.xlu0 %5575, %v5211
      %v5577 = vpop.permute.xlu0 %5576
      %5578 = vset.pattern.permute.xlu0 0
      %5579 = vperm.xlu0 %5578, %v5212
      %v5580 = vpop.permute.xlu0 %5579
      %5581 = vset.pattern.permute.xlu0 0
      %5582 = vperm.xlu0 %5581, %v5213
      %v5583 = vpop.permute.xlu0 %5582
      %5584 = vset.pattern.permute.xlu0 0
      %5585 = vperm.xlu0 %5584, %v5214
      %v5586 = vpop.permute.xlu0 %5585
      %5587 = vset.pattern.permute.xlu0 0
      %5588 = vperm.xlu0 %5587, %v5215
      %v5589 = vpop.permute.xlu0 %5588
      %5590 = vset.pattern.permute.xlu0 0
      %5591 = vperm.xlu0 %5590, %v5216
      %v5592 = vpop.permute.xlu0 %5591
      %5593 = vset.pattern.permute.xlu0 0
      %5594 = vperm.xlu0 %5593, %v5217
      %v5595 = vpop.permute.xlu0 %5594
      %5596 = vset.pattern.permute.xlu0 0
      %5597 = vperm.xlu0 %5596, %v5218
      %v5598 = vpop.permute.xlu0 %5597
      %5599 = vset.pattern.permute.xlu0 0
      %5600 = vperm.xlu0 %5599, %v5219
      %v5601 = vpop.permute.xlu0 %5600
      %5602 = vset.pattern.permute.xlu0 0
      %5603 = vperm.xlu0 %5602, %v5220
      %v5604 = vpop.permute.xlu0 %5603
      %5605 = vset.pattern.permute.xlu0 0
      %5606 = vperm.xlu0 %5605, %v5221
      %v5607 = vpop.permute.xlu0 %5606
      %5608 = vset.pattern.permute.xlu0 0
      %5609 = vperm.xlu0 %5608, %v5222
      %v5610 = vpop.permute.xlu0 %5609
      %5611 = vset.pattern.permute.xlu0 0
      %5612 = vperm.xlu0 %5611, %v5223
      %v5613 = vpop.permute.xlu0 %5612
      %5614 = vset.pattern.permute.xlu0 0
      %5615 = vperm.xlu0 %5614, %v5224
      %v5616 = vpop.permute.xlu0 %5615
      %5617 = vset.pattern.permute.xlu0 0
      %5618 = vperm.xlu0 %5617, %v5225
      %v5619 = vpop.permute.xlu0 %5618
      %5620 = vset.pattern.permute.xlu0 0
      %5621 = vperm.xlu0 %5620, %v5226
      %v5622 = vpop.permute.xlu0 %5621
      %5623 = vset.pattern.permute.xlu0 0
      %5624 = vperm.xlu0 %5623, %v5227
      %v5625 = vpop.permute.xlu0 %5624
      %5626 = vset.pattern.permute.xlu0 0
      %5627 = vperm.xlu0 %5626, %v5228
      %v5628 = vpop.permute.xlu0 %5627
      %5629 = vset.pattern.permute.xlu0 0
      %5630 = vperm.xlu0 %5629, %v5229
      %v5631 = vpop.permute.xlu0 %5630
      %5632 = vset.pattern.permute.xlu0 0
      %5633 = vperm.xlu0 %5632, %v5230
      %v5634 = vpop.permute.xlu0 %5633
      %5635 = vset.pattern.permute.xlu0 0
      %5636 = vperm.xlu0 %5635, %v5231
      %v5637 = vpop.permute.xlu0 %5636
      %5638 = vset.pattern.permute.xlu0 0
      %5639 = vperm.xlu0 %5638, %v5232
      %v5640 = vpop.permute.xlu0 %5639
      %5641 = vset.pattern.permute.xlu0 0
      %5642 = vperm.xlu0 %5641, %v5233
      %v5643 = vpop.permute.xlu0 %5642
      %5644 = vset.pattern.permute.xlu0 0
      %5645 = vperm.xlu0 %5644, %v5234
      %v5646 = vpop.permute.xlu0 %5645
      %5647 = vset.pattern.permute.xlu0 0
      %5648 = vperm.xlu0 %5647, %v5235
      %v5649 = vpop.permute.xlu0 %5648
      %5650 = vset.pattern.permute.xlu0 0
      %5651 = vperm.xlu0 %5650, %v5236
      %v5652 = vpop.permute.xlu0 %5651
      %5653 = vset.pattern.permute.xlu0 0
      %5654 = vperm.xlu0 %5653, %v5237
      %v5655 = vpop.permute.xlu0 %5654
      %5656 = vset.pattern.permute.xlu0 0
      %5657 = vperm.xlu0 %5656, %v5238
      %v5658 = vpop.permute.xlu0 %5657
      %5659 = vset.pattern.permute.xlu0 0
      %5660 = vperm.xlu0 %5659, %v5239
      %v5661 = vpop.permute.xlu0 %5660
      %5662 = vset.pattern.permute.xlu0 0
      %5663 = vperm.xlu0 %5662, %v5240
      %v5664 = vpop.permute.xlu0 %5663
      %5665 = vset.pattern.permute.xlu0 0
      %5666 = vperm.xlu0 %5665, %v5241
      %v5667 = vpop.permute.xlu0 %5666
      %5668 = vset.pattern.permute.xlu0 0
      %5669 = vperm.xlu0 %5668, %v5242
      %v5670 = vpop.permute.xlu0 %5669
      %5671 = vset.pattern.permute.xlu0 0
      %5672 = vperm.xlu0 %5671, %v5243
      %v5673 = vpop.permute.xlu0 %5672
      %5674 = vset.pattern.permute.xlu0 0
      %5675 = vperm.xlu0 %5674, %v5244
      %v5676 = vpop.permute.xlu0 %5675
      %5677 = vset.pattern.permute.xlu0 0
      %5678 = vperm.xlu0 %5677, %v5245
      %v5679 = vpop.permute.xlu0 %5678
      %5680 = vset.pattern.permute.xlu0 0
      %5681 = vperm.xlu0 %5680, %v5246
      %v5682 = vpop.permute.xlu0 %5681
      %5683 = vset.pattern.permute.xlu0 0
      %5684 = vperm.xlu0 %5683, %v5247
      %v5685 = vpop.permute.xlu0 %5684
      %5686 = vset.pattern.permute.xlu0 0
      %5687 = vperm.xlu0 %5686, %v5248
      %v5688 = vpop.permute.xlu0 %5687
      %5689 = vset.pattern.permute.xlu0 0
      %5690 = vperm.xlu0 %5689, %v5249
      %v5691 = vpop.permute.xlu0 %5690
      %5692 = vset.pattern.permute.xlu0 0
      %5693 = vperm.xlu0 %5692, %v5250
      %v5694 = vpop.permute.xlu0 %5693
      %5695 = vset.pattern.permute.xlu0 0
      %5696 = vperm.xlu0 %5695, %v5251
      %v5697 = vpop.permute.xlu0 %5696
      %5698 = vset.pattern.permute.xlu0 0
      %5699 = vperm.xlu0 %5698, %v5252
      %v5700 = vpop.permute.xlu0 %5699
      %5701 = vset.pattern.permute.xlu0 0
      %5702 = vperm.xlu0 %5701, %v5253
      %v5703 = vpop.permute.xlu0 %5702
      %5704 = vset.pattern.permute.xlu0 0
      %5705 = vperm.xlu0 %5704, %v5254
      %v5706 = vpop.permute.xlu0 %5705
      %5707 = vset.pattern.permute.xlu0 0
      %5708 = vperm.xlu0 %5707, %v5255
      %v5709 = vpop.permute.xlu0 %5708
      %5710 = vset.pattern.permute.xlu0 0
      %5711 = vperm.xlu0 %5710, %v5256
      %v5712 = vpop.permute.xlu0 %5711
      %5713 = vset.pattern.permute.xlu0 0
      %5714 = vperm.xlu0 %5713, %v5257
      %v5715 = vpop.permute.xlu0 %5714
      %5716 = vset.pattern.permute.xlu0 0
      %5717 = vperm.xlu0 %5716, %v5258
      %v5718 = vpop.permute.xlu0 %5717
      %5719 = vset.pattern.permute.xlu0 0
      %5720 = vperm.xlu0 %5719, %v5259
      %v5721 = vpop.permute.xlu0 %5720
      %5722 = vset.pattern.permute.xlu0 0
      %5723 = vperm.xlu0 %5722, %v5260
      %v5724 = vpop.permute.xlu0 %5723
      %5725 = vset.pattern.permute.xlu0 0
      %5726 = vperm.xlu0 %5725, %v5261
      %v5727 = vpop.permute.xlu0 %5726
      %5728 = vset.pattern.permute.xlu0 0
      %5729 = vperm.xlu0 %5728, %v5262
      %v5730 = vpop.permute.xlu0 %5729
      %5731 = vset.pattern.permute.xlu0 0
      %5732 = vperm.xlu0 %5731, %v5263
      %v5733 = vpop.permute.xlu0 %5732
      %5734 = vset.pattern.permute.xlu0 0
      %5735 = vperm.xlu0 %5734, %v5264
      %v5736 = vpop.permute.xlu0 %5735
      %5737 = vset.pattern.permute.xlu0 0
      %5738 = vperm.xlu0 %5737, %v5265
      %v5739 = vpop.permute.xlu0 %5738
      %5740 = vset.pattern.permute.xlu0 0
      %5741 = vperm.xlu0 %5740, %v5266
      %v5742 = vpop.permute.xlu0 %5741
      %5743 = vset.pattern.permute.xlu0 0
      %5744 = vperm.xlu0 %5743, %v5267
      %v5745 = vpop.permute.xlu0 %5744
      %5746 = vset.pattern.permute.xlu0 0
      %5747 = vperm.xlu0 %5746, %v5268
      %v5748 = vpop.permute.xlu0 %5747
      %5749 = vset.pattern.permute.xlu0 0
      %5750 = vperm.xlu0 %5749, %v5269
      %v5751 = vpop.permute.xlu0 %5750
      %5752 = vset.pattern.permute.xlu0 0
      %5753 = vperm.xlu0 %5752, %v5270
      %v5754 = vpop.permute.xlu0 %5753
      %5755 = vset.pattern.permute.xlu0 0
      %5756 = vperm.xlu0 %5755, %v5271
      %v5757 = vpop.permute.xlu0 %5756
      %5758 = vset.pattern.permute.xlu0 0
      %5759 = vperm.xlu0 %5758, %v5272
      %v5760 = vpop.permute.xlu0 %5759
      %5761 = vset.pattern.permute.xlu0 0
      %5762 = vperm.xlu0 %5761, %v5273
      %v5763 = vpop.permute.xlu0 %5762
      %5764 = vset.pattern.permute.xlu0 0
      %5765 = vperm.xlu0 %5764, %v5274
      %v5766 = vpop.permute.xlu0 %5765
      %5767 = vset.pattern.permute.xlu0 0
      %5768 = vperm.xlu0 %5767, %v5275
      %v5769 = vpop.permute.xlu0 %5768
      %5770 = vset.pattern.permute.xlu0 0
      %5771 = vperm.xlu0 %5770, %v5276
      %v5772 = vpop.permute.xlu0 %5771
      %5773 = vset.pattern.permute.xlu0 0
      %5774 = vperm.xlu0 %5773, %v5277
      %v5775 = vpop.permute.xlu0 %5774
      %5776 = vset.pattern.permute.xlu0 0
      %5777 = vperm.xlu0 %5776, %v5278
      %v5778 = vpop.permute.xlu0 %5777
      %5779 = vset.pattern.permute.xlu0 0
      %5780 = vperm.xlu0 %5779, %v5279
      %v5781 = vpop.permute.xlu0 %5780
      %5782 = vset.pattern.permute.xlu0 0
      %5783 = vperm.xlu0 %5782, %v5280
      %v5784 = vpop.permute.xlu0 %5783
      %5785 = vset.pattern.permute.xlu0 0
      %5786 = vperm.xlu0 %5785, %v5281
      %v5787 = vpop.permute.xlu0 %5786
      %5788 = vset.pattern.permute.xlu0 0
      %5789 = vperm.xlu0 %5788, %v5282
      %v5790 = vpop.permute.xlu0 %5789
      %5791 = vset.pattern.permute.xlu0 0
      %5792 = vperm.xlu0 %5791, %v5283
      %v5793 = vpop.permute.xlu0 %5792
      %5794 = vset.pattern.permute.xlu0 0
      %5795 = vperm.xlu0 %5794, %v5284
      %v5796 = vpop.permute.xlu0 %5795
      %v5797 = vlaneseq
      %v5798 = vshrl.u32 %v5797, 7
      %v5799 = vsub.s32 %v2876, %v5798
      %v5800 = vrot.slane %v5415, %v5799
      %v5801 = vlaneseq
      %v5802 = vshrl.u32 %v5801, 7
      %v5803 = vsub.s32 %v2881, %v5802
      %v5804 = vrot.slane %v5418, %v5803
      %v5805 = vsel %vm2886, %v5804, %v5800
      %v5806 = vlaneseq
      %v5807 = vshrl.u32 %v5806, 7
      %v5808 = vsub.s32 %v2876, %v5807
      %v5809 = vrot.slane %v5421, %v5808
      %v5810 = vlaneseq
      %v5811 = vshrl.u32 %v5810, 7
      %v5812 = vsub.s32 %v2881, %v5811
      %v5813 = vrot.slane %v5424, %v5812
      %v5814 = vsel %vm2886, %v5813, %v5809
      %v5815 = vlaneseq
      %v5816 = vshrl.u32 %v5815, 7
      %v5817 = vsub.s32 %v2876, %v5816
      %v5818 = vrot.slane %v5427, %v5817
      %v5819 = vlaneseq
      %v5820 = vshrl.u32 %v5819, 7
      %v5821 = vsub.s32 %v2881, %v5820
      %v5822 = vrot.slane %v5430, %v5821
      %v5823 = vsel %vm2886, %v5822, %v5818
      %v5824 = vlaneseq
      %v5825 = vshrl.u32 %v5824, 7
      %v5826 = vsub.s32 %v2876, %v5825
      %v5827 = vrot.slane %v5433, %v5826
      %v5828 = vlaneseq
      %v5829 = vshrl.u32 %v5828, 7
      %v5830 = vsub.s32 %v2881, %v5829
      %v5831 = vrot.slane %v5436, %v5830
      %v5832 = vsel %vm2886, %v5831, %v5827
      %v5833 = vlaneseq
      %v5834 = vshrl.u32 %v5833, 7
      %v5835 = vsub.s32 %v2876, %v5834
      %v5836 = vrot.slane %v5439, %v5835
      %v5837 = vlaneseq
      %v5838 = vshrl.u32 %v5837, 7
      %v5839 = vsub.s32 %v2881, %v5838
      %v5840 = vrot.slane %v5442, %v5839
      %v5841 = vsel %vm2886, %v5840, %v5836
      %v5842 = vlaneseq
      %v5843 = vshrl.u32 %v5842, 7
      %v5844 = vsub.s32 %v2876, %v5843
      %v5845 = vrot.slane %v5445, %v5844
      %v5846 = vlaneseq
      %v5847 = vshrl.u32 %v5846, 7
      %v5848 = vsub.s32 %v2881, %v5847
      %v5849 = vrot.slane %v5448, %v5848
      %v5850 = vsel %vm2886, %v5849, %v5845
      %v5851 = vlaneseq
      %v5852 = vshrl.u32 %v5851, 7
      %v5853 = vsub.s32 %v2876, %v5852
      %v5854 = vrot.slane %v5451, %v5853
      %v5855 = vlaneseq
      %v5856 = vshrl.u32 %v5855, 7
      %v5857 = vsub.s32 %v2881, %v5856
      %v5858 = vrot.slane %v5454, %v5857
      %v5859 = vsel %vm2886, %v5858, %v5854
      %v5860 = vlaneseq
      %v5861 = vshrl.u32 %v5860, 7
      %v5862 = vsub.s32 %v2876, %v5861
      %v5863 = vrot.slane %v5457, %v5862
      %v5864 = vlaneseq
      %v5865 = vshrl.u32 %v5864, 7
      %v5866 = vsub.s32 %v2881, %v5865
      %v5867 = vrot.slane %v5460, %v5866
      %v5868 = vsel %vm2886, %v5867, %v5863
      %v5869 = vlaneseq
      %v5870 = vshrl.u32 %v5869, 7
      %v5871 = vsub.s32 %v2876, %v5870
      %v5872 = vrot.slane %v5463, %v5871
      %v5873 = vlaneseq
      %v5874 = vshrl.u32 %v5873, 7
      %v5875 = vsub.s32 %v2881, %v5874
      %v5876 = vrot.slane %v5466, %v5875
      %v5877 = vsel %vm2886, %v5876, %v5872
      %v5878 = vlaneseq
      %v5879 = vshrl.u32 %v5878, 7
      %v5880 = vsub.s32 %v2876, %v5879
      %v5881 = vrot.slane %v5469, %v5880
      %v5882 = vlaneseq
      %v5883 = vshrl.u32 %v5882, 7
      %v5884 = vsub.s32 %v2881, %v5883
      %v5885 = vrot.slane %v5472, %v5884
      %v5886 = vsel %vm2886, %v5885, %v5881
      %v5887 = vlaneseq
      %v5888 = vshrl.u32 %v5887, 7
      %v5889 = vsub.s32 %v2876, %v5888
      %v5890 = vrot.slane %v5475, %v5889
      %v5891 = vlaneseq
      %v5892 = vshrl.u32 %v5891, 7
      %v5893 = vsub.s32 %v2881, %v5892
      %v5894 = vrot.slane %v5478, %v5893
      %v5895 = vsel %vm2886, %v5894, %v5890
      %v5896 = vlaneseq
      %v5897 = vshrl.u32 %v5896, 7
      %v5898 = vsub.s32 %v2876, %v5897
      %v5899 = vrot.slane %v5481, %v5898
      %v5900 = vlaneseq
      %v5901 = vshrl.u32 %v5900, 7
      %v5902 = vsub.s32 %v2881, %v5901
      %v5903 = vrot.slane %v5484, %v5902
      %v5904 = vsel %vm2886, %v5903, %v5899
      %v5905 = vlaneseq
      %v5906 = vshrl.u32 %v5905, 7
      %v5907 = vsub.s32 %v2876, %v5906
      %v5908 = vrot.slane %v5487, %v5907
      %v5909 = vlaneseq
      %v5910 = vshrl.u32 %v5909, 7
      %v5911 = vsub.s32 %v2881, %v5910
      %v5912 = vrot.slane %v5490, %v5911
      %v5913 = vsel %vm2886, %v5912, %v5908
      %v5914 = vlaneseq
      %v5915 = vshrl.u32 %v5914, 7
      %v5916 = vsub.s32 %v2876, %v5915
      %v5917 = vrot.slane %v5493, %v5916
      %v5918 = vlaneseq
      %v5919 = vshrl.u32 %v5918, 7
      %v5920 = vsub.s32 %v2881, %v5919
      %v5921 = vrot.slane %v5496, %v5920
      %v5922 = vsel %vm2886, %v5921, %v5917
      %v5923 = vlaneseq
      %v5924 = vshrl.u32 %v5923, 7
      %v5925 = vsub.s32 %v2876, %v5924
      %v5926 = vrot.slane %v5499, %v5925
      %v5927 = vlaneseq
      %v5928 = vshrl.u32 %v5927, 7
      %v5929 = vsub.s32 %v2881, %v5928
      %v5930 = vrot.slane %v5502, %v5929
      %v5931 = vsel %vm2886, %v5930, %v5926
      %v5932 = vlaneseq
      %v5933 = vshrl.u32 %v5932, 7
      %v5934 = vsub.s32 %v2876, %v5933
      %v5935 = vrot.slane %v5505, %v5934
      %v5936 = vlaneseq
      %v5937 = vshrl.u32 %v5936, 7
      %v5938 = vsub.s32 %v2881, %v5937
      %v5939 = vrot.slane %v5508, %v5938
      %v5940 = vsel %vm2886, %v5939, %v5935
      %v5941 = vlaneseq
      %v5942 = vshrl.u32 %v5941, 7
      %v5943 = vsub.s32 %v2876, %v5942
      %v5944 = vrot.slane %v5511, %v5943
      %v5945 = vlaneseq
      %v5946 = vshrl.u32 %v5945, 7
      %v5947 = vsub.s32 %v2881, %v5946
      %v5948 = vrot.slane %v5514, %v5947
      %v5949 = vsel %vm2886, %v5948, %v5944
      %v5950 = vlaneseq
      %v5951 = vshrl.u32 %v5950, 7
      %v5952 = vsub.s32 %v2876, %v5951
      %v5953 = vrot.slane %v5517, %v5952
      %v5954 = vlaneseq
      %v5955 = vshrl.u32 %v5954, 7
      %v5956 = vsub.s32 %v2881, %v5955
      %v5957 = vrot.slane %v5520, %v5956
      %v5958 = vsel %vm2886, %v5957, %v5953
      %v5959 = vlaneseq
      %v5960 = vshrl.u32 %v5959, 7
      %v5961 = vsub.s32 %v2876, %v5960
      %v5962 = vrot.slane %v5523, %v5961
      %v5963 = vlaneseq
      %v5964 = vshrl.u32 %v5963, 7
      %v5965 = vsub.s32 %v2881, %v5964
      %v5966 = vrot.slane %v5526, %v5965
      %v5967 = vsel %vm2886, %v5966, %v5962
      %v5968 = vlaneseq
      %v5969 = vshrl.u32 %v5968, 7
      %v5970 = vsub.s32 %v2876, %v5969
      %v5971 = vrot.slane %v5529, %v5970
      %v5972 = vlaneseq
      %v5973 = vshrl.u32 %v5972, 7
      %v5974 = vsub.s32 %v2881, %v5973
      %v5975 = vrot.slane %v5532, %v5974
      %v5976 = vsel %vm2886, %v5975, %v5971
      %v5977 = vlaneseq
      %v5978 = vshrl.u32 %v5977, 7
      %v5979 = vsub.s32 %v2876, %v5978
      %v5980 = vrot.slane %v5535, %v5979
      %v5981 = vlaneseq
      %v5982 = vshrl.u32 %v5981, 7
      %v5983 = vsub.s32 %v2881, %v5982
      %v5984 = vrot.slane %v5538, %v5983
      %v5985 = vsel %vm2886, %v5984, %v5980
      %v5986 = vlaneseq
      %v5987 = vshrl.u32 %v5986, 7
      %v5988 = vsub.s32 %v2876, %v5987
      %v5989 = vrot.slane %v5541, %v5988
      %v5990 = vlaneseq
      %v5991 = vshrl.u32 %v5990, 7
      %v5992 = vsub.s32 %v2881, %v5991
      %v5993 = vrot.slane %v5544, %v5992
      %v5994 = vsel %vm2886, %v5993, %v5989
      %v5995 = vlaneseq
      %v5996 = vshrl.u32 %v5995, 7
      %v5997 = vsub.s32 %v2876, %v5996
      %v5998 = vrot.slane %v5547, %v5997
      %v5999 = vlaneseq
      %v6000 = vshrl.u32 %v5999, 7
      %v6001 = vsub.s32 %v2881, %v6000
      %v6002 = vrot.slane %v5550, %v6001
      %v6003 = vsel %vm2886, %v6002, %v5998
      %v6004 = vlaneseq
      %v6005 = vshrl.u32 %v6004, 7
      %v6006 = vsub.s32 %v2876, %v6005
      %v6007 = vrot.slane %v5553, %v6006
      %v6008 = vlaneseq
      %v6009 = vshrl.u32 %v6008, 7
      %v6010 = vsub.s32 %v2881, %v6009
      %v6011 = vrot.slane %v5556, %v6010
      %v6012 = vsel %vm2886, %v6011, %v6007
      %v6013 = vlaneseq
      %v6014 = vshrl.u32 %v6013, 7
      %v6015 = vsub.s32 %v2876, %v6014
      %v6016 = vrot.slane %v5559, %v6015
      %v6017 = vlaneseq
      %v6018 = vshrl.u32 %v6017, 7
      %v6019 = vsub.s32 %v2881, %v6018
      %v6020 = vrot.slane %v5562, %v6019
      %v6021 = vsel %vm2886, %v6020, %v6016
      %v6022 = vlaneseq
      %v6023 = vshrl.u32 %v6022, 7
      %v6024 = vsub.s32 %v2876, %v6023
      %v6025 = vrot.slane %v5565, %v6024
      %v6026 = vlaneseq
      %v6027 = vshrl.u32 %v6026, 7
      %v6028 = vsub.s32 %v2881, %v6027
      %v6029 = vrot.slane %v5568, %v6028
      %v6030 = vsel %vm2886, %v6029, %v6025
      %v6031 = vlaneseq
      %v6032 = vshrl.u32 %v6031, 7
      %v6033 = vsub.s32 %v2876, %v6032
      %v6034 = vrot.slane %v5571, %v6033
      %v6035 = vlaneseq
      %v6036 = vshrl.u32 %v6035, 7
      %v6037 = vsub.s32 %v2881, %v6036
      %v6038 = vrot.slane %v5574, %v6037
      %v6039 = vsel %vm2886, %v6038, %v6034
      %v6040 = vlaneseq
      %v6041 = vshrl.u32 %v6040, 7
      %v6042 = vsub.s32 %v2876, %v6041
      %v6043 = vrot.slane %v5577, %v6042
      %v6044 = vlaneseq
      %v6045 = vshrl.u32 %v6044, 7
      %v6046 = vsub.s32 %v2881, %v6045
      %v6047 = vrot.slane %v5580, %v6046
      %v6048 = vsel %vm2886, %v6047, %v6043
      %v6049 = vlaneseq
      %v6050 = vshrl.u32 %v6049, 7
      %v6051 = vsub.s32 %v2876, %v6050
      %v6052 = vrot.slane %v5583, %v6051
      %v6053 = vlaneseq
      %v6054 = vshrl.u32 %v6053, 7
      %v6055 = vsub.s32 %v2881, %v6054
      %v6056 = vrot.slane %v5586, %v6055
      %v6057 = vsel %vm2886, %v6056, %v6052
      %v6058 = vlaneseq
      %v6059 = vshrl.u32 %v6058, 7
      %v6060 = vsub.s32 %v2876, %v6059
      %v6061 = vrot.slane %v5589, %v6060
      %v6062 = vlaneseq
      %v6063 = vshrl.u32 %v6062, 7
      %v6064 = vsub.s32 %v2881, %v6063
      %v6065 = vrot.slane %v5592, %v6064
      %v6066 = vsel %vm2886, %v6065, %v6061
      %v6067 = vlaneseq
      %v6068 = vshrl.u32 %v6067, 7
      %v6069 = vsub.s32 %v2876, %v6068
      %v6070 = vrot.slane %v5595, %v6069
      %v6071 = vlaneseq
      %v6072 = vshrl.u32 %v6071, 7
      %v6073 = vsub.s32 %v2881, %v6072
      %v6074 = vrot.slane %v5598, %v6073
      %v6075 = vsel %vm2886, %v6074, %v6070
      %v6076 = vlaneseq
      %v6077 = vshrl.u32 %v6076, 7
      %v6078 = vsub.s32 %v2876, %v6077
      %v6079 = vrot.slane %v5601, %v6078
      %v6080 = vlaneseq
      %v6081 = vshrl.u32 %v6080, 7
      %v6082 = vsub.s32 %v2881, %v6081
      %v6083 = vrot.slane %v5604, %v6082
      %v6084 = vsel %vm2886, %v6083, %v6079
      %v6085 = vlaneseq
      %v6086 = vshrl.u32 %v6085, 7
      %v6087 = vsub.s32 %v2876, %v6086
      %v6088 = vrot.slane %v5607, %v6087
      %v6089 = vlaneseq
      %v6090 = vshrl.u32 %v6089, 7
      %v6091 = vsub.s32 %v2881, %v6090
      %v6092 = vrot.slane %v5610, %v6091
      %v6093 = vsel %vm2886, %v6092, %v6088
      %v6094 = vlaneseq
      %v6095 = vshrl.u32 %v6094, 7
      %v6096 = vsub.s32 %v2876, %v6095
      %v6097 = vrot.slane %v5613, %v6096
      %v6098 = vlaneseq
      %v6099 = vshrl.u32 %v6098, 7
      %v6100 = vsub.s32 %v2881, %v6099
      %v6101 = vrot.slane %v5616, %v6100
      %v6102 = vsel %vm2886, %v6101, %v6097
      %v6103 = vlaneseq
      %v6104 = vshrl.u32 %v6103, 7
      %v6105 = vsub.s32 %v2876, %v6104
      %v6106 = vrot.slane %v5619, %v6105
      %v6107 = vlaneseq
      %v6108 = vshrl.u32 %v6107, 7
      %v6109 = vsub.s32 %v2881, %v6108
      %v6110 = vrot.slane %v5622, %v6109
      %v6111 = vsel %vm2886, %v6110, %v6106
      %v6112 = vlaneseq
      %v6113 = vshrl.u32 %v6112, 7
      %v6114 = vsub.s32 %v2876, %v6113
      %v6115 = vrot.slane %v5625, %v6114
      %v6116 = vlaneseq
      %v6117 = vshrl.u32 %v6116, 7
      %v6118 = vsub.s32 %v2881, %v6117
      %v6119 = vrot.slane %v5628, %v6118
      %v6120 = vsel %vm2886, %v6119, %v6115
      %v6121 = vlaneseq
      %v6122 = vshrl.u32 %v6121, 7
      %v6123 = vsub.s32 %v2876, %v6122
      %v6124 = vrot.slane %v5631, %v6123
      %v6125 = vlaneseq
      %v6126 = vshrl.u32 %v6125, 7
      %v6127 = vsub.s32 %v2881, %v6126
      %v6128 = vrot.slane %v5634, %v6127
      %v6129 = vsel %vm2886, %v6128, %v6124
      %v6130 = vlaneseq
      %v6131 = vshrl.u32 %v6130, 7
      %v6132 = vsub.s32 %v2876, %v6131
      %v6133 = vrot.slane %v5637, %v6132
      %v6134 = vlaneseq
      %v6135 = vshrl.u32 %v6134, 7
      %v6136 = vsub.s32 %v2881, %v6135
      %v6137 = vrot.slane %v5640, %v6136
      %v6138 = vsel %vm2886, %v6137, %v6133
      %v6139 = vlaneseq
      %v6140 = vshrl.u32 %v6139, 7
      %v6141 = vsub.s32 %v2876, %v6140
      %v6142 = vrot.slane %v5643, %v6141
      %v6143 = vlaneseq
      %v6144 = vshrl.u32 %v6143, 7
      %v6145 = vsub.s32 %v2881, %v6144
      %v6146 = vrot.slane %v5646, %v6145
      %v6147 = vsel %vm2886, %v6146, %v6142
      %v6148 = vlaneseq
      %v6149 = vshrl.u32 %v6148, 7
      %v6150 = vsub.s32 %v2876, %v6149
      %v6151 = vrot.slane %v5649, %v6150
      %v6152 = vlaneseq
      %v6153 = vshrl.u32 %v6152, 7
      %v6154 = vsub.s32 %v2881, %v6153
      %v6155 = vrot.slane %v5652, %v6154
      %v6156 = vsel %vm2886, %v6155, %v6151
      %v6157 = vlaneseq
      %v6158 = vshrl.u32 %v6157, 7
      %v6159 = vsub.s32 %v2876, %v6158
      %v6160 = vrot.slane %v5655, %v6159
      %v6161 = vlaneseq
      %v6162 = vshrl.u32 %v6161, 7
      %v6163 = vsub.s32 %v2881, %v6162
      %v6164 = vrot.slane %v5658, %v6163
      %v6165 = vsel %vm2886, %v6164, %v6160
      %v6166 = vlaneseq
      %v6167 = vshrl.u32 %v6166, 7
      %v6168 = vsub.s32 %v2876, %v6167
      %v6169 = vrot.slane %v5661, %v6168
      %v6170 = vlaneseq
      %v6171 = vshrl.u32 %v6170, 7
      %v6172 = vsub.s32 %v2881, %v6171
      %v6173 = vrot.slane %v5664, %v6172
      %v6174 = vsel %vm2886, %v6173, %v6169
      %v6175 = vlaneseq
      %v6176 = vshrl.u32 %v6175, 7
      %v6177 = vsub.s32 %v2876, %v6176
      %v6178 = vrot.slane %v5667, %v6177
      %v6179 = vlaneseq
      %v6180 = vshrl.u32 %v6179, 7
      %v6181 = vsub.s32 %v2881, %v6180
      %v6182 = vrot.slane %v5670, %v6181
      %v6183 = vsel %vm2886, %v6182, %v6178
      %v6184 = vlaneseq
      %v6185 = vshrl.u32 %v6184, 7
      %v6186 = vsub.s32 %v2876, %v6185
      %v6187 = vrot.slane %v5673, %v6186
      %v6188 = vlaneseq
      %v6189 = vshrl.u32 %v6188, 7
      %v6190 = vsub.s32 %v2881, %v6189
      %v6191 = vrot.slane %v5676, %v6190
      %v6192 = vsel %vm2886, %v6191, %v6187
      %v6193 = vlaneseq
      %v6194 = vshrl.u32 %v6193, 7
      %v6195 = vsub.s32 %v2876, %v6194
      %v6196 = vrot.slane %v5679, %v6195
      %v6197 = vlaneseq
      %v6198 = vshrl.u32 %v6197, 7
      %v6199 = vsub.s32 %v2881, %v6198
      %v6200 = vrot.slane %v5682, %v6199
      %v6201 = vsel %vm2886, %v6200, %v6196
      %v6202 = vlaneseq
      %v6203 = vshrl.u32 %v6202, 7
      %v6204 = vsub.s32 %v2876, %v6203
      %v6205 = vrot.slane %v5685, %v6204
      %v6206 = vlaneseq
      %v6207 = vshrl.u32 %v6206, 7
      %v6208 = vsub.s32 %v2881, %v6207
      %v6209 = vrot.slane %v5688, %v6208
      %v6210 = vsel %vm2886, %v6209, %v6205
      %v6211 = vlaneseq
      %v6212 = vshrl.u32 %v6211, 7
      %v6213 = vsub.s32 %v2876, %v6212
      %v6214 = vrot.slane %v5691, %v6213
      %v6215 = vlaneseq
      %v6216 = vshrl.u32 %v6215, 7
      %v6217 = vsub.s32 %v2881, %v6216
      %v6218 = vrot.slane %v5694, %v6217
      %v6219 = vsel %vm2886, %v6218, %v6214
      %v6220 = vlaneseq
      %v6221 = vshrl.u32 %v6220, 7
      %v6222 = vsub.s32 %v2876, %v6221
      %v6223 = vrot.slane %v5697, %v6222
      %v6224 = vlaneseq
      %v6225 = vshrl.u32 %v6224, 7
      %v6226 = vsub.s32 %v2881, %v6225
      %v6227 = vrot.slane %v5700, %v6226
      %v6228 = vsel %vm2886, %v6227, %v6223
      %v6229 = vlaneseq
      %v6230 = vshrl.u32 %v6229, 7
      %v6231 = vsub.s32 %v2876, %v6230
      %v6232 = vrot.slane %v5703, %v6231
      %v6233 = vlaneseq
      %v6234 = vshrl.u32 %v6233, 7
      %v6235 = vsub.s32 %v2881, %v6234
      %v6236 = vrot.slane %v5706, %v6235
      %v6237 = vsel %vm2886, %v6236, %v6232
      %v6238 = vlaneseq
      %v6239 = vshrl.u32 %v6238, 7
      %v6240 = vsub.s32 %v2876, %v6239
      %v6241 = vrot.slane %v5709, %v6240
      %v6242 = vlaneseq
      %v6243 = vshrl.u32 %v6242, 7
      %v6244 = vsub.s32 %v2881, %v6243
      %v6245 = vrot.slane %v5712, %v6244
      %v6246 = vsel %vm2886, %v6245, %v6241
      %v6247 = vlaneseq
      %v6248 = vshrl.u32 %v6247, 7
      %v6249 = vsub.s32 %v2876, %v6248
      %v6250 = vrot.slane %v5715, %v6249
      %v6251 = vlaneseq
      %v6252 = vshrl.u32 %v6251, 7
      %v6253 = vsub.s32 %v2881, %v6252
      %v6254 = vrot.slane %v5718, %v6253
      %v6255 = vsel %vm2886, %v6254, %v6250
      %v6256 = vlaneseq
      %v6257 = vshrl.u32 %v6256, 7
      %v6258 = vsub.s32 %v2876, %v6257
      %v6259 = vrot.slane %v5721, %v6258
      %v6260 = vlaneseq
      %v6261 = vshrl.u32 %v6260, 7
      %v6262 = vsub.s32 %v2881, %v6261
      %v6263 = vrot.slane %v5724, %v6262
      %v6264 = vsel %vm2886, %v6263, %v6259
      %v6265 = vlaneseq
      %v6266 = vshrl.u32 %v6265, 7
      %v6267 = vsub.s32 %v2876, %v6266
      %v6268 = vrot.slane %v5727, %v6267
      %v6269 = vlaneseq
      %v6270 = vshrl.u32 %v6269, 7
      %v6271 = vsub.s32 %v2881, %v6270
      %v6272 = vrot.slane %v5730, %v6271
      %v6273 = vsel %vm2886, %v6272, %v6268
      %v6274 = vlaneseq
      %v6275 = vshrl.u32 %v6274, 7
      %v6276 = vsub.s32 %v2876, %v6275
      %v6277 = vrot.slane %v5733, %v6276
      %v6278 = vlaneseq
      %v6279 = vshrl.u32 %v6278, 7
      %v6280 = vsub.s32 %v2881, %v6279
      %v6281 = vrot.slane %v5736, %v6280
      %v6282 = vsel %vm2886, %v6281, %v6277
      %v6283 = vlaneseq
      %v6284 = vshrl.u32 %v6283, 7
      %v6285 = vsub.s32 %v2876, %v6284
      %v6286 = vrot.slane %v5739, %v6285
      %v6287 = vlaneseq
      %v6288 = vshrl.u32 %v6287, 7
      %v6289 = vsub.s32 %v2881, %v6288
      %v6290 = vrot.slane %v5742, %v6289
      %v6291 = vsel %vm2886, %v6290, %v6286
      %v6292 = vlaneseq
      %v6293 = vshrl.u32 %v6292, 7
      %v6294 = vsub.s32 %v2876, %v6293
      %v6295 = vrot.slane %v5745, %v6294
      %v6296 = vlaneseq
      %v6297 = vshrl.u32 %v6296, 7
      %v6298 = vsub.s32 %v2881, %v6297
      %v6299 = vrot.slane %v5748, %v6298
      %v6300 = vsel %vm2886, %v6299, %v6295
      %v6301 = vlaneseq
      %v6302 = vshrl.u32 %v6301, 7
      %v6303 = vsub.s32 %v2876, %v6302
      %v6304 = vrot.slane %v5751, %v6303
      %v6305 = vlaneseq
      %v6306 = vshrl.u32 %v6305, 7
      %v6307 = vsub.s32 %v2881, %v6306
      %v6308 = vrot.slane %v5754, %v6307
      %v6309 = vsel %vm2886, %v6308, %v6304
      %v6310 = vlaneseq
      %v6311 = vshrl.u32 %v6310, 7
      %v6312 = vsub.s32 %v2876, %v6311
      %v6313 = vrot.slane %v5757, %v6312
      %v6314 = vlaneseq
      %v6315 = vshrl.u32 %v6314, 7
      %v6316 = vsub.s32 %v2881, %v6315
      %v6317 = vrot.slane %v5760, %v6316
      %v6318 = vsel %vm2886, %v6317, %v6313
      %v6319 = vlaneseq
      %v6320 = vshrl.u32 %v6319, 7
      %v6321 = vsub.s32 %v2876, %v6320
      %v6322 = vrot.slane %v5763, %v6321
      %v6323 = vlaneseq
      %v6324 = vshrl.u32 %v6323, 7
      %v6325 = vsub.s32 %v2881, %v6324
      %v6326 = vrot.slane %v5766, %v6325
      %v6327 = vsel %vm2886, %v6326, %v6322
      %v6328 = vlaneseq
      %v6329 = vshrl.u32 %v6328, 7
      %v6330 = vsub.s32 %v2876, %v6329
      %v6331 = vrot.slane %v5769, %v6330
      %v6332 = vlaneseq
      %v6333 = vshrl.u32 %v6332, 7
      %v6334 = vsub.s32 %v2881, %v6333
      %v6335 = vrot.slane %v5772, %v6334
      %v6336 = vsel %vm2886, %v6335, %v6331
      %v6337 = vlaneseq
      %v6338 = vshrl.u32 %v6337, 7
      %v6339 = vsub.s32 %v2876, %v6338
      %v6340 = vrot.slane %v5775, %v6339
      %v6341 = vlaneseq
      %v6342 = vshrl.u32 %v6341, 7
      %v6343 = vsub.s32 %v2881, %v6342
      %v6344 = vrot.slane %v5778, %v6343
      %v6345 = vsel %vm2886, %v6344, %v6340
      %v6346 = vlaneseq
      %v6347 = vshrl.u32 %v6346, 7
      %v6348 = vsub.s32 %v2876, %v6347
      %v6349 = vrot.slane %v5781, %v6348
      %v6350 = vlaneseq
      %v6351 = vshrl.u32 %v6350, 7
      %v6352 = vsub.s32 %v2881, %v6351
      %v6353 = vrot.slane %v5784, %v6352
      %v6354 = vsel %vm2886, %v6353, %v6349
      %v6355 = vlaneseq
      %v6356 = vshrl.u32 %v6355, 7
      %v6357 = vsub.s32 %v2876, %v6356
      %v6358 = vrot.slane %v5787, %v6357
      %v6359 = vlaneseq
      %v6360 = vshrl.u32 %v6359, 7
      %v6361 = vsub.s32 %v2881, %v6360
      %v6362 = vrot.slane %v5790, %v6361
      %v6363 = vsel %vm2886, %v6362, %v6358
      %v6364 = vlaneseq
      %v6365 = vshrl.u32 %v6364, 7
      %v6366 = vsub.s32 %v2876, %v6365
      %v6367 = vrot.slane %v5793, %v6366
      %v6368 = vlaneseq
      %v6369 = vshrl.u32 %v6368, 7
      %v6370 = vsub.s32 %v2881, %v6369
      %v6371 = vrot.slane %v5796, %v6370
      %v6372 = vsel %vm2886, %v6371, %v6367
      %v6373 = vsel %vm3455, %v5814, %v5805
      %v6374 = vsel %vm3457, %v5823, %v6373
      %v6375 = vsel %vm3459, %v5832, %v6374
      %v6376 = vsel %vm3461, %v5841, %v6375
      %v6377 = vsel %vm3463, %v5850, %v6376
      %v6378 = vsel %vm3465, %v5859, %v6377
      %v6379 = vsel %vm3467, %v5868, %v6378
      %v6380 = vsel %vm3455, %v5886, %v5877
      %v6381 = vsel %vm3457, %v5895, %v6380
      %v6382 = vsel %vm3459, %v5904, %v6381
      %v6383 = vsel %vm3461, %v5913, %v6382
      %v6384 = vsel %vm3463, %v5922, %v6383
      %v6385 = vsel %vm3465, %v5931, %v6384
      %v6386 = vsel %vm3467, %v5940, %v6385
      %v6387 = vsel %vm3455, %v5958, %v5949
      %v6388 = vsel %vm3457, %v5967, %v6387
      %v6389 = vsel %vm3459, %v5976, %v6388
      %v6390 = vsel %vm3461, %v5985, %v6389
      %v6391 = vsel %vm3463, %v5994, %v6390
      %v6392 = vsel %vm3465, %v6003, %v6391
      %v6393 = vsel %vm3467, %v6012, %v6392
      %v6394 = vsel %vm3455, %v6030, %v6021
      %v6395 = vsel %vm3457, %v6039, %v6394
      %v6396 = vsel %vm3459, %v6048, %v6395
      %v6397 = vsel %vm3461, %v6057, %v6396
      %v6398 = vsel %vm3463, %v6066, %v6397
      %v6399 = vsel %vm3465, %v6075, %v6398
      %v6400 = vsel %vm3467, %v6084, %v6399
      %v6401 = vsel %vm3455, %v6102, %v6093
      %v6402 = vsel %vm3457, %v6111, %v6401
      %v6403 = vsel %vm3459, %v6120, %v6402
      %v6404 = vsel %vm3461, %v6129, %v6403
      %v6405 = vsel %vm3463, %v6138, %v6404
      %v6406 = vsel %vm3465, %v6147, %v6405
      %v6407 = vsel %vm3467, %v6156, %v6406
      %v6408 = vsel %vm3455, %v6174, %v6165
      %v6409 = vsel %vm3457, %v6183, %v6408
      %v6410 = vsel %vm3459, %v6192, %v6409
      %v6411 = vsel %vm3461, %v6201, %v6410
      %v6412 = vsel %vm3463, %v6210, %v6411
      %v6413 = vsel %vm3465, %v6219, %v6412
      %v6414 = vsel %vm3467, %v6228, %v6413
      %v6415 = vsel %vm3455, %v6246, %v6237
      %v6416 = vsel %vm3457, %v6255, %v6415
      %v6417 = vsel %vm3459, %v6264, %v6416
      %v6418 = vsel %vm3461, %v6273, %v6417
      %v6419 = vsel %vm3463, %v6282, %v6418
      %v6420 = vsel %vm3465, %v6291, %v6419
      %v6421 = vsel %vm3467, %v6300, %v6420
      %v6422 = vsel %vm3455, %v6318, %v6309
      %v6423 = vsel %vm3457, %v6327, %v6422
      %v6424 = vsel %vm3459, %v6336, %v6423
      %v6425 = vsel %vm3461, %v6345, %v6424
      %v6426 = vsel %vm3463, %v6354, %v6425
      %v6427 = vsel %vm3465, %v6363, %v6426
      %v6428 = vsel %vm3467, %v6372, %v6427
      %v6437 = vsel %vm693, %v6379, 0.0
      %6438 = vadd.xlane.f32.xlu0 %v6437
      %v6439 = vpop.xlane.xlu0 %6438
      %v6440 = vsel %vm693, %v6386, 0.0
      %6441 = vadd.xlane.f32.xlu0 %v6440
      %v6442 = vpop.xlane.xlu0 %6441
      %v6443 = vsel %vm693, %v6393, 0.0
      %6444 = vadd.xlane.f32.xlu0 %v6443
      %v6445 = vpop.xlane.xlu0 %6444
      %v6446 = vsel %vm693, %v6400, 0.0
      %6447 = vadd.xlane.f32.xlu0 %v6446
      %v6448 = vpop.xlane.xlu0 %6447
      %v6449 = vsel %vm693, %v6407, 0.0
      %6450 = vadd.xlane.f32.xlu0 %v6449
      %v6451 = vpop.xlane.xlu0 %6450
      %v6452 = vsel %vm693, %v6414, 0.0
      %6453 = vadd.xlane.f32.xlu0 %v6452
      %v6454 = vpop.xlane.xlu0 %6453
      %v6455 = vsel %vm693, %v6421, 0.0
      %6456 = vadd.xlane.f32.xlu0 %v6455
      %v6457 = vpop.xlane.xlu0 %6456
      %v6458 = vsel %vm693, %v6428, 0.0
      %6459 = vadd.xlane.f32.xlu0 %v6458
      %v6460 = vpop.xlane.xlu0 %6459
      %vm6461 = vcmp.lt.f32.partialorder %v6439, 4.0
      %vm6462 = vcmp.lt.f32.partialorder %v6442, 4.0
      %vm6463 = vcmp.lt.f32.partialorder %v6445, 4.0
      %vm6464 = vcmp.lt.f32.partialorder %v6448, 4.0
      %vm6465 = vcmp.lt.f32.partialorder %v6451, 4.0
      %vm6466 = vcmp.lt.f32.partialorder %v6454, 4.0
      %vm6467 = vcmp.lt.f32.partialorder %v6457, 4.0
      %vm6468 = vcmp.lt.f32.partialorder %v6460, 4.0
      %vm6469 = vmand %vm6461, %vm3598
      %vm6470 = vmand %vm6462, %vm3599
      %vm6471 = vmand %vm6463, %vm3600
      %vm6472 = vmand %vm6464, %vm3601
      %vm6473 = vmand %vm6465, %vm3602
      %vm6474 = vmand %vm6466, %vm3603
      %vm6475 = vmand %vm6467, %vm3604
      %vm6476 = vmand %vm6468, %vm3605
      %v6477 = vsel %vm6469, 1.0, 0.0
      %v6478 = vsel %vm6470, 1.0, 0.0
      %v6479 = vsel %vm6471, 1.0, 0.0
      %v6480 = vsel %vm6472, 1.0, 0.0
      %v6481 = vsel %vm6473, 1.0, 0.0
      %v6482 = vsel %vm6474, 1.0, 0.0
      %v6483 = vsel %vm6475, 1.0, 0.0
      %v6484 = vsel %vm6476, 1.0, 0.0
      %v6485 = vtanh.pop %v4415
      %v6486 = vtanh.pop %v4418
      %v6487 = vtanh.pop %v4421
      %v6488 = vtanh.pop %v4424
      %v6489 = vtanh.pop %v4427
      %v6490 = vtanh.pop %v4430
      %v6491 = vtanh.pop %v4433
      %v6492 = vtanh.pop %v4436
      %v6493 = vmul.f32 %v6485, %v6477
      %v6494 = vmul.f32 %v6486, %v6478
      %v6495 = vmul.f32 %v6487, %v6479
      %v6496 = vmul.f32 %v6488, %v6480
      %v6497 = vmul.f32 %v6489, %v6481
      %v6498 = vmul.f32 %v6490, %v6482
      %v6499 = vmul.f32 %v6491, %v6483
      %v6500 = vmul.f32 %v6492, %v6484
      %v6501 = vmul.f32 %v4391, %v6493
      %v6502 = vmul.f32 %v4392, %v6494
      %v6503 = vmul.f32 %v4393, %v6495
      %v6504 = vmul.f32 %v4394, %v6496
      %v6505 = vmul.f32 %v4395, %v6497
      %v6506 = vmul.f32 %v4396, %v6498
      %v6507 = vmul.f32 %v4397, %v6499
      %v6508 = vmul.f32 %v4398, %v6500
      %vm6509 = vcmp.gt.f32.partialorder %v6477, 0.0
      %vm6510 = vcmp.gt.f32.partialorder %v6478, 0.0
      %vm6511 = vcmp.gt.f32.partialorder %v6479, 0.0
      %vm6512 = vcmp.gt.f32.partialorder %v6480, 0.0
      %vm6513 = vcmp.gt.f32.partialorder %v6481, 0.0
      %vm6514 = vcmp.gt.f32.partialorder %v6482, 0.0
      %vm6515 = vcmp.gt.f32.partialorder %v6483, 0.0
      %vm6516 = vcmp.gt.f32.partialorder %v6484, 0.0
      %v6517 = vsel %vm6509, 1, 0
      %v6518 = vsel %vm6510, 1, 0
      %v6519 = vsel %vm6511, 1, 0
      %v6520 = vsel %vm6512, 1, 0
      %v6521 = vsel %vm6513, 1, 0
      %v6522 = vsel %vm6514, 1, 0
      %v6523 = vsel %vm6515, 1, 0
      %v6524 = vsel %vm6516, 1, 0
      %vm6525 = vcmp.eq.s32.totalorder %v6517, 1
      %vm6526 = vcmp.eq.s32.totalorder %v6518, 1
      %vm6527 = vcmp.eq.s32.totalorder %v6519, 1
      %vm6528 = vcmp.eq.s32.totalorder %v6520, 1
      %vm6529 = vcmp.eq.s32.totalorder %v6521, 1
      %vm6530 = vcmp.eq.s32.totalorder %v6522, 1
      %vm6531 = vcmp.eq.s32.totalorder %v6523, 1
      %vm6532 = vcmp.eq.s32.totalorder %v6524, 1
      %v6533 = vsel %vm6525, %v6501, -1e+30
      %v6534 = vsel %vm6526, %v6502, -1e+30
      %v6535 = vsel %vm6527, %v6503, -1e+30
      %v6536 = vsel %vm6528, %v6504, -1e+30
      %v6537 = vsel %vm6529, %v6505, -1e+30
      %v6538 = vsel %vm6530, %v6506, -1e+30
      %v6539 = vsel %vm6531, %v6507, -1e+30
      %v6540 = vsel %vm6532, %v6508, -1e+30
      %v6541 = vsel %vm1279, %v6533, -inf
      %v6542 = vsel %vm1279, %v6534, -inf
      %v6543 = vmax.f32 %v6541, %v6542
      %v6544 = vrot.slane %v6543, 4
      %v6545 = vmax.f32 %v6543, %v6544
      %v6546 = vrot.slane %v6545, 2
      %v6547 = vmax.f32 %v6545, %v6546
      %v6548 = vrot.slane %v6547, 1
      %v6549 = vmax.f32 %v6547, %v6548
      %v6550 = vsel %vm1279, %v6535, -inf
      %v6551 = vsel %vm1279, %v6536, -inf
      %v6552 = vmax.f32 %v6550, %v6551
      %v6553 = vrot.slane %v6552, 4
      %v6554 = vmax.f32 %v6552, %v6553
      %v6555 = vrot.slane %v6554, 2
      %v6556 = vmax.f32 %v6554, %v6555
      %v6557 = vrot.slane %v6556, 1
      %v6558 = vmax.f32 %v6556, %v6557
      %v6559 = vsel %vm1279, %v6537, -inf
      %v6560 = vsel %vm1279, %v6538, -inf
      %v6561 = vmax.f32 %v6559, %v6560
      %v6562 = vrot.slane %v6561, 4
      %v6563 = vmax.f32 %v6561, %v6562
      %v6564 = vrot.slane %v6563, 2
      %v6565 = vmax.f32 %v6563, %v6564
      %v6566 = vrot.slane %v6565, 1
      %v6567 = vmax.f32 %v6565, %v6566
      %v6568 = vsel %vm1279, %v6539, -inf
      %v6569 = vsel %vm1279, %v6540, -inf
      %v6570 = vmax.f32 %v6568, %v6569
      %v6571 = vrot.slane %v6570, 4
      %v6572 = vmax.f32 %v6570, %v6571
      %v6573 = vrot.slane %v6572, 2
      %v6574 = vmax.f32 %v6572, %v6573
      %v6575 = vrot.slane %v6574, 1
      %v6576 = vmax.f32 %v6574, %v6575
      %v6577 = vsel %vm1279, %v6501, 0.0
      %v6578 = vsel %vm1279, %v6502, 0.0
      %v6579 = vadd.f32 %v6577, %v6578
      %v6580 = vrot.slane %v6579, 4
      %v6581 = vadd.f32 %v6579, %v6580
      %v6582 = vrot.slane %v6581, 2
      %v6583 = vadd.f32 %v6581, %v6582
      %v6584 = vrot.slane %v6583, 1
      %v6585 = vadd.f32 %v6583, %v6584
      %v6586 = vsel %vm1279, %v6503, 0.0
      %v6587 = vsel %vm1279, %v6504, 0.0
      %v6588 = vadd.f32 %v6586, %v6587
      %v6589 = vrot.slane %v6588, 4
      %v6590 = vadd.f32 %v6588, %v6589
      %v6591 = vrot.slane %v6590, 2
      %v6592 = vadd.f32 %v6590, %v6591
      %v6593 = vrot.slane %v6592, 1
      %v6594 = vadd.f32 %v6592, %v6593
      %v6595 = vsel %vm1279, %v6505, 0.0
      %v6596 = vsel %vm1279, %v6506, 0.0
      %v6597 = vadd.f32 %v6595, %v6596
      %v6598 = vrot.slane %v6597, 4
      %v6599 = vadd.f32 %v6597, %v6598
      %v6600 = vrot.slane %v6599, 2
      %v6601 = vadd.f32 %v6599, %v6600
      %v6602 = vrot.slane %v6601, 1
      %v6603 = vadd.f32 %v6601, %v6602
      %v6604 = vsel %vm1279, %v6507, 0.0
      %v6605 = vsel %vm1279, %v6508, 0.0
      %v6606 = vadd.f32 %v6604, %v6605
      %v6607 = vrot.slane %v6606, 4
      %v6608 = vadd.f32 %v6606, %v6607
      %v6609 = vrot.slane %v6608, 2
      %v6610 = vadd.f32 %v6608, %v6609
      %v6611 = vrot.slane %v6610, 1
      %v6612 = vadd.f32 %v6610, %v6611
      %v6621 = vlaneseq
      %v6622 = vshrl.u32 %v6621, 7
      %v6623 = vsub.s32 %v2876, %v6622
      %v6624 = vrot.slane %v6477, %v6623
      %v6625 = vlaneseq
      %v6626 = vshrl.u32 %v6625, 7
      %v6627 = vsub.s32 %v2881, %v6626
      %v6628 = vrot.slane %v6478, %v6627
      %v6629 = vsel %vm2886, %v6628, %v6624
      %v6630 = vlaneseq
      %v6631 = vshrl.u32 %v6630, 7
      %v6632 = vsub.s32 %v2876, %v6631
      %v6633 = vrot.slane %v6479, %v6632
      %v6634 = vlaneseq
      %v6635 = vshrl.u32 %v6634, 7
      %v6636 = vsub.s32 %v2881, %v6635
      %v6637 = vrot.slane %v6480, %v6636
      %v6638 = vsel %vm2886, %v6637, %v6633
      %v6639 = vlaneseq
      %v6640 = vshrl.u32 %v6639, 7
      %v6641 = vsub.s32 %v2876, %v6640
      %v6642 = vrot.slane %v6481, %v6641
      %v6643 = vlaneseq
      %v6644 = vshrl.u32 %v6643, 7
      %v6645 = vsub.s32 %v2881, %v6644
      %v6646 = vrot.slane %v6482, %v6645
      %v6647 = vsel %vm2886, %v6646, %v6642
      %v6648 = vlaneseq
      %v6649 = vshrl.u32 %v6648, 7
      %v6650 = vsub.s32 %v2876, %v6649
      %v6651 = vrot.slane %v6483, %v6650
      %v6652 = vlaneseq
      %v6653 = vshrl.u32 %v6652, 7
      %v6654 = vsub.s32 %v2881, %v6653
      %v6655 = vrot.slane %v6484, %v6654
      %v6656 = vsel %vm2886, %v6655, %v6651
      %v6657 = vsel %vm3455, %v6638, %v6629
      %v6658 = vsel %vm3457, %v6647, %v6657
      %v6659 = vsel %vm3459, %v6656, %v6658
      %v6661 = vsel %vm3750, %v6659, 0.0
      %6662 = vadd.xlane.f32.xlu0 %v6661
      %v6663 = vpop.xlane.xlu0 %6662
      %v6665 = vrot.slane %v6663, 1
      %v6666 = vrot.slane %v6663, 2
      %v6667 = vrot.slane %v6663, 3
      %v6672 = vrcp.pop %v6663
      %v6673 = vmul.f32 %v6585, %v6672
      %v6674 = vrcp.pop %v6665
      %v6675 = vmul.f32 %v6594, %v6674
      %v6676 = vrcp.pop %v6666
      %v6677 = vmul.f32 %v6603, %v6676
      %v6678 = vrcp.pop %v6667
      %v6679 = vmul.f32 %v6612, %v6678
      %v6680 = vadd.f32 %v3770, %v6549
      %v6681 = vadd.f32 %v3771, %v6558
      %v6682 = vadd.f32 %v3772, %v6567
      %v6683 = vadd.f32 %v3773, %v6576
      %v6684 = vadd.f32 %v3774, %v6673
      %v6685 = vadd.f32 %v3775, %v6675
      %v6686 = vadd.f32 %v3776, %v6677
      %v6687 = vadd.f32 %v3777, %v6679
      %v6688 = vld [vmem:[%s647] sm:$0xff]
      %v6689 = vld [vmem:[%s647 + $0x8] sm:$0xff]
      %v6690 = vld [vmem:[%s647 + $0x10] sm:$0xff]
      %v6691 = vld [vmem:[%s647 + $0x18] sm:$0xff]
      %v6692 = vld [vmem:[%s647 + $0x20] sm:$0xff]
      %v6693 = vld [vmem:[%s647 + $0x28] sm:$0xff]
      %v6694 = vld [vmem:[%s647 + $0x30] sm:$0xff]
      %v6695 = vld [vmem:[%s647 + $0x38] sm:$0xff]
      %v6700 = vrot.slane %v6685, 7
      %v6701 = vsel %vm3455, %v6700, %v6684
      %v6702 = vrot.slane %v6686, 6
      %v6703 = vsel %vm3457, %v6702, %v6701
      %v6704 = vrot.slane %v6687, 5
      %v6705 = vsel %vm3459, %v6704, %v6703
      %v6706 = vsel %vm1279, %v6705, 0
      %6708 = vmatprep.subr.mxu0 0.0
      %6709 = vmatpush1.msra.mxu0 0.0
      %6710 = vmatprep.subr.mxu0 0.0
      %6711 = vmatpush1.msra.mxu0 0.0
      %6712 = vmatprep.subr.mxu0 0.0
      %6713 = vmatpush1.msra.mxu0 0.0
      %6714 = vmatprep.subr.mxu0 0.0
      %6715 = vmatpush1.msra.mxu0 0.0
      %6716 = vmatprep.subr.mxu0 0.0
      %6717 = vmatpush1.msra.mxu0 0.0
      %6718 = vmatprep.subr.mxu0 0.0
      %6719 = vmatpush1.msra.mxu0 0.0
      %6720 = vmatprep.subr.mxu0 0.0
      %6721 = vmatpush1.msra.mxu0 0.0
      %6722 = vmatprep.subr.mxu0 0.0
      %6723 = vmatpush1.msra.mxu0 0.0
      %6724 = vmatprep.subr.mxu0 0.0
      %6725 = vmatpush1.msra.mxu0 0.0
      %6726 = vmatprep.subr.mxu0 0.0
      %6727 = vmatpush1.msra.mxu0 0.0
      %6728 = vmatprep.subr.mxu0 0.0
      %6729 = vmatpush1.msra.mxu0 0.0
      %6730 = vmatprep.subr.mxu0 0.0
      %6731 = vmatpush1.msra.mxu0 0.0
      %6732 = vmatprep.subr.mxu0 0.0
      %6733 = vmatpush1.msra.mxu0 %v6695
      %6734 = vmatprep.subr.mxu0 0.0
      %6735 = vmatpush1.msra.mxu0 %v6694
      %6736 = vmatprep.subr.mxu0 0.0
      %6737 = vmatpush1.msra.mxu0 %v6693
      %6738 = vmatprep.subr.mxu0 0.0
      %6739 = vmatpush1.msra.mxu0 %v6692
      %6740 = vmatprep.subr.mxu0 0.0
      %6741 = vmatpush2.msra.mxu0 0.0
      %6742 = vmatprep.subr.mxu0 0.0
      %6743 = vmatpush2.msra.mxu0 0.0
      %6744 = vmatprep.subr.mxu0 0.0
      %6745 = vmatpush2.msra.mxu0 0.0
      %6746 = vmatprep.subr.mxu0 0.0
      %6747 = vmatpush2.msra.mxu0 0.0
      %6748 = vmatprep.subr.mxu0 0.0
      %6749 = vmatpush2.msra.mxu0 0.0
      %6750 = vmatprep.subr.mxu0 0.0
      %6751 = vmatpush2.msra.mxu0 0.0
      %6752 = vmatprep.subr.mxu0 0.0
      %6753 = vmatpush2.msra.mxu0 0.0
      %6754 = vmatprep.subr.mxu0 0.0
      %6755 = vmatpush2.msra.mxu0 0.0
      %6756 = vmatprep.subr.mxu0 0.0
      %6757 = vmatpush2.msra.mxu0 0.0
      %6758 = vmatprep.subr.mxu0 0.0
      %6759 = vmatpush2.msra.mxu0 0.0
      %6760 = vmatprep.subr.mxu0 0.0
      %6761 = vmatpush2.msra.mxu0 0.0
      %6762 = vmatprep.subr.mxu0 0.0
      %6763 = vmatpush2.msra.mxu0 0.0
      %6764 = vmatprep.subr.mxu0 0.0
      %6765 = vmatpush2.msra.mxu0 0.0
      %6766 = vmatprep.subr.mxu0 0.0
      %6767 = vmatpush2.msra.mxu0 0.0
      %6768 = vmatprep.subr.mxu0 0.0
      %6769 = vmatpush2.msra.mxu0 0.0
      %6770 = vmatprep.subr.mxu0 0.0
      %6771 = vmatpush2.msra.mxu0 0.0
      %6772 = vmatprep.mubr.f32.mxu0 0.0
      %6773 = vmatmul.mubr.f32.gmra.mxu0 %v6706
      %v6774 = vpop.f32.mrf.mxu0
      %v6775 = vadd.f32 0.0, %v6774
      %v6776 = vpop.f32.mrf.mxu0
      %6777 = vdwg.mxu0
      %v6782 = vsel %vm3455, %v6681, %v6680
      %v6783 = vsel %vm3457, %v6682, %v6782
      %v6784 = vsel %vm3459, %v6683, %v6783
      %v6785 = vsel %vm1279, %v6784, 0
      %6787 = vmatprep.subr.mxu0 0.0
      %6788 = vmatpush1.msra.mxu0 0.0
      %6789 = vmatprep.subr.mxu0 0.0
      %6790 = vmatpush1.msra.mxu0 0.0
      %6791 = vmatprep.subr.mxu0 0.0
      %6792 = vmatpush1.msra.mxu0 0.0
      %6793 = vmatprep.subr.mxu0 0.0
      %6794 = vmatpush1.msra.mxu0 0.0
      %6795 = vmatprep.subr.mxu0 0.0
      %6796 = vmatpush1.msra.mxu0 0.0
      %6797 = vmatprep.subr.mxu0 0.0
      %6798 = vmatpush1.msra.mxu0 0.0
      %6799 = vmatprep.subr.mxu0 0.0
      %6800 = vmatpush1.msra.mxu0 0.0
      %6801 = vmatprep.subr.mxu0 0.0
      %6802 = vmatpush1.msra.mxu0 0.0
      %6803 = vmatprep.subr.mxu0 0.0
      %6804 = vmatpush1.msra.mxu0 0.0
      %6805 = vmatprep.subr.mxu0 0.0
      %6806 = vmatpush1.msra.mxu0 0.0
      %6807 = vmatprep.subr.mxu0 0.0
      %6808 = vmatpush1.msra.mxu0 0.0
      %6809 = vmatprep.subr.mxu0 0.0
      %6810 = vmatpush1.msra.mxu0 0.0
      %6811 = vmatprep.subr.mxu0 0.0
      %6812 = vmatpush1.msra.mxu0 %v6691
      %6813 = vmatprep.subr.mxu0 0.0
      %6814 = vmatpush1.msra.mxu0 %v6690
      %6815 = vmatprep.subr.mxu0 0.0
      %6816 = vmatpush1.msra.mxu0 %v6689
      %6817 = vmatprep.subr.mxu0 0.0
      %6818 = vmatpush1.msra.mxu0 %v6688
      %6819 = vmatprep.subr.mxu0 0.0
      %6820 = vmatpush2.msra.mxu0 0.0
      %6821 = vmatprep.subr.mxu0 0.0
      %6822 = vmatpush2.msra.mxu0 0.0
      %6823 = vmatprep.subr.mxu0 0.0
      %6824 = vmatpush2.msra.mxu0 0.0
      %6825 = vmatprep.subr.mxu0 0.0
      %6826 = vmatpush2.msra.mxu0 0.0
      %6827 = vmatprep.subr.mxu0 0.0
      %6828 = vmatpush2.msra.mxu0 0.0
      %6829 = vmatprep.subr.mxu0 0.0
      %6830 = vmatpush2.msra.mxu0 0.0
      %6831 = vmatprep.subr.mxu0 0.0
      %6832 = vmatpush2.msra.mxu0 0.0
      %6833 = vmatprep.subr.mxu0 0.0
      %6834 = vmatpush2.msra.mxu0 0.0
      %6835 = vmatprep.subr.mxu0 0.0
      %6836 = vmatpush2.msra.mxu0 0.0
      %6837 = vmatprep.subr.mxu0 0.0
      %6838 = vmatpush2.msra.mxu0 0.0
      %6839 = vmatprep.subr.mxu0 0.0
      %6840 = vmatpush2.msra.mxu0 0.0
      %6841 = vmatprep.subr.mxu0 0.0
      %6842 = vmatpush2.msra.mxu0 0.0
      %6843 = vmatprep.subr.mxu0 0.0
      %6844 = vmatpush2.msra.mxu0 0.0
      %6845 = vmatprep.subr.mxu0 0.0
      %6846 = vmatpush2.msra.mxu0 0.0
      %6847 = vmatprep.subr.mxu0 0.0
      %6848 = vmatpush2.msra.mxu0 0.0
      %6849 = vmatprep.subr.mxu0 0.0
      %6850 = vmatpush2.msra.mxu0 0.0
      %6851 = vmatprep.mubr.f32.mxu0 0.0
      %6852 = vmatmul.mubr.f32.gmra.mxu0 %v6785
      %v6853 = vpop.f32.mrf.mxu0
      %v6854 = vadd.f32 %v6775, %v6853
      %v6855 = vpop.f32.mrf.mxu0
      %6856 = vdwg.mxu0
      %v6857 = vld [vmem:[%s650] sm:$0x1]
      %v6859 = vlaneseq
      %v6860 = vshrl.u32 %v6859, 7
      %v6861 = vsub.s32 0, %v6860
      %v6862 = vrot.slane %v6857, %v6861
      %v6864 = vadd.f32 %v6854, %v6862
      %v6865 = vmax.f32 %v6864, 0.0
      %v6866 = vld [vmem:[%s655] sm:$0xff]
      %v6867 = vld [vmem:[%s655 + $0x8] sm:$0xff]
      %v6868 = vld [vmem:[%s655 + $0x10] sm:$0xff]
      %v6869 = vld [vmem:[%s655 + $0x18] sm:$0xff]
      %v6870 = vld [vmem:[%s658] sm:$0x1]
      %v6872 = vlaneseq
      %v6873 = vshrl.u32 %v6872, 7
      %v6874 = vsub.s32 0, %v6873
      %v6875 = vrot.slane %v6870, %v6874
      %v6878 = vsel %vm1279, %v6865, 0
      %6880 = vmatprep.subr.mxu0 0.0
      %6881 = vmatpush1.msra.mxu0 0.0
      %6882 = vmatprep.subr.mxu0 0.0
      %6883 = vmatpush1.msra.mxu0 0.0
      %6884 = vmatprep.subr.mxu0 0.0
      %6885 = vmatpush1.msra.mxu0 0.0
      %6886 = vmatprep.subr.mxu0 0.0
      %6887 = vmatpush1.msra.mxu0 0.0
      %6888 = vmatprep.subr.mxu0 0.0
      %6889 = vmatpush1.msra.mxu0 0.0
      %6890 = vmatprep.subr.mxu0 0.0
      %6891 = vmatpush1.msra.mxu0 0.0
      %6892 = vmatprep.subr.mxu0 0.0
      %6893 = vmatpush1.msra.mxu0 0.0
      %6894 = vmatprep.subr.mxu0 0.0
      %6895 = vmatpush1.msra.mxu0 0.0
      %6896 = vmatprep.subr.mxu0 0.0
      %6897 = vmatpush1.msra.mxu0 0.0
      %6898 = vmatprep.subr.mxu0 0.0
      %6899 = vmatpush1.msra.mxu0 0.0
      %6900 = vmatprep.subr.mxu0 0.0
      %6901 = vmatpush1.msra.mxu0 0.0
      %6902 = vmatprep.subr.mxu0 0.0
      %6903 = vmatpush1.msra.mxu0 0.0
      %6904 = vmatprep.subr.mxu0 0.0
      %6905 = vmatpush1.msra.mxu0 %v6869
      %6906 = vmatprep.subr.mxu0 0.0
      %6907 = vmatpush1.msra.mxu0 %v6868
      %6908 = vmatprep.subr.mxu0 0.0
      %6909 = vmatpush1.msra.mxu0 %v6867
      %6910 = vmatprep.subr.mxu0 0.0
      %6911 = vmatpush1.msra.mxu0 %v6866
      %6912 = vmatprep.subr.mxu0 0.0
      %6913 = vmatpush2.msra.mxu0 0.0
      %6914 = vmatprep.subr.mxu0 0.0
      %6915 = vmatpush2.msra.mxu0 0.0
      %6916 = vmatprep.subr.mxu0 0.0
      %6917 = vmatpush2.msra.mxu0 0.0
      %6918 = vmatprep.subr.mxu0 0.0
      %6919 = vmatpush2.msra.mxu0 0.0
      %6920 = vmatprep.subr.mxu0 0.0
      %6921 = vmatpush2.msra.mxu0 0.0
      %6922 = vmatprep.subr.mxu0 0.0
      %6923 = vmatpush2.msra.mxu0 0.0
      %6924 = vmatprep.subr.mxu0 0.0
      %6925 = vmatpush2.msra.mxu0 0.0
      %6926 = vmatprep.subr.mxu0 0.0
      %6927 = vmatpush2.msra.mxu0 0.0
      %6928 = vmatprep.subr.mxu0 0.0
      %6929 = vmatpush2.msra.mxu0 0.0
      %6930 = vmatprep.subr.mxu0 0.0
      %6931 = vmatpush2.msra.mxu0 0.0
      %6932 = vmatprep.subr.mxu0 0.0
      %6933 = vmatpush2.msra.mxu0 0.0
      %6934 = vmatprep.subr.mxu0 0.0
      %6935 = vmatpush2.msra.mxu0 0.0
      %6936 = vmatprep.subr.mxu0 0.0
      %6937 = vmatpush2.msra.mxu0 0.0
      %6938 = vmatprep.subr.mxu0 0.0
      %6939 = vmatpush2.msra.mxu0 0.0
      %6940 = vmatprep.subr.mxu0 0.0
      %6941 = vmatpush2.msra.mxu0 0.0
      %6942 = vmatprep.subr.mxu0 0.0
      %6943 = vmatpush2.msra.mxu0 0.0
      %6944 = vmatprep.mubr.f32.mxu0 0.0
      %6945 = vmatmul.mubr.f32.gmra.mxu0 %v6878
      %v6946 = vpop.f32.mrf.mxu0
      %v6947 = vadd.f32 %v6875, %v6946
      %v6948 = vpop.f32.mrf.mxu0
      %6949 = vdwg.mxu0
      %v6950 = vmax.f32 %v6947, 0.0
      %v6951 = vld [vmem:[%s663] sm:$0xff]
      %v6952 = vld [vmem:[%s663 + $0x8] sm:$0xff]
      %v6953 = vld [vmem:[%s666] sm:$0x1]
      %v6955 = vlaneseq
      %v6956 = vshrl.u32 %v6955, 7
      %v6957 = vsub.s32 0, %v6956
      %v6958 = vrot.slane %v6953, %v6957
      %v6961 = vsel %vm693, %v6950, 0
      %6963 = vmatprep.subr.mxu0 0.0
      %6964 = vmatpush1.msra.mxu0 0.0
      %6965 = vmatprep.subr.mxu0 0.0
      %6966 = vmatpush1.msra.mxu0 0.0
      %6967 = vmatprep.subr.mxu0 0.0
      %6968 = vmatpush1.msra.mxu0 0.0
      %6969 = vmatprep.subr.mxu0 0.0
      %6970 = vmatpush1.msra.mxu0 0.0
      %6971 = vmatprep.subr.mxu0 0.0
      %6972 = vmatpush1.msra.mxu0 0.0
      %6973 = vmatprep.subr.mxu0 0.0
      %6974 = vmatpush1.msra.mxu0 0.0
      %6975 = vmatprep.subr.mxu0 0.0
      %6976 = vmatpush1.msra.mxu0 0.0
      %6977 = vmatprep.subr.mxu0 0.0
      %6978 = vmatpush1.msra.mxu0 0.0
      %6979 = vmatprep.subr.mxu0 0.0
      %6980 = vmatpush1.msra.mxu0 0.0
      %6981 = vmatprep.subr.mxu0 0.0
      %6982 = vmatpush1.msra.mxu0 0.0
      %6983 = vmatprep.subr.mxu0 0.0
      %6984 = vmatpush1.msra.mxu0 0.0
      %6985 = vmatprep.subr.mxu0 0.0
      %6986 = vmatpush1.msra.mxu0 0.0
      %6987 = vmatprep.subr.mxu0 0.0
      %6988 = vmatpush1.msra.mxu0 0.0
      %6989 = vmatprep.subr.mxu0 0.0
      %6990 = vmatpush1.msra.mxu0 0.0
      %6991 = vmatprep.subr.mxu0 0.0
      %6992 = vmatpush1.msra.mxu0 %v6952
      %6993 = vmatprep.subr.mxu0 0.0
      %6994 = vmatpush1.msra.mxu0 %v6951
      %6995 = vmatprep.subr.mxu0 0.0
      %6996 = vmatpush2.msra.mxu0 0.0
      %6997 = vmatprep.subr.mxu0 0.0
      %6998 = vmatpush2.msra.mxu0 0.0
      %6999 = vmatprep.subr.mxu0 0.0
      %7000 = vmatpush2.msra.mxu0 0.0
      %7001 = vmatprep.subr.mxu0 0.0
      %7002 = vmatpush2.msra.mxu0 0.0
      %7003 = vmatprep.subr.mxu0 0.0
      %7004 = vmatpush2.msra.mxu0 0.0
      %7005 = vmatprep.subr.mxu0 0.0
      %7006 = vmatpush2.msra.mxu0 0.0
      %7007 = vmatprep.subr.mxu0 0.0
      %7008 = vmatpush2.msra.mxu0 0.0
      %7009 = vmatprep.subr.mxu0 0.0
      %7010 = vmatpush2.msra.mxu0 0.0
      %7011 = vmatprep.subr.mxu0 0.0
      %7012 = vmatpush2.msra.mxu0 0.0
      %7013 = vmatprep.subr.mxu0 0.0
      %7014 = vmatpush2.msra.mxu0 0.0
      %7015 = vmatprep.subr.mxu0 0.0
      %7016 = vmatpush2.msra.mxu0 0.0
      %7017 = vmatprep.subr.mxu0 0.0
      %7018 = vmatpush2.msra.mxu0 0.0
      %7019 = vmatprep.subr.mxu0 0.0
      %7020 = vmatpush2.msra.mxu0 0.0
      %7021 = vmatprep.subr.mxu0 0.0
      %7022 = vmatpush2.msra.mxu0 0.0
      %7023 = vmatprep.subr.mxu0 0.0
      %7024 = vmatpush2.msra.mxu0 0.0
      %7025 = vmatprep.subr.mxu0 0.0
      %7026 = vmatpush2.msra.mxu0 0.0
      %7027 = vmatprep.mubr.f32.mxu0 0.0
      %7028 = vmatmul.mubr.f32.gmra.mxu0 %v6961
      %v7029 = vpop.f32.mrf.mxu0
      %v7030 = vadd.f32 %v6958, %v7029
      %v7031 = vpop.f32.mrf.mxu0
      %7032 = vdwg.mxu0
      %vm7033 = vcmask 11264
      %v7034 = vsel %vm7033, %v7030, -inf
      %7035 = vmax.xlane.f32.xlu0 %v7034
      %v7036 = vpop.xlane.xlu0 %7035
      %v7037 = vsub.f32 %v7030, %v7036
      %v7038 = vmul.f32 %v7037, 1.442695
      %v7039 = vpow.pop %v7038
      %v7040 = vsel %vm7033, %v7039, 0.0
      %7041 = vadd.xlane.f32.xlu0 %v7040
      %v7042 = vpop.xlane.xlu0 %7041
      %v7043 = vrcp.pop %v7042
      %v7044 = vmul.f32 %v7039, %v7043
      %7045 = vst.msk [vmem:[%s670] sm:$0xf] %vm7033, %v7044
      %p7046 = scmp.lt.s32.totalorder %s26, 2
      %s7047 = scalar_select %p7046, %s26, 2
      %s7048 = smul.addr %s7047, 4
      %s7049 = scalar_lea.vmem %s15, %s7048
      // Predicated region
      $region81: #{cv_ensemble_forward.1} parent=79 // pred_check
        %p7050 = pneg %p419
      $region82: #{cv_ensemble_forward.1} parent=79 // pred_check_branch
        %7052 = sbr.rel (%p7050) target = $region84
      $region83: #{cv_ensemble_forward.1} parent=79 // pred_region
        _
      $region84: #{cv_ensemble_forward.1} parent=79 // pred_fallthru
        _
    $region80: #{cv_ensemble_forward.1} parent=5 // pred_fallthru
      _
    %p7053 = scmp.le.s32.totalorder 2, %s21
    // Predicated region
    $region85: #{cv_ensemble_forward.1} parent=5 // pred_check
      %p7054 = pneg %p7053
    $region86: #{cv_ensemble_forward.1} parent=5 // pred_check_branch
      %7056 = sbr.rel (%p7054) target = $region88
    $region87: #{cv_ensemble_forward.1} parent=5 // pred_region
      %s7057 = ssub.s32 %s21, 2
      // Predicated region
      $region89: #{cv_ensemble_forward.1} parent=87 // pred_check
        %p7058 = pneg %p425
      $region90: #{cv_ensemble_forward.1} parent=87 // pred_check_branch
        %7060 = sbr.rel (%p7058) target = $region92
      $region91: #{cv_ensemble_forward.1} parent=87 // pred_region
        %p7061 = scmp.lt.s32.totalorder %s27, 2
        %s7062 = scalar_select %p7061, %s27, 2
        %s7063 = smul.addr %s7062, 4
        %s7064 = scalar_lea.vmem %s15, %s7063
      $region92: #{cv_ensemble_forward.1} parent=87 // pred_fallthru
        _
    $region88: #{cv_ensemble_forward.1} parent=5 // pred_fallthru
      _
  $region6: #{cv_ensemble_forward.1} parent=0 // loop_footer
    %s25 = sadd.s32 1, %s21
  $region7: #{cv_ensemble_forward.1} parent=0 // loop_footer_branch
    %20 = sbr.rel target = $region3
  $region8: #{cv_ensemble_forward.1} parent=0 // loop_exit
    _

</llo_original>
